<compile_context>
chip_gen: v5e
topology: v5e:2x2
jax: 0.10.0
libtpu: 0.0.40
codegen_flags: <defaults>
</compile_context>

<pallas_src>
import functools
import math

import jax
import jax.numpy as jnp
from jax.experimental import pallas as pl
from jax.experimental.pallas import tpu as pltpu

H = 64               # GRU hidden size per direction
GP = 3 * 128         # 3 gate blocks of 128 lanes (fwd hidden in lanes 0:64, bwd in 64:128)
QK = 128             # attention Q/K size (fixed by module)
AO = 128             # attention V/out size (att_size)
LP = 128             # emission output padded to 128 lanes
WBIG = GP + 3 * QK   # fused [GRU-input | Q | K | V] projection width = 768


def _vmem_limit_bytes():
    # v7x: 64 MiB physical VMEM per TensorCore; v5e/v6e: 128 MiB.  Use at most half.
    try:
        cap = int(pltpu.get_tpu_info().vmem_capacity_bytes)
    except Exception:
        cap = 64 * 1024 * 1024
    return int(min(cap // 2, 64 * 1024 * 1024))


# -----------------------------------------------------------------------------
# Fused forward kernel: BiGRU + self-attention + emission linear.
# One grid step == one sequence (batch-parallel on v7x megacore).
# -----------------------------------------------------------------------------
def fused_forward_pallas(x, lens, pp):
    """x: (B, S, D) bf16, lens: (B,) int32.  Returns emissions (B, S, LP) f32."""
    B, S, D = x.shape
    scale = 1.0 / math.sqrt(float(QK))
    U = max(u for u in (8, 4, 2, 1) if S % u == 0)   # time-chunk unroll factor
    n_chunks = S // U

    def kernel(len_ref, x_ref, wbig_ref, b_in_ref, whh_ref, bhh_ref,
               w_lr_ref, w_la_ref, b_lin_ref, emis_ref,
               gi_scr, rnn_f_scr, rnn_b_scr):
        b = pl.program_id(0)
        seq_len = len_ref[b]                                           # scalar int32

        # ---- fused input projection: [GRU gates | Q | K | V] in ONE MXU pass ----
        xv = x_ref[...]                                                # (S, D) bf16
        big = jnp.dot(xv, wbig_ref[...],
                      preferred_element_type=jnp.float32)              # (S, 768) f32
        gi_scr[...] = big[:, 0:GP] + b_in_ref[...]                     # (S, 384)
        q = big[:, GP:GP + QK].astype(jnp.bfloat16)                    # (S, 128)
        k = big[:, GP + QK:GP + 2 * QK].astype(jnp.bfloat16)
        v = big[:, GP + 2 * QK:GP + 2 * QK + AO].astype(jnp.bfloat16)

        # ---- per-sequence self-attention (module applies no padding mask) ----
        sc = jax.lax.dot_general(q, k, (((1,), (1,)), ((), ())),
                                 preferred_element_type=jnp.float32) * scale   # (S, S)
        sc = sc - jnp.max(sc, axis=-1, keepdims=True)
        e = jnp.exp(sc)
        denom = jnp.sum(e, axis=-1, keepdims=True)
        probs = (e * pl.reciprocal(denom, approx=True)).astype(jnp.bfloat16)
        att = jnp.dot(probs, v, preferred_element_type=jnp.float32)    # (S, AO)

        # attention half of the emission linear; rnn half is accumulated after the GRU
        emis_ref[...] = (jnp.dot(att.astype(jnp.bfloat16), w_la_ref[...],
                                 preferred_element_type=jnp.float32)
                         + b_lin_ref[...])                             # (S, LP)

        # ---- bidirectional GRU recurrence: fwd & bwd lane-packed in one 128-lane h ----
        lane_h = jax.lax.broadcasted_iota(jnp.int32, (1, 2 * H), 1)
        is_fwd_h = lane_h < H                                          # (1, 128)
        lane_g = jax.lax.broadcasted_iota(jnp.int32, (1, GP), 1)
        is_fwd_g = (lane_g % 128) < H                                  # (1, 384)

        def chunk(c, h):
            s0 = pl.multiple_of(c * U, U)                              # fwd chunk start
            r0 = pl.multiple_of((n_chunks - 1 - c) * U, U)             # bwd chunk start
            f_rows, b_rows = [], []
            for u in range(U):                                         # manual unroll
                s = s0 + u
                t_b = r0 + (U - 1 - u)                                 # = S - 1 - s
                gi_row = jnp.where(is_fwd_g,
                                   gi_scr[pl.ds(s, 1), :],
                                   gi_scr[pl.ds(t_b, 1), :])           # (1, 384)
                gh = (jnp.dot(h.astype(jnp.bfloat16), whh_ref[...],
                              preferred_element_type=jnp.float32)
                      + bhh_ref[...])                                  # (1, 384)
                r = jax.nn.sigmoid(gi_row[:, 0:128] + gh[:, 0:128])
                z = jax.nn.sigmoid(gi_row[:, 128:256] + gh[:, 128:256])
                n = jnp.tanh(gi_row[:, 256:384] + r * gh[:, 256:384])
                h_new = (1.0 - z) * n + z * h
                # pack_padded_sequence semantics: update / emit only inside the length
                t_vec = jnp.where(is_fwd_h, s, t_b)                    # per-lane time idx
                act = t_vec < seq_len                                  # (1, 128) bool
                h = jnp.where(act, h_new, h)
                zeros = jnp.zeros_like(h)
                f_rows.append(jnp.where(jnp.logical_and(is_fwd_h, act), h, zeros))
                b_rows.append(jnp.where(
                    jnp.logical_and(jnp.logical_not(is_fwd_h), act), h, zeros))
            # dense (U, 128) stores (one full sublane tile when U == 8)
            rnn_f_scr[pl.ds(s0, U), :] = jnp.concatenate(f_rows, axis=0)
            rnn_b_scr[pl.ds(r0, U), :] = jnp.concatenate(b_rows[::-1], axis=0)
            return h

        h0 = jnp.zeros((1, 2 * H), jnp.float32)
        jax.lax.fori_loop(0, n_chunks, chunk, h0, unroll=n_chunks <= 8)

        # ---- rnn half of the emission linear ----
        rnn = (rnn_f_scr[...] + rnn_b_scr[...]).astype(jnp.bfloat16)   # (S, 128)
        emis_ref[...] = emis_ref[...] + jnp.dot(
            rnn, w_lr_ref[...], preferred_element_type=jnp.float32)

    grid_spec = pltpu.PrefetchScalarGridSpec(
        num_scalar_prefetch=1,                       # lengths -> SMEM
        grid=(B,),                                   # one sequence per grid step
        in_specs=[
            pl.BlockSpec((None, S, D), lambda b, lens: (b, 0, 0)),      # x
            pl.BlockSpec((D, WBIG), lambda b, lens: (0, 0)),            # fused proj weight
            pl.BlockSpec((1, GP), lambda b, lens: (0, 0)),              # GRU input bias
            pl.BlockSpec((2 * H, GP), lambda b, lens: (0, 0)),          # recurrent weight
            pl.BlockSpec((1, GP), lambda b, lens: (0, 0)),              # recurrent bias
            pl.BlockSpec((2 * H, LP), lambda b, lens: (0, 0)),          # linear (rnn half)
            pl.BlockSpec((AO, LP), lambda b, lens: (0, 0)),             # linear (att half)
            pl.BlockSpec((1, LP), lambda b, lens: (0, 0)),              # linear bias
        ],
        out_specs=pl.BlockSpec((None, S, LP), lambda b, lens: (b, 0, 0)),
        scratch_shapes=[
            pltpu.VMEM((S, GP), jnp.float32),        # GRU input pre-activations
            pltpu.VMEM((S, 2 * H), jnp.float32),     # forward outputs (lanes 0:64)
            pltpu.VMEM((S, 2 * H), jnp.float32),     # backward outputs (lanes 64:128)
        ],
    )
    return pl.pallas_call(
        kernel,
        grid_spec=grid_spec,
        out_shape=jax.ShapeDtypeStruct((B, S, LP), jnp.float32),
        compiler_params=pltpu.CompilerParams(
            dimension_semantics=("parallel",),       # independent batch elems -> both v7x TCs
            vmem_limit_bytes=_vmem_limit_bytes()),
    )(lens, x, pp["wbig"], pp["b_in"], pp["whh"], pp["bhh"],
      pp["w_lr"], pp["w_la"], pp["b_lin"])


# -----------------------------------------------------------------------------
# CRF Viterbi decode (torchcrf semantics), plain JAX with lax.scan.
# -----------------------------------------------------------------------------
def crf_decode(emissions, mask, start_trans, end_trans, trans):
    B, T, L = emissions.shape
    maskf = mask.astype(jnp.float32)
    lengths = jnp.sum(mask.astype(jnp.int32), axis=1)
    seq_end = lengths - 1

    score0 = start_trans[None, :] + emissions[:, 0]                       # (B, L)

    def fwd_step(score, xs):
        emit_t, m_t = xs                                                  # (B, L), (B,)
        nxt = score[:, :, None] + trans[None, :, :] + emit_t[:, None, :]  # (B, L, L)
        idx = jnp.argmax(nxt, axis=1).astype(jnp.int32)
        val = jnp.max(nxt, axis=1)
        m = m_t[:, None]
        return m * val + (1.0 - m) * score, idx

    emits = jnp.swapaxes(emissions[:, 1:], 0, 1)                          # (T-1, B, L)
    ms = jnp.swapaxes(maskf[:, 1:], 0, 1)                                 # (T-1, B)
    score, history = jax.lax.scan(fwd_step, score0, (emits, ms))
    score = score + end_trans[None, :]
    last_tag = jnp.argmax(score, axis=1).astype(jnp.int32)                # (B,)

    def back_step(cur, xs):
        idx_t, t = xs                                                     # (B, L), scalar
        active = t <= seq_end
        prev = jnp.take_along_axis(idx_t, cur[:, None], axis=1)[:, 0]
        new_cur = jnp.where(active, prev, cur).astype(jnp.int32)
        return new_cur, jnp.where(active, new_cur, 0).astype(jnp.int32)

    ts = jnp.arange(T - 1, 0, -1)
    _, tags_rev = jax.lax.scan(back_step, last_tag, (history[::-1], ts))
    tags_body = jnp.swapaxes(tags_rev[::-1], 0, 1)                        # (B, T-1)
    tags = jnp.concatenate([tags_body, jnp.zeros((B, 1), jnp.int32)], axis=1)
    tags = tags.at[jnp.arange(B), seq_end].set(last_tag)
    return tags, lengths


# -----------------------------------------------------------------------------
# Full forward (eval mode), fully jit-able (no host syncs, static shapes).
# -----------------------------------------------------------------------------
def bert_bigru_att_crf_forward(length, word2vec, mask, packed, num_labels):
    x = word2vec.astype(jnp.bfloat16)                                     # (B, S, D)
    lens = length.astype(jnp.int32)                                       # (B,)
    emis = fused_forward_pallas(x, lens, packed)                          # (B, S, 128)
    emissions = emis[:, :, :num_labels]
    tags, lengths = crf_decode(emissions, mask,
                               packed["crf_start"], packed["crf_end"],
                               packed["crf_trans"])
    return tags, lengths


# -----------------------------------------------------------------------------
# Parameter setup: logical params (PyTorch layout) -> packed / padded kernel params.
# -----------------------------------------------------------------------------
def init_params(key, num_labels, D=768):
    ks = jax.random.split(key, 17)
    s = 0.05

    def rnd(k, shape):
        return jax.random.normal(k, shape, jnp.float32) * s

    return {
        # GRU (bidirectional, hid=64 per direction); gate order [r | z | n]
        "wih_f": rnd(ks[0], (D, 3 * H)), "whh_f": rnd(ks[1], (H, 3 * H)),
        "bih_f": rnd(ks[2], (1, 3 * H)), "bhh_f": rnd(ks[3], (1, 3 * H)),
        "wih_b": rnd(ks[4], (D, 3 * H)), "whh_b": rnd(ks[5], (H, 3 * H)),
        "bih_b": rnd(ks[6], (1, 3 * H)), "bhh_b": rnd(ks[7], (1, 3 * H)),
        # ATT (Q/K size 128, V/out size 128, no bias)
        "wq": rnd(ks[8], (D, QK)), "wk": rnd(ks[9], (D, QK)), "wv": rnd(ks[10], (D, AO)),
        # final linear: (rnn_size + att_size) -> num_labels
        "w_lin": rnd(ks[11], (2 * H + AO, num_labels)),
        "b_lin": rnd(ks[12], (num_labels,)),
        # CRF parameters (torchcrf init: uniform(-0.1, 0.1))
        "crf_start": jax.random.uniform(ks[13], (num_labels,), jnp.float32, -0.1, 0.1),
        "crf_end": jax.random.uniform(ks[14], (num_labels,), jnp.float32, -0.1, 0.1),
        "crf_trans": jax.random.uniform(ks[15], (num_labels, num_labels),
                                        jnp.float32, -0.1, 0.1),
    }


def _pad_gates(w, lane_off):
    """(in_dim, 3H) gate-major [r|z|n] -> (in_dim, 384) with gate g at lanes
    [128*g + lane_off, 128*g + lane_off + H)."""
    out = jnp.zeros((w.shape[0], GP), jnp.float32)
    for g in range(3):
        out = out.at[:, 128 * g + lane_off:128 * g + lane_off + H].set(
            w[:, H * g:H * (g + 1)])
    return out


def pack_params(p, num_labels):
    # densely packed GRU input weight (no zero half): fwd gates at lane offset 0,
    # bwd gates at lane offset 64 of the same 128-lane gate block (same layout as whh)
    w_in = _pad_gates(p["wih_f"], 0) + _pad_gates(p["wih_b"], H)          # (D, 384)
    b_in = _pad_gates(p["bih_f"], 0) + _pad_gates(p["bih_b"], H)          # (1, 384)
    # combined recurrent weight: rows 0:64 = fwd hidden, rows 64:128 = bwd hidden
    whh = jnp.zeros((2 * H, GP), jnp.float32)
    whh = whh.at[0:H, :].set(_pad_gates(p["whh_f"], 0))
    whh = whh.at[H:2 * H, :].set(_pad_gates(p["whh_b"], H))
    bhh = _pad_gates(p["bhh_f"], 0) + _pad_gates(p["bhh_b"], H)
    # single fused projection: [GRU input gates | Q | K | V]  (D, 768)
    wbig = jnp.concatenate([w_in, p["wq"], p["wk"], p["wv"]], axis=1)
    # emission linear, split into rnn / att halves and padded to 128 label lanes
    w_lr = jnp.zeros((2 * H, LP), jnp.float32).at[:, :num_labels].set(p["w_lin"][0:2 * H, :])
    w_la = jnp.zeros((AO, LP), jnp.float32).at[:, :num_labels].set(p["w_lin"][2 * H:, :])
    b_lin = jnp.zeros((1, LP), jnp.float32).at[0, :num_labels].set(p["b_lin"])
    return {
        "wbig": wbig.astype(jnp.bfloat16), "b_in": b_in,
        "whh": whh.astype(jnp.bfloat16), "bhh": bhh,
        "w_lr": w_lr.astype(jnp.bfloat16), "w_la": w_la.astype(jnp.bfloat16),
        "b_lin": b_lin,
        "crf_start": p["crf_start"], "crf_end": p["crf_end"], "crf_trans": p["crf_trans"],
    }


if __name__ == "__main__":
    key = jax.random.PRNGKey(0)
    B, S, D = 2, 16, 768                  # hid_size=768 is fixed by the module
    num_labels = 9                        # e.g. BIO over 4 entity types + O
    k1, k2 = jax.random.split(key)

    word2vec = jax.random.normal(k1, (B, S, D), jnp.float32)
    length = jnp.array([16, 11], dtype=jnp.int32)
    mask = jnp.arange(S)[None, :] < length[:, None]

    params = init_params(k2, num_labels)
    packed = pack_params(params, num_labels)

    fwd = jax.jit(functools.partial(bert_bigru_att_crf_forward, num_labels=num_labels))
    tags, lens = fwd(length, word2vec, mask, packed)
    jax.block_until_ready((tags, lens))
    print("KERNEL_OK")
</pallas_src>

<mosaic_0001>
module attributes {stable_mosaic.version = 11 : i64} {
  func.func @kernel(%arg0: i32, %arg1: memref<2xi32, #tpu.memory_space<smem>>, %arg2: memref<1x16x768xbf16, #tpu.memory_space<vmem>>, %arg3: memref<768x768xbf16, #tpu.memory_space<vmem>>, %arg4: memref<1x384xf32, #tpu.memory_space<vmem>>, %arg5: memref<128x384xbf16, #tpu.memory_space<vmem>>, %arg6: memref<1x384xf32, #tpu.memory_space<vmem>>, %arg7: memref<128x128xbf16, #tpu.memory_space<vmem>>, %arg8: memref<128x128xbf16, #tpu.memory_space<vmem>>, %arg9: memref<1x128xf32, #tpu.memory_space<vmem>>, %arg10: memref<1x16x128xf32, #tpu.memory_space<vmem>>, %arg11: memref<16x384xf32, #tpu.memory_space<vmem>>, %arg12: memref<16x128xf32, #tpu.memory_space<vmem>>, %arg13: memref<16x128xf32, #tpu.memory_space<vmem>>) attributes {dimension_semantics = [#tpu.dimension_semantics<parallel>], iteration_bounds = array<i64: 2>, scalar_prefetch = 1 : i64, scratch_operands = 3 : i64, tpu.core_type = #tpu.core_type<tc>, window_params = [{transform_indices = @transform_0, window_bounds = array<i64: 1, 16, 768>}, {pipeline_mode = #tpu.pipeline_mode<synchronous>, transform_indices = @transform_1, window_bounds = array<i64: 768, 768>}, {pipeline_mode = #tpu.pipeline_mode<synchronous>, transform_indices = @transform_2, window_bounds = array<i64: 1, 384>}, {pipeline_mode = #tpu.pipeline_mode<synchronous>, transform_indices = @transform_3, window_bounds = array<i64: 128, 384>}, {pipeline_mode = #tpu.pipeline_mode<synchronous>, transform_indices = @transform_4, window_bounds = array<i64: 1, 384>}, {pipeline_mode = #tpu.pipeline_mode<synchronous>, transform_indices = @transform_5, window_bounds = array<i64: 128, 128>}, {pipeline_mode = #tpu.pipeline_mode<synchronous>, transform_indices = @transform_6, window_bounds = array<i64: 128, 128>}, {pipeline_mode = #tpu.pipeline_mode<synchronous>, transform_indices = @transform_7, window_bounds = array<i64: 1, 128>}, {transform_indices = @transform_8, window_bounds = array<i64: 1, 16, 128>}]} {
    %0 = arith.index_cast %arg0 : i32 to index
    %1 = memref.load %arg1[%0] : memref<2xi32, #tpu.memory_space<smem>>
    %c0 = arith.constant 0 : index
    %c0_0 = arith.constant 0 : index
    %c0_1 = arith.constant 0 : index
    %2 = vector.load %arg2[%c0, %c0_0, %c0_1] : memref<1x16x768xbf16, #tpu.memory_space<vmem>>, vector<1x16x768xbf16>
    %3 = vector.shape_cast %2 : vector<1x16x768xbf16> to vector<16x768xbf16>
    %c0_2 = arith.constant 0 : index
    %c0_3 = arith.constant 0 : index
    %4 = vector.load %arg3[%c0_2, %c0_3] : memref<768x768xbf16, #tpu.memory_space<vmem>>, vector<768x768xbf16>
    %cst = arith.constant dense<0.000000e+00> : vector<16x768xf32>
    %5 = tpu.matmul %3, %4, %cst {dimension_numbers = #tpu.dot_dimension_numbers<[1], [0], [0], [1], [0, 0, 1, 1], [], []>} : vector<16x768xbf16>, vector<768x768xbf16>, vector<16x768xf32> -> vector<16x768xf32>
    %6 = vector.extract_strided_slice %5 {offsets = [0, 0], sizes = [16, 384], strides = [1, 1]} : vector<16x768xf32> to vector<16x384xf32>
    %c0_4 = arith.constant 0 : index
    %c0_5 = arith.constant 0 : index
    %7 = vector.load %arg4[%c0_4, %c0_5] : memref<1x384xf32, #tpu.memory_space<vmem>>, vector<1x384xf32>
    %8 = vector.broadcast %7 : vector<1x384xf32> to vector<16x384xf32>
    %9 = arith.addf %6, %8 : vector<16x384xf32>
    %c0_6 = arith.constant 0 : index
    %c0_7 = arith.constant 0 : index
    %10 = vector.load %arg11[%c0_6, %c0_7] : memref<16x384xf32, #tpu.memory_space<vmem>>, vector<16x384xf32>
    tpu.vector_store %arg11[%c0_6, %c0_7], %9 {strides = array<i32>} : memref<16x384xf32, #tpu.memory_space<vmem>>, vector<16x384xf32>,
    %11 = vector.extract_strided_slice %5 {offsets = [0, 384], sizes = [16, 128], strides = [1, 1]} : vector<16x768xf32> to vector<16x128xf32>
    %12 = arith.truncf %11 : vector<16x128xf32> to vector<16x128xbf16>
    %13 = vector.extract_strided_slice %5 {offsets = [0, 512], sizes = [16, 128], strides = [1, 1]} : vector<16x768xf32> to vector<16x128xf32>
    %14 = arith.truncf %13 : vector<16x128xf32> to vector<16x128xbf16>
    %15 = vector.extract_strided_slice %5 {offsets = [0, 640], sizes = [16, 128], strides = [1, 1]} : vector<16x768xf32> to vector<16x128xf32>
    %16 = arith.truncf %15 : vector<16x128xf32> to vector<16x128xbf16>
    %cst_8 = arith.constant dense<0.000000e+00> : vector<16x16xf32>
    %17 = tpu.matmul %12, %14, %cst_8 {dimension_numbers = #tpu.dot_dimension_numbers<[1], [1], [0], [0], [0, 0, 1, 0], [], []>} : vector<16x128xbf16>, vector<16x128xbf16>, vector<16x16xf32> -> vector<16x16xf32>
    %cst_9 = arith.constant 0.0883883461 : f32
    %18 = vector.broadcast %cst_9 : f32 to vector<16x16xf32>
    %19 = arith.mulf %17, %18 : vector<16x16xf32>
    %cst_10 = arith.constant dense<0xFF800000> : vector<16xf32>
    %20 = vector.multi_reduction <maximumf>, %19, %cst_10 [1] : vector<16x16xf32> to vector<16xf32>
    %21 = vector.shape_cast %20 : vector<16xf32> to vector<16x1xf32>
    %22 = vector.broadcast %21 : vector<16x1xf32> to vector<16x16xf32>
    %23 = arith.subf %19, %22 : vector<16x16xf32>
    %24 = math.exp %23 : vector<16x16xf32>
    %cst_11 = arith.constant dense<0.000000e+00> : vector<16xf32>
    %25 = vector.multi_reduction <add>, %24, %cst_11 [1] : vector<16x16xf32> to vector<16xf32>
    %26 = vector.shape_cast %25 : vector<16xf32> to vector<16x1xf32>
    %27 = tpu.reciprocal %26 {approx = true} : vector<16x1xf32> -> vector<16x1xf32>
    %28 = vector.broadcast %27 : vector<16x1xf32> to vector<16x16xf32>
    %29 = arith.mulf %24, %28 : vector<16x16xf32>
    %30 = arith.truncf %29 : vector<16x16xf32> to vector<16x16xbf16>
    %cst_12 = arith.constant dense<0.000000e+00> : vector<16x128xf32>
    %31 = tpu.matmul %30, %16, %cst_12 {dimension_numbers = #tpu.dot_dimension_numbers<[1], [0], [0], [1], [0, 0, 1, 1], [], []>} : vector<16x16xbf16>, vector<16x128xbf16>, vector<16x128xf32> -> vector<16x128xf32>
    %32 = arith.truncf %31 : vector<16x128xf32> to vector<16x128xbf16>
    %c0_13 = arith.constant 0 : index
    %c0_14 = arith.constant 0 : index
    %33 = vector.load %arg8[%c0_13, %c0_14] : memref<128x128xbf16, #tpu.memory_space<vmem>>, vector<128x128xbf16>
    %cst_15 = arith.constant dense<0.000000e+00> : vector<16x128xf32>
    %34 = tpu.matmul %32, %33, %cst_15 {dimension_numbers = #tpu.dot_dimension_numbers<[1], [0], [0], [1], [0, 0, 1, 1], [], []>} : vector<16x128xbf16>, vector<128x128xbf16>, vector<16x128xf32> -> vector<16x128xf32>
    %c0_16 = arith.constant 0 : index
    %c0_17 = arith.constant 0 : index
    %35 = vector.load %arg9[%c0_16, %c0_17] : memref<1x128xf32, #tpu.memory_space<vmem>>, vector<1x128xf32>
    %36 = vector.broadcast %35 : vector<1x128xf32> to vector<16x128xf32>
    %37 = arith.addf %34, %36 : vector<16x128xf32>
    %c0_18 = arith.constant 0 : index
    %c0_19 = arith.constant 0 : index
    %c0_20 = arith.constant 0 : index
    %38 = vector.load %arg10[%c0_18, %c0_19, %c0_20] : memref<1x16x128xf32, #tpu.memory_space<vmem>>, vector<1x16x128xf32>
    %39 = vector.shape_cast %38 : vector<1x16x128xf32> to vector<16x128xf32>
    %40 = vector.shape_cast %37 : vector<16x128xf32> to vector<1x16x128xf32>
    tpu.vector_store %arg10[%c0_18, %c0_19, %c0_20], %40 {strides = array<i32>} : memref<1x16x128xf32, #tpu.memory_space<vmem>>, vector<1x16x128xf32>,
    %41 = tpu.iota {dimensions = array<i32: 1>} : vector<1x128xi32>
    %c64_i32 = arith.constant 64 : i32
    %42 = vector.broadcast %c64_i32 : i32 to vector<1x128xi32>
    %43 = arith.cmpi slt, %41, %42 : vector<1x128xi32>
    %44 = tpu.iota {dimensions = array<i32: 1>} : vector<1x384xi32>
    %c128_i32 = arith.constant 128 : i32
    %c0_i32 = arith.constant 0 : i32
    %45 = arith.cmpi eq, %c128_i32, %c0_i32 : i32
    %c1_i32 = arith.constant 1 : i32
    %46 = arith.select %45, %c1_i32, %c128_i32 : i32
    %47 = vector.broadcast %46 : i32 to vector<1x384xi32>
    %48 = arith.remsi %44, %47 : vector<1x384xi32>
    %c0_i32_21 = arith.constant 0 : i32
    %49 = vector.broadcast %c0_i32_21 : i32 to vector<1x384xi32>
    %50 = arith.cmpi ne, %48, %49 : vector<1x384xi32>
    %c0_i32_22 = arith.constant 0 : i32
    %51 = vector.broadcast %c0_i32_22 : i32 to vector<1x384xi32>
    %52 = arith.cmpi slt, %48, %51 : vector<1x384xi32>
    %c0_i32_23 = arith.constant 0 : i32
    %53 = arith.cmpi slt, %46, %c0_i32_23 : i32
    %54 = vector.broadcast %53 : i1 to vector<1x384xi1>
    %55 = vector.broadcast %54 : vector<1x384xi1> to vector<1x384xi1>
    %56 = arith.xori %52, %55 : vector<1x384xi1>
    %57 = arith.andi %56, %50 : vector<1x384xi1>
    %58 = vector.broadcast %46 : i32 to vector<1x384xi32>
    %59 = arith.addi %48, %58 : vector<1x384xi32>
    %60 = arith.select %57, %59, %48 : vector<1x384xi1>, vector<1x384xi32>
    %c64_i32_24 = arith.constant 64 : i32
    %61 = vector.broadcast %c64_i32_24 : i32 to vector<1x384xi32>
    %62 = arith.cmpi slt, %60, %61 : vector<1x384xi32>
    %cst_25 = arith.constant 0.000000e+00 : f32
    %63 = vector.broadcast %cst_25 : f32 to vector<1x128xf32>
    %c0_i32_26 = arith.constant 0 : i32
    %c8_i32 = arith.constant 8 : i32
    %64 = arith.muli %c0_i32_26, %c8_i32 : i32
    %65 = tpu.assume_multiple %64, 8 : i32
    %c1_i32_27 = arith.constant 1 : i32
    %66 = arith.subi %c1_i32_27, %c0_i32_26 : i32
    %c8_i32_28 = arith.constant 8 : i32
    %67 = arith.muli %66, %c8_i32_28 : i32
    %68 = tpu.assume_multiple %67, 8 : i32
    %c0_i32_29 = arith.constant 0 : i32
    %69 = arith.addi %65, %c0_i32_29 : i32
    %c7_i32 = arith.constant 7 : i32
    %70 = arith.addi %68, %c7_i32 : i32
    %71 = arith.index_cast %69 : i32 to index
    %c0_30 = arith.constant 0 : index
    %72 = vector.load %arg11[%71, %c0_30] : memref<16x384xf32, #tpu.memory_space<vmem>>, vector<1x384xf32>
    %73 = arith.index_cast %70 : i32 to index
    %c0_31 = arith.constant 0 : index
    %74 = vector.load %arg11[%73, %c0_31] : memref<16x384xf32, #tpu.memory_space<vmem>>, vector<1x384xf32>
    %75 = arith.select %62, %72, %74 : vector<1x384xi1>, vector<1x384xf32>
    %76 = arith.truncf %63 : vector<1x128xf32> to vector<1x128xbf16>
    %c0_32 = arith.constant 0 : index
    %c0_33 = arith.constant 0 : index
    %77 = vector.load %arg5[%c0_32, %c0_33] : memref<128x384xbf16, #tpu.memory_space<vmem>>, vector<128x384xbf16>
    %cst_34 = arith.constant dense<0.000000e+00> : vector<1x384xf32>
    %78 = tpu.matmul %76, %77, %cst_34 {dimension_numbers = #tpu.dot_dimension_numbers<[1], [0], [0], [1], [0, 0, 1, 1], [], []>} : vector<1x128xbf16>, vector<128x384xbf16>, vector<1x384xf32> -> vector<1x384xf32>
    %c0_35 = arith.constant 0 : index
    %c0_36 = arith.constant 0 : index
    %79 = vector.load %arg6[%c0_35, %c0_36] : memref<1x384xf32, #tpu.memory_space<vmem>>, vector<1x384xf32>
    %80 = arith.addf %78, %79 : vector<1x384xf32>
    %81 = vector.extract_strided_slice %75 {offsets = [0, 0], sizes = [1, 128], strides = [1, 1]} : vector<1x384xf32> to vector<1x128xf32>
    %82 = vector.extract_strided_slice %80 {offsets = [0, 0], sizes = [1, 128], strides = [1, 1]} : vector<1x384xf32> to vector<1x128xf32>
    %83 = arith.addf %81, %82 : vector<1x128xf32>
    %84 = arith.negf %83 : vector<1x128xf32>
    %85 = math.exp %84 : vector<1x128xf32>
    %cst_37 = arith.constant 1.000000e+00 : f32
    %86 = vector.broadcast %cst_37 : f32 to vector<1x128xf32>
    %87 = arith.addf %86, %85 : vector<1x128xf32>
    %88 = arith.divf %86, %87 : vector<1x128xf32>
    %89 = vector.extract_strided_slice %75 {offsets = [0, 128], sizes = [1, 128], strides = [1, 1]} : vector<1x384xf32> to vector<1x128xf32>
    %90 = vector.extract_strided_slice %80 {offsets = [0, 128], sizes = [1, 128], strides = [1, 1]} : vector<1x384xf32> to vector<1x128xf32>
    %91 = arith.addf %89, %90 : vector<1x128xf32>
    %92 = arith.negf %91 : vector<1x128xf32>
    %93 = math.exp %92 : vector<1x128xf32>
    %cst_38 = arith.constant 1.000000e+00 : f32
    %94 = vector.broadcast %cst_38 : f32 to vector<1x128xf32>
    %95 = arith.addf %94, %93 : vector<1x128xf32>
    %96 = arith.divf %94, %95 : vector<1x128xf32>
    %97 = vector.extract_strided_slice %75 {offsets = [0, 256], sizes = [1, 128], strides = [1, 1]} : vector<1x384xf32> to vector<1x128xf32>
    %98 = vector.extract_strided_slice %80 {offsets = [0, 256], sizes = [1, 128], strides = [1, 1]} : vector<1x384xf32> to vector<1x128xf32>
    %99 = arith.mulf %88, %98 : vector<1x128xf32>
    %100 = arith.addf %97, %99 : vector<1x128xf32>
    %101 = math.tanh %100 : vector<1x128xf32>
    %cst_39 = arith.constant 1.000000e+00 : f32
    %102 = vector.broadcast %cst_39 : f32 to vector<1x128xf32>
    %103 = arith.subf %102, %96 : vector<1x128xf32>
    %104 = arith.mulf %103, %101 : vector<1x128xf32>
    %105 = arith.mulf %96, %63 : vector<1x128xf32>
    %106 = arith.addf %104, %105 : vector<1x128xf32>
    %107 = vector.broadcast %69 : i32 to vector<1x128xi32>
    %108 = vector.broadcast %70 : i32 to vector<1x128xi32>
    %109 = arith.select %43, %107, %108 : vector<1x128xi1>, vector<1x128xi32>
    %110 = vector.broadcast %1 : i32 to vector<1x128xi32>
    %111 = arith.cmpi slt, %109, %110 : vector<1x128xi32>
    %112 = arith.select %111, %106, %63 : vector<1x128xi1>, vector<1x128xf32>
    %cst_40 = arith.constant 0.000000e+00 : f32
    %113 = vector.broadcast %cst_40 : f32 to vector<1x128xf32>
    %114 = arith.andi %43, %111 : vector<1x128xi1>
    %115 = arith.select %114, %112, %113 : vector<1x128xi1>, vector<1x128xf32>
    %cst_41 = arith.constant dense<true> : vector<1x128xi1>
    %116 = arith.xori %43, %cst_41 : vector<1x128xi1>
    %117 = arith.andi %116, %111 : vector<1x128xi1>
    %118 = arith.select %117, %112, %113 : vector<1x128xi1>, vector<1x128xf32>
    %c1_i32_42 = arith.constant 1 : i32
    %119 = arith.addi %65, %c1_i32_42 : i32
    %c6_i32 = arith.constant 6 : i32
    %120 = arith.addi %68, %c6_i32 : i32
    %121 = arith.index_cast %119 : i32 to index
    %c0_43 = arith.constant 0 : index
    %122 = vector.load %arg11[%121, %c0_43] : memref<16x384xf32, #tpu.memory_space<vmem>>, vector<1x384xf32>
    %123 = arith.index_cast %120 : i32 to index
    %c0_44 = arith.constant 0 : index
    %124 = vector.load %arg11[%123, %c0_44] : memref<16x384xf32, #tpu.memory_space<vmem>>, vector<1x384xf32>
    %125 = arith.select %62, %122, %124 : vector<1x384xi1>, vector<1x384xf32>
    %126 = arith.truncf %112 : vector<1x128xf32> to vector<1x128xbf16>
    %c0_45 = arith.constant 0 : index
    %c0_46 = arith.constant 0 : index
    %127 = vector.load %arg5[%c0_45, %c0_46] : memref<128x384xbf16, #tpu.memory_space<vmem>>, vector<128x384xbf16>
    %cst_47 = arith.constant dense<0.000000e+00> : vector<1x384xf32>
    %128 = tpu.matmul %126, %127, %cst_47 {dimension_numbers = #tpu.dot_dimension_numbers<[1], [0], [0], [1], [0, 0, 1, 1], [], []>} : vector<1x128xbf16>, vector<128x384xbf16>, vector<1x384xf32> -> vector<1x384xf32>
    %c0_48 = arith.constant 0 : index
    %c0_49 = arith.constant 0 : index
    %129 = vector.load %arg6[%c0_48, %c0_49] : memref<1x384xf32, #tpu.memory_space<vmem>>, vector<1x384xf32>
    %130 = arith.addf %128, %129 : vector<1x384xf32>
    %131 = vector.extract_strided_slice %125 {offsets = [0, 0], sizes = [1, 128], strides = [1, 1]} : vector<1x384xf32> to vector<1x128xf32>
    %132 = vector.extract_strided_slice %130 {offsets = [0, 0], sizes = [1, 128], strides = [1, 1]} : vector<1x384xf32> to vector<1x128xf32>
    %133 = arith.addf %131, %132 : vector<1x128xf32>
    %134 = arith.negf %133 : vector<1x128xf32>
    %135 = math.exp %134 : vector<1x128xf32>
    %cst_50 = arith.constant 1.000000e+00 : f32
    %136 = vector.broadcast %cst_50 : f32 to vector<1x128xf32>
    %137 = arith.addf %136, %135 : vector<1x128xf32>
    %138 = arith.divf %136, %137 : vector<1x128xf32>
    %139 = vector.extract_strided_slice %125 {offsets = [0, 128], sizes = [1, 128], strides = [1, 1]} : vector<1x384xf32> to vector<1x128xf32>
    %140 = vector.extract_strided_slice %130 {offsets = [0, 128], sizes = [1, 128], strides = [1, 1]} : vector<1x384xf32> to vector<1x128xf32>
    %141 = arith.addf %139, %140 : vector<1x128xf32>
    %142 = arith.negf %141 : vector<1x128xf32>
    %143 = math.exp %142 : vector<1x128xf32>
    %cst_51 = arith.constant 1.000000e+00 : f32
    %144 = vector.broadcast %cst_51 : f32 to vector<1x128xf32>
    %145 = arith.addf %144, %143 : vector<1x128xf32>
    %146 = arith.divf %144, %145 : vector<1x128xf32>
    %147 = vector.extract_strided_slice %125 {offsets = [0, 256], sizes = [1, 128], strides = [1, 1]} : vector<1x384xf32> to vector<1x128xf32>
    %148 = vector.extract_strided_slice %130 {offsets = [0, 256], sizes = [1, 128], strides = [1, 1]} : vector<1x384xf32> to vector<1x128xf32>
    %149 = arith.mulf %138, %148 : vector<1x128xf32>
    %150 = arith.addf %147, %149 : vector<1x128xf32>
    %151 = math.tanh %150 : vector<1x128xf32>
    %cst_52 = arith.constant 1.000000e+00 : f32
    %152 = vector.broadcast %cst_52 : f32 to vector<1x128xf32>
    %153 = arith.subf %152, %146 : vector<1x128xf32>
    %154 = arith.mulf %153, %151 : vector<1x128xf32>
    %155 = arith.mulf %146, %112 : vector<1x128xf32>
    %156 = arith.addf %154, %155 : vector<1x128xf32>
    %157 = vector.broadcast %119 : i32 to vector<1x128xi32>
    %158 = vector.broadcast %120 : i32 to vector<1x128xi32>
    %159 = arith.select %43, %157, %158 : vector<1x128xi1>, vector<1x128xi32>
    %160 = vector.broadcast %1 : i32 to vector<1x128xi32>
    %161 = arith.cmpi slt, %159, %160 : vector<1x128xi32>
    %162 = arith.select %161, %156, %112 : vector<1x128xi1>, vector<1x128xf32>
    %cst_53 = arith.constant 0.000000e+00 : f32
    %163 = vector.broadcast %cst_53 : f32 to vector<1x128xf32>
    %164 = arith.andi %43, %161 : vector<1x128xi1>
    %165 = arith.select %164, %162, %163 : vector<1x128xi1>, vector<1x128xf32>
    %cst_54 = arith.constant dense<true> : vector<1x128xi1>
    %166 = arith.xori %43, %cst_54 : vector<1x128xi1>
    %167 = arith.andi %166, %161 : vector<1x128xi1>
    %168 = arith.select %167, %162, %163 : vector<1x128xi1>, vector<1x128xf32>
    %c2_i32 = arith.constant 2 : i32
    %169 = arith.addi %65, %c2_i32 : i32
    %c5_i32 = arith.constant 5 : i32
    %170 = arith.addi %68, %c5_i32 : i32
    %171 = arith.index_cast %169 : i32 to index
    %c0_55 = arith.constant 0 : index
    %172 = vector.load %arg11[%171, %c0_55] : memref<16x384xf32, #tpu.memory_space<vmem>>, vector<1x384xf32>
    %173 = arith.index_cast %170 : i32 to index
    %c0_56 = arith.constant 0 : index
    %174 = vector.load %arg11[%173, %c0_56] : memref<16x384xf32, #tpu.memory_space<vmem>>, vector<1x384xf32>
    %175 = arith.select %62, %172, %174 : vector<1x384xi1>, vector<1x384xf32>
    %176 = arith.truncf %162 : vector<1x128xf32> to vector<1x128xbf16>
    %c0_57 = arith.constant 0 : index
    %c0_58 = arith.constant 0 : index
    %177 = vector.load %arg5[%c0_57, %c0_58] : memref<128x384xbf16, #tpu.memory_space<vmem>>, vector<128x384xbf16>
    %cst_59 = arith.constant dense<0.000000e+00> : vector<1x384xf32>
    %178 = tpu.matmul %176, %177, %cst_59 {dimension_numbers = #tpu.dot_dimension_numbers<[1], [0], [0], [1], [0, 0, 1, 1], [], []>} : vector<1x128xbf16>, vector<128x384xbf16>, vector<1x384xf32> -> vector<1x384xf32>
    %c0_60 = arith.constant 0 : index
    %c0_61 = arith.constant 0 : index
    %179 = vector.load %arg6[%c0_60, %c0_61] : memref<1x384xf32, #tpu.memory_space<vmem>>, vector<1x384xf32>
    %180 = arith.addf %178, %179 : vector<1x384xf32>
    %181 = vector.extract_strided_slice %175 {offsets = [0, 0], sizes = [1, 128], strides = [1, 1]} : vector<1x384xf32> to vector<1x128xf32>
    %182 = vector.extract_strided_slice %180 {offsets = [0, 0], sizes = [1, 128], strides = [1, 1]} : vector<1x384xf32> to vector<1x128xf32>
    %183 = arith.addf %181, %182 : vector<1x128xf32>
    %184 = arith.negf %183 : vector<1x128xf32>
    %185 = math.exp %184 : vector<1x128xf32>
    %cst_62 = arith.constant 1.000000e+00 : f32
    %186 = vector.broadcast %cst_62 : f32 to vector<1x128xf32>
    %187 = arith.addf %186, %185 : vector<1x128xf32>
    %188 = arith.divf %186, %187 : vector<1x128xf32>
    %189 = vector.extract_strided_slice %175 {offsets = [0, 128], sizes = [1, 128], strides = [1, 1]} : vector<1x384xf32> to vector<1x128xf32>
    %190 = vector.extract_strided_slice %180 {offsets = [0, 128], sizes = [1, 128], strides = [1, 1]} : vector<1x384xf32> to vector<1x128xf32>
    %191 = arith.addf %189, %190 : vector<1x128xf32>
    %192 = arith.negf %191 : vector<1x128xf32>
    %193 = math.exp %192 : vector<1x128xf32>
    %cst_63 = arith.constant 1.000000e+00 : f32
    %194 = vector.broadcast %cst_63 : f32 to vector<1x128xf32>
    %195 = arith.addf %194, %193 : vector<1x128xf32>
    %196 = arith.divf %194, %195 : vector<1x128xf32>
    %197 = vector.extract_strided_slice %175 {offsets = [0, 256], sizes = [1, 128], strides = [1, 1]} : vector<1x384xf32> to vector<1x128xf32>
    %198 = vector.extract_strided_slice %180 {offsets = [0, 256], sizes = [1, 128], strides = [1, 1]} : vector<1x384xf32> to vector<1x128xf32>
    %199 = arith.mulf %188, %198 : vector<1x128xf32>
    %200 = arith.addf %197, %199 : vector<1x128xf32>
    %201 = math.tanh %200 : vector<1x128xf32>
    %cst_64 = arith.constant 1.000000e+00 : f32
    %202 = vector.broadcast %cst_64 : f32 to vector<1x128xf32>
    %203 = arith.subf %202, %196 : vector<1x128xf32>
    %204 = arith.mulf %203, %201 : vector<1x128xf32>
    %205 = arith.mulf %196, %162 : vector<1x128xf32>
    %206 = arith.addf %204, %205 : vector<1x128xf32>
    %207 = vector.broadcast %169 : i32 to vector<1x128xi32>
    %208 = vector.broadcast %170 : i32 to vector<1x128xi32>
    %209 = arith.select %43, %207, %208 : vector<1x128xi1>, vector<1x128xi32>
    %210 = vector.broadcast %1 : i32 to vector<1x128xi32>
    %211 = arith.cmpi slt, %209, %210 : vector<1x128xi32>
    %212 = arith.select %211, %206, %162 : vector<1x128xi1>, vector<1x128xf32>
    %cst_65 = arith.constant 0.000000e+00 : f32
    %213 = vector.broadcast %cst_65 : f32 to vector<1x128xf32>
    %214 = arith.andi %43, %211 : vector<1x128xi1>
    %215 = arith.select %214, %212, %213 : vector<1x128xi1>, vector<1x128xf32>
    %cst_66 = arith.constant dense<true> : vector<1x128xi1>
    %216 = arith.xori %43, %cst_66 : vector<1x128xi1>
    %217 = arith.andi %216, %211 : vector<1x128xi1>
    %218 = arith.select %217, %212, %213 : vector<1x128xi1>, vector<1x128xf32>
    %c3_i32 = arith.constant 3 : i32
    %219 = arith.addi %65, %c3_i32 : i32
    %c4_i32 = arith.constant 4 : i32
    %220 = arith.addi %68, %c4_i32 : i32
    %221 = arith.index_cast %219 : i32 to index
    %c0_67 = arith.constant 0 : index
    %222 = vector.load %arg11[%221, %c0_67] : memref<16x384xf32, #tpu.memory_space<vmem>>, vector<1x384xf32>
    %223 = arith.index_cast %220 : i32 to index
    %c0_68 = arith.constant 0 : index
    %224 = vector.load %arg11[%223, %c0_68] : memref<16x384xf32, #tpu.memory_space<vmem>>, vector<1x384xf32>
    %225 = arith.select %62, %222, %224 : vector<1x384xi1>, vector<1x384xf32>
    %226 = arith.truncf %212 : vector<1x128xf32> to vector<1x128xbf16>
    %c0_69 = arith.constant 0 : index
    %c0_70 = arith.constant 0 : index
    %227 = vector.load %arg5[%c0_69, %c0_70] : memref<128x384xbf16, #tpu.memory_space<vmem>>, vector<128x384xbf16>
    %cst_71 = arith.constant dense<0.000000e+00> : vector<1x384xf32>
    %228 = tpu.matmul %226, %227, %cst_71 {dimension_numbers = #tpu.dot_dimension_numbers<[1], [0], [0], [1], [0, 0, 1, 1], [], []>} : vector<1x128xbf16>, vector<128x384xbf16>, vector<1x384xf32> -> vector<1x384xf32>
    %c0_72 = arith.constant 0 : index
    %c0_73 = arith.constant 0 : index
    %229 = vector.load %arg6[%c0_72, %c0_73] : memref<1x384xf32, #tpu.memory_space<vmem>>, vector<1x384xf32>
    %230 = arith.addf %228, %229 : vector<1x384xf32>
    %231 = vector.extract_strided_slice %225 {offsets = [0, 0], sizes = [1, 128], strides = [1, 1]} : vector<1x384xf32> to vector<1x128xf32>
    %232 = vector.extract_strided_slice %230 {offsets = [0, 0], sizes = [1, 128], strides = [1, 1]} : vector<1x384xf32> to vector<1x128xf32>
    %233 = arith.addf %231, %232 : vector<1x128xf32>
    %234 = arith.negf %233 : vector<1x128xf32>
    %235 = math.exp %234 : vector<1x128xf32>
    %cst_74 = arith.constant 1.000000e+00 : f32
    %236 = vector.broadcast %cst_74 : f32 to vector<1x128xf32>
    %237 = arith.addf %236, %235 : vector<1x128xf32>
    %238 = arith.divf %236, %237 : vector<1x128xf32>
    %239 = vector.extract_strided_slice %225 {offsets = [0, 128], sizes = [1, 128], strides = [1, 1]} : vector<1x384xf32> to vector<1x128xf32>
    %240 = vector.extract_strided_slice %230 {offsets = [0, 128], sizes = [1, 128], strides = [1, 1]} : vector<1x384xf32> to vector<1x128xf32>
    %241 = arith.addf %239, %240 : vector<1x128xf32>
    %242 = arith.negf %241 : vector<1x128xf32>
    %243 = math.exp %242 : vector<1x128xf32>
    %cst_75 = arith.constant 1.000000e+00 : f32
    %244 = vector.broadcast %cst_75 : f32 to vector<1x128xf32>
    %245 = arith.addf %244, %243 : vector<1x128xf32>
    %246 = arith.divf %244, %245 : vector<1x128xf32>
    %247 = vector.extract_strided_slice %225 {offsets = [0, 256], sizes = [1, 128], strides = [1, 1]} : vector<1x384xf32> to vector<1x128xf32>
    %248 = vector.extract_strided_slice %230 {offsets = [0, 256], sizes = [1, 128], strides = [1, 1]} : vector<1x384xf32> to vector<1x128xf32>
    %249 = arith.mulf %238, %248 : vector<1x128xf32>
    %250 = arith.addf %247, %249 : vector<1x128xf32>
    %251 = math.tanh %250 : vector<1x128xf32>
    %cst_76 = arith.constant 1.000000e+00 : f32
    %252 = vector.broadcast %cst_76 : f32 to vector<1x128xf32>
    %253 = arith.subf %252, %246 : vector<1x128xf32>
    %254 = arith.mulf %253, %251 : vector<1x128xf32>
    %255 = arith.mulf %246, %212 : vector<1x128xf32>
    %256 = arith.addf %254, %255 : vector<1x128xf32>
    %257 = vector.broadcast %219 : i32 to vector<1x128xi32>
    %258 = vector.broadcast %220 : i32 to vector<1x128xi32>
    %259 = arith.select %43, %257, %258 : vector<1x128xi1>, vector<1x128xi32>
    %260 = vector.broadcast %1 : i32 to vector<1x128xi32>
    %261 = arith.cmpi slt, %259, %260 : vector<1x128xi32>
    %262 = arith.select %261, %256, %212 : vector<1x128xi1>, vector<1x128xf32>
    %cst_77 = arith.constant 0.000000e+00 : f32
    %263 = vector.broadcast %cst_77 : f32 to vector<1x128xf32>
    %264 = arith.andi %43, %261 : vector<1x128xi1>
    %265 = arith.select %264, %262, %263 : vector<1x128xi1>, vector<1x128xf32>
    %cst_78 = arith.constant dense<true> : vector<1x128xi1>
    %266 = arith.xori %43, %cst_78 : vector<1x128xi1>
    %267 = arith.andi %266, %261 : vector<1x128xi1>
    %268 = arith.select %267, %262, %263 : vector<1x128xi1>, vector<1x128xf32>
    %c4_i32_79 = arith.constant 4 : i32
    %269 = arith.addi %65, %c4_i32_79 : i32
    %c3_i32_80 = arith.constant 3 : i32
    %270 = arith.addi %68, %c3_i32_80 : i32
    %271 = arith.index_cast %269 : i32 to index
    %c0_81 = arith.constant 0 : index
    %272 = vector.load %arg11[%271, %c0_81] : memref<16x384xf32, #tpu.memory_space<vmem>>, vector<1x384xf32>
    %273 = arith.index_cast %270 : i32 to index
    %c0_82 = arith.constant 0 : index
    %274 = vector.load %arg11[%273, %c0_82] : memref<16x384xf32, #tpu.memory_space<vmem>>, vector<1x384xf32>
    %275 = arith.select %62, %272, %274 : vector<1x384xi1>, vector<1x384xf32>
    %276 = arith.truncf %262 : vector<1x128xf32> to vector<1x128xbf16>
    %c0_83 = arith.constant 0 : index
    %c0_84 = arith.constant 0 : index
    %277 = vector.load %arg5[%c0_83, %c0_84] : memref<128x384xbf16, #tpu.memory_space<vmem>>, vector<128x384xbf16>
    %cst_85 = arith.constant dense<0.000000e+00> : vector<1x384xf32>
    %278 = tpu.matmul %276, %277, %cst_85 {dimension_numbers = #tpu.dot_dimension_numbers<[1], [0], [0], [1], [0, 0, 1, 1], [], []>} : vector<1x128xbf16>, vector<128x384xbf16>, vector<1x384xf32> -> vector<1x384xf32>
    %c0_86 = arith.constant 0 : index
    %c0_87 = arith.constant 0 : index
    %279 = vector.load %arg6[%c0_86, %c0_87] : memref<1x384xf32, #tpu.memory_space<vmem>>, vector<1x384xf32>
    %280 = arith.addf %278, %279 : vector<1x384xf32>
    %281 = vector.extract_strided_slice %275 {offsets = [0, 0], sizes = [1, 128], strides = [1, 1]} : vector<1x384xf32> to vector<1x128xf32>
    %282 = vector.extract_strided_slice %280 {offsets = [0, 0], sizes = [1, 128], strides = [1, 1]} : vector<1x384xf32> to vector<1x128xf32>
    %283 = arith.addf %281, %282 : vector<1x128xf32>
    %284 = arith.negf %283 : vector<1x128xf32>
    %285 = math.exp %284 : vector<1x128xf32>
    %cst_88 = arith.constant 1.000000e+00 : f32
    %286 = vector.broadcast %cst_88 : f32 to vector<1x128xf32>
    %287 = arith.addf %286, %285 : vector<1x128xf32>
    %288 = arith.divf %286, %287 : vector<1x128xf32>
    %289 = vector.extract_strided_slice %275 {offsets = [0, 128], sizes = [1, 128], strides = [1, 1]} : vector<1x384xf32> to vector<1x128xf32>
    %290 = vector.extract_strided_slice %280 {offsets = [0, 128], sizes = [1, 128], strides = [1, 1]} : vector<1x384xf32> to vector<1x128xf32>
    %291 = arith.addf %289, %290 : vector<1x128xf32>
    %292 = arith.negf %291 : vector<1x128xf32>
    %293 = math.exp %292 : vector<1x128xf32>
    %cst_89 = arith.constant 1.000000e+00 : f32
    %294 = vector.broadcast %cst_89 : f32 to vector<1x128xf32>
    %295 = arith.addf %294, %293 : vector<1x128xf32>
    %296 = arith.divf %294, %295 : vector<1x128xf32>
    %297 = vector.extract_strided_slice %275 {offsets = [0, 256], sizes = [1, 128], strides = [1, 1]} : vector<1x384xf32> to vector<1x128xf32>
    %298 = vector.extract_strided_slice %280 {offsets = [0, 256], sizes = [1, 128], strides = [1, 1]} : vector<1x384xf32> to vector<1x128xf32>
    %299 = arith.mulf %288, %298 : vector<1x128xf32>
    %300 = arith.addf %297, %299 : vector<1x128xf32>
    %301 = math.tanh %300 : vector<1x128xf32>
    %cst_90 = arith.constant 1.000000e+00 : f32
    %302 = vector.broadcast %cst_90 : f32 to vector<1x128xf32>
    %303 = arith.subf %302, %296 : vector<1x128xf32>
    %304 = arith.mulf %303, %301 : vector<1x128xf32>
    %305 = arith.mulf %296, %262 : vector<1x128xf32>
    %306 = arith.addf %304, %305 : vector<1x128xf32>
    %307 = vector.broadcast %269 : i32 to vector<1x128xi32>
    %308 = vector.broadcast %270 : i32 to vector<1x128xi32>
    %309 = arith.select %43, %307, %308 : vector<1x128xi1>, vector<1x128xi32>
    %310 = vector.broadcast %1 : i32 to vector<1x128xi32>
    %311 = arith.cmpi slt, %309, %310 : vector<1x128xi32>
    %312 = arith.select %311, %306, %262 : vector<1x128xi1>, vector<1x128xf32>
    %cst_91 = arith.constant 0.000000e+00 : f32
    %313 = vector.broadcast %cst_91 : f32 to vector<1x128xf32>
    %314 = arith.andi %43, %311 : vector<1x128xi1>
    %315 = arith.select %314, %312, %313 : vector<1x128xi1>, vector<1x128xf32>
    %cst_92 = arith.constant dense<true> : vector<1x128xi1>
    %316 = arith.xori %43, %cst_92 : vector<1x128xi1>
    %317 = arith.andi %316, %311 : vector<1x128xi1>
    %318 = arith.select %317, %312, %313 : vector<1x128xi1>, vector<1x128xf32>
    %c5_i32_93 = arith.constant 5 : i32
    %319 = arith.addi %65, %c5_i32_93 : i32
    %c2_i32_94 = arith.constant 2 : i32
    %320 = arith.addi %68, %c2_i32_94 : i32
    %321 = arith.index_cast %319 : i32 to index
    %c0_95 = arith.constant 0 : index
    %322 = vector.load %arg11[%321, %c0_95] : memref<16x384xf32, #tpu.memory_space<vmem>>, vector<1x384xf32>
    %323 = arith.index_cast %320 : i32 to index
    %c0_96 = arith.constant 0 : index
    %324 = vector.load %arg11[%323, %c0_96] : memref<16x384xf32, #tpu.memory_space<vmem>>, vector<1x384xf32>
    %325 = arith.select %62, %322, %324 : vector<1x384xi1>, vector<1x384xf32>
    %326 = arith.truncf %312 : vector<1x128xf32> to vector<1x128xbf16>
    %c0_97 = arith.constant 0 : index
    %c0_98 = arith.constant 0 : index
    %327 = vector.load %arg5[%c0_97, %c0_98] : memref<128x384xbf16, #tpu.memory_space<vmem>>, vector<128x384xbf16>
    %cst_99 = arith.constant dense<0.000000e+00> : vector<1x384xf32>
    %328 = tpu.matmul %326, %327, %cst_99 {dimension_numbers = #tpu.dot_dimension_numbers<[1], [0], [0], [1], [0, 0, 1, 1], [], []>} : vector<1x128xbf16>, vector<128x384xbf16>, vector<1x384xf32> -> vector<1x384xf32>
    %c0_100 = arith.constant 0 : index
    %c0_101 = arith.constant 0 : index
    %329 = vector.load %arg6[%c0_100, %c0_101] : memref<1x384xf32, #tpu.memory_space<vmem>>, vector<1x384xf32>
    %330 = arith.addf %328, %329 : vector<1x384xf32>
    %331 = vector.extract_strided_slice %325 {offsets = [0, 0], sizes = [1, 128], strides = [1, 1]} : vector<1x384xf32> to vector<1x128xf32>
    %332 = vector.extract_strided_slice %330 {offsets = [0, 0], sizes = [1, 128], strides = [1, 1]} : vector<1x384xf32> to vector<1x128xf32>
    %333 = arith.addf %331, %332 : vector<1x128xf32>
    %334 = arith.negf %333 : vector<1x128xf32>
    %335 = math.exp %334 : vector<1x128xf32>
    %cst_102 = arith.constant 1.000000e+00 : f32
    %336 = vector.broadcast %cst_102 : f32 to vector<1x128xf32>
    %337 = arith.addf %336, %335 : vector<1x128xf32>
    %338 = arith.divf %336, %337 : vector<1x128xf32>
    %339 = vector.extract_strided_slice %325 {offsets = [0, 128], sizes = [1, 128], strides = [1, 1]} : vector<1x384xf32> to vector<1x128xf32>
    %340 = vector.extract_strided_slice %330 {offsets = [0, 128], sizes = [1, 128], strides = [1, 1]} : vector<1x384xf32> to vector<1x128xf32>
    %341 = arith.addf %339, %340 : vector<1x128xf32>
    %342 = arith.negf %341 : vector<1x128xf32>
    %343 = math.exp %342 : vector<1x128xf32>
    %cst_103 = arith.constant 1.000000e+00 : f32
    %344 = vector.broadcast %cst_103 : f32 to vector<1x128xf32>
    %345 = arith.addf %344, %343 : vector<1x128xf32>
    %346 = arith.divf %344, %345 : vector<1x128xf32>
    %347 = vector.extract_strided_slice %325 {offsets = [0, 256], sizes = [1, 128], strides = [1, 1]} : vector<1x384xf32> to vector<1x128xf32>
    %348 = vector.extract_strided_slice %330 {offsets = [0, 256], sizes = [1, 128], strides = [1, 1]} : vector<1x384xf32> to vector<1x128xf32>
    %349 = arith.mulf %338, %348 : vector<1x128xf32>
    %350 = arith.addf %347, %349 : vector<1x128xf32>
    %351 = math.tanh %350 : vector<1x128xf32>
    %cst_104 = arith.constant 1.000000e+00 : f32
    %352 = vector.broadcast %cst_104 : f32 to vector<1x128xf32>
    %353 = arith.subf %352, %346 : vector<1x128xf32>
    %354 = arith.mulf %353, %351 : vector<1x128xf32>
    %355 = arith.mulf %346, %312 : vector<1x128xf32>
    %356 = arith.addf %354, %355 : vector<1x128xf32>
    %357 = vector.broadcast %319 : i32 to vector<1x128xi32>
    %358 = vector.broadcast %320 : i32 to vector<1x128xi32>
    %359 = arith.select %43, %357, %358 : vector<1x128xi1>, vector<1x128xi32>
    %360 = vector.broadcast %1 : i32 to vector<1x128xi32>
    %361 = arith.cmpi slt, %359, %360 : vector<1x128xi32>
    %362 = arith.select %361, %356, %312 : vector<1x128xi1>, vector<1x128xf32>
    %cst_105 = arith.constant 0.000000e+00 : f32
    %363 = vector.broadcast %cst_105 : f32 to vector<1x128xf32>
    %364 = arith.andi %43, %361 : vector<1x128xi1>
    %365 = arith.select %364, %362, %363 : vector<1x128xi1>, vector<1x128xf32>
    %cst_106 = arith.constant dense<true> : vector<1x128xi1>
    %366 = arith.xori %43, %cst_106 : vector<1x128xi1>
    %367 = arith.andi %366, %361 : vector<1x128xi1>
    %368 = arith.select %367, %362, %363 : vector<1x128xi1>, vector<1x128xf32>
    %c6_i32_107 = arith.constant 6 : i32
    %369 = arith.addi %65, %c6_i32_107 : i32
    %c1_i32_108 = arith.constant 1 : i32
    %370 = arith.addi %68, %c1_i32_108 : i32
    %371 = arith.index_cast %369 : i32 to index
    %c0_109 = arith.constant 0 : index
    %372 = vector.load %arg11[%371, %c0_109] : memref<16x384xf32, #tpu.memory_space<vmem>>, vector<1x384xf32>
    %373 = arith.index_cast %370 : i32 to index
    %c0_110 = arith.constant 0 : index
    %374 = vector.load %arg11[%373, %c0_110] : memref<16x384xf32, #tpu.memory_space<vmem>>, vector<1x384xf32>
    %375 = arith.select %62, %372, %374 : vector<1x384xi1>, vector<1x384xf32>
    %376 = arith.truncf %362 : vector<1x128xf32> to vector<1x128xbf16>
    %c0_111 = arith.constant 0 : index
    %c0_112 = arith.constant 0 : index
    %377 = vector.load %arg5[%c0_111, %c0_112] : memref<128x384xbf16, #tpu.memory_space<vmem>>, vector<128x384xbf16>
    %cst_113 = arith.constant dense<0.000000e+00> : vector<1x384xf32>
    %378 = tpu.matmul %376, %377, %cst_113 {dimension_numbers = #tpu.dot_dimension_numbers<[1], [0], [0], [1], [0, 0, 1, 1], [], []>} : vector<1x128xbf16>, vector<128x384xbf16>, vector<1x384xf32> -> vector<1x384xf32>
    %c0_114 = arith.constant 0 : index
    %c0_115 = arith.constant 0 : index
    %379 = vector.load %arg6[%c0_114, %c0_115] : memref<1x384xf32, #tpu.memory_space<vmem>>, vector<1x384xf32>
    %380 = arith.addf %378, %379 : vector<1x384xf32>
    %381 = vector.extract_strided_slice %375 {offsets = [0, 0], sizes = [1, 128], strides = [1, 1]} : vector<1x384xf32> to vector<1x128xf32>
    %382 = vector.extract_strided_slice %380 {offsets = [0, 0], sizes = [1, 128], strides = [1, 1]} : vector<1x384xf32> to vector<1x128xf32>
    %383 = arith.addf %381, %382 : vector<1x128xf32>
    %384 = arith.negf %383 : vector<1x128xf32>
    %385 = math.exp %384 : vector<1x128xf32>
    %cst_116 = arith.constant 1.000000e+00 : f32
    %386 = vector.broadcast %cst_116 : f32 to vector<1x128xf32>
    %387 = arith.addf %386, %385 : vector<1x128xf32>
    %388 = arith.divf %386, %387 : vector<1x128xf32>
    %389 = vector.extract_strided_slice %375 {offsets = [0, 128], sizes = [1, 128], strides = [1, 1]} : vector<1x384xf32> to vector<1x128xf32>
    %390 = vector.extract_strided_slice %380 {offsets = [0, 128], sizes = [1, 128], strides = [1, 1]} : vector<1x384xf32> to vector<1x128xf32>
    %391 = arith.addf %389, %390 : vector<1x128xf32>
    %392 = arith.negf %391 : vector<1x128xf32>
    %393 = math.exp %392 : vector<1x128xf32>
    %cst_117 = arith.constant 1.000000e+00 : f32
    %394 = vector.broadcast %cst_117 : f32 to vector<1x128xf32>
    %395 = arith.addf %394, %393 : vector<1x128xf32>
    %396 = arith.divf %394, %395 : vector<1x128xf32>
    %397 = vector.extract_strided_slice %375 {offsets = [0, 256], sizes = [1, 128], strides = [1, 1]} : vector<1x384xf32> to vector<1x128xf32>
    %398 = vector.extract_strided_slice %380 {offsets = [0, 256], sizes = [1, 128], strides = [1, 1]} : vector<1x384xf32> to vector<1x128xf32>
    %399 = arith.mulf %388, %398 : vector<1x128xf32>
    %400 = arith.addf %397, %399 : vector<1x128xf32>
    %401 = math.tanh %400 : vector<1x128xf32>
    %cst_118 = arith.constant 1.000000e+00 : f32
    %402 = vector.broadcast %cst_118 : f32 to vector<1x128xf32>
    %403 = arith.subf %402, %396 : vector<1x128xf32>
    %404 = arith.mulf %403, %401 : vector<1x128xf32>
    %405 = arith.mulf %396, %362 : vector<1x128xf32>
    %406 = arith.addf %404, %405 : vector<1x128xf32>
    %407 = vector.broadcast %369 : i32 to vector<1x128xi32>
    %408 = vector.broadcast %370 : i32 to vector<1x128xi32>
    %409 = arith.select %43, %407, %408 : vector<1x128xi1>, vector<1x128xi32>
    %410 = vector.broadcast %1 : i32 to vector<1x128xi32>
    %411 = arith.cmpi slt, %409, %410 : vector<1x128xi32>
    %412 = arith.select %411, %406, %362 : vector<1x128xi1>, vector<1x128xf32>
    %cst_119 = arith.constant 0.000000e+00 : f32
    %413 = vector.broadcast %cst_119 : f32 to vector<1x128xf32>
    %414 = arith.andi %43, %411 : vector<1x128xi1>
    %415 = arith.select %414, %412, %413 : vector<1x128xi1>, vector<1x128xf32>
    %cst_120 = arith.constant dense<true> : vector<1x128xi1>
    %416 = arith.xori %43, %cst_120 : vector<1x128xi1>
    %417 = arith.andi %416, %411 : vector<1x128xi1>
    %418 = arith.select %417, %412, %413 : vector<1x128xi1>, vector<1x128xf32>
    %c7_i32_121 = arith.constant 7 : i32
    %419 = arith.addi %65, %c7_i32_121 : i32
    %c0_i32_122 = arith.constant 0 : i32
    %420 = arith.addi %68, %c0_i32_122 : i32
    %421 = arith.index_cast %419 : i32 to index
    %c0_123 = arith.constant 0 : index
    %422 = vector.load %arg11[%421, %c0_123] : memref<16x384xf32, #tpu.memory_space<vmem>>, vector<1x384xf32>
    %423 = arith.index_cast %420 : i32 to index
    %c0_124 = arith.constant 0 : index
    %424 = vector.load %arg11[%423, %c0_124] : memref<16x384xf32, #tpu.memory_space<vmem>>, vector<1x384xf32>
    %425 = arith.select %62, %422, %424 : vector<1x384xi1>, vector<1x384xf32>
    %426 = arith.truncf %412 : vector<1x128xf32> to vector<1x128xbf16>
    %c0_125 = arith.constant 0 : index
    %c0_126 = arith.constant 0 : index
    %427 = vector.load %arg5[%c0_125, %c0_126] : memref<128x384xbf16, #tpu.memory_space<vmem>>, vector<128x384xbf16>
    %cst_127 = arith.constant dense<0.000000e+00> : vector<1x384xf32>
    %428 = tpu.matmul %426, %427, %cst_127 {dimension_numbers = #tpu.dot_dimension_numbers<[1], [0], [0], [1], [0, 0, 1, 1], [], []>} : vector<1x128xbf16>, vector<128x384xbf16>, vector<1x384xf32> -> vector<1x384xf32>
    %c0_128 = arith.constant 0 : index
    %c0_129 = arith.constant 0 : index
    %429 = vector.load %arg6[%c0_128, %c0_129] : memref<1x384xf32, #tpu.memory_space<vmem>>, vector<1x384xf32>
    %430 = arith.addf %428, %429 : vector<1x384xf32>
    %431 = vector.extract_strided_slice %425 {offsets = [0, 0], sizes = [1, 128], strides = [1, 1]} : vector<1x384xf32> to vector<1x128xf32>
    %432 = vector.extract_strided_slice %430 {offsets = [0, 0], sizes = [1, 128], strides = [1, 1]} : vector<1x384xf32> to vector<1x128xf32>
    %433 = arith.addf %431, %432 : vector<1x128xf32>
    %434 = arith.negf %433 : vector<1x128xf32>
    %435 = math.exp %434 : vector<1x128xf32>
    %cst_130 = arith.constant 1.000000e+00 : f32
    %436 = vector.broadcast %cst_130 : f32 to vector<1x128xf32>
    %437 = arith.addf %436, %435 : vector<1x128xf32>
    %438 = arith.divf %436, %437 : vector<1x128xf32>
    %439 = vector.extract_strided_slice %425 {offsets = [0, 128], sizes = [1, 128], strides = [1, 1]} : vector<1x384xf32> to vector<1x128xf32>
    %440 = vector.extract_strided_slice %430 {offsets = [0, 128], sizes = [1, 128], strides = [1, 1]} : vector<1x384xf32> to vector<1x128xf32>
    %441 = arith.addf %439, %440 : vector<1x128xf32>
    %442 = arith.negf %441 : vector<1x128xf32>
    %443 = math.exp %442 : vector<1x128xf32>
    %cst_131 = arith.constant 1.000000e+00 : f32
    %444 = vector.broadcast %cst_131 : f32 to vector<1x128xf32>
    %445 = arith.addf %444, %443 : vector<1x128xf32>
    %446 = arith.divf %444, %445 : vector<1x128xf32>
    %447 = vector.extract_strided_slice %425 {offsets = [0, 256], sizes = [1, 128], strides = [1, 1]} : vector<1x384xf32> to vector<1x128xf32>
    %448 = vector.extract_strided_slice %430 {offsets = [0, 256], sizes = [1, 128], strides = [1, 1]} : vector<1x384xf32> to vector<1x128xf32>
    %449 = arith.mulf %438, %448 : vector<1x128xf32>
    %450 = arith.addf %447, %449 : vector<1x128xf32>
    %451 = math.tanh %450 : vector<1x128xf32>
    %cst_132 = arith.constant 1.000000e+00 : f32
    %452 = vector.broadcast %cst_132 : f32 to vector<1x128xf32>
    %453 = arith.subf %452, %446 : vector<1x128xf32>
    %454 = arith.mulf %453, %451 : vector<1x128xf32>
    %455 = arith.mulf %446, %412 : vector<1x128xf32>
    %456 = arith.addf %454, %455 : vector<1x128xf32>
    %457 = vector.broadcast %419 : i32 to vector<1x128xi32>
    %458 = vector.broadcast %420 : i32 to vector<1x128xi32>
    %459 = arith.select %43, %457, %458 : vector<1x128xi1>, vector<1x128xi32>
    %460 = vector.broadcast %1 : i32 to vector<1x128xi32>
    %461 = arith.cmpi slt, %459, %460 : vector<1x128xi32>
    %462 = arith.select %461, %456, %412 : vector<1x128xi1>, vector<1x128xf32>
    %cst_133 = arith.constant 0.000000e+00 : f32
    %463 = vector.broadcast %cst_133 : f32 to vector<1x128xf32>
    %464 = arith.andi %43, %461 : vector<1x128xi1>
    %465 = arith.select %464, %462, %463 : vector<1x128xi1>, vector<1x128xf32>
    %cst_134 = arith.constant dense<true> : vector<1x128xi1>
    %466 = arith.xori %43, %cst_134 : vector<1x128xi1>
    %467 = arith.andi %466, %461 : vector<1x128xi1>
    %468 = arith.select %467, %462, %463 : vector<1x128xi1>, vector<1x128xf32>
    %469 = tpu.concatenate %115, %165, %215, %265, %315, %365, %415, %465 in 0 : vector<1x128xf32>, vector<1x128xf32>, vector<1x128xf32>, vector<1x128xf32>, vector<1x128xf32>, vector<1x128xf32>, vector<1x128xf32>, vector<1x128xf32> -> vector<8x128xf32>
    %470 = arith.index_cast %65 : i32 to index
    %c0_135 = arith.constant 0 : index
    %471 = vector.load %arg12[%470, %c0_135] : memref<16x128xf32, #tpu.memory_space<vmem>>, vector<8x128xf32>
    tpu.vector_store %arg12[%470, %c0_135], %469 {strides = array<i32>} : memref<16x128xf32, #tpu.memory_space<vmem>>, vector<8x128xf32>,
    %472 = tpu.concatenate %468, %418, %368, %318, %268, %218, %168, %118 in 0 : vector<1x128xf32>, vector<1x128xf32>, vector<1x128xf32>, vector<1x128xf32>, vector<1x128xf32>, vector<1x128xf32>, vector<1x128xf32>, vector<1x128xf32> -> vector<8x128xf32>
    %473 = arith.index_cast %68 : i32 to index
    %c0_136 = arith.constant 0 : index
    %474 = vector.load %arg13[%473, %c0_136] : memref<16x128xf32, #tpu.memory_space<vmem>>, vector<8x128xf32>
    tpu.vector_store %arg13[%473, %c0_136], %472 {strides = array<i32>} : memref<16x128xf32, #tpu.memory_space<vmem>>, vector<8x128xf32>,
    %c1_i32_137 = arith.constant 1 : i32
    %c8_i32_138 = arith.constant 8 : i32
    %475 = arith.muli %c1_i32_137, %c8_i32_138 : i32
    %476 = tpu.assume_multiple %475, 8 : i32
    %c1_i32_139 = arith.constant 1 : i32
    %477 = arith.subi %c1_i32_139, %c1_i32_137 : i32
    %c8_i32_140 = arith.constant 8 : i32
    %478 = arith.muli %477, %c8_i32_140 : i32
    %479 = tpu.assume_multiple %478, 8 : i32
    %c0_i32_141 = arith.constant 0 : i32
    %480 = arith.addi %476, %c0_i32_141 : i32
    %c7_i32_142 = arith.constant 7 : i32
    %481 = arith.addi %479, %c7_i32_142 : i32
    %482 = arith.index_cast %480 : i32 to index
    %c0_143 = arith.constant 0 : index
    %483 = vector.load %arg11[%482, %c0_143] : memref<16x384xf32, #tpu.memory_space<vmem>>, vector<1x384xf32>
    %484 = arith.index_cast %481 : i32 to index
    %c0_144 = arith.constant 0 : index
    %485 = vector.load %arg11[%484, %c0_144] : memref<16x384xf32, #tpu.memory_space<vmem>>, vector<1x384xf32>
    %486 = arith.select %62, %483, %485 : vector<1x384xi1>, vector<1x384xf32>
    %487 = arith.truncf %462 : vector<1x128xf32> to vector<1x128xbf16>
    %c0_145 = arith.constant 0 : index
    %c0_146 = arith.constant 0 : index
    %488 = vector.load %arg5[%c0_145, %c0_146] : memref<128x384xbf16, #tpu.memory_space<vmem>>, vector<128x384xbf16>
    %cst_147 = arith.constant dense<0.000000e+00> : vector<1x384xf32>
    %489 = tpu.matmul %487, %488, %cst_147 {dimension_numbers = #tpu.dot_dimension_numbers<[1], [0], [0], [1], [0, 0, 1, 1], [], []>} : vector<1x128xbf16>, vector<128x384xbf16>, vector<1x384xf32> -> vector<1x384xf32>
    %c0_148 = arith.constant 0 : index
    %c0_149 = arith.constant 0 : index
    %490 = vector.load %arg6[%c0_148, %c0_149] : memref<1x384xf32, #tpu.memory_space<vmem>>, vector<1x384xf32>
    %491 = arith.addf %489, %490 : vector<1x384xf32>
    %492 = vector.extract_strided_slice %486 {offsets = [0, 0], sizes = [1, 128], strides = [1, 1]} : vector<1x384xf32> to vector<1x128xf32>
    %493 = vector.extract_strided_slice %491 {offsets = [0, 0], sizes = [1, 128], strides = [1, 1]} : vector<1x384xf32> to vector<1x128xf32>
    %494 = arith.addf %492, %493 : vector<1x128xf32>
    %495 = arith.negf %494 : vector<1x128xf32>
    %496 = math.exp %495 : vector<1x128xf32>
    %cst_150 = arith.constant 1.000000e+00 : f32
    %497 = vector.broadcast %cst_150 : f32 to vector<1x128xf32>
    %498 = arith.addf %497, %496 : vector<1x128xf32>
    %499 = arith.divf %497, %498 : vector<1x128xf32>
    %500 = vector.extract_strided_slice %486 {offsets = [0, 128], sizes = [1, 128], strides = [1, 1]} : vector<1x384xf32> to vector<1x128xf32>
    %501 = vector.extract_strided_slice %491 {offsets = [0, 128], sizes = [1, 128], strides = [1, 1]} : vector<1x384xf32> to vector<1x128xf32>
    %502 = arith.addf %500, %501 : vector<1x128xf32>
    %503 = arith.negf %502 : vector<1x128xf32>
    %504 = math.exp %503 : vector<1x128xf32>
    %cst_151 = arith.constant 1.000000e+00 : f32
    %505 = vector.broadcast %cst_151 : f32 to vector<1x128xf32>
    %506 = arith.addf %505, %504 : vector<1x128xf32>
    %507 = arith.divf %505, %506 : vector<1x128xf32>
    %508 = vector.extract_strided_slice %486 {offsets = [0, 256], sizes = [1, 128], strides = [1, 1]} : vector<1x384xf32> to vector<1x128xf32>
    %509 = vector.extract_strided_slice %491 {offsets = [0, 256], sizes = [1, 128], strides = [1, 1]} : vector<1x384xf32> to vector<1x128xf32>
    %510 = arith.mulf %499, %509 : vector<1x128xf32>
    %511 = arith.addf %508, %510 : vector<1x128xf32>
    %512 = math.tanh %511 : vector<1x128xf32>
    %cst_152 = arith.constant 1.000000e+00 : f32
    %513 = vector.broadcast %cst_152 : f32 to vector<1x128xf32>
    %514 = arith.subf %513, %507 : vector<1x128xf32>
    %515 = arith.mulf %514, %512 : vector<1x128xf32>
    %516 = arith.mulf %507, %462 : vector<1x128xf32>
    %517 = arith.addf %515, %516 : vector<1x128xf32>
    %518 = vector.broadcast %480 : i32 to vector<1x128xi32>
    %519 = vector.broadcast %481 : i32 to vector<1x128xi32>
    %520 = arith.select %43, %518, %519 : vector<1x128xi1>, vector<1x128xi32>
    %521 = vector.broadcast %1 : i32 to vector<1x128xi32>
    %522 = arith.cmpi slt, %520, %521 : vector<1x128xi32>
    %523 = arith.select %522, %517, %462 : vector<1x128xi1>, vector<1x128xf32>
    %cst_153 = arith.constant 0.000000e+00 : f32
    %524 = vector.broadcast %cst_153 : f32 to vector<1x128xf32>
    %525 = arith.andi %43, %522 : vector<1x128xi1>
    %526 = arith.select %525, %523, %524 : vector<1x128xi1>, vector<1x128xf32>
    %cst_154 = arith.constant dense<true> : vector<1x128xi1>
    %527 = arith.xori %43, %cst_154 : vector<1x128xi1>
    %528 = arith.andi %527, %522 : vector<1x128xi1>
    %529 = arith.select %528, %523, %524 : vector<1x128xi1>, vector<1x128xf32>
    %c1_i32_155 = arith.constant 1 : i32
    %530 = arith.addi %476, %c1_i32_155 : i32
    %c6_i32_156 = arith.constant 6 : i32
    %531 = arith.addi %479, %c6_i32_156 : i32
    %532 = arith.index_cast %530 : i32 to index
    %c0_157 = arith.constant 0 : index
    %533 = vector.load %arg11[%532, %c0_157] : memref<16x384xf32, #tpu.memory_space<vmem>>, vector<1x384xf32>
    %534 = arith.index_cast %531 : i32 to index
    %c0_158 = arith.constant 0 : index
    %535 = vector.load %arg11[%534, %c0_158] : memref<16x384xf32, #tpu.memory_space<vmem>>, vector<1x384xf32>
    %536 = arith.select %62, %533, %535 : vector<1x384xi1>, vector<1x384xf32>
    %537 = arith.truncf %523 : vector<1x128xf32> to vector<1x128xbf16>
    %c0_159 = arith.constant 0 : index
    %c0_160 = arith.constant 0 : index
    %538 = vector.load %arg5[%c0_159, %c0_160] : memref<128x384xbf16, #tpu.memory_space<vmem>>, vector<128x384xbf16>
    %cst_161 = arith.constant dense<0.000000e+00> : vector<1x384xf32>
    %539 = tpu.matmul %537, %538, %cst_161 {dimension_numbers = #tpu.dot_dimension_numbers<[1], [0], [0], [1], [0, 0, 1, 1], [], []>} : vector<1x128xbf16>, vector<128x384xbf16>, vector<1x384xf32> -> vector<1x384xf32>
    %c0_162 = arith.constant 0 : index
    %c0_163 = arith.constant 0 : index
    %540 = vector.load %arg6[%c0_162, %c0_163] : memref<1x384xf32, #tpu.memory_space<vmem>>, vector<1x384xf32>
    %541 = arith.addf %539, %540 : vector<1x384xf32>
    %542 = vector.extract_strided_slice %536 {offsets = [0, 0], sizes = [1, 128], strides = [1, 1]} : vector<1x384xf32> to vector<1x128xf32>
    %543 = vector.extract_strided_slice %541 {offsets = [0, 0], sizes = [1, 128], strides = [1, 1]} : vector<1x384xf32> to vector<1x128xf32>
    %544 = arith.addf %542, %543 : vector<1x128xf32>
    %545 = arith.negf %544 : vector<1x128xf32>
    %546 = math.exp %545 : vector<1x128xf32>
    %cst_164 = arith.constant 1.000000e+00 : f32
    %547 = vector.broadcast %cst_164 : f32 to vector<1x128xf32>
    %548 = arith.addf %547, %546 : vector<1x128xf32>
    %549 = arith.divf %547, %548 : vector<1x128xf32>
    %550 = vector.extract_strided_slice %536 {offsets = [0, 128], sizes = [1, 128], strides = [1, 1]} : vector<1x384xf32> to vector<1x128xf32>
    %551 = vector.extract_strided_slice %541 {offsets = [0, 128], sizes = [1, 128], strides = [1, 1]} : vector<1x384xf32> to vector<1x128xf32>
    %552 = arith.addf %550, %551 : vector<1x128xf32>
    %553 = arith.negf %552 : vector<1x128xf32>
    %554 = math.exp %553 : vector<1x128xf32>
    %cst_165 = arith.constant 1.000000e+00 : f32
    %555 = vector.broadcast %cst_165 : f32 to vector<1x128xf32>
    %556 = arith.addf %555, %554 : vector<1x128xf32>
    %557 = arith.divf %555, %556 : vector<1x128xf32>
    %558 = vector.extract_strided_slice %536 {offsets = [0, 256], sizes = [1, 128], strides = [1, 1]} : vector<1x384xf32> to vector<1x128xf32>
    %559 = vector.extract_strided_slice %541 {offsets = [0, 256], sizes = [1, 128], strides = [1, 1]} : vector<1x384xf32> to vector<1x128xf32>
    %560 = arith.mulf %549, %559 : vector<1x128xf32>
    %561 = arith.addf %558, %560 : vector<1x128xf32>
    %562 = math.tanh %561 : vector<1x128xf32>
    %cst_166 = arith.constant 1.000000e+00 : f32
    %563 = vector.broadcast %cst_166 : f32 to vector<1x128xf32>
    %564 = arith.subf %563, %557 : vector<1x128xf32>
    %565 = arith.mulf %564, %562 : vector<1x128xf32>
    %566 = arith.mulf %557, %523 : vector<1x128xf32>
    %567 = arith.addf %565, %566 : vector<1x128xf32>
    %568 = vector.broadcast %530 : i32 to vector<1x128xi32>
    %569 = vector.broadcast %531 : i32 to vector<1x128xi32>
    %570 = arith.select %43, %568, %569 : vector<1x128xi1>, vector<1x128xi32>
    %571 = vector.broadcast %1 : i32 to vector<1x128xi32>
    %572 = arith.cmpi slt, %570, %571 : vector<1x128xi32>
    %573 = arith.select %572, %567, %523 : vector<1x128xi1>, vector<1x128xf32>
    %cst_167 = arith.constant 0.000000e+00 : f32
    %574 = vector.broadcast %cst_167 : f32 to vector<1x128xf32>
    %575 = arith.andi %43, %572 : vector<1x128xi1>
    %576 = arith.select %575, %573, %574 : vector<1x128xi1>, vector<1x128xf32>
    %cst_168 = arith.constant dense<true> : vector<1x128xi1>
    %577 = arith.xori %43, %cst_168 : vector<1x128xi1>
    %578 = arith.andi %577, %572 : vector<1x128xi1>
    %579 = arith.select %578, %573, %574 : vector<1x128xi1>, vector<1x128xf32>
    %c2_i32_169 = arith.constant 2 : i32
    %580 = arith.addi %476, %c2_i32_169 : i32
    %c5_i32_170 = arith.constant 5 : i32
    %581 = arith.addi %479, %c5_i32_170 : i32
    %582 = arith.index_cast %580 : i32 to index
    %c0_171 = arith.constant 0 : index
    %583 = vector.load %arg11[%582, %c0_171] : memref<16x384xf32, #tpu.memory_space<vmem>>, vector<1x384xf32>
    %584 = arith.index_cast %581 : i32 to index
    %c0_172 = arith.constant 0 : index
    %585 = vector.load %arg11[%584, %c0_172] : memref<16x384xf32, #tpu.memory_space<vmem>>, vector<1x384xf32>
    %586 = arith.select %62, %583, %585 : vector<1x384xi1>, vector<1x384xf32>
    %587 = arith.truncf %573 : vector<1x128xf32> to vector<1x128xbf16>
    %c0_173 = arith.constant 0 : index
    %c0_174 = arith.constant 0 : index
    %588 = vector.load %arg5[%c0_173, %c0_174] : memref<128x384xbf16, #tpu.memory_space<vmem>>, vector<128x384xbf16>
    %cst_175 = arith.constant dense<0.000000e+00> : vector<1x384xf32>
    %589 = tpu.matmul %587, %588, %cst_175 {dimension_numbers = #tpu.dot_dimension_numbers<[1], [0], [0], [1], [0, 0, 1, 1], [], []>} : vector<1x128xbf16>, vector<128x384xbf16>, vector<1x384xf32> -> vector<1x384xf32>
    %c0_176 = arith.constant 0 : index
    %c0_177 = arith.constant 0 : index
    %590 = vector.load %arg6[%c0_176, %c0_177] : memref<1x384xf32, #tpu.memory_space<vmem>>, vector<1x384xf32>
    %591 = arith.addf %589, %590 : vector<1x384xf32>
    %592 = vector.extract_strided_slice %586 {offsets = [0, 0], sizes = [1, 128], strides = [1, 1]} : vector<1x384xf32> to vector<1x128xf32>
    %593 = vector.extract_strided_slice %591 {offsets = [0, 0], sizes = [1, 128], strides = [1, 1]} : vector<1x384xf32> to vector<1x128xf32>
    %594 = arith.addf %592, %593 : vector<1x128xf32>
    %595 = arith.negf %594 : vector<1x128xf32>
    %596 = math.exp %595 : vector<1x128xf32>
    %cst_178 = arith.constant 1.000000e+00 : f32
    %597 = vector.broadcast %cst_178 : f32 to vector<1x128xf32>
    %598 = arith.addf %597, %596 : vector<1x128xf32>
    %599 = arith.divf %597, %598 : vector<1x128xf32>
    %600 = vector.extract_strided_slice %586 {offsets = [0, 128], sizes = [1, 128], strides = [1, 1]} : vector<1x384xf32> to vector<1x128xf32>
    %601 = vector.extract_strided_slice %591 {offsets = [0, 128], sizes = [1, 128], strides = [1, 1]} : vector<1x384xf32> to vector<1x128xf32>
    %602 = arith.addf %600, %601 : vector<1x128xf32>
    %603 = arith.negf %602 : vector<1x128xf32>
    %604 = math.exp %603 : vector<1x128xf32>
    %cst_179 = arith.constant 1.000000e+00 : f32
    %605 = vector.broadcast %cst_179 : f32 to vector<1x128xf32>
    %606 = arith.addf %605, %604 : vector<1x128xf32>
    %607 = arith.divf %605, %606 : vector<1x128xf32>
    %608 = vector.extract_strided_slice %586 {offsets = [0, 256], sizes = [1, 128], strides = [1, 1]} : vector<1x384xf32> to vector<1x128xf32>
    %609 = vector.extract_strided_slice %591 {offsets = [0, 256], sizes = [1, 128], strides = [1, 1]} : vector<1x384xf32> to vector<1x128xf32>
    %610 = arith.mulf %599, %609 : vector<1x128xf32>
    %611 = arith.addf %608, %610 : vector<1x128xf32>
    %612 = math.tanh %611 : vector<1x128xf32>
    %cst_180 = arith.constant 1.000000e+00 : f32
    %613 = vector.broadcast %cst_180 : f32 to vector<1x128xf32>
    %614 = arith.subf %613, %607 : vector<1x128xf32>
    %615 = arith.mulf %614, %612 : vector<1x128xf32>
    %616 = arith.mulf %607, %573 : vector<1x128xf32>
    %617 = arith.addf %615, %616 : vector<1x128xf32>
    %618 = vector.broadcast %580 : i32 to vector<1x128xi32>
    %619 = vector.broadcast %581 : i32 to vector<1x128xi32>
    %620 = arith.select %43, %618, %619 : vector<1x128xi1>, vector<1x128xi32>
    %621 = vector.broadcast %1 : i32 to vector<1x128xi32>
    %622 = arith.cmpi slt, %620, %621 : vector<1x128xi32>
    %623 = arith.select %622, %617, %573 : vector<1x128xi1>, vector<1x128xf32>
    %cst_181 = arith.constant 0.000000e+00 : f32
    %624 = vector.broadcast %cst_181 : f32 to vector<1x128xf32>
    %625 = arith.andi %43, %622 : vector<1x128xi1>
    %626 = arith.select %625, %623, %624 : vector<1x128xi1>, vector<1x128xf32>
    %cst_182 = arith.constant dense<true> : vector<1x128xi1>
    %627 = arith.xori %43, %cst_182 : vector<1x128xi1>
    %628 = arith.andi %627, %622 : vector<1x128xi1>
    %629 = arith.select %628, %623, %624 : vector<1x128xi1>, vector<1x128xf32>
    %c3_i32_183 = arith.constant 3 : i32
    %630 = arith.addi %476, %c3_i32_183 : i32
    %c4_i32_184 = arith.constant 4 : i32
    %631 = arith.addi %479, %c4_i32_184 : i32
    %632 = arith.index_cast %630 : i32 to index
    %c0_185 = arith.constant 0 : index
    %633 = vector.load %arg11[%632, %c0_185] : memref<16x384xf32, #tpu.memory_space<vmem>>, vector<1x384xf32>
    %634 = arith.index_cast %631 : i32 to index
    %c0_186 = arith.constant 0 : index
    %635 = vector.load %arg11[%634, %c0_186] : memref<16x384xf32, #tpu.memory_space<vmem>>, vector<1x384xf32>
    %636 = arith.select %62, %633, %635 : vector<1x384xi1>, vector<1x384xf32>
    %637 = arith.truncf %623 : vector<1x128xf32> to vector<1x128xbf16>
    %c0_187 = arith.constant 0 : index
    %c0_188 = arith.constant 0 : index
    %638 = vector.load %arg5[%c0_187, %c0_188] : memref<128x384xbf16, #tpu.memory_space<vmem>>, vector<128x384xbf16>
    %cst_189 = arith.constant dense<0.000000e+00> : vector<1x384xf32>
    %639 = tpu.matmul %637, %638, %cst_189 {dimension_numbers = #tpu.dot_dimension_numbers<[1], [0], [0], [1], [0, 0, 1, 1], [], []>} : vector<1x128xbf16>, vector<128x384xbf16>, vector<1x384xf32> -> vector<1x384xf32>
    %c0_190 = arith.constant 0 : index
    %c0_191 = arith.constant 0 : index
    %640 = vector.load %arg6[%c0_190, %c0_191] : memref<1x384xf32, #tpu.memory_space<vmem>>, vector<1x384xf32>
    %641 = arith.addf %639, %640 : vector<1x384xf32>
    %642 = vector.extract_strided_slice %636 {offsets = [0, 0], sizes = [1, 128], strides = [1, 1]} : vector<1x384xf32> to vector<1x128xf32>
    %643 = vector.extract_strided_slice %641 {offsets = [0, 0], sizes = [1, 128], strides = [1, 1]} : vector<1x384xf32> to vector<1x128xf32>
    %644 = arith.addf %642, %643 : vector<1x128xf32>
    %645 = arith.negf %644 : vector<1x128xf32>
    %646 = math.exp %645 : vector<1x128xf32>
    %cst_192 = arith.constant 1.000000e+00 : f32
    %647 = vector.broadcast %cst_192 : f32 to vector<1x128xf32>
    %648 = arith.addf %647, %646 : vector<1x128xf32>
    %649 = arith.divf %647, %648 : vector<1x128xf32>
    %650 = vector.extract_strided_slice %636 {offsets = [0, 128], sizes = [1, 128], strides = [1, 1]} : vector<1x384xf32> to vector<1x128xf32>
    %651 = vector.extract_strided_slice %641 {offsets = [0, 128], sizes = [1, 128], strides = [1, 1]} : vector<1x384xf32> to vector<1x128xf32>
    %652 = arith.addf %650, %651 : vector<1x128xf32>
    %653 = arith.negf %652 : vector<1x128xf32>
    %654 = math.exp %653 : vector<1x128xf32>
    %cst_193 = arith.constant 1.000000e+00 : f32
    %655 = vector.broadcast %cst_193 : f32 to vector<1x128xf32>
    %656 = arith.addf %655, %654 : vector<1x128xf32>
    %657 = arith.divf %655, %656 : vector<1x128xf32>
    %658 = vector.extract_strided_slice %636 {offsets = [0, 256], sizes = [1, 128], strides = [1, 1]} : vector<1x384xf32> to vector<1x128xf32>
    %659 = vector.extract_strided_slice %641 {offsets = [0, 256], sizes = [1, 128], strides = [1, 1]} : vector<1x384xf32> to vector<1x128xf32>
    %660 = arith.mulf %649, %659 : vector<1x128xf32>
    %661 = arith.addf %658, %660 : vector<1x128xf32>
    %662 = math.tanh %661 : vector<1x128xf32>
    %cst_194 = arith.constant 1.000000e+00 : f32
    %663 = vector.broadcast %cst_194 : f32 to vector<1x128xf32>
    %664 = arith.subf %663, %657 : vector<1x128xf32>
    %665 = arith.mulf %664, %662 : vector<1x128xf32>
    %666 = arith.mulf %657, %623 : vector<1x128xf32>
    %667 = arith.addf %665, %666 : vector<1x128xf32>
    %668 = vector.broadcast %630 : i32 to vector<1x128xi32>
    %669 = vector.broadcast %631 : i32 to vector<1x128xi32>
    %670 = arith.select %43, %668, %669 : vector<1x128xi1>, vector<1x128xi32>
    %671 = vector.broadcast %1 : i32 to vector<1x128xi32>
    %672 = arith.cmpi slt, %670, %671 : vector<1x128xi32>
    %673 = arith.select %672, %667, %623 : vector<1x128xi1>, vector<1x128xf32>
    %cst_195 = arith.constant 0.000000e+00 : f32
    %674 = vector.broadcast %cst_195 : f32 to vector<1x128xf32>
    %675 = arith.andi %43, %672 : vector<1x128xi1>
    %676 = arith.select %675, %673, %674 : vector<1x128xi1>, vector<1x128xf32>
    %cst_196 = arith.constant dense<true> : vector<1x128xi1>
    %677 = arith.xori %43, %cst_196 : vector<1x128xi1>
    %678 = arith.andi %677, %672 : vector<1x128xi1>
    %679 = arith.select %678, %673, %674 : vector<1x128xi1>, vector<1x128xf32>
    %c4_i32_197 = arith.constant 4 : i32
    %680 = arith.addi %476, %c4_i32_197 : i32
    %c3_i32_198 = arith.constant 3 : i32
    %681 = arith.addi %479, %c3_i32_198 : i32
    %682 = arith.index_cast %680 : i32 to index
    %c0_199 = arith.constant 0 : index
    %683 = vector.load %arg11[%682, %c0_199] : memref<16x384xf32, #tpu.memory_space<vmem>>, vector<1x384xf32>
    %684 = arith.index_cast %681 : i32 to index
    %c0_200 = arith.constant 0 : index
    %685 = vector.load %arg11[%684, %c0_200] : memref<16x384xf32, #tpu.memory_space<vmem>>, vector<1x384xf32>
    %686 = arith.select %62, %683, %685 : vector<1x384xi1>, vector<1x384xf32>
    %687 = arith.truncf %673 : vector<1x128xf32> to vector<1x128xbf16>
    %c0_201 = arith.constant 0 : index
    %c0_202 = arith.constant 0 : index
    %688 = vector.load %arg5[%c0_201, %c0_202] : memref<128x384xbf16, #tpu.memory_space<vmem>>, vector<128x384xbf16>
    %cst_203 = arith.constant dense<0.000000e+00> : vector<1x384xf32>
    %689 = tpu.matmul %687, %688, %cst_203 {dimension_numbers = #tpu.dot_dimension_numbers<[1], [0], [0], [1], [0, 0, 1, 1], [], []>} : vector<1x128xbf16>, vector<128x384xbf16>, vector<1x384xf32> -> vector<1x384xf32>
    %c0_204 = arith.constant 0 : index
    %c0_205 = arith.constant 0 : index
    %690 = vector.load %arg6[%c0_204, %c0_205] : memref<1x384xf32, #tpu.memory_space<vmem>>, vector<1x384xf32>
    %691 = arith.addf %689, %690 : vector<1x384xf32>
    %692 = vector.extract_strided_slice %686 {offsets = [0, 0], sizes = [1, 128], strides = [1, 1]} : vector<1x384xf32> to vector<1x128xf32>
    %693 = vector.extract_strided_slice %691 {offsets = [0, 0], sizes = [1, 128], strides = [1, 1]} : vector<1x384xf32> to vector<1x128xf32>
    %694 = arith.addf %692, %693 : vector<1x128xf32>
    %695 = arith.negf %694 : vector<1x128xf32>
    %696 = math.exp %695 : vector<1x128xf32>
    %cst_206 = arith.constant 1.000000e+00 : f32
    %697 = vector.broadcast %cst_206 : f32 to vector<1x128xf32>
    %698 = arith.addf %697, %696 : vector<1x128xf32>
    %699 = arith.divf %697, %698 : vector<1x128xf32>
    %700 = vector.extract_strided_slice %686 {offsets = [0, 128], sizes = [1, 128], strides = [1, 1]} : vector<1x384xf32> to vector<1x128xf32>
    %701 = vector.extract_strided_slice %691 {offsets = [0, 128], sizes = [1, 128], strides = [1, 1]} : vector<1x384xf32> to vector<1x128xf32>
    %702 = arith.addf %700, %701 : vector<1x128xf32>
    %703 = arith.negf %702 : vector<1x128xf32>
    %704 = math.exp %703 : vector<1x128xf32>
    %cst_207 = arith.constant 1.000000e+00 : f32
    %705 = vector.broadcast %cst_207 : f32 to vector<1x128xf32>
    %706 = arith.addf %705, %704 : vector<1x128xf32>
    %707 = arith.divf %705, %706 : vector<1x128xf32>
    %708 = vector.extract_strided_slice %686 {offsets = [0, 256], sizes = [1, 128], strides = [1, 1]} : vector<1x384xf32> to vector<1x128xf32>
    %709 = vector.extract_strided_slice %691 {offsets = [0, 256], sizes = [1, 128], strides = [1, 1]} : vector<1x384xf32> to vector<1x128xf32>
    %710 = arith.mulf %699, %709 : vector<1x128xf32>
    %711 = arith.addf %708, %710 : vector<1x128xf32>
    %712 = math.tanh %711 : vector<1x128xf32>
    %cst_208 = arith.constant 1.000000e+00 : f32
    %713 = vector.broadcast %cst_208 : f32 to vector<1x128xf32>
    %714 = arith.subf %713, %707 : vector<1x128xf32>
    %715 = arith.mulf %714, %712 : vector<1x128xf32>
    %716 = arith.mulf %707, %673 : vector<1x128xf32>
    %717 = arith.addf %715, %716 : vector<1x128xf32>
    %718 = vector.broadcast %680 : i32 to vector<1x128xi32>
    %719 = vector.broadcast %681 : i32 to vector<1x128xi32>
    %720 = arith.select %43, %718, %719 : vector<1x128xi1>, vector<1x128xi32>
    %721 = vector.broadcast %1 : i32 to vector<1x128xi32>
    %722 = arith.cmpi slt, %720, %721 : vector<1x128xi32>
    %723 = arith.select %722, %717, %673 : vector<1x128xi1>, vector<1x128xf32>
    %cst_209 = arith.constant 0.000000e+00 : f32
    %724 = vector.broadcast %cst_209 : f32 to vector<1x128xf32>
    %725 = arith.andi %43, %722 : vector<1x128xi1>
    %726 = arith.select %725, %723, %724 : vector<1x128xi1>, vector<1x128xf32>
    %cst_210 = arith.constant dense<true> : vector<1x128xi1>
    %727 = arith.xori %43, %cst_210 : vector<1x128xi1>
    %728 = arith.andi %727, %722 : vector<1x128xi1>
    %729 = arith.select %728, %723, %724 : vector<1x128xi1>, vector<1x128xf32>
    %c5_i32_211 = arith.constant 5 : i32
    %730 = arith.addi %476, %c5_i32_211 : i32
    %c2_i32_212 = arith.constant 2 : i32
    %731 = arith.addi %479, %c2_i32_212 : i32
    %732 = arith.index_cast %730 : i32 to index
    %c0_213 = arith.constant 0 : index
    %733 = vector.load %arg11[%732, %c0_213] : memref<16x384xf32, #tpu.memory_space<vmem>>, vector<1x384xf32>
    %734 = arith.index_cast %731 : i32 to index
    %c0_214 = arith.constant 0 : index
    %735 = vector.load %arg11[%734, %c0_214] : memref<16x384xf32, #tpu.memory_space<vmem>>, vector<1x384xf32>
    %736 = arith.select %62, %733, %735 : vector<1x384xi1>, vector<1x384xf32>
    %737 = arith.truncf %723 : vector<1x128xf32> to vector<1x128xbf16>
    %c0_215 = arith.constant 0 : index
    %c0_216 = arith.constant 0 : index
    %738 = vector.load %arg5[%c0_215, %c0_216] : memref<128x384xbf16, #tpu.memory_space<vmem>>, vector<128x384xbf16>
    %cst_217 = arith.constant dense<0.000000e+00> : vector<1x384xf32>
    %739 = tpu.matmul %737, %738, %cst_217 {dimension_numbers = #tpu.dot_dimension_numbers<[1], [0], [0], [1], [0, 0, 1, 1], [], []>} : vector<1x128xbf16>, vector<128x384xbf16>, vector<1x384xf32> -> vector<1x384xf32>
    %c0_218 = arith.constant 0 : index
    %c0_219 = arith.constant 0 : index
    %740 = vector.load %arg6[%c0_218, %c0_219] : memref<1x384xf32, #tpu.memory_space<vmem>>, vector<1x384xf32>
    %741 = arith.addf %739, %740 : vector<1x384xf32>
    %742 = vector.extract_strided_slice %736 {offsets = [0, 0], sizes = [1, 128], strides = [1, 1]} : vector<1x384xf32> to vector<1x128xf32>
    %743 = vector.extract_strided_slice %741 {offsets = [0, 0], sizes = [1, 128], strides = [1, 1]} : vector<1x384xf32> to vector<1x128xf32>
    %744 = arith.addf %742, %743 : vector<1x128xf32>
    %745 = arith.negf %744 : vector<1x128xf32>
    %746 = math.exp %745 : vector<1x128xf32>
    %cst_220 = arith.constant 1.000000e+00 : f32
    %747 = vector.broadcast %cst_220 : f32 to vector<1x128xf32>
    %748 = arith.addf %747, %746 : vector<1x128xf32>
    %749 = arith.divf %747, %748 : vector<1x128xf32>
    %750 = vector.extract_strided_slice %736 {offsets = [0, 128], sizes = [1, 128], strides = [1, 1]} : vector<1x384xf32> to vector<1x128xf32>
    %751 = vector.extract_strided_slice %741 {offsets = [0, 128], sizes = [1, 128], strides = [1, 1]} : vector<1x384xf32> to vector<1x128xf32>
    %752 = arith.addf %750, %751 : vector<1x128xf32>
    %753 = arith.negf %752 : vector<1x128xf32>
    %754 = math.exp %753 : vector<1x128xf32>
    %cst_221 = arith.constant 1.000000e+00 : f32
    %755 = vector.broadcast %cst_221 : f32 to vector<1x128xf32>
    %756 = arith.addf %755, %754 : vector<1x128xf32>
    %757 = arith.divf %755, %756 : vector<1x128xf32>
    %758 = vector.extract_strided_slice %736 {offsets = [0, 256], sizes = [1, 128], strides = [1, 1]} : vector<1x384xf32> to vector<1x128xf32>
    %759 = vector.extract_strided_slice %741 {offsets = [0, 256], sizes = [1, 128], strides = [1, 1]} : vector<1x384xf32> to vector<1x128xf32>
    %760 = arith.mulf %749, %759 : vector<1x128xf32>
    %761 = arith.addf %758, %760 : vector<1x128xf32>
    %762 = math.tanh %761 : vector<1x128xf32>
    %cst_222 = arith.constant 1.000000e+00 : f32
    %763 = vector.broadcast %cst_222 : f32 to vector<1x128xf32>
    %764 = arith.subf %763, %757 : vector<1x128xf32>
    %765 = arith.mulf %764, %762 : vector<1x128xf32>
    %766 = arith.mulf %757, %723 : vector<1x128xf32>
    %767 = arith.addf %765, %766 : vector<1x128xf32>
    %768 = vector.broadcast %730 : i32 to vector<1x128xi32>
    %769 = vector.broadcast %731 : i32 to vector<1x128xi32>
    %770 = arith.select %43, %768, %769 : vector<1x128xi1>, vector<1x128xi32>
    %771 = vector.broadcast %1 : i32 to vector<1x128xi32>
    %772 = arith.cmpi slt, %770, %771 : vector<1x128xi32>
    %773 = arith.select %772, %767, %723 : vector<1x128xi1>, vector<1x128xf32>
    %cst_223 = arith.constant 0.000000e+00 : f32
    %774 = vector.broadcast %cst_223 : f32 to vector<1x128xf32>
    %775 = arith.andi %43, %772 : vector<1x128xi1>
    %776 = arith.select %775, %773, %774 : vector<1x128xi1>, vector<1x128xf32>
    %cst_224 = arith.constant dense<true> : vector<1x128xi1>
    %777 = arith.xori %43, %cst_224 : vector<1x128xi1>
    %778 = arith.andi %777, %772 : vector<1x128xi1>
    %779 = arith.select %778, %773, %774 : vector<1x128xi1>, vector<1x128xf32>
    %c6_i32_225 = arith.constant 6 : i32
    %780 = arith.addi %476, %c6_i32_225 : i32
    %c1_i32_226 = arith.constant 1 : i32
    %781 = arith.addi %479, %c1_i32_226 : i32
    %782 = arith.index_cast %780 : i32 to index
    %c0_227 = arith.constant 0 : index
    %783 = vector.load %arg11[%782, %c0_227] : memref<16x384xf32, #tpu.memory_space<vmem>>, vector<1x384xf32>
    %784 = arith.index_cast %781 : i32 to index
    %c0_228 = arith.constant 0 : index
    %785 = vector.load %arg11[%784, %c0_228] : memref<16x384xf32, #tpu.memory_space<vmem>>, vector<1x384xf32>
    %786 = arith.select %62, %783, %785 : vector<1x384xi1>, vector<1x384xf32>
    %787 = arith.truncf %773 : vector<1x128xf32> to vector<1x128xbf16>
    %c0_229 = arith.constant 0 : index
    %c0_230 = arith.constant 0 : index
    %788 = vector.load %arg5[%c0_229, %c0_230] : memref<128x384xbf16, #tpu.memory_space<vmem>>, vector<128x384xbf16>
    %cst_231 = arith.constant dense<0.000000e+00> : vector<1x384xf32>
    %789 = tpu.matmul %787, %788, %cst_231 {dimension_numbers = #tpu.dot_dimension_numbers<[1], [0], [0], [1], [0, 0, 1, 1], [], []>} : vector<1x128xbf16>, vector<128x384xbf16>, vector<1x384xf32> -> vector<1x384xf32>
    %c0_232 = arith.constant 0 : index
    %c0_233 = arith.constant 0 : index
    %790 = vector.load %arg6[%c0_232, %c0_233] : memref<1x384xf32, #tpu.memory_space<vmem>>, vector<1x384xf32>
    %791 = arith.addf %789, %790 : vector<1x384xf32>
    %792 = vector.extract_strided_slice %786 {offsets = [0, 0], sizes = [1, 128], strides = [1, 1]} : vector<1x384xf32> to vector<1x128xf32>
    %793 = vector.extract_strided_slice %791 {offsets = [0, 0], sizes = [1, 128], strides = [1, 1]} : vector<1x384xf32> to vector<1x128xf32>
    %794 = arith.addf %792, %793 : vector<1x128xf32>
    %795 = arith.negf %794 : vector<1x128xf32>
    %796 = math.exp %795 : vector<1x128xf32>
    %cst_234 = arith.constant 1.000000e+00 : f32
    %797 = vector.broadcast %cst_234 : f32 to vector<1x128xf32>
    %798 = arith.addf %797, %796 : vector<1x128xf32>
    %799 = arith.divf %797, %798 : vector<1x128xf32>
    %800 = vector.extract_strided_slice %786 {offsets = [0, 128], sizes = [1, 128], strides = [1, 1]} : vector<1x384xf32> to vector<1x128xf32>
    %801 = vector.extract_strided_slice %791 {offsets = [0, 128], sizes = [1, 128], strides = [1, 1]} : vector<1x384xf32> to vector<1x128xf32>
    %802 = arith.addf %800, %801 : vector<1x128xf32>
    %803 = arith.negf %802 : vector<1x128xf32>
    %804 = math.exp %803 : vector<1x128xf32>
    %cst_235 = arith.constant 1.000000e+00 : f32
    %805 = vector.broadcast %cst_235 : f32 to vector<1x128xf32>
    %806 = arith.addf %805, %804 : vector<1x128xf32>
    %807 = arith.divf %805, %806 : vector<1x128xf32>
    %808 = vector.extract_strided_slice %786 {offsets = [0, 256], sizes = [1, 128], strides = [1, 1]} : vector<1x384xf32> to vector<1x128xf32>
    %809 = vector.extract_strided_slice %791 {offsets = [0, 256], sizes = [1, 128], strides = [1, 1]} : vector<1x384xf32> to vector<1x128xf32>
    %810 = arith.mulf %799, %809 : vector<1x128xf32>
    %811 = arith.addf %808, %810 : vector<1x128xf32>
    %812 = math.tanh %811 : vector<1x128xf32>
    %cst_236 = arith.constant 1.000000e+00 : f32
    %813 = vector.broadcast %cst_236 : f32 to vector<1x128xf32>
    %814 = arith.subf %813, %807 : vector<1x128xf32>
    %815 = arith.mulf %814, %812 : vector<1x128xf32>
    %816 = arith.mulf %807, %773 : vector<1x128xf32>
    %817 = arith.addf %815, %816 : vector<1x128xf32>
    %818 = vector.broadcast %780 : i32 to vector<1x128xi32>
    %819 = vector.broadcast %781 : i32 to vector<1x128xi32>
    %820 = arith.select %43, %818, %819 : vector<1x128xi1>, vector<1x128xi32>
    %821 = vector.broadcast %1 : i32 to vector<1x128xi32>
    %822 = arith.cmpi slt, %820, %821 : vector<1x128xi32>
    %823 = arith.select %822, %817, %773 : vector<1x128xi1>, vector<1x128xf32>
    %cst_237 = arith.constant 0.000000e+00 : f32
    %824 = vector.broadcast %cst_237 : f32 to vector<1x128xf32>
    %825 = arith.andi %43, %822 : vector<1x128xi1>
    %826 = arith.select %825, %823, %824 : vector<1x128xi1>, vector<1x128xf32>
    %cst_238 = arith.constant dense<true> : vector<1x128xi1>
    %827 = arith.xori %43, %cst_238 : vector<1x128xi1>
    %828 = arith.andi %827, %822 : vector<1x128xi1>
    %829 = arith.select %828, %823, %824 : vector<1x128xi1>, vector<1x128xf32>
    %c7_i32_239 = arith.constant 7 : i32
    %830 = arith.addi %476, %c7_i32_239 : i32
    %c0_i32_240 = arith.constant 0 : i32
    %831 = arith.addi %479, %c0_i32_240 : i32
    %832 = arith.index_cast %830 : i32 to index
    %c0_241 = arith.constant 0 : index
    %833 = vector.load %arg11[%832, %c0_241] : memref<16x384xf32, #tpu.memory_space<vmem>>, vector<1x384xf32>
    %834 = arith.index_cast %831 : i32 to index
    %c0_242 = arith.constant 0 : index
    %835 = vector.load %arg11[%834, %c0_242] : memref<16x384xf32, #tpu.memory_space<vmem>>, vector<1x384xf32>
    %836 = arith.select %62, %833, %835 : vector<1x384xi1>, vector<1x384xf32>
    %837 = arith.truncf %823 : vector<1x128xf32> to vector<1x128xbf16>
    %c0_243 = arith.constant 0 : index
    %c0_244 = arith.constant 0 : index
    %838 = vector.load %arg5[%c0_243, %c0_244] : memref<128x384xbf16, #tpu.memory_space<vmem>>, vector<128x384xbf16>
    %cst_245 = arith.constant dense<0.000000e+00> : vector<1x384xf32>
    %839 = tpu.matmul %837, %838, %cst_245 {dimension_numbers = #tpu.dot_dimension_numbers<[1], [0], [0], [1], [0, 0, 1, 1], [], []>} : vector<1x128xbf16>, vector<128x384xbf16>, vector<1x384xf32> -> vector<1x384xf32>
    %c0_246 = arith.constant 0 : index
    %c0_247 = arith.constant 0 : index
    %840 = vector.load %arg6[%c0_246, %c0_247] : memref<1x384xf32, #tpu.memory_space<vmem>>, vector<1x384xf32>
    %841 = arith.addf %839, %840 : vector<1x384xf32>
    %842 = vector.extract_strided_slice %836 {offsets = [0, 0], sizes = [1, 128], strides = [1, 1]} : vector<1x384xf32> to vector<1x128xf32>
    %843 = vector.extract_strided_slice %841 {offsets = [0, 0], sizes = [1, 128], strides = [1, 1]} : vector<1x384xf32> to vector<1x128xf32>
    %844 = arith.addf %842, %843 : vector<1x128xf32>
    %845 = arith.negf %844 : vector<1x128xf32>
    %846 = math.exp %845 : vector<1x128xf32>
    %cst_248 = arith.constant 1.000000e+00 : f32
    %847 = vector.broadcast %cst_248 : f32 to vector<1x128xf32>
    %848 = arith.addf %847, %846 : vector<1x128xf32>
    %849 = arith.divf %847, %848 : vector<1x128xf32>
    %850 = vector.extract_strided_slice %836 {offsets = [0, 128], sizes = [1, 128], strides = [1, 1]} : vector<1x384xf32> to vector<1x128xf32>
    %851 = vector.extract_strided_slice %841 {offsets = [0, 128], sizes = [1, 128], strides = [1, 1]} : vector<1x384xf32> to vector<1x128xf32>
    %852 = arith.addf %850, %851 : vector<1x128xf32>
    %853 = arith.negf %852 : vector<1x128xf32>
    %854 = math.exp %853 : vector<1x128xf32>
    %cst_249 = arith.constant 1.000000e+00 : f32
    %855 = vector.broadcast %cst_249 : f32 to vector<1x128xf32>
    %856 = arith.addf %855, %854 : vector<1x128xf32>
    %857 = arith.divf %855, %856 : vector<1x128xf32>
    %858 = vector.extract_strided_slice %836 {offsets = [0, 256], sizes = [1, 128], strides = [1, 1]} : vector<1x384xf32> to vector<1x128xf32>
    %859 = vector.extract_strided_slice %841 {offsets = [0, 256], sizes = [1, 128], strides = [1, 1]} : vector<1x384xf32> to vector<1x128xf32>
    %860 = arith.mulf %849, %859 : vector<1x128xf32>
    %861 = arith.addf %858, %860 : vector<1x128xf32>
    %862 = math.tanh %861 : vector<1x128xf32>
    %cst_250 = arith.constant 1.000000e+00 : f32
    %863 = vector.broadcast %cst_250 : f32 to vector<1x128xf32>
    %864 = arith.subf %863, %857 : vector<1x128xf32>
    %865 = arith.mulf %864, %862 : vector<1x128xf32>
    %866 = arith.mulf %857, %823 : vector<1x128xf32>
    %867 = arith.addf %865, %866 : vector<1x128xf32>
    %868 = vector.broadcast %830 : i32 to vector<1x128xi32>
    %869 = vector.broadcast %831 : i32 to vector<1x128xi32>
    %870 = arith.select %43, %868, %869 : vector<1x128xi1>, vector<1x128xi32>
    %871 = vector.broadcast %1 : i32 to vector<1x128xi32>
    %872 = arith.cmpi slt, %870, %871 : vector<1x128xi32>
    %873 = arith.select %872, %867, %823 : vector<1x128xi1>, vector<1x128xf32>
    %cst_251 = arith.constant 0.000000e+00 : f32
    %874 = vector.broadcast %cst_251 : f32 to vector<1x128xf32>
    %875 = arith.andi %43, %872 : vector<1x128xi1>
    %876 = arith.select %875, %873, %874 : vector<1x128xi1>, vector<1x128xf32>
    %cst_252 = arith.constant dense<true> : vector<1x128xi1>
    %877 = arith.xori %43, %cst_252 : vector<1x128xi1>
    %878 = arith.andi %877, %872 : vector<1x128xi1>
    %879 = arith.select %878, %873, %874 : vector<1x128xi1>, vector<1x128xf32>
    %880 = tpu.concatenate %526, %576, %626, %676, %726, %776, %826, %876 in 0 : vector<1x128xf32>, vector<1x128xf32>, vector<1x128xf32>, vector<1x128xf32>, vector<1x128xf32>, vector<1x128xf32>, vector<1x128xf32>, vector<1x128xf32> -> vector<8x128xf32>
    %881 = arith.index_cast %476 : i32 to index
    %c0_253 = arith.constant 0 : index
    %882 = vector.load %arg12[%881, %c0_253] : memref<16x128xf32, #tpu.memory_space<vmem>>, vector<8x128xf32>
    tpu.vector_store %arg12[%881, %c0_253], %880 {strides = array<i32>} : memref<16x128xf32, #tpu.memory_space<vmem>>, vector<8x128xf32>,
    %883 = tpu.concatenate %879, %829, %779, %729, %679, %629, %579, %529 in 0 : vector<1x128xf32>, vector<1x128xf32>, vector<1x128xf32>, vector<1x128xf32>, vector<1x128xf32>, vector<1x128xf32>, vector<1x128xf32>, vector<1x128xf32> -> vector<8x128xf32>
    %884 = arith.index_cast %479 : i32 to index
    %c0_254 = arith.constant 0 : index
    %885 = vector.load %arg13[%884, %c0_254] : memref<16x128xf32, #tpu.memory_space<vmem>>, vector<8x128xf32>
    tpu.vector_store %arg13[%884, %c0_254], %883 {strides = array<i32>} : memref<16x128xf32, #tpu.memory_space<vmem>>, vector<8x128xf32>,
    %c2_i32_255 = arith.constant 2 : i32
    %c0_256 = arith.constant 0 : index
    %c0_257 = arith.constant 0 : index
    %886 = vector.load %arg12[%c0_256, %c0_257] : memref<16x128xf32, #tpu.memory_space<vmem>>, vector<16x128xf32>
    %c0_258 = arith.constant 0 : index
    %c0_259 = arith.constant 0 : index
    %887 = vector.load %arg13[%c0_258, %c0_259] : memref<16x128xf32, #tpu.memory_space<vmem>>, vector<16x128xf32>
    %888 = arith.addf %886, %887 : vector<16x128xf32>
    %889 = arith.truncf %888 : vector<16x128xf32> to vector<16x128xbf16>
    %c0_260 = arith.constant 0 : index
    %c0_261 = arith.constant 0 : index
    %c0_262 = arith.constant 0 : index
    %890 = vector.load %arg10[%c0_260, %c0_261, %c0_262] : memref<1x16x128xf32, #tpu.memory_space<vmem>>, vector<1x16x128xf32>
    %891 = vector.shape_cast %890 : vector<1x16x128xf32> to vector<16x128xf32>
    %c0_263 = arith.constant 0 : index
    %c0_264 = arith.constant 0 : index
    %892 = vector.load %arg7[%c0_263, %c0_264] : memref<128x128xbf16, #tpu.memory_space<vmem>>, vector<128x128xbf16>
    %cst_265 = arith.constant dense<0.000000e+00> : vector<16x128xf32>
    %893 = tpu.matmul %889, %892, %cst_265 {dimension_numbers = #tpu.dot_dimension_numbers<[1], [0], [0], [1], [0, 0, 1, 1], [], []>} : vector<16x128xbf16>, vector<128x128xbf16>, vector<16x128xf32> -> vector<16x128xf32>
    %894 = arith.addf %891, %893 : vector<16x128xf32>
    %c0_266 = arith.constant 0 : index
    %c0_267 = arith.constant 0 : index
    %c0_268 = arith.constant 0 : index
    %895 = vector.load %arg10[%c0_266, %c0_267, %c0_268] : memref<1x16x128xf32, #tpu.memory_space<vmem>>, vector<1x16x128xf32>
    %896 = vector.shape_cast %895 : vector<1x16x128xf32> to vector<16x128xf32>
    %897 = vector.shape_cast %894 : vector<16x128xf32> to vector<1x16x128xf32>
    tpu.vector_store %arg10[%c0_266, %c0_267, %c0_268], %897 {strides = array<i32>} : memref<1x16x128xf32, #tpu.memory_space<vmem>>, vector<1x16x128xf32>,
    return
  }
  func.func @transform_0(%arg0: i32, %arg1: memref<2xi32, #tpu.memory_space<smem>>) -> (i32, i32, i32) {
    %c0_i32 = arith.constant 0 : i32
    %c0_i32_0 = arith.constant 0 : i32
    %c0_i32_1 = arith.constant 0 : i32
    return %arg0, %c0_i32, %c0_i32_0 : i32, i32, i32
  }
  func.func @transform_1(%arg0: i32, %arg1: memref<2xi32, #tpu.memory_space<smem>>) -> (i32, i32) {
    %c0_i32 = arith.constant 0 : i32
    %c0_i32_0 = arith.constant 0 : i32
    %c0_i32_1 = arith.constant 0 : i32
    return %c0_i32, %c0_i32_0 : i32, i32
  }
  func.func @transform_2(%arg0: i32, %arg1: memref<2xi32, #tpu.memory_space<smem>>) -> (i32, i32) {
    %c0_i32 = arith.constant 0 : i32
    %c0_i32_0 = arith.constant 0 : i32
    %c0_i32_1 = arith.constant 0 : i32
    return %c0_i32, %c0_i32_0 : i32, i32
  }
  func.func @transform_3(%arg0: i32, %arg1: memref<2xi32, #tpu.memory_space<smem>>) -> (i32, i32) {
    %c0_i32 = arith.constant 0 : i32
    %c0_i32_0 = arith.constant 0 : i32
    %c0_i32_1 = arith.constant 0 : i32
    return %c0_i32, %c0_i32_0 : i32, i32
  }
  func.func @transform_4(%arg0: i32, %arg1: memref<2xi32, #tpu.memory_space<smem>>) -> (i32, i32) {
    %c0_i32 = arith.constant 0 : i32
    %c0_i32_0 = arith.constant 0 : i32
    %c0_i32_1 = arith.constant 0 : i32
    return %c0_i32, %c0_i32_0 : i32, i32
  }
  func.func @transform_5(%arg0: i32, %arg1: memref<2xi32, #tpu.memory_space<smem>>) -> (i32, i32) {
    %c0_i32 = arith.constant 0 : i32
    %c0_i32_0 = arith.constant 0 : i32
    %c0_i32_1 = arith.constant 0 : i32
    return %c0_i32, %c0_i32_0 : i32, i32
  }
  func.func @transform_6(%arg0: i32, %arg1: memref<2xi32, #tpu.memory_space<smem>>) -> (i32, i32) {
    %c0_i32 = arith.constant 0 : i32
    %c0_i32_0 = arith.constant 0 : i32
    %c0_i32_1 = arith.constant 0 : i32
    return %c0_i32, %c0_i32_0 : i32, i32
  }
  func.func @transform_7(%arg0: i32, %arg1: memref<2xi32, #tpu.memory_space<smem>>) -> (i32, i32) {
    %c0_i32 = arith.constant 0 : i32
    %c0_i32_0 = arith.constant 0 : i32
    %c0_i32_1 = arith.constant 0 : i32
    return %c0_i32, %c0_i32_0 : i32, i32
  }
  func.func @transform_8(%arg0: i32, %arg1: memref<2xi32, #tpu.memory_space<smem>>) -> (i32, i32, i32) {
    %c0_i32 = arith.constant 0 : i32
    %c0_i32_0 = arith.constant 0 : i32
    %c0_i32_1 = arith.constant 0 : i32
    return %arg0, %c0_i32, %c0_i32_0 : i32, i32, i32
  }
}

</mosaic_0001>

<llo_original>
// kernel: custom-call.4
$region0: #{custom-call.4}
  %s0 = inlined_call_operand.vmem [shape: s32[15,2,9], index: 0, kind: output, shape index: {}]

// kernel: custom-call.5
$region0: #{custom-call.5}
  %s0 = inlined_call_operand.vmem [shape: s32[15,2], index: 0, kind: output, shape index: {}]

// kernel: bert_bigru_att_crf_forward.1
$region0: #{bert_bigru_att_crf_forward.1}
  #allocation0 [shape = 'u32[]', space=smem, size = 0x4, offset = 0x4, fixed_abs, tag = 'smem constant byte address 0x4 - core index']
  #allocation1 [shape = 'u32[72,128]{1,0:T(1,128)}', space=vmem, size = 0x9000, scoped, tag = 'internal scratch']
  #allocation2 [shape = 'f32[16,384]{1,0:T(8,128)}', space=vmem, size = 0x6000, scoped, tag = 'scratch operand']
  #allocation3 [shape = 'f32[16,128]{1,0:T(8,128)}', space=vmem, size = 0x2000, scoped, tag = 'scratch operand']
  #allocation4 [shape = 'f32[16,128]{1,0:T(8,128)}', space=vmem, size = 0x2000, scoped, tag = 'scratch operand']
  #allocation5 [shape = 's32[1]{0}', space=sflag, size = 0x4, scoped, tag = 'scoped memory for bert_bigru_att_crf_forward.1']
  #allocation6 [shape = 'u8[512]{0}', space=smem, size = 0x200, scoped, tag = 'prefetched SMEM operand 0']
  %s0 = inlined_call_operand.hbm [shape: s32[2], index: 0, kind: input, shape index: {}]
  %s1 = inlined_call_operand.vmem [shape: bf16[2,16,768], index: 1, kind: input, shape index: {}]
  %s2 = inlined_call_operand.hbm [shape: bf16[768,768], index: 2, kind: input, shape index: {}]
  %s3 = inlined_call_operand.hbm [shape: f32[1,384], index: 3, kind: input, shape index: {}]
  %s4 = inlined_call_operand.hbm [shape: bf16[128,384], index: 4, kind: input, shape index: {}]
  %s5 = inlined_call_operand.hbm [shape: f32[1,384], index: 5, kind: input, shape index: {}]
  %s6 = inlined_call_operand.hbm [shape: bf16[128,128], index: 6, kind: input, shape index: {}]
  %s7 = inlined_call_operand.hbm [shape: bf16[128,128], index: 7, kind: input, shape index: {}]
  %s8 = inlined_call_operand.hbm [shape: f32[1,128], index: 8, kind: input, shape index: {}]
  %s9 = inlined_call_operand.vmem [shape: f32[2,16,128], index: 9, kind: output, shape index: {}]
  %s10 = sld [smem:[#allocation0]]
  $region93: #{bert_bigru_att_crf_forward.1} parent=0
    _
  %s12 = ssub.s32 1, %s10
  %s13 = scalar_select 0, %s12, %s10
  %s15 = sshll.u32 %s0, 4
  %s16 = int_to_ptr.hbm [resolvable:$true] %s15
  %18 = dma.hbm_to_smem %s16, 16, [#allocation6], [#allocation5]
  %20 = dma.done [#allocation5], 16
  %21 = sfence
  $region1: #{bert_bigru_att_crf_forward.1} parent=0
    #allocation7 [shape = 'u8[1179648]{0}', space=vmem, size = 0x120000, scoped, tag = 'input window, operand 2, single buffered']
    #allocation8 [shape = 's32[2]{0}', space=sflag, size = 0x8, scoped, tag = 'scoped memory for bert_bigru_att_crf_forward.1']
    #allocation9 [shape = 'u8[1536]{0}', space=vmem, size = 0x800, scoped, tag = 'input window, operand 3, single buffered']
    #allocation10 [shape = 's32[1]{0}', space=sflag, size = 0x4, scoped, tag = 'scoped memory for bert_bigru_att_crf_forward.1']
    #allocation11 [shape = 'u8[98304]{0}', space=vmem, size = 0x18000, scoped, tag = 'input window, operand 4, single buffered']
    #allocation12 [shape = 'u8[1536]{0}', space=vmem, size = 0x800, scoped, tag = 'input window, operand 5, single buffered']
    #allocation13 [shape = 's32[1]{0}', space=sflag, size = 0x4, scoped, tag = 'scoped memory for bert_bigru_att_crf_forward.1']
    #allocation14 [shape = 'u8[32768]{0}', space=vmem, size = 0x8000, scoped, tag = 'input window, operand 6, single buffered']
    #allocation15 [shape = 'u8[32768]{0}', space=vmem, size = 0x8000, scoped, tag = 'input window, operand 7, single buffered']
    #allocation16 [shape = 's32[1]{0}', space=sflag, size = 0x4, scoped, tag = 'scoped memory for bert_bigru_att_crf_forward.1']
    #allocation17 [shape = 'u8[512]{0}', space=vmem, size = 0x400, scoped, tag = 'input window, operand 8, single buffered']
    %22 = vsyncpa [#allocation8], 0
    %23 = vsyncpa [#allocation10], 0
    %24 = vsyncpa [#allocation13], 0
    %25 = vsyncpa [#allocation16], 0
    loop: start=0, step=1, limit=4
    $region2: #{bert_bigru_att_crf_forward.1} parent=1 // loop_pre_header
      _
    $region3: #{bert_bigru_att_crf_forward.1} parent=1 // loop_header
      %s27 = sphi 0, %s31
      %p28 = scmp.ge.s32.totalorder %s27, 4
      %s37 = sphi 0, %s39
      %s40 = sphi 0, %s37
      %s41 = sphi 0, %s40
      %s57 = sphi 0, %s41
      %s61 = sphi 0, %s61
      %s63 = sphi 0, %s61
      %s64 = sphi 0, %s63
      %s78 = sphi 0, %s64
      %s82 = sphi 0, %s82
      %s84 = sphi 0, %s82
      %s85 = sphi 0, %s84
      %s99 = sphi 0, %s85
      %s103 = sphi 0, %s103
      %s105 = sphi 0, %s103
      %s106 = sphi 0, %s105
      %s120 = sphi 0, %s106
      %s124 = sphi 0, %s124
      %s126 = sphi 0, %s124
      %s127 = sphi 0, %s126
      %s141 = sphi 0, %s127
      %s145 = sphi 0, %s145
      %s147 = sphi 0, %s145
      %s148 = sphi 0, %s147
      %s162 = sphi 0, %s148
      %s166 = sphi 0, %s166
      %s168 = sphi 0, %s166
      %s169 = sphi 0, %s168
      %s183 = sphi 0, %s169
      %s187 = sphi 0, %s187
      %s189 = sphi 0, %s187
      %s190 = sphi 0, %s189
      %s204 = sphi 0, %s190
      %s210 = sphi 0, %s212
      %s213 = sphi 0, %s210
      %s214 = sphi 0, %s213
      %s230 = sphi 0, %s214
    $region4: #{bert_bigru_att_crf_forward.1} parent=1 // loop_header_branch
      %30 = sbr.rel (%p28) target = $region8
    $region5: #{bert_bigru_att_crf_forward.1} parent=1 // loop_body
      %s32 = ssub.s32 %s27, 1
      %s33 = ssub.s32 %s27, 2
      %s34 = sadd.s32 %s27, 1
      %s35 = ssub.s32 %s27, %s34
      %p36 = scmp.eq.s32.totalorder %s35, 0
      %s38 = sadd.s32 %s37, 1
      %s39 = scalar_select %p36, %s37, %s38
      %p42 = pneg %p36
      %p43 = scmp.eq.s32.totalorder %s27, 1
      %p44 = por %p42, %p43
      %p45 = scmp.ne.s32.totalorder %s37, %s40
      %p46 = scmp.eq.s32.totalorder %s27, 0
      %p47 = por %p45, %p46
      %p48 = scmp.ne.s32.totalorder %s37, %s40
      %p49 = scmp.eq.s32.totalorder %s32, 1
      %p50 = por %p48, %p49
      %p51 = scmp.ne.s32.totalorder %s40, %s41
      %p52 = scmp.eq.s32.totalorder %s32, 0
      %p53 = por %p51, %p52
      %p54 = scmp.ne.s32.totalorder %s40, %s41
      %p55 = scmp.eq.s32.totalorder %s33, 1
      %p56 = por %p54, %p55
      %p58 = scmp.ne.s32.totalorder %s41, %s57
      %p59 = scmp.eq.s32.totalorder %s33, 0
      %p60 = por %p58, %p59
      %s62 = sadd.s32 %s61, 1
      %p65 = scmp.eq.s32.totalorder %s27, 1
      %p66 = scmp.ne.s32.totalorder %s61, %s63
      %p67 = scmp.eq.s32.totalorder %s27, 0
      %p68 = por %p66, %p67
      %p69 = scmp.ne.s32.totalorder %s61, %s63
      %p70 = scmp.eq.s32.totalorder %s32, 1
      %p71 = por %p69, %p70
      %p72 = scmp.ne.s32.totalorder %s63, %s64
      %p73 = scmp.eq.s32.totalorder %s32, 0
      %p74 = por %p72, %p73
      %p75 = scmp.ne.s32.totalorder %s63, %s64
      %p76 = scmp.eq.s32.totalorder %s33, 1
      %p77 = por %p75, %p76
      %p79 = scmp.ne.s32.totalorder %s64, %s78
      %p80 = scmp.eq.s32.totalorder %s33, 0
      %p81 = por %p79, %p80
      %s83 = sadd.s32 %s82, 1
      %p86 = scmp.eq.s32.totalorder %s27, 1
      %p87 = scmp.ne.s32.totalorder %s82, %s84
      %p88 = scmp.eq.s32.totalorder %s27, 0
      %p89 = por %p87, %p88
      %p90 = scmp.ne.s32.totalorder %s82, %s84
      %p91 = scmp.eq.s32.totalorder %s32, 1
      %p92 = por %p90, %p91
      %p93 = scmp.ne.s32.totalorder %s84, %s85
      %p94 = scmp.eq.s32.totalorder %s32, 0
      %p95 = por %p93, %p94
      %p96 = scmp.ne.s32.totalorder %s84, %s85
      %p97 = scmp.eq.s32.totalorder %s33, 1
      %p98 = por %p96, %p97
      %p100 = scmp.ne.s32.totalorder %s85, %s99
      %p101 = scmp.eq.s32.totalorder %s33, 0
      %p102 = por %p100, %p101
      %s104 = sadd.s32 %s103, 1
      %p107 = scmp.eq.s32.totalorder %s27, 1
      %p108 = scmp.ne.s32.totalorder %s103, %s105
      %p109 = scmp.eq.s32.totalorder %s27, 0
      %p110 = por %p108, %p109
      %p111 = scmp.ne.s32.totalorder %s103, %s105
      %p112 = scmp.eq.s32.totalorder %s32, 1
      %p113 = por %p111, %p112
      %p114 = scmp.ne.s32.totalorder %s105, %s106
      %p115 = scmp.eq.s32.totalorder %s32, 0
      %p116 = por %p114, %p115
      %p117 = scmp.ne.s32.totalorder %s105, %s106
      %p118 = scmp.eq.s32.totalorder %s33, 1
      %p119 = por %p117, %p118
      %p121 = scmp.ne.s32.totalorder %s106, %s120
      %p122 = scmp.eq.s32.totalorder %s33, 0
      %p123 = por %p121, %p122
      %s125 = sadd.s32 %s124, 1
      %p128 = scmp.eq.s32.totalorder %s27, 1
      %p129 = scmp.ne.s32.totalorder %s124, %s126
      %p130 = scmp.eq.s32.totalorder %s27, 0
      %p131 = por %p129, %p130
      %p132 = scmp.ne.s32.totalorder %s124, %s126
      %p133 = scmp.eq.s32.totalorder %s32, 1
      %p134 = por %p132, %p133
      %p135 = scmp.ne.s32.totalorder %s126, %s127
      %p136 = scmp.eq.s32.totalorder %s32, 0
      %p137 = por %p135, %p136
      %p138 = scmp.ne.s32.totalorder %s126, %s127
      %p139 = scmp.eq.s32.totalorder %s33, 1
      %p140 = por %p138, %p139
      %p142 = scmp.ne.s32.totalorder %s127, %s141
      %p143 = scmp.eq.s32.totalorder %s33, 0
      %p144 = por %p142, %p143
      %s146 = sadd.s32 %s145, 1
      %p149 = scmp.eq.s32.totalorder %s27, 1
      %p150 = scmp.ne.s32.totalorder %s145, %s147
      %p151 = scmp.eq.s32.totalorder %s27, 0
      %p152 = por %p150, %p151
      %p153 = scmp.ne.s32.totalorder %s145, %s147
      %p154 = scmp.eq.s32.totalorder %s32, 1
      %p155 = por %p153, %p154
      %p156 = scmp.ne.s32.totalorder %s147, %s148
      %p157 = scmp.eq.s32.totalorder %s32, 0
      %p158 = por %p156, %p157
      %p159 = scmp.ne.s32.totalorder %s147, %s148
      %p160 = scmp.eq.s32.totalorder %s33, 1
      %p161 = por %p159, %p160
      %p163 = scmp.ne.s32.totalorder %s148, %s162
      %p164 = scmp.eq.s32.totalorder %s33, 0
      %p165 = por %p163, %p164
      %s167 = sadd.s32 %s166, 1
      %p170 = scmp.eq.s32.totalorder %s27, 1
      %p171 = scmp.ne.s32.totalorder %s166, %s168
      %p172 = scmp.eq.s32.totalorder %s27, 0
      %p173 = por %p171, %p172
      %p174 = scmp.ne.s32.totalorder %s166, %s168
      %p175 = scmp.eq.s32.totalorder %s32, 1
      %p176 = por %p174, %p175
      %p177 = scmp.ne.s32.totalorder %s168, %s169
      %p178 = scmp.eq.s32.totalorder %s32, 0
      %p179 = por %p177, %p178
      %p180 = scmp.ne.s32.totalorder %s168, %s169
      %p181 = scmp.eq.s32.totalorder %s33, 1
      %p182 = por %p180, %p181
      %p184 = scmp.ne.s32.totalorder %s169, %s183
      %p185 = scmp.eq.s32.totalorder %s33, 0
      %p186 = por %p184, %p185
      %s188 = sadd.s32 %s187, 1
      %p191 = scmp.eq.s32.totalorder %s27, 1
      %p192 = scmp.ne.s32.totalorder %s187, %s189
      %p193 = scmp.eq.s32.totalorder %s27, 0
      %p194 = por %p192, %p193
      %p195 = scmp.ne.s32.totalorder %s187, %s189
      %p196 = scmp.eq.s32.totalorder %s32, 1
      %p197 = por %p195, %p196
      %p198 = scmp.ne.s32.totalorder %s189, %s190
      %p199 = scmp.eq.s32.totalorder %s32, 0
      %p200 = por %p198, %p199
      %p201 = scmp.ne.s32.totalorder %s189, %s190
      %p202 = scmp.eq.s32.totalorder %s33, 1
      %p203 = por %p201, %p202
      %p205 = scmp.ne.s32.totalorder %s190, %s204
      %p206 = scmp.eq.s32.totalorder %s33, 0
      %p207 = por %p205, %p206
      %s208 = ssub.s32 %s27, %s34
      %p209 = scmp.eq.s32.totalorder %s208, 0
      %s211 = sadd.s32 %s210, 1
      %s212 = scalar_select %p209, %s210, %s211
      %p215 = pneg %p209
      %p216 = scmp.eq.s32.totalorder %s27, 1
      %p217 = por %p215, %p216
      %p218 = scmp.ne.s32.totalorder %s210, %s213
      %p219 = scmp.eq.s32.totalorder %s27, 0
      %p220 = por %p218, %p219
      %p221 = scmp.ne.s32.totalorder %s210, %s213
      %p222 = scmp.eq.s32.totalorder %s32, 1
      %p223 = por %p221, %p222
      %p224 = scmp.ne.s32.totalorder %s213, %s214
      %p225 = scmp.eq.s32.totalorder %s32, 0
      %p226 = por %p224, %p225
      %p227 = scmp.ne.s32.totalorder %s213, %s214
      %p228 = scmp.eq.s32.totalorder %s33, 1
      %p229 = por %p227, %p228
      %p231 = scmp.ne.s32.totalorder %s214, %s230
      %p232 = scmp.eq.s32.totalorder %s33, 0
      %p233 = por %p231, %p232
      %p234 = scmp.le.s32.totalorder 1, %s27
      %p235 = scmp.lt.s32.totalorder %s27, 3
      %p236 = pnand %p234, %p235
      %p237 = pneg %p236
      // Predicated region
      $region9: #{bert_bigru_att_crf_forward.1} parent=5 // pred_check
        _
      $region10: #{bert_bigru_att_crf_forward.1} parent=5 // pred_check_branch
        %239 = sbr.rel (%p236) target = $region12
      $region11: #{bert_bigru_att_crf_forward.1} parent=5 // pred_region
        %s240 = ssub.s32 %s27, 1
        // Predicated region
        $region13: #{bert_bigru_att_crf_forward.1} parent=11 // pred_check
          %p241 = pneg %p74
        $region14: #{bert_bigru_att_crf_forward.1} parent=11 // pred_check_branch
          %243 = sbr.rel (%p241) target = $region16
        $region15: #{bert_bigru_att_crf_forward.1} parent=11 // pred_region
          %245 = vsyncadd [#allocation8], 0
          %s246 = sshll.u32 %s2, 4
          %s247 = int_to_ptr.hbm [resolvable:$true] %s246
          %s248 = sshll.u32 [#allocation7], 4
          %s249 = int_to_ptr.vmem [resolvable:$true] %s248
          %254 = dma.hbm_to_vmem [thread:$0]  %s247, 36864, %s249, [#allocation8], 384, 384, 24
        $region16: #{bert_bigru_att_crf_forward.1} parent=11 // pred_fallthru
          _
        // Predicated region
        $region17: #{bert_bigru_att_crf_forward.1} parent=11 // pred_check
          %p255 = pneg %p95
        $region18: #{bert_bigru_att_crf_forward.1} parent=11 // pred_check_branch
          %257 = sbr.rel (%p255) target = $region20
        $region19: #{bert_bigru_att_crf_forward.1} parent=11 // pred_region
          %259 = vsyncadd [#allocation10], 0
          %s261 = sshll.u32 %s3, 4
          %s262 = int_to_ptr.hbm [resolvable:$true] %s261
          %s263 = sshll.u32 [#allocation9], 4
          %s264 = int_to_ptr.vmem [resolvable:$true] %s263
          %266 = dma.hbm_to_vmem [thread:$0]  %s262, 48, %s264, [#allocation10]
        $region20: #{bert_bigru_att_crf_forward.1} parent=11 // pred_fallthru
          _
        // Predicated region
        $region21: #{bert_bigru_att_crf_forward.1} parent=11 // pred_check
          %p267 = pneg %p116
        $region22: #{bert_bigru_att_crf_forward.1} parent=11 // pred_check_branch
          %269 = sbr.rel (%p267) target = $region24
        $region23: #{bert_bigru_att_crf_forward.1} parent=11 // pred_region
          %271 = vsyncadd [#allocation10], 0
          %s272 = sshll.u32 %s4, 4
          %s273 = int_to_ptr.hbm [resolvable:$true] %s272
          %s274 = sshll.u32 [#allocation11], 4
          %s275 = int_to_ptr.vmem [resolvable:$true] %s274
          %280 = dma.hbm_to_vmem [thread:$0]  %s273, 3072, %s275, [#allocation10], 192, 192, 12
        $region24: #{bert_bigru_att_crf_forward.1} parent=11 // pred_fallthru
          _
        // Predicated region
        $region25: #{bert_bigru_att_crf_forward.1} parent=11 // pred_check
          %p281 = pneg %p137
        $region26: #{bert_bigru_att_crf_forward.1} parent=11 // pred_check_branch
          %283 = sbr.rel (%p281) target = $region28
        $region27: #{bert_bigru_att_crf_forward.1} parent=11 // pred_region
          %285 = vsyncadd [#allocation13], 0
          %s287 = sshll.u32 %s5, 4
          %s288 = int_to_ptr.hbm [resolvable:$true] %s287
          %s289 = sshll.u32 [#allocation12], 4
          %s290 = int_to_ptr.vmem [resolvable:$true] %s289
          %292 = dma.hbm_to_vmem [thread:$0]  %s288, 48, %s290, [#allocation13]
        $region28: #{bert_bigru_att_crf_forward.1} parent=11 // pred_fallthru
          _
        // Predicated region
        $region29: #{bert_bigru_att_crf_forward.1} parent=11 // pred_check
          %p293 = pneg %p158
        $region30: #{bert_bigru_att_crf_forward.1} parent=11 // pred_check_branch
          %295 = sbr.rel (%p293) target = $region32
        $region31: #{bert_bigru_att_crf_forward.1} parent=11 // pred_region
          %297 = vsyncadd [#allocation13], 0
          %s298 = sshll.u32 %s6, 4
          %s299 = int_to_ptr.hbm [resolvable:$true] %s298
          %s300 = sshll.u32 [#allocation14], 4
          %s301 = int_to_ptr.vmem [resolvable:$true] %s300
          %306 = dma.hbm_to_vmem [thread:$0]  %s299, 1024, %s301, [#allocation13], 64, 64, 4
        $region32: #{bert_bigru_att_crf_forward.1} parent=11 // pred_fallthru
          _
        // Predicated region
        $region33: #{bert_bigru_att_crf_forward.1} parent=11 // pred_check
          %p307 = pneg %p179
        $region34: #{bert_bigru_att_crf_forward.1} parent=11 // pred_check_branch
          %309 = sbr.rel (%p307) target = $region36
        $region35: #{bert_bigru_att_crf_forward.1} parent=11 // pred_region
          %311 = vsyncadd [#allocation16], 0
          %s312 = sshll.u32 %s7, 4
          %s313 = int_to_ptr.hbm [resolvable:$true] %s312
          %s314 = sshll.u32 [#allocation15], 4
          %s315 = int_to_ptr.vmem [resolvable:$true] %s314
          %320 = dma.hbm_to_vmem [thread:$0]  %s313, 1024, %s315, [#allocation16], 64, 64, 4
        $region36: #{bert_bigru_att_crf_forward.1} parent=11 // pred_fallthru
          _
        // Predicated region
        $region37: #{bert_bigru_att_crf_forward.1} parent=11 // pred_check
          %p321 = pneg %p200
        $region38: #{bert_bigru_att_crf_forward.1} parent=11 // pred_check_branch
          %323 = sbr.rel (%p321) target = $region40
        $region39: #{bert_bigru_att_crf_forward.1} parent=11 // pred_region
          %325 = vsyncadd [#allocation16], 0
          %s327 = sshll.u32 %s8, 4
          %s328 = int_to_ptr.hbm [resolvable:$true] %s327
          %s329 = sshll.u32 [#allocation17], 4
          %s330 = int_to_ptr.vmem [resolvable:$true] %s329
          %332 = dma.hbm_to_vmem [thread:$0]  %s328, 16, %s330, [#allocation16]
        $region40: #{bert_bigru_att_crf_forward.1} parent=11 // pred_fallthru
          _
      $region12: #{bert_bigru_att_crf_forward.1} parent=5 // pred_fallthru
        _
      %p333 = scmp.lt.s32.totalorder %s27, 2
      // Predicated region
      $region41: #{bert_bigru_att_crf_forward.1} parent=5 // pred_check
        %p334 = pneg %p333
      $region42: #{bert_bigru_att_crf_forward.1} parent=5 // pred_check_branch
        %336 = sbr.rel (%p334) target = $region44
      $region43: #{bert_bigru_att_crf_forward.1} parent=5 // pred_region
        // Predicated region
        $region45: #{bert_bigru_att_crf_forward.1} parent=43 // pred_check
          %p337 = pneg %p47
        $region46: #{bert_bigru_att_crf_forward.1} parent=43 // pred_check_branch
          %339 = sbr.rel (%p337) target = $region48
        $region47: #{bert_bigru_att_crf_forward.1} parent=43 // pred_region
          %p340 = scmp.lt.s32.totalorder %s27, 1
          %s341 = scalar_select %p340, %s27, 1
          %s342 = smul.addr %s341, 12
          %s343 = smul.addr %s342, 4
          %s344 = scalar_lea.vmem %s1, %s343
        $region48: #{bert_bigru_att_crf_forward.1} parent=43 // pred_fallthru
          _
      $region44: #{bert_bigru_att_crf_forward.1} parent=5 // pred_fallthru
        _
      %p345 = scmp.le.s32.totalorder 1, %s27
      %p346 = scmp.lt.s32.totalorder %s27, 3
      %p347 = pnand %p345, %p346
      %p348 = pneg %p347
      // Predicated region
      $region49: #{bert_bigru_att_crf_forward.1} parent=5 // pred_check
        _
      $region50: #{bert_bigru_att_crf_forward.1} parent=5 // pred_check_branch
        %350 = sbr.rel (%p347) target = $region52
      $region51: #{bert_bigru_att_crf_forward.1} parent=5 // pred_region
        %s351 = ssub.s32 %s27, 1
        // Predicated region
        $region53: #{bert_bigru_att_crf_forward.1} parent=51 // pred_check
          %p352 = pneg %p74
        $region54: #{bert_bigru_att_crf_forward.1} parent=51 // pred_check_branch
          %354 = sbr.rel (%p352) target = $region56
        $region55: #{bert_bigru_att_crf_forward.1} parent=51 // pred_region
          %356 = dma.done [#allocation8], 36864
        $region56: #{bert_bigru_att_crf_forward.1} parent=51 // pred_fallthru
          _
        // Predicated region
        $region57: #{bert_bigru_att_crf_forward.1} parent=51 // pred_check
          %p357 = pneg %p95
        $region58: #{bert_bigru_att_crf_forward.1} parent=51 // pred_check_branch
          %359 = sbr.rel (%p357) target = $region60
        $region59: #{bert_bigru_att_crf_forward.1} parent=51 // pred_region
          %361 = dma.done [#allocation10], 48
        $region60: #{bert_bigru_att_crf_forward.1} parent=51 // pred_fallthru
          _
        // Predicated region
        $region61: #{bert_bigru_att_crf_forward.1} parent=51 // pred_check
          %p362 = pneg %p116
        $region62: #{bert_bigru_att_crf_forward.1} parent=51 // pred_check_branch
          %364 = sbr.rel (%p362) target = $region64
        $region63: #{bert_bigru_att_crf_forward.1} parent=51 // pred_region
          %366 = dma.done [#allocation10], 3072
        $region64: #{bert_bigru_att_crf_forward.1} parent=51 // pred_fallthru
          _
        // Predicated region
        $region65: #{bert_bigru_att_crf_forward.1} parent=51 // pred_check
          %p367 = pneg %p137
        $region66: #{bert_bigru_att_crf_forward.1} parent=51 // pred_check_branch
          %369 = sbr.rel (%p367) target = $region68
        $region67: #{bert_bigru_att_crf_forward.1} parent=51 // pred_region
          %371 = dma.done [#allocation13], 48
        $region68: #{bert_bigru_att_crf_forward.1} parent=51 // pred_fallthru
          _
        // Predicated region
        $region69: #{bert_bigru_att_crf_forward.1} parent=51 // pred_check
          %p372 = pneg %p158
        $region70: #{bert_bigru_att_crf_forward.1} parent=51 // pred_check_branch
          %374 = sbr.rel (%p372) target = $region72
        $region71: #{bert_bigru_att_crf_forward.1} parent=51 // pred_region
          %376 = dma.done [#allocation13], 1024
        $region72: #{bert_bigru_att_crf_forward.1} parent=51 // pred_fallthru
          _
        // Predicated region
        $region73: #{bert_bigru_att_crf_forward.1} parent=51 // pred_check
          %p377 = pneg %p179
        $region74: #{bert_bigru_att_crf_forward.1} parent=51 // pred_check_branch
          %379 = sbr.rel (%p377) target = $region76
        $region75: #{bert_bigru_att_crf_forward.1} parent=51 // pred_region
          %381 = dma.done [#allocation16], 1024
        $region76: #{bert_bigru_att_crf_forward.1} parent=51 // pred_fallthru
          _
        // Predicated region
        $region77: #{bert_bigru_att_crf_forward.1} parent=51 // pred_check
          %p382 = pneg %p200
        $region78: #{bert_bigru_att_crf_forward.1} parent=51 // pred_check_branch
          %384 = sbr.rel (%p382) target = $region80
        $region79: #{bert_bigru_att_crf_forward.1} parent=51 // pred_region
          %386 = dma.done [#allocation16], 16
        $region80: #{bert_bigru_att_crf_forward.1} parent=51 // pred_fallthru
          _
        %p387 = scmp.lt.s32.totalorder %s32, 1
        %s388 = scalar_select %p387, %s32, 1
        %s389 = smul.addr %s388, 12
        %s390 = smul.addr %s389, 4
        %s391 = scalar_lea.vmem %s1, %s390
        %p392 = pneg %p53
        %p393 = pneg %p50
        %p394 = pneg %p74
        %p395 = pneg %p71
        %p396 = pneg %p95
        %p397 = pneg %p92
        %p398 = pneg %p116
        %p399 = pneg %p113
        %p400 = pneg %p137
        %p401 = pneg %p134
        %p402 = pneg %p158
        %p403 = pneg %p155
        %p404 = pneg %p179
        %p405 = pneg %p176
        %p406 = pneg %p200
        %p407 = pneg %p197
        %p408 = pneg %p226
        %p409 = pneg %p223
        %p410 = scmp.lt.s32.totalorder %s32, 1
        %s411 = scalar_select %p410, %s32, 1
        %s412 = smul.addr %s411, 2
        %s413 = smul.addr %s412, 8
        %s414 = scalar_lea.vmem %s9, %s413
        %p415 = scmp.lt.s32.totalorder %s32, 1
        %s416 = scalar_select %p415, %s32, 1
        %s417 = smul.addr %s416, 12
        %s418 = smul.addr %s417, 4
        %s419 = scalar_lea.vmem %s1, %s418
        %p420 = scmp.lt.s32.totalorder %s32, 1
        %s421 = scalar_select %p420, %s32, 1
        %s422 = smul.addr %s421, 2
        %s423 = smul.addr %s422, 8
        %s424 = scalar_lea.vmem %s9, %s423
        %s426 = sld [smem:[#allocation6 + %s32]]
        %v427 = vld [vmem:[%s419] sm:$0xff]
        %v428 = vld [vmem:[%s419 + $0x8] sm:$0xff]
        %v429 = vld [vmem:[%s419 + $0x10] sm:$0xff]
        %v430 = vld [vmem:[%s419 + $0x18] sm:$0xff]
        %v431 = vld [vmem:[%s419 + $0x20] sm:$0xff]
        %v432 = vld [vmem:[%s419 + $0x28] sm:$0xff]
        %v433 = vld [vmem:[#allocation7] sm:$0xff]
        %v434 = vld [vmem:[#allocation7 + $0x8] sm:$0xff]
        %v435 = vld [vmem:[#allocation7 + $0x10] sm:$0xff]
        %v436 = vld [vmem:[#allocation7 + $0x18] sm:$0xff]
        %v437 = vld [vmem:[#allocation7 + $0x20] sm:$0xff]
        %v438 = vld [vmem:[#allocation7 + $0x28] sm:$0xff]
        %v439 = vld [vmem:[#allocation7 + $0x30] sm:$0xff]
        %v440 = vld [vmem:[#allocation7 + $0x38] sm:$0xff]
        %v441 = vld [vmem:[#allocation7 + $0x40] sm:$0xff]
        %v442 = vld [vmem:[#allocation7 + $0x48] sm:$0xff]
        %v443 = vld [vmem:[#allocation7 + $0x50] sm:$0xff]
        %v444 = vld [vmem:[#allocation7 + $0x58] sm:$0xff]
        %v445 = vld [vmem:[#allocation7 + $0x60] sm:$0xff]
        %v446 = vld [vmem:[#allocation7 + $0x68] sm:$0xff]
        %v447 = vld [vmem:[#allocation7 + $0x70] sm:$0xff]
        %v448 = vld [vmem:[#allocation7 + $0x78] sm:$0xff]
        %v449 = vld [vmem:[#allocation7 + $0x80] sm:$0xff]
        %v450 = vld [vmem:[#allocation7 + $0x88] sm:$0xff]
        %v451 = vld [vmem:[#allocation7 + $0x90] sm:$0xff]
        %v452 = vld [vmem:[#allocation7 + $0x98] sm:$0xff]
        %v453 = vld [vmem:[#allocation7 + $0xa0] sm:$0xff]
        %v454 = vld [vmem:[#allocation7 + $0xa8] sm:$0xff]
        %v455 = vld [vmem:[#allocation7 + $0xb0] sm:$0xff]
        %v456 = vld [vmem:[#allocation7 + $0xb8] sm:$0xff]
        %v457 = vld [vmem:[#allocation7 + $0xc0] sm:$0xff]
        %v458 = vld [vmem:[#allocation7 + $0xc8] sm:$0xff]
        %v459 = vld [vmem:[#allocation7 + $0xd0] sm:$0xff]
        %v460 = vld [vmem:[#allocation7 + $0xd8] sm:$0xff]
        %v461 = vld [vmem:[#allocation7 + $0xe0] sm:$0xff]
        %v462 = vld [vmem:[#allocation7 + $0xe8] sm:$0xff]
        %v463 = vld [vmem:[#allocation7 + $0xf0] sm:$0xff]
        %v464 = vld [vmem:[#allocation7 + $0xf8] sm:$0xff]
        %v465 = vld [vmem:[#allocation7 + $0x100] sm:$0xff]
        %v466 = vld [vmem:[#allocation7 + $0x108] sm:$0xff]
        %v467 = vld [vmem:[#allocation7 + $0x110] sm:$0xff]
        %v468 = vld [vmem:[#allocation7 + $0x118] sm:$0xff]
        %v469 = vld [vmem:[#allocation7 + $0x120] sm:$0xff]
        %v470 = vld [vmem:[#allocation7 + $0x128] sm:$0xff]
        %v471 = vld [vmem:[#allocation7 + $0x130] sm:$0xff]
        %v472 = vld [vmem:[#allocation7 + $0x138] sm:$0xff]
        %v473 = vld [vmem:[#allocation7 + $0x140] sm:$0xff]
        %v474 = vld [vmem:[#allocation7 + $0x148] sm:$0xff]
        %v475 = vld [vmem:[#allocation7 + $0x150] sm:$0xff]
        %v476 = vld [vmem:[#allocation7 + $0x158] sm:$0xff]
        %v477 = vld [vmem:[#allocation7 + $0x160] sm:$0xff]
        %v478 = vld [vmem:[#allocation7 + $0x168] sm:$0xff]
        %v479 = vld [vmem:[#allocation7 + $0x170] sm:$0xff]
        %v480 = vld [vmem:[#allocation7 + $0x178] sm:$0xff]
        %v481 = vld [vmem:[#allocation7 + $0x180] sm:$0xff]
        %v482 = vld [vmem:[#allocation7 + $0x188] sm:$0xff]
        %v483 = vld [vmem:[#allocation7 + $0x190] sm:$0xff]
        %v484 = vld [vmem:[#allocation7 + $0x198] sm:$0xff]
        %v485 = vld [vmem:[#allocation7 + $0x1a0] sm:$0xff]
        %v486 = vld [vmem:[#allocation7 + $0x1a8] sm:$0xff]
        %v487 = vld [vmem:[#allocation7 + $0x1b0] sm:$0xff]
        %v488 = vld [vmem:[#allocation7 + $0x1b8] sm:$0xff]
        %v489 = vld [vmem:[#allocation7 + $0x1c0] sm:$0xff]
        %v490 = vld [vmem:[#allocation7 + $0x1c8] sm:$0xff]
        %v491 = vld [vmem:[#allocation7 + $0x1d0] sm:$0xff]
        %v492 = vld [vmem:[#allocation7 + $0x1d8] sm:$0xff]
        %v493 = vld [vmem:[#allocation7 + $0x1e0] sm:$0xff]
        %v494 = vld [vmem:[#allocation7 + $0x1e8] sm:$0xff]
        %v495 = vld [vmem:[#allocation7 + $0x1f0] sm:$0xff]
        %v496 = vld [vmem:[#allocation7 + $0x1f8] sm:$0xff]
        %v497 = vld [vmem:[#allocation7 + $0x200] sm:$0xff]
        %v498 = vld [vmem:[#allocation7 + $0x208] sm:$0xff]
        %v499 = vld [vmem:[#allocation7 + $0x210] sm:$0xff]
        %v500 = vld [vmem:[#allocation7 + $0x218] sm:$0xff]
        %v501 = vld [vmem:[#allocation7 + $0x220] sm:$0xff]
        %v502 = vld [vmem:[#allocation7 + $0x228] sm:$0xff]
        %v503 = vld [vmem:[#allocation7 + $0x230] sm:$0xff]
        %v504 = vld [vmem:[#allocation7 + $0x238] sm:$0xff]
        %v505 = vld [vmem:[#allocation7 + $0x240] sm:$0xff]
        %v506 = vld [vmem:[#allocation7 + $0x248] sm:$0xff]
        %v507 = vld [vmem:[#allocation7 + $0x250] sm:$0xff]
        %v508 = vld [vmem:[#allocation7 + $0x258] sm:$0xff]
        %v509 = vld [vmem:[#allocation7 + $0x260] sm:$0xff]
        %v510 = vld [vmem:[#allocation7 + $0x268] sm:$0xff]
        %v511 = vld [vmem:[#allocation7 + $0x270] sm:$0xff]
        %v512 = vld [vmem:[#allocation7 + $0x278] sm:$0xff]
        %v513 = vld [vmem:[#allocation7 + $0x280] sm:$0xff]
        %v514 = vld [vmem:[#allocation7 + $0x288] sm:$0xff]
        %v515 = vld [vmem:[#allocation7 + $0x290] sm:$0xff]
        %v516 = vld [vmem:[#allocation7 + $0x298] sm:$0xff]
        %v517 = vld [vmem:[#allocation7 + $0x2a0] sm:$0xff]
        %v518 = vld [vmem:[#allocation7 + $0x2a8] sm:$0xff]
        %v519 = vld [vmem:[#allocation7 + $0x2b0] sm:$0xff]
        %v520 = vld [vmem:[#allocation7 + $0x2b8] sm:$0xff]
        %v521 = vld [vmem:[#allocation7 + $0x2c0] sm:$0xff]
        %v522 = vld [vmem:[#allocation7 + $0x2c8] sm:$0xff]
        %v523 = vld [vmem:[#allocation7 + $0x2d0] sm:$0xff]
        %v524 = vld [vmem:[#allocation7 + $0x2d8] sm:$0xff]
        %v525 = vld [vmem:[#allocation7 + $0x2e0] sm:$0xff]
        %v526 = vld [vmem:[#allocation7 + $0x2e8] sm:$0xff]
        %v527 = vld [vmem:[#allocation7 + $0x2f0] sm:$0xff]
        %v528 = vld [vmem:[#allocation7 + $0x2f8] sm:$0xff]
        %v529 = vld [vmem:[#allocation7 + $0x300] sm:$0xff]
        %v530 = vld [vmem:[#allocation7 + $0x308] sm:$0xff]
        %v531 = vld [vmem:[#allocation7 + $0x310] sm:$0xff]
        %v532 = vld [vmem:[#allocation7 + $0x318] sm:$0xff]
        %v533 = vld [vmem:[#allocation7 + $0x320] sm:$0xff]
        %v534 = vld [vmem:[#allocation7 + $0x328] sm:$0xff]
        %v535 = vld [vmem:[#allocation7 + $0x330] sm:$0xff]
        %v536 = vld [vmem:[#allocation7 + $0x338] sm:$0xff]
        %v537 = vld [vmem:[#allocation7 + $0x340] sm:$0xff]
        %v538 = vld [vmem:[#allocation7 + $0x348] sm:$0xff]
        %v539 = vld [vmem:[#allocation7 + $0x350] sm:$0xff]
        %v540 = vld [vmem:[#allocation7 + $0x358] sm:$0xff]
        %v541 = vld [vmem:[#allocation7 + $0x360] sm:$0xff]
        %v542 = vld [vmem:[#allocation7 + $0x368] sm:$0xff]
        %v543 = vld [vmem:[#allocation7 + $0x370] sm:$0xff]
        %v544 = vld [vmem:[#allocation7 + $0x378] sm:$0xff]
        %v545 = vld [vmem:[#allocation7 + $0x380] sm:$0xff]
        %v546 = vld [vmem:[#allocation7 + $0x388] sm:$0xff]
        %v547 = vld [vmem:[#allocation7 + $0x390] sm:$0xff]
        %v548 = vld [vmem:[#allocation7 + $0x398] sm:$0xff]
        %v549 = vld [vmem:[#allocation7 + $0x3a0] sm:$0xff]
        %v550 = vld [vmem:[#allocation7 + $0x3a8] sm:$0xff]
        %v551 = vld [vmem:[#allocation7 + $0x3b0] sm:$0xff]
        %v552 = vld [vmem:[#allocation7 + $0x3b8] sm:$0xff]
        %v553 = vld [vmem:[#allocation7 + $0x3c0] sm:$0xff]
        %v554 = vld [vmem:[#allocation7 + $0x3c8] sm:$0xff]
        %v555 = vld [vmem:[#allocation7 + $0x3d0] sm:$0xff]
        %v556 = vld [vmem:[#allocation7 + $0x3d8] sm:$0xff]
        %v557 = vld [vmem:[#allocation7 + $0x3e0] sm:$0xff]
        %v558 = vld [vmem:[#allocation7 + $0x3e8] sm:$0xff]
        %v559 = vld [vmem:[#allocation7 + $0x3f0] sm:$0xff]
        %v560 = vld [vmem:[#allocation7 + $0x3f8] sm:$0xff]
        %v561 = vld [vmem:[#allocation7 + $0x400] sm:$0xff]
        %v562 = vld [vmem:[#allocation7 + $0x408] sm:$0xff]
        %v563 = vld [vmem:[#allocation7 + $0x410] sm:$0xff]
        %v564 = vld [vmem:[#allocation7 + $0x418] sm:$0xff]
        %v565 = vld [vmem:[#allocation7 + $0x420] sm:$0xff]
        %v566 = vld [vmem:[#allocation7 + $0x428] sm:$0xff]
        %v567 = vld [vmem:[#allocation7 + $0x430] sm:$0xff]
        %v568 = vld [vmem:[#allocation7 + $0x438] sm:$0xff]
        %v569 = vld [vmem:[#allocation7 + $0x440] sm:$0xff]
        %v570 = vld [vmem:[#allocation7 + $0x448] sm:$0xff]
        %v571 = vld [vmem:[#allocation7 + $0x450] sm:$0xff]
        %v572 = vld [vmem:[#allocation7 + $0x458] sm:$0xff]
        %v573 = vld [vmem:[#allocation7 + $0x460] sm:$0xff]
        %v574 = vld [vmem:[#allocation7 + $0x468] sm:$0xff]
        %v575 = vld [vmem:[#allocation7 + $0x470] sm:$0xff]
        %v576 = vld [vmem:[#allocation7 + $0x478] sm:$0xff]
        %v577 = vld [vmem:[#allocation7 + $0x480] sm:$0xff]
        %v578 = vld [vmem:[#allocation7 + $0x488] sm:$0xff]
        %v579 = vld [vmem:[#allocation7 + $0x490] sm:$0xff]
        %v580 = vld [vmem:[#allocation7 + $0x498] sm:$0xff]
        %v581 = vld [vmem:[#allocation7 + $0x4a0] sm:$0xff]
        %v582 = vld [vmem:[#allocation7 + $0x4a8] sm:$0xff]
        %v583 = vld [vmem:[#allocation7 + $0x4b0] sm:$0xff]
        %v584 = vld [vmem:[#allocation7 + $0x4b8] sm:$0xff]
        %v585 = vld [vmem:[#allocation7 + $0x4c0] sm:$0xff]
        %v586 = vld [vmem:[#allocation7 + $0x4c8] sm:$0xff]
        %v587 = vld [vmem:[#allocation7 + $0x4d0] sm:$0xff]
        %v588 = vld [vmem:[#allocation7 + $0x4d8] sm:$0xff]
        %v589 = vld [vmem:[#allocation7 + $0x4e0] sm:$0xff]
        %v590 = vld [vmem:[#allocation7 + $0x4e8] sm:$0xff]
        %v591 = vld [vmem:[#allocation7 + $0x4f0] sm:$0xff]
        %v592 = vld [vmem:[#allocation7 + $0x4f8] sm:$0xff]
        %v593 = vld [vmem:[#allocation7 + $0x500] sm:$0xff]
        %v594 = vld [vmem:[#allocation7 + $0x508] sm:$0xff]
        %v595 = vld [vmem:[#allocation7 + $0x510] sm:$0xff]
        %v596 = vld [vmem:[#allocation7 + $0x518] sm:$0xff]
        %v597 = vld [vmem:[#allocation7 + $0x520] sm:$0xff]
        %v598 = vld [vmem:[#allocation7 + $0x528] sm:$0xff]
        %v599 = vld [vmem:[#allocation7 + $0x530] sm:$0xff]
        %v600 = vld [vmem:[#allocation7 + $0x538] sm:$0xff]
        %v601 = vld [vmem:[#allocation7 + $0x540] sm:$0xff]
        %v602 = vld [vmem:[#allocation7 + $0x548] sm:$0xff]
        %v603 = vld [vmem:[#allocation7 + $0x550] sm:$0xff]
        %v604 = vld [vmem:[#allocation7 + $0x558] sm:$0xff]
        %v605 = vld [vmem:[#allocation7 + $0x560] sm:$0xff]
        %v606 = vld [vmem:[#allocation7 + $0x568] sm:$0xff]
        %v607 = vld [vmem:[#allocation7 + $0x570] sm:$0xff]
        %v608 = vld [vmem:[#allocation7 + $0x578] sm:$0xff]
        %v609 = vld [vmem:[#allocation7 + $0x580] sm:$0xff]
        %v610 = vld [vmem:[#allocation7 + $0x588] sm:$0xff]
        %v611 = vld [vmem:[#allocation7 + $0x590] sm:$0xff]
        %v612 = vld [vmem:[#allocation7 + $0x598] sm:$0xff]
        %v613 = vld [vmem:[#allocation7 + $0x5a0] sm:$0xff]
        %v614 = vld [vmem:[#allocation7 + $0x5a8] sm:$0xff]
        %v615 = vld [vmem:[#allocation7 + $0x5b0] sm:$0xff]
        %v616 = vld [vmem:[#allocation7 + $0x5b8] sm:$0xff]
        %v617 = vld [vmem:[#allocation7 + $0x5c0] sm:$0xff]
        %v618 = vld [vmem:[#allocation7 + $0x5c8] sm:$0xff]
        %v619 = vld [vmem:[#allocation7 + $0x5d0] sm:$0xff]
        %v620 = vld [vmem:[#allocation7 + $0x5d8] sm:$0xff]
        %v621 = vld [vmem:[#allocation7 + $0x5e0] sm:$0xff]
        %v622 = vld [vmem:[#allocation7 + $0x5e8] sm:$0xff]
        %v623 = vld [vmem:[#allocation7 + $0x5f0] sm:$0xff]
        %v624 = vld [vmem:[#allocation7 + $0x5f8] sm:$0xff]
        %v625 = vld [vmem:[#allocation7 + $0x600] sm:$0xff]
        %v626 = vld [vmem:[#allocation7 + $0x608] sm:$0xff]
        %v627 = vld [vmem:[#allocation7 + $0x610] sm:$0xff]
        %v628 = vld [vmem:[#allocation7 + $0x618] sm:$0xff]
        %v629 = vld [vmem:[#allocation7 + $0x620] sm:$0xff]
        %v630 = vld [vmem:[#allocation7 + $0x628] sm:$0xff]
        %v631 = vld [vmem:[#allocation7 + $0x630] sm:$0xff]
        %v632 = vld [vmem:[#allocation7 + $0x638] sm:$0xff]
        %v633 = vld [vmem:[#allocation7 + $0x640] sm:$0xff]
        %v634 = vld [vmem:[#allocation7 + $0x648] sm:$0xff]
        %v635 = vld [vmem:[#allocation7 + $0x650] sm:$0xff]
        %v636 = vld [vmem:[#allocation7 + $0x658] sm:$0xff]
        %v637 = vld [vmem:[#allocation7 + $0x660] sm:$0xff]
        %v638 = vld [vmem:[#allocation7 + $0x668] sm:$0xff]
        %v639 = vld [vmem:[#allocation7 + $0x670] sm:$0xff]
        %v640 = vld [vmem:[#allocation7 + $0x678] sm:$0xff]
        %v641 = vld [vmem:[#allocation7 + $0x680] sm:$0xff]
        %v642 = vld [vmem:[#allocation7 + $0x688] sm:$0xff]
        %v643 = vld [vmem:[#allocation7 + $0x690] sm:$0xff]
        %v644 = vld [vmem:[#allocation7 + $0x698] sm:$0xff]
        %v645 = vld [vmem:[#allocation7 + $0x6a0] sm:$0xff]
        %v646 = vld [vmem:[#allocation7 + $0x6a8] sm:$0xff]
        %v647 = vld [vmem:[#allocation7 + $0x6b0] sm:$0xff]
        %v648 = vld [vmem:[#allocation7 + $0x6b8] sm:$0xff]
        %v649 = vld [vmem:[#allocation7 + $0x6c0] sm:$0xff]
        %v650 = vld [vmem:[#allocation7 + $0x6c8] sm:$0xff]
        %v651 = vld [vmem:[#allocation7 + $0x6d0] sm:$0xff]
        %v652 = vld [vmem:[#allocation7 + $0x6d8] sm:$0xff]
        %v653 = vld [vmem:[#allocation7 + $0x6e0] sm:$0xff]
        %v654 = vld [vmem:[#allocation7 + $0x6e8] sm:$0xff]
        %v655 = vld [vmem:[#allocation7 + $0x6f0] sm:$0xff]
        %v656 = vld [vmem:[#allocation7 + $0x6f8] sm:$0xff]
        %v657 = vld [vmem:[#allocation7 + $0x700] sm:$0xff]
        %v658 = vld [vmem:[#allocation7 + $0x708] sm:$0xff]
        %v659 = vld [vmem:[#allocation7 + $0x710] sm:$0xff]
        %v660 = vld [vmem:[#allocation7 + $0x718] sm:$0xff]
        %v661 = vld [vmem:[#allocation7 + $0x720] sm:$0xff]
        %v662 = vld [vmem:[#allocation7 + $0x728] sm:$0xff]
        %v663 = vld [vmem:[#allocation7 + $0x730] sm:$0xff]
        %v664 = vld [vmem:[#allocation7 + $0x738] sm:$0xff]
        %v665 = vld [vmem:[#allocation7 + $0x740] sm:$0xff]
        %v666 = vld [vmem:[#allocation7 + $0x748] sm:$0xff]
        %v667 = vld [vmem:[#allocation7 + $0x750] sm:$0xff]
        %v668 = vld [vmem:[#allocation7 + $0x758] sm:$0xff]
        %v669 = vld [vmem:[#allocation7 + $0x760] sm:$0xff]
        %v670 = vld [vmem:[#allocation7 + $0x768] sm:$0xff]
        %v671 = vld [vmem:[#allocation7 + $0x770] sm:$0xff]
        %v672 = vld [vmem:[#allocation7 + $0x778] sm:$0xff]
        %v673 = vld [vmem:[#allocation7 + $0x780] sm:$0xff]
        %v674 = vld [vmem:[#allocation7 + $0x788] sm:$0xff]
        %v675 = vld [vmem:[#allocation7 + $0x790] sm:$0xff]
        %v676 = vld [vmem:[#allocation7 + $0x798] sm:$0xff]
        %v677 = vld [vmem:[#allocation7 + $0x7a0] sm:$0xff]
        %v678 = vld [vmem:[#allocation7 + $0x7a8] sm:$0xff]
        %v679 = vld [vmem:[#allocation7 + $0x7b0] sm:$0xff]
        %v680 = vld [vmem:[#allocation7 + $0x7b8] sm:$0xff]
        %v681 = vld [vmem:[#allocation7 + $0x7c0] sm:$0xff]
        %v682 = vld [vmem:[#allocation7 + $0x7c8] sm:$0xff]
        %v683 = vld [vmem:[#allocation7 + $0x7d0] sm:$0xff]
        %v684 = vld [vmem:[#allocation7 + $0x7d8] sm:$0xff]
        %v685 = vld [vmem:[#allocation7 + $0x7e0] sm:$0xff]
        %v686 = vld [vmem:[#allocation7 + $0x7e8] sm:$0xff]
        %v687 = vld [vmem:[#allocation7 + $0x7f0] sm:$0xff]
        %v688 = vld [vmem:[#allocation7 + $0x7f8] sm:$0xff]
        %v689 = vld [vmem:[#allocation7 + $0x800] sm:$0xff]
        %v690 = vld [vmem:[#allocation7 + $0x808] sm:$0xff]
        %v691 = vld [vmem:[#allocation7 + $0x810] sm:$0xff]
        %v692 = vld [vmem:[#allocation7 + $0x818] sm:$0xff]
        %v693 = vld [vmem:[#allocation7 + $0x820] sm:$0xff]
        %v694 = vld [vmem:[#allocation7 + $0x828] sm:$0xff]
        %v695 = vld [vmem:[#allocation7 + $0x830] sm:$0xff]
        %v696 = vld [vmem:[#allocation7 + $0x838] sm:$0xff]
        %v697 = vld [vmem:[#allocation7 + $0x840] sm:$0xff]
        %v698 = vld [vmem:[#allocation7 + $0x848] sm:$0xff]
        %v699 = vld [vmem:[#allocation7 + $0x850] sm:$0xff]
        %v700 = vld [vmem:[#allocation7 + $0x858] sm:$0xff]
        %v701 = vld [vmem:[#allocation7 + $0x860] sm:$0xff]
        %v702 = vld [vmem:[#allocation7 + $0x868] sm:$0xff]
        %v703 = vld [vmem:[#allocation7 + $0x870] sm:$0xff]
        %v704 = vld [vmem:[#allocation7 + $0x878] sm:$0xff]
        %v705 = vld [vmem:[#allocation7 + $0x880] sm:$0xff]
        %v706 = vld [vmem:[#allocation7 + $0x888] sm:$0xff]
        %v707 = vld [vmem:[#allocation7 + $0x890] sm:$0xff]
        %v708 = vld [vmem:[#allocation7 + $0x898] sm:$0xff]
        %v709 = vld [vmem:[#allocation7 + $0x8a0] sm:$0xff]
        %v710 = vld [vmem:[#allocation7 + $0x8a8] sm:$0xff]
        %v711 = vld [vmem:[#allocation7 + $0x8b0] sm:$0xff]
        %v712 = vld [vmem:[#allocation7 + $0x8b8] sm:$0xff]
        %v713 = vld [vmem:[#allocation7 + $0x8c0] sm:$0xff]
        %v714 = vld [vmem:[#allocation7 + $0x8c8] sm:$0xff]
        %v715 = vld [vmem:[#allocation7 + $0x8d0] sm:$0xff]
        %v716 = vld [vmem:[#allocation7 + $0x8d8] sm:$0xff]
        %v717 = vld [vmem:[#allocation7 + $0x8e0] sm:$0xff]
        %v718 = vld [vmem:[#allocation7 + $0x8e8] sm:$0xff]
        %v719 = vld [vmem:[#allocation7 + $0x8f0] sm:$0xff]
        %v720 = vld [vmem:[#allocation7 + $0x8f8] sm:$0xff]
        %v727 = vunpack.c.l.b16 %v427
        %v728 = vunpack.c.h.b16 %v427
        %v729 = vunpack.c.l.b16 %v428
        %v730 = vunpack.c.h.b16 %v428
        %v731 = vunpack.c.l.b16 %v429
        %v732 = vunpack.c.h.b16 %v429
        %v733 = vunpack.c.l.b16 %v430
        %v734 = vunpack.c.h.b16 %v430
        %v735 = vunpack.c.l.b16 %v431
        %v736 = vunpack.c.h.b16 %v431
        %v737 = vunpack.c.l.b16 %v432
        %v738 = vunpack.c.h.b16 %v432
        %v739 = vpack.c.b16 %v733, %v727
        %v740 = vpack.c.b16 %v734, %v728
        %v741 = vpack.c.b16 %v735, %v729
        %v742 = vpack.c.b16 %v736, %v730
        %v743 = vpack.c.b16 %v737, %v731
        %v744 = vpack.c.b16 %v738, %v732
        %v1039 = vunpack.c.l.b16 %v433
        %v1040 = vunpack.c.h.b16 %v433
        %v1041 = vunpack.c.l.b16 %v434
        %v1042 = vunpack.c.h.b16 %v434
        %v1043 = vunpack.c.l.b16 %v435
        %v1044 = vunpack.c.h.b16 %v435
        %v1045 = vunpack.c.l.b16 %v436
        %v1046 = vunpack.c.h.b16 %v436
        %v1047 = vunpack.c.l.b16 %v437
        %v1048 = vunpack.c.h.b16 %v437
        %v1049 = vunpack.c.l.b16 %v438
        %v1050 = vunpack.c.h.b16 %v438
        %v1051 = vunpack.c.l.b16 %v439
        %v1052 = vunpack.c.h.b16 %v439
        %v1053 = vunpack.c.l.b16 %v440
        %v1054 = vunpack.c.h.b16 %v440
        %v1055 = vunpack.c.l.b16 %v441
        %v1056 = vunpack.c.h.b16 %v441
        %v1057 = vunpack.c.l.b16 %v442
        %v1058 = vunpack.c.h.b16 %v442
        %v1059 = vunpack.c.l.b16 %v443
        %v1060 = vunpack.c.h.b16 %v443
        %v1061 = vunpack.c.l.b16 %v444
        %v1062 = vunpack.c.h.b16 %v444
        %v1063 = vunpack.c.l.b16 %v445
        %v1064 = vunpack.c.h.b16 %v445
        %v1065 = vunpack.c.l.b16 %v446
        %v1066 = vunpack.c.h.b16 %v446
        %v1067 = vunpack.c.l.b16 %v447
        %v1068 = vunpack.c.h.b16 %v447
        %v1069 = vunpack.c.l.b16 %v448
        %v1070 = vunpack.c.h.b16 %v448
        %v1071 = vunpack.c.l.b16 %v449
        %v1072 = vunpack.c.h.b16 %v449
        %v1073 = vunpack.c.l.b16 %v450
        %v1074 = vunpack.c.h.b16 %v450
        %v1075 = vunpack.c.l.b16 %v451
        %v1076 = vunpack.c.h.b16 %v451
        %v1077 = vunpack.c.l.b16 %v452
        %v1078 = vunpack.c.h.b16 %v452
        %v1079 = vunpack.c.l.b16 %v453
        %v1080 = vunpack.c.h.b16 %v453
        %v1081 = vunpack.c.l.b16 %v454
        %v1082 = vunpack.c.h.b16 %v454
        %v1083 = vunpack.c.l.b16 %v455
        %v1084 = vunpack.c.h.b16 %v455
        %v1085 = vunpack.c.l.b16 %v456
        %v1086 = vunpack.c.h.b16 %v456
        %v1087 = vunpack.c.l.b16 %v457
        %v1088 = vunpack.c.h.b16 %v457
        %v1089 = vunpack.c.l.b16 %v458
        %v1090 = vunpack.c.h.b16 %v458
        %v1091 = vunpack.c.l.b16 %v459
        %v1092 = vunpack.c.h.b16 %v459
        %v1093 = vunpack.c.l.b16 %v460
        %v1094 = vunpack.c.h.b16 %v460
        %v1095 = vunpack.c.l.b16 %v461
        %v1096 = vunpack.c.h.b16 %v461
        %v1097 = vunpack.c.l.b16 %v462
        %v1098 = vunpack.c.h.b16 %v462
        %v1099 = vunpack.c.l.b16 %v463
        %v1100 = vunpack.c.h.b16 %v463
        %v1101 = vunpack.c.l.b16 %v464
        %v1102 = vunpack.c.h.b16 %v464
        %v1103 = vunpack.c.l.b16 %v465
        %v1104 = vunpack.c.h.b16 %v465
        %v1105 = vunpack.c.l.b16 %v466
        %v1106 = vunpack.c.h.b16 %v466
        %v1107 = vunpack.c.l.b16 %v467
        %v1108 = vunpack.c.h.b16 %v467
        %v1109 = vunpack.c.l.b16 %v468
        %v1110 = vunpack.c.h.b16 %v468
        %v1111 = vunpack.c.l.b16 %v469
        %v1112 = vunpack.c.h.b16 %v469
        %v1113 = vunpack.c.l.b16 %v470
        %v1114 = vunpack.c.h.b16 %v470
        %v1115 = vunpack.c.l.b16 %v471
        %v1116 = vunpack.c.h.b16 %v471
        %v1117 = vunpack.c.l.b16 %v472
        %v1118 = vunpack.c.h.b16 %v472
        %v1119 = vunpack.c.l.b16 %v473
        %v1120 = vunpack.c.h.b16 %v473
        %v1121 = vunpack.c.l.b16 %v474
        %v1122 = vunpack.c.h.b16 %v474
        %v1123 = vunpack.c.l.b16 %v475
        %v1124 = vunpack.c.h.b16 %v475
        %v1125 = vunpack.c.l.b16 %v476
        %v1126 = vunpack.c.h.b16 %v476
        %v1127 = vunpack.c.l.b16 %v477
        %v1128 = vunpack.c.h.b16 %v477
        %v1129 = vunpack.c.l.b16 %v478
        %v1130 = vunpack.c.h.b16 %v478
        %v1131 = vunpack.c.l.b16 %v479
        %v1132 = vunpack.c.h.b16 %v479
        %v1133 = vunpack.c.l.b16 %v480
        %v1134 = vunpack.c.h.b16 %v480
        %v1135 = vunpack.c.l.b16 %v481
        %v1136 = vunpack.c.h.b16 %v481
        %v1137 = vunpack.c.l.b16 %v482
        %v1138 = vunpack.c.h.b16 %v482
        %v1139 = vunpack.c.l.b16 %v483
        %v1140 = vunpack.c.h.b16 %v483
        %v1141 = vunpack.c.l.b16 %v484
        %v1142 = vunpack.c.h.b16 %v484
        %v1143 = vunpack.c.l.b16 %v485
        %v1144 = vunpack.c.h.b16 %v485
        %v1145 = vunpack.c.l.b16 %v486
        %v1146 = vunpack.c.h.b16 %v486
        %v1147 = vunpack.c.l.b16 %v487
        %v1148 = vunpack.c.h.b16 %v487
        %v1149 = vunpack.c.l.b16 %v488
        %v1150 = vunpack.c.h.b16 %v488
        %v1151 = vunpack.c.l.b16 %v489
        %v1152 = vunpack.c.h.b16 %v489
        %v1153 = vunpack.c.l.b16 %v490
        %v1154 = vunpack.c.h.b16 %v490
        %v1155 = vunpack.c.l.b16 %v491
        %v1156 = vunpack.c.h.b16 %v491
        %v1157 = vunpack.c.l.b16 %v492
        %v1158 = vunpack.c.h.b16 %v492
        %v1159 = vunpack.c.l.b16 %v493
        %v1160 = vunpack.c.h.b16 %v493
        %v1161 = vunpack.c.l.b16 %v494
        %v1162 = vunpack.c.h.b16 %v494
        %v1163 = vunpack.c.l.b16 %v495
        %v1164 = vunpack.c.h.b16 %v495
        %v1165 = vunpack.c.l.b16 %v496
        %v1166 = vunpack.c.h.b16 %v496
        %v1167 = vunpack.c.l.b16 %v497
        %v1168 = vunpack.c.h.b16 %v497
        %v1169 = vunpack.c.l.b16 %v498
        %v1170 = vunpack.c.h.b16 %v498
        %v1171 = vunpack.c.l.b16 %v499
        %v1172 = vunpack.c.h.b16 %v499
        %v1173 = vunpack.c.l.b16 %v500
        %v1174 = vunpack.c.h.b16 %v500
        %v1175 = vunpack.c.l.b16 %v501
        %v1176 = vunpack.c.h.b16 %v501
        %v1177 = vunpack.c.l.b16 %v502
        %v1178 = vunpack.c.h.b16 %v502
        %v1179 = vunpack.c.l.b16 %v503
        %v1180 = vunpack.c.h.b16 %v503
        %v1181 = vunpack.c.l.b16 %v504
        %v1182 = vunpack.c.h.b16 %v504
        %v1183 = vunpack.c.l.b16 %v505
        %v1184 = vunpack.c.h.b16 %v505
        %v1185 = vunpack.c.l.b16 %v506
        %v1186 = vunpack.c.h.b16 %v506
        %v1187 = vunpack.c.l.b16 %v507
        %v1188 = vunpack.c.h.b16 %v507
        %v1189 = vunpack.c.l.b16 %v508
        %v1190 = vunpack.c.h.b16 %v508
        %v1191 = vunpack.c.l.b16 %v509
        %v1192 = vunpack.c.h.b16 %v509
        %v1193 = vunpack.c.l.b16 %v510
        %v1194 = vunpack.c.h.b16 %v510
        %v1195 = vunpack.c.l.b16 %v511
        %v1196 = vunpack.c.h.b16 %v511
        %v1197 = vunpack.c.l.b16 %v512
        %v1198 = vunpack.c.h.b16 %v512
        %v1199 = vunpack.c.l.b16 %v513
        %v1200 = vunpack.c.h.b16 %v513
        %v1201 = vunpack.c.l.b16 %v514
        %v1202 = vunpack.c.h.b16 %v514
        %v1203 = vunpack.c.l.b16 %v515
        %v1204 = vunpack.c.h.b16 %v515
        %v1205 = vunpack.c.l.b16 %v516
        %v1206 = vunpack.c.h.b16 %v516
        %v1207 = vunpack.c.l.b16 %v517
        %v1208 = vunpack.c.h.b16 %v517
        %v1209 = vunpack.c.l.b16 %v518
        %v1210 = vunpack.c.h.b16 %v518
        %v1211 = vunpack.c.l.b16 %v519
        %v1212 = vunpack.c.h.b16 %v519
        %v1213 = vunpack.c.l.b16 %v520
        %v1214 = vunpack.c.h.b16 %v520
        %v1215 = vunpack.c.l.b16 %v521
        %v1216 = vunpack.c.h.b16 %v521
        %v1217 = vunpack.c.l.b16 %v522
        %v1218 = vunpack.c.h.b16 %v522
        %v1219 = vunpack.c.l.b16 %v523
        %v1220 = vunpack.c.h.b16 %v523
        %v1221 = vunpack.c.l.b16 %v524
        %v1222 = vunpack.c.h.b16 %v524
        %v1223 = vunpack.c.l.b16 %v525
        %v1224 = vunpack.c.h.b16 %v525
        %v1225 = vunpack.c.l.b16 %v526
        %v1226 = vunpack.c.h.b16 %v526
        %v1227 = vunpack.c.l.b16 %v527
        %v1228 = vunpack.c.h.b16 %v527
        %v1229 = vunpack.c.l.b16 %v528
        %v1230 = vunpack.c.h.b16 %v528
        %v1231 = vunpack.c.l.b16 %v529
        %v1232 = vunpack.c.h.b16 %v529
        %v1233 = vunpack.c.l.b16 %v530
        %v1234 = vunpack.c.h.b16 %v530
        %v1235 = vunpack.c.l.b16 %v531
        %v1236 = vunpack.c.h.b16 %v531
        %v1237 = vunpack.c.l.b16 %v532
        %v1238 = vunpack.c.h.b16 %v532
        %v1239 = vunpack.c.l.b16 %v533
        %v1240 = vunpack.c.h.b16 %v533
        %v1241 = vunpack.c.l.b16 %v534
        %v1242 = vunpack.c.h.b16 %v534
        %v1243 = vunpack.c.l.b16 %v535
        %v1244 = vunpack.c.h.b16 %v535
        %v1245 = vunpack.c.l.b16 %v536
        %v1246 = vunpack.c.h.b16 %v536
        %v1247 = vunpack.c.l.b16 %v537
        %v1248 = vunpack.c.h.b16 %v537
        %v1249 = vunpack.c.l.b16 %v538
        %v1250 = vunpack.c.h.b16 %v538
        %v1251 = vunpack.c.l.b16 %v539
        %v1252 = vunpack.c.h.b16 %v539
        %v1253 = vunpack.c.l.b16 %v540
        %v1254 = vunpack.c.h.b16 %v540
        %v1255 = vunpack.c.l.b16 %v541
        %v1256 = vunpack.c.h.b16 %v541
        %v1257 = vunpack.c.l.b16 %v542
        %v1258 = vunpack.c.h.b16 %v542
        %v1259 = vunpack.c.l.b16 %v543
        %v1260 = vunpack.c.h.b16 %v543
        %v1261 = vunpack.c.l.b16 %v544
        %v1262 = vunpack.c.h.b16 %v544
        %v1263 = vunpack.c.l.b16 %v545
        %v1264 = vunpack.c.h.b16 %v545
        %v1265 = vunpack.c.l.b16 %v546
        %v1266 = vunpack.c.h.b16 %v546
        %v1267 = vunpack.c.l.b16 %v547
        %v1268 = vunpack.c.h.b16 %v547
        %v1269 = vunpack.c.l.b16 %v548
        %v1270 = vunpack.c.h.b16 %v548
        %v1271 = vunpack.c.l.b16 %v549
        %v1272 = vunpack.c.h.b16 %v549
        %v1273 = vunpack.c.l.b16 %v550
        %v1274 = vunpack.c.h.b16 %v550
        %v1275 = vunpack.c.l.b16 %v551
        %v1276 = vunpack.c.h.b16 %v551
        %v1277 = vunpack.c.l.b16 %v552
        %v1278 = vunpack.c.h.b16 %v552
        %v1279 = vunpack.c.l.b16 %v553
        %v1280 = vunpack.c.h.b16 %v553
        %v1281 = vunpack.c.l.b16 %v554
        %v1282 = vunpack.c.h.b16 %v554
        %v1283 = vunpack.c.l.b16 %v555
        %v1284 = vunpack.c.h.b16 %v555
        %v1285 = vunpack.c.l.b16 %v556
        %v1286 = vunpack.c.h.b16 %v556
        %v1287 = vunpack.c.l.b16 %v557
        %v1288 = vunpack.c.h.b16 %v557
        %v1289 = vunpack.c.l.b16 %v558
        %v1290 = vunpack.c.h.b16 %v558
        %v1291 = vunpack.c.l.b16 %v559
        %v1292 = vunpack.c.h.b16 %v559
        %v1293 = vunpack.c.l.b16 %v560
        %v1294 = vunpack.c.h.b16 %v560
        %v1295 = vunpack.c.l.b16 %v561
        %v1296 = vunpack.c.h.b16 %v561
        %v1297 = vunpack.c.l.b16 %v562
        %v1298 = vunpack.c.h.b16 %v562
        %v1299 = vunpack.c.l.b16 %v563
        %v1300 = vunpack.c.h.b16 %v563
        %v1301 = vunpack.c.l.b16 %v564
        %v1302 = vunpack.c.h.b16 %v564
        %v1303 = vunpack.c.l.b16 %v565
        %v1304 = vunpack.c.h.b16 %v565
        %v1305 = vunpack.c.l.b16 %v566
        %v1306 = vunpack.c.h.b16 %v566
        %v1307 = vunpack.c.l.b16 %v567
        %v1308 = vunpack.c.h.b16 %v567
        %v1309 = vunpack.c.l.b16 %v568
        %v1310 = vunpack.c.h.b16 %v568
        %v1311 = vunpack.c.l.b16 %v569
        %v1312 = vunpack.c.h.b16 %v569
        %v1313 = vunpack.c.l.b16 %v570
        %v1314 = vunpack.c.h.b16 %v570
        %v1315 = vunpack.c.l.b16 %v571
        %v1316 = vunpack.c.h.b16 %v571
        %v1317 = vunpack.c.l.b16 %v572
        %v1318 = vunpack.c.h.b16 %v572
        %v1319 = vunpack.c.l.b16 %v573
        %v1320 = vunpack.c.h.b16 %v573
        %v1321 = vunpack.c.l.b16 %v574
        %v1322 = vunpack.c.h.b16 %v574
        %v1323 = vunpack.c.l.b16 %v575
        %v1324 = vunpack.c.h.b16 %v575
        %v1325 = vunpack.c.l.b16 %v576
        %v1326 = vunpack.c.h.b16 %v576
        %v1327 = vunpack.c.l.b16 %v577
        %v1328 = vunpack.c.h.b16 %v577
        %v1329 = vunpack.c.l.b16 %v578
        %v1330 = vunpack.c.h.b16 %v578
        %v1331 = vunpack.c.l.b16 %v579
        %v1332 = vunpack.c.h.b16 %v579
        %v1333 = vunpack.c.l.b16 %v580
        %v1334 = vunpack.c.h.b16 %v580
        %v1335 = vunpack.c.l.b16 %v581
        %v1336 = vunpack.c.h.b16 %v581
        %v1337 = vunpack.c.l.b16 %v582
        %v1338 = vunpack.c.h.b16 %v582
        %v1339 = vunpack.c.l.b16 %v583
        %v1340 = vunpack.c.h.b16 %v583
        %v1341 = vunpack.c.l.b16 %v584
        %v1342 = vunpack.c.h.b16 %v584
        %v1343 = vunpack.c.l.b16 %v585
        %v1344 = vunpack.c.h.b16 %v585
        %v1345 = vunpack.c.l.b16 %v586
        %v1346 = vunpack.c.h.b16 %v586
        %v1347 = vunpack.c.l.b16 %v587
        %v1348 = vunpack.c.h.b16 %v587
        %v1349 = vunpack.c.l.b16 %v588
        %v1350 = vunpack.c.h.b16 %v588
        %v1351 = vunpack.c.l.b16 %v589
        %v1352 = vunpack.c.h.b16 %v589
        %v1353 = vunpack.c.l.b16 %v590
        %v1354 = vunpack.c.h.b16 %v590
        %v1355 = vunpack.c.l.b16 %v591
        %v1356 = vunpack.c.h.b16 %v591
        %v1357 = vunpack.c.l.b16 %v592
        %v1358 = vunpack.c.h.b16 %v592
        %v1359 = vunpack.c.l.b16 %v593
        %v1360 = vunpack.c.h.b16 %v593
        %v1361 = vunpack.c.l.b16 %v594
        %v1362 = vunpack.c.h.b16 %v594
        %v1363 = vunpack.c.l.b16 %v595
        %v1364 = vunpack.c.h.b16 %v595
        %v1365 = vunpack.c.l.b16 %v596
        %v1366 = vunpack.c.h.b16 %v596
        %v1367 = vunpack.c.l.b16 %v597
        %v1368 = vunpack.c.h.b16 %v597
        %v1369 = vunpack.c.l.b16 %v598
        %v1370 = vunpack.c.h.b16 %v598
        %v1371 = vunpack.c.l.b16 %v599
        %v1372 = vunpack.c.h.b16 %v599
        %v1373 = vunpack.c.l.b16 %v600
        %v1374 = vunpack.c.h.b16 %v600
        %v1375 = vunpack.c.l.b16 %v601
        %v1376 = vunpack.c.h.b16 %v601
        %v1377 = vunpack.c.l.b16 %v602
        %v1378 = vunpack.c.h.b16 %v602
        %v1379 = vunpack.c.l.b16 %v603
        %v1380 = vunpack.c.h.b16 %v603
        %v1381 = vunpack.c.l.b16 %v604
        %v1382 = vunpack.c.h.b16 %v604
        %v1383 = vunpack.c.l.b16 %v605
        %v1384 = vunpack.c.h.b16 %v605
        %v1385 = vunpack.c.l.b16 %v606
        %v1386 = vunpack.c.h.b16 %v606
        %v1387 = vunpack.c.l.b16 %v607
        %v1388 = vunpack.c.h.b16 %v607
        %v1389 = vunpack.c.l.b16 %v608
        %v1390 = vunpack.c.h.b16 %v608
        %v1391 = vunpack.c.l.b16 %v609
        %v1392 = vunpack.c.h.b16 %v609
        %v1393 = vunpack.c.l.b16 %v610
        %v1394 = vunpack.c.h.b16 %v610
        %v1395 = vunpack.c.l.b16 %v611
        %v1396 = vunpack.c.h.b16 %v611
        %v1397 = vunpack.c.l.b16 %v612
        %v1398 = vunpack.c.h.b16 %v612
        %v1399 = vunpack.c.l.b16 %v613
        %v1400 = vunpack.c.h.b16 %v613
        %v1401 = vunpack.c.l.b16 %v614
        %v1402 = vunpack.c.h.b16 %v614
        %v1403 = vunpack.c.l.b16 %v615
        %v1404 = vunpack.c.h.b16 %v615
        %v1405 = vunpack.c.l.b16 %v616
        %v1406 = vunpack.c.h.b16 %v616
        %v1407 = vunpack.c.l.b16 %v617
        %v1408 = vunpack.c.h.b16 %v617
        %v1409 = vunpack.c.l.b16 %v618
        %v1410 = vunpack.c.h.b16 %v618
        %v1411 = vunpack.c.l.b16 %v619
        %v1412 = vunpack.c.h.b16 %v619
        %v1413 = vunpack.c.l.b16 %v620
        %v1414 = vunpack.c.h.b16 %v620
        %v1415 = vunpack.c.l.b16 %v621
        %v1416 = vunpack.c.h.b16 %v621
        %v1417 = vunpack.c.l.b16 %v622
        %v1418 = vunpack.c.h.b16 %v622
        %v1419 = vunpack.c.l.b16 %v623
        %v1420 = vunpack.c.h.b16 %v623
        %v1421 = vunpack.c.l.b16 %v624
        %v1422 = vunpack.c.h.b16 %v624
        %v1423 = vunpack.c.l.b16 %v625
        %v1424 = vunpack.c.h.b16 %v625
        %v1425 = vunpack.c.l.b16 %v626
        %v1426 = vunpack.c.h.b16 %v626
        %v1427 = vunpack.c.l.b16 %v627
        %v1428 = vunpack.c.h.b16 %v627
        %v1429 = vunpack.c.l.b16 %v628
        %v1430 = vunpack.c.h.b16 %v628
        %v1431 = vunpack.c.l.b16 %v629
        %v1432 = vunpack.c.h.b16 %v629
        %v1433 = vunpack.c.l.b16 %v630
        %v1434 = vunpack.c.h.b16 %v630
        %v1435 = vunpack.c.l.b16 %v631
        %v1436 = vunpack.c.h.b16 %v631
        %v1437 = vunpack.c.l.b16 %v632
        %v1438 = vunpack.c.h.b16 %v632
        %v1439 = vunpack.c.l.b16 %v633
        %v1440 = vunpack.c.h.b16 %v633
        %v1441 = vunpack.c.l.b16 %v634
        %v1442 = vunpack.c.h.b16 %v634
        %v1443 = vunpack.c.l.b16 %v635
        %v1444 = vunpack.c.h.b16 %v635
        %v1445 = vunpack.c.l.b16 %v636
        %v1446 = vunpack.c.h.b16 %v636
        %v1447 = vunpack.c.l.b16 %v637
        %v1448 = vunpack.c.h.b16 %v637
        %v1449 = vunpack.c.l.b16 %v638
        %v1450 = vunpack.c.h.b16 %v638
        %v1451 = vunpack.c.l.b16 %v639
        %v1452 = vunpack.c.h.b16 %v639
        %v1453 = vunpack.c.l.b16 %v640
        %v1454 = vunpack.c.h.b16 %v640
        %v1455 = vunpack.c.l.b16 %v641
        %v1456 = vunpack.c.h.b16 %v641
        %v1457 = vunpack.c.l.b16 %v642
        %v1458 = vunpack.c.h.b16 %v642
        %v1459 = vunpack.c.l.b16 %v643
        %v1460 = vunpack.c.h.b16 %v643
        %v1461 = vunpack.c.l.b16 %v644
        %v1462 = vunpack.c.h.b16 %v644
        %v1463 = vunpack.c.l.b16 %v645
        %v1464 = vunpack.c.h.b16 %v645
        %v1465 = vunpack.c.l.b16 %v646
        %v1466 = vunpack.c.h.b16 %v646
        %v1467 = vunpack.c.l.b16 %v647
        %v1468 = vunpack.c.h.b16 %v647
        %v1469 = vunpack.c.l.b16 %v648
        %v1470 = vunpack.c.h.b16 %v648
        %v1471 = vunpack.c.l.b16 %v649
        %v1472 = vunpack.c.h.b16 %v649
        %v1473 = vunpack.c.l.b16 %v650
        %v1474 = vunpack.c.h.b16 %v650
        %v1475 = vunpack.c.l.b16 %v651
        %v1476 = vunpack.c.h.b16 %v651
        %v1477 = vunpack.c.l.b16 %v652
        %v1478 = vunpack.c.h.b16 %v652
        %v1479 = vunpack.c.l.b16 %v653
        %v1480 = vunpack.c.h.b16 %v653
        %v1481 = vunpack.c.l.b16 %v654
        %v1482 = vunpack.c.h.b16 %v654
        %v1483 = vunpack.c.l.b16 %v655
        %v1484 = vunpack.c.h.b16 %v655
        %v1485 = vunpack.c.l.b16 %v656
        %v1486 = vunpack.c.h.b16 %v656
        %v1487 = vunpack.c.l.b16 %v657
        %v1488 = vunpack.c.h.b16 %v657
        %v1489 = vunpack.c.l.b16 %v658
        %v1490 = vunpack.c.h.b16 %v658
        %v1491 = vunpack.c.l.b16 %v659
        %v1492 = vunpack.c.h.b16 %v659
        %v1493 = vunpack.c.l.b16 %v660
        %v1494 = vunpack.c.h.b16 %v660
        %v1495 = vunpack.c.l.b16 %v661
        %v1496 = vunpack.c.h.b16 %v661
        %v1497 = vunpack.c.l.b16 %v662
        %v1498 = vunpack.c.h.b16 %v662
        %v1499 = vunpack.c.l.b16 %v663
        %v1500 = vunpack.c.h.b16 %v663
        %v1501 = vunpack.c.l.b16 %v664
        %v1502 = vunpack.c.h.b16 %v664
        %v1503 = vunpack.c.l.b16 %v665
        %v1504 = vunpack.c.h.b16 %v665
        %v1505 = vunpack.c.l.b16 %v666
        %v1506 = vunpack.c.h.b16 %v666
        %v1507 = vunpack.c.l.b16 %v667
        %v1508 = vunpack.c.h.b16 %v667
        %v1509 = vunpack.c.l.b16 %v668
        %v1510 = vunpack.c.h.b16 %v668
        %v1511 = vunpack.c.l.b16 %v669
        %v1512 = vunpack.c.h.b16 %v669
        %v1513 = vunpack.c.l.b16 %v670
        %v1514 = vunpack.c.h.b16 %v670
        %v1515 = vunpack.c.l.b16 %v671
        %v1516 = vunpack.c.h.b16 %v671
        %v1517 = vunpack.c.l.b16 %v672
        %v1518 = vunpack.c.h.b16 %v672
        %v1519 = vunpack.c.l.b16 %v673
        %v1520 = vunpack.c.h.b16 %v673
        %v1521 = vunpack.c.l.b16 %v674
        %v1522 = vunpack.c.h.b16 %v674
        %v1523 = vunpack.c.l.b16 %v675
        %v1524 = vunpack.c.h.b16 %v675
        %v1525 = vunpack.c.l.b16 %v676
        %v1526 = vunpack.c.h.b16 %v676
        %v1527 = vunpack.c.l.b16 %v677
        %v1528 = vunpack.c.h.b16 %v677
        %v1529 = vunpack.c.l.b16 %v678
        %v1530 = vunpack.c.h.b16 %v678
        %v1531 = vunpack.c.l.b16 %v679
        %v1532 = vunpack.c.h.b16 %v679
        %v1533 = vunpack.c.l.b16 %v680
        %v1534 = vunpack.c.h.b16 %v680
        %v1535 = vunpack.c.l.b16 %v681
        %v1536 = vunpack.c.h.b16 %v681
        %v1537 = vunpack.c.l.b16 %v682
        %v1538 = vunpack.c.h.b16 %v682
        %v1539 = vunpack.c.l.b16 %v683
        %v1540 = vunpack.c.h.b16 %v683
        %v1541 = vunpack.c.l.b16 %v684
        %v1542 = vunpack.c.h.b16 %v684
        %v1543 = vunpack.c.l.b16 %v685
        %v1544 = vunpack.c.h.b16 %v685
        %v1545 = vunpack.c.l.b16 %v686
        %v1546 = vunpack.c.h.b16 %v686
        %v1547 = vunpack.c.l.b16 %v687
        %v1548 = vunpack.c.h.b16 %v687
        %v1549 = vunpack.c.l.b16 %v688
        %v1550 = vunpack.c.h.b16 %v688
        %v1551 = vunpack.c.l.b16 %v689
        %v1552 = vunpack.c.h.b16 %v689
        %v1553 = vunpack.c.l.b16 %v690
        %v1554 = vunpack.c.h.b16 %v690
        %v1555 = vunpack.c.l.b16 %v691
        %v1556 = vunpack.c.h.b16 %v691
        %v1557 = vunpack.c.l.b16 %v692
        %v1558 = vunpack.c.h.b16 %v692
        %v1559 = vunpack.c.l.b16 %v693
        %v1560 = vunpack.c.h.b16 %v693
        %v1561 = vunpack.c.l.b16 %v694
        %v1562 = vunpack.c.h.b16 %v694
        %v1563 = vunpack.c.l.b16 %v695
        %v1564 = vunpack.c.h.b16 %v695
        %v1565 = vunpack.c.l.b16 %v696
        %v1566 = vunpack.c.h.b16 %v696
        %v1567 = vunpack.c.l.b16 %v697
        %v1568 = vunpack.c.h.b16 %v697
        %v1569 = vunpack.c.l.b16 %v698
        %v1570 = vunpack.c.h.b16 %v698
        %v1571 = vunpack.c.l.b16 %v699
        %v1572 = vunpack.c.h.b16 %v699
        %v1573 = vunpack.c.l.b16 %v700
        %v1574 = vunpack.c.h.b16 %v700
        %v1575 = vunpack.c.l.b16 %v701
        %v1576 = vunpack.c.h.b16 %v701
        %v1577 = vunpack.c.l.b16 %v702
        %v1578 = vunpack.c.h.b16 %v702
        %v1579 = vunpack.c.l.b16 %v703
        %v1580 = vunpack.c.h.b16 %v703
        %v1581 = vunpack.c.l.b16 %v704
        %v1582 = vunpack.c.h.b16 %v704
        %v1583 = vunpack.c.l.b16 %v705
        %v1584 = vunpack.c.h.b16 %v705
        %v1585 = vunpack.c.l.b16 %v706
        %v1586 = vunpack.c.h.b16 %v706
        %v1587 = vunpack.c.l.b16 %v707
        %v1588 = vunpack.c.h.b16 %v707
        %v1589 = vunpack.c.l.b16 %v708
        %v1590 = vunpack.c.h.b16 %v708
        %v1591 = vunpack.c.l.b16 %v709
        %v1592 = vunpack.c.h.b16 %v709
        %v1593 = vunpack.c.l.b16 %v710
        %v1594 = vunpack.c.h.b16 %v710
        %v1595 = vunpack.c.l.b16 %v711
        %v1596 = vunpack.c.h.b16 %v711
        %v1597 = vunpack.c.l.b16 %v712
        %v1598 = vunpack.c.h.b16 %v712
        %v1599 = vunpack.c.l.b16 %v713
        %v1600 = vunpack.c.h.b16 %v713
        %v1601 = vunpack.c.l.b16 %v714
        %v1602 = vunpack.c.h.b16 %v714
        %v1603 = vunpack.c.l.b16 %v715
        %v1604 = vunpack.c.h.b16 %v715
        %v1605 = vunpack.c.l.b16 %v716
        %v1606 = vunpack.c.h.b16 %v716
        %v1607 = vunpack.c.l.b16 %v717
        %v1608 = vunpack.c.h.b16 %v717
        %v1609 = vunpack.c.l.b16 %v718
        %v1610 = vunpack.c.h.b16 %v718
        %v1611 = vunpack.c.l.b16 %v719
        %v1612 = vunpack.c.h.b16 %v719
        %v1613 = vunpack.c.l.b16 %v720
        %v1614 = vunpack.c.h.b16 %v720
        %v1615 = vpack.c.b16 %v1045, %v1039
        %v1616 = vpack.c.b16 %v1046, %v1040
        %v1617 = vpack.c.b16 %v1047, %v1041
        %v1618 = vpack.c.b16 %v1048, %v1042
        %v1619 = vpack.c.b16 %v1049, %v1043
        %v1620 = vpack.c.b16 %v1050, %v1044
        %v1621 = vpack.c.b16 %v1057, %v1051
        %v1622 = vpack.c.b16 %v1058, %v1052
        %v1623 = vpack.c.b16 %v1059, %v1053
        %v1624 = vpack.c.b16 %v1060, %v1054
        %v1625 = vpack.c.b16 %v1061, %v1055
        %v1626 = vpack.c.b16 %v1062, %v1056
        %v1627 = vpack.c.b16 %v1069, %v1063
        %v1628 = vpack.c.b16 %v1070, %v1064
        %v1629 = vpack.c.b16 %v1071, %v1065
        %v1630 = vpack.c.b16 %v1072, %v1066
        %v1631 = vpack.c.b16 %v1073, %v1067
        %v1632 = vpack.c.b16 %v1074, %v1068
        %v1633 = vpack.c.b16 %v1081, %v1075
        %v1634 = vpack.c.b16 %v1082, %v1076
        %v1635 = vpack.c.b16 %v1083, %v1077
        %v1636 = vpack.c.b16 %v1084, %v1078
        %v1637 = vpack.c.b16 %v1085, %v1079
        %v1638 = vpack.c.b16 %v1086, %v1080
        %v1639 = vpack.c.b16 %v1093, %v1087
        %v1640 = vpack.c.b16 %v1094, %v1088
        %v1641 = vpack.c.b16 %v1095, %v1089
        %v1642 = vpack.c.b16 %v1096, %v1090
        %v1643 = vpack.c.b16 %v1097, %v1091
        %v1644 = vpack.c.b16 %v1098, %v1092
        %v1645 = vpack.c.b16 %v1105, %v1099
        %v1646 = vpack.c.b16 %v1106, %v1100
        %v1647 = vpack.c.b16 %v1107, %v1101
        %v1648 = vpack.c.b16 %v1108, %v1102
        %v1649 = vpack.c.b16 %v1109, %v1103
        %v1650 = vpack.c.b16 %v1110, %v1104
        %v1651 = vpack.c.b16 %v1117, %v1111
        %v1652 = vpack.c.b16 %v1118, %v1112
        %v1653 = vpack.c.b16 %v1119, %v1113
        %v1654 = vpack.c.b16 %v1120, %v1114
        %v1655 = vpack.c.b16 %v1121, %v1115
        %v1656 = vpack.c.b16 %v1122, %v1116
        %v1657 = vpack.c.b16 %v1129, %v1123
        %v1658 = vpack.c.b16 %v1130, %v1124
        %v1659 = vpack.c.b16 %v1131, %v1125
        %v1660 = vpack.c.b16 %v1132, %v1126
        %v1661 = vpack.c.b16 %v1133, %v1127
        %v1662 = vpack.c.b16 %v1134, %v1128
        %v1663 = vpack.c.b16 %v1141, %v1135
        %v1664 = vpack.c.b16 %v1142, %v1136
        %v1665 = vpack.c.b16 %v1143, %v1137
        %v1666 = vpack.c.b16 %v1144, %v1138
        %v1667 = vpack.c.b16 %v1145, %v1139
        %v1668 = vpack.c.b16 %v1146, %v1140
        %v1669 = vpack.c.b16 %v1153, %v1147
        %v1670 = vpack.c.b16 %v1154, %v1148
        %v1671 = vpack.c.b16 %v1155, %v1149
        %v1672 = vpack.c.b16 %v1156, %v1150
        %v1673 = vpack.c.b16 %v1157, %v1151
        %v1674 = vpack.c.b16 %v1158, %v1152
        %v1675 = vpack.c.b16 %v1165, %v1159
        %v1676 = vpack.c.b16 %v1166, %v1160
        %v1677 = vpack.c.b16 %v1167, %v1161
        %v1678 = vpack.c.b16 %v1168, %v1162
        %v1679 = vpack.c.b16 %v1169, %v1163
        %v1680 = vpack.c.b16 %v1170, %v1164
        %v1681 = vpack.c.b16 %v1177, %v1171
        %v1682 = vpack.c.b16 %v1178, %v1172
        %v1683 = vpack.c.b16 %v1179, %v1173
        %v1684 = vpack.c.b16 %v1180, %v1174
        %v1685 = vpack.c.b16 %v1181, %v1175
        %v1686 = vpack.c.b16 %v1182, %v1176
        %v1687 = vpack.c.b16 %v1189, %v1183
        %v1688 = vpack.c.b16 %v1190, %v1184
        %v1689 = vpack.c.b16 %v1191, %v1185
        %v1690 = vpack.c.b16 %v1192, %v1186
        %v1691 = vpack.c.b16 %v1193, %v1187
        %v1692 = vpack.c.b16 %v1194, %v1188
        %v1693 = vpack.c.b16 %v1201, %v1195
        %v1694 = vpack.c.b16 %v1202, %v1196
        %v1695 = vpack.c.b16 %v1203, %v1197
        %v1696 = vpack.c.b16 %v1204, %v1198
        %v1697 = vpack.c.b16 %v1205, %v1199
        %v1698 = vpack.c.b16 %v1206, %v1200
        %v1699 = vpack.c.b16 %v1213, %v1207
        %v1700 = vpack.c.b16 %v1214, %v1208
        %v1701 = vpack.c.b16 %v1215, %v1209
        %v1702 = vpack.c.b16 %v1216, %v1210
        %v1703 = vpack.c.b16 %v1217, %v1211
        %v1704 = vpack.c.b16 %v1218, %v1212
        %v1705 = vpack.c.b16 %v1225, %v1219
        %v1706 = vpack.c.b16 %v1226, %v1220
        %v1707 = vpack.c.b16 %v1227, %v1221
        %v1708 = vpack.c.b16 %v1228, %v1222
        %v1709 = vpack.c.b16 %v1229, %v1223
        %v1710 = vpack.c.b16 %v1230, %v1224
        %v1711 = vpack.c.b16 %v1237, %v1231
        %v1712 = vpack.c.b16 %v1238, %v1232
        %v1713 = vpack.c.b16 %v1239, %v1233
        %v1714 = vpack.c.b16 %v1240, %v1234
        %v1715 = vpack.c.b16 %v1241, %v1235
        %v1716 = vpack.c.b16 %v1242, %v1236
        %v1717 = vpack.c.b16 %v1249, %v1243
        %v1718 = vpack.c.b16 %v1250, %v1244
        %v1719 = vpack.c.b16 %v1251, %v1245
        %v1720 = vpack.c.b16 %v1252, %v1246
        %v1721 = vpack.c.b16 %v1253, %v1247
        %v1722 = vpack.c.b16 %v1254, %v1248
        %v1723 = vpack.c.b16 %v1261, %v1255
        %v1724 = vpack.c.b16 %v1262, %v1256
        %v1725 = vpack.c.b16 %v1263, %v1257
        %v1726 = vpack.c.b16 %v1264, %v1258
        %v1727 = vpack.c.b16 %v1265, %v1259
        %v1728 = vpack.c.b16 %v1266, %v1260
        %v1729 = vpack.c.b16 %v1273, %v1267
        %v1730 = vpack.c.b16 %v1274, %v1268
        %v1731 = vpack.c.b16 %v1275, %v1269
        %v1732 = vpack.c.b16 %v1276, %v1270
        %v1733 = vpack.c.b16 %v1277, %v1271
        %v1734 = vpack.c.b16 %v1278, %v1272
        %v1735 = vpack.c.b16 %v1285, %v1279
        %v1736 = vpack.c.b16 %v1286, %v1280
        %v1737 = vpack.c.b16 %v1287, %v1281
        %v1738 = vpack.c.b16 %v1288, %v1282
        %v1739 = vpack.c.b16 %v1289, %v1283
        %v1740 = vpack.c.b16 %v1290, %v1284
        %v1741 = vpack.c.b16 %v1297, %v1291
        %v1742 = vpack.c.b16 %v1298, %v1292
        %v1743 = vpack.c.b16 %v1299, %v1293
        %v1744 = vpack.c.b16 %v1300, %v1294
        %v1745 = vpack.c.b16 %v1301, %v1295
        %v1746 = vpack.c.b16 %v1302, %v1296
        %v1747 = vpack.c.b16 %v1309, %v1303
        %v1748 = vpack.c.b16 %v1310, %v1304
        %v1749 = vpack.c.b16 %v1311, %v1305
        %v1750 = vpack.c.b16 %v1312, %v1306
        %v1751 = vpack.c.b16 %v1313, %v1307
        %v1752 = vpack.c.b16 %v1314, %v1308
        %v1753 = vpack.c.b16 %v1321, %v1315
        %v1754 = vpack.c.b16 %v1322, %v1316
        %v1755 = vpack.c.b16 %v1323, %v1317
        %v1756 = vpack.c.b16 %v1324, %v1318
        %v1757 = vpack.c.b16 %v1325, %v1319
        %v1758 = vpack.c.b16 %v1326, %v1320
        %v1759 = vpack.c.b16 %v1333, %v1327
        %v1760 = vpack.c.b16 %v1334, %v1328
        %v1761 = vpack.c.b16 %v1335, %v1329
        %v1762 = vpack.c.b16 %v1336, %v1330
        %v1763 = vpack.c.b16 %v1337, %v1331
        %v1764 = vpack.c.b16 %v1338, %v1332
        %v1765 = vpack.c.b16 %v1345, %v1339
        %v1766 = vpack.c.b16 %v1346, %v1340
        %v1767 = vpack.c.b16 %v1347, %v1341
        %v1768 = vpack.c.b16 %v1348, %v1342
        %v1769 = vpack.c.b16 %v1349, %v1343
        %v1770 = vpack.c.b16 %v1350, %v1344
        %v1771 = vpack.c.b16 %v1357, %v1351
        %v1772 = vpack.c.b16 %v1358, %v1352
        %v1773 = vpack.c.b16 %v1359, %v1353
        %v1774 = vpack.c.b16 %v1360, %v1354
        %v1775 = vpack.c.b16 %v1361, %v1355
        %v1776 = vpack.c.b16 %v1362, %v1356
        %v1777 = vpack.c.b16 %v1369, %v1363
        %v1778 = vpack.c.b16 %v1370, %v1364
        %v1779 = vpack.c.b16 %v1371, %v1365
        %v1780 = vpack.c.b16 %v1372, %v1366
        %v1781 = vpack.c.b16 %v1373, %v1367
        %v1782 = vpack.c.b16 %v1374, %v1368
        %v1783 = vpack.c.b16 %v1381, %v1375
        %v1784 = vpack.c.b16 %v1382, %v1376
        %v1785 = vpack.c.b16 %v1383, %v1377
        %v1786 = vpack.c.b16 %v1384, %v1378
        %v1787 = vpack.c.b16 %v1385, %v1379
        %v1788 = vpack.c.b16 %v1386, %v1380
        %v1789 = vpack.c.b16 %v1393, %v1387
        %v1790 = vpack.c.b16 %v1394, %v1388
        %v1791 = vpack.c.b16 %v1395, %v1389
        %v1792 = vpack.c.b16 %v1396, %v1390
        %v1793 = vpack.c.b16 %v1397, %v1391
        %v1794 = vpack.c.b16 %v1398, %v1392
        %v1795 = vpack.c.b16 %v1405, %v1399
        %v1796 = vpack.c.b16 %v1406, %v1400
        %v1797 = vpack.c.b16 %v1407, %v1401
        %v1798 = vpack.c.b16 %v1408, %v1402
        %v1799 = vpack.c.b16 %v1409, %v1403
        %v1800 = vpack.c.b16 %v1410, %v1404
        %v1801 = vpack.c.b16 %v1417, %v1411
        %v1802 = vpack.c.b16 %v1418, %v1412
        %v1803 = vpack.c.b16 %v1419, %v1413
        %v1804 = vpack.c.b16 %v1420, %v1414
        %v1805 = vpack.c.b16 %v1421, %v1415
        %v1806 = vpack.c.b16 %v1422, %v1416
        %v1807 = vpack.c.b16 %v1429, %v1423
        %v1808 = vpack.c.b16 %v1430, %v1424
        %v1809 = vpack.c.b16 %v1431, %v1425
        %v1810 = vpack.c.b16 %v1432, %v1426
        %v1811 = vpack.c.b16 %v1433, %v1427
        %v1812 = vpack.c.b16 %v1434, %v1428
        %v1813 = vpack.c.b16 %v1441, %v1435
        %v1814 = vpack.c.b16 %v1442, %v1436
        %v1815 = vpack.c.b16 %v1443, %v1437
        %v1816 = vpack.c.b16 %v1444, %v1438
        %v1817 = vpack.c.b16 %v1445, %v1439
        %v1818 = vpack.c.b16 %v1446, %v1440
        %v1819 = vpack.c.b16 %v1453, %v1447
        %v1820 = vpack.c.b16 %v1454, %v1448
        %v1821 = vpack.c.b16 %v1455, %v1449
        %v1822 = vpack.c.b16 %v1456, %v1450
        %v1823 = vpack.c.b16 %v1457, %v1451
        %v1824 = vpack.c.b16 %v1458, %v1452
        %v1825 = vpack.c.b16 %v1465, %v1459
        %v1826 = vpack.c.b16 %v1466, %v1460
        %v1827 = vpack.c.b16 %v1467, %v1461
        %v1828 = vpack.c.b16 %v1468, %v1462
        %v1829 = vpack.c.b16 %v1469, %v1463
        %v1830 = vpack.c.b16 %v1470, %v1464
        %v1831 = vpack.c.b16 %v1477, %v1471
        %v1832 = vpack.c.b16 %v1478, %v1472
        %v1833 = vpack.c.b16 %v1479, %v1473
        %v1834 = vpack.c.b16 %v1480, %v1474
        %v1835 = vpack.c.b16 %v1481, %v1475
        %v1836 = vpack.c.b16 %v1482, %v1476
        %v1837 = vpack.c.b16 %v1489, %v1483
        %v1838 = vpack.c.b16 %v1490, %v1484
        %v1839 = vpack.c.b16 %v1491, %v1485
        %v1840 = vpack.c.b16 %v1492, %v1486
        %v1841 = vpack.c.b16 %v1493, %v1487
        %v1842 = vpack.c.b16 %v1494, %v1488
        %v1843 = vpack.c.b16 %v1501, %v1495
        %v1844 = vpack.c.b16 %v1502, %v1496
        %v1845 = vpack.c.b16 %v1503, %v1497
        %v1846 = vpack.c.b16 %v1504, %v1498
        %v1847 = vpack.c.b16 %v1505, %v1499
        %v1848 = vpack.c.b16 %v1506, %v1500
        %v1849 = vpack.c.b16 %v1513, %v1507
        %v1850 = vpack.c.b16 %v1514, %v1508
        %v1851 = vpack.c.b16 %v1515, %v1509
        %v1852 = vpack.c.b16 %v1516, %v1510
        %v1853 = vpack.c.b16 %v1517, %v1511
        %v1854 = vpack.c.b16 %v1518, %v1512
        %v1855 = vpack.c.b16 %v1525, %v1519
        %v1856 = vpack.c.b16 %v1526, %v1520
        %v1857 = vpack.c.b16 %v1527, %v1521
        %v1858 = vpack.c.b16 %v1528, %v1522
        %v1859 = vpack.c.b16 %v1529, %v1523
        %v1860 = vpack.c.b16 %v1530, %v1524
        %v1861 = vpack.c.b16 %v1537, %v1531
        %v1862 = vpack.c.b16 %v1538, %v1532
        %v1863 = vpack.c.b16 %v1539, %v1533
        %v1864 = vpack.c.b16 %v1540, %v1534
        %v1865 = vpack.c.b16 %v1541, %v1535
        %v1866 = vpack.c.b16 %v1542, %v1536
        %v1867 = vpack.c.b16 %v1549, %v1543
        %v1868 = vpack.c.b16 %v1550, %v1544
        %v1869 = vpack.c.b16 %v1551, %v1545
        %v1870 = vpack.c.b16 %v1552, %v1546
        %v1871 = vpack.c.b16 %v1553, %v1547
        %v1872 = vpack.c.b16 %v1554, %v1548
        %v1873 = vpack.c.b16 %v1561, %v1555
        %v1874 = vpack.c.b16 %v1562, %v1556
        %v1875 = vpack.c.b16 %v1563, %v1557
        %v1876 = vpack.c.b16 %v1564, %v1558
        %v1877 = vpack.c.b16 %v1565, %v1559
        %v1878 = vpack.c.b16 %v1566, %v1560
        %v1879 = vpack.c.b16 %v1573, %v1567
        %v1880 = vpack.c.b16 %v1574, %v1568
        %v1881 = vpack.c.b16 %v1575, %v1569
        %v1882 = vpack.c.b16 %v1576, %v1570
        %v1883 = vpack.c.b16 %v1577, %v1571
        %v1884 = vpack.c.b16 %v1578, %v1572
        %v1885 = vpack.c.b16 %v1585, %v1579
        %v1886 = vpack.c.b16 %v1586, %v1580
        %v1887 = vpack.c.b16 %v1587, %v1581
        %v1888 = vpack.c.b16 %v1588, %v1582
        %v1889 = vpack.c.b16 %v1589, %v1583
        %v1890 = vpack.c.b16 %v1590, %v1584
        %v1891 = vpack.c.b16 %v1597, %v1591
        %v1892 = vpack.c.b16 %v1598, %v1592
        %v1893 = vpack.c.b16 %v1599, %v1593
        %v1894 = vpack.c.b16 %v1600, %v1594
        %v1895 = vpack.c.b16 %v1601, %v1595
        %v1896 = vpack.c.b16 %v1602, %v1596
        %v1897 = vpack.c.b16 %v1609, %v1603
        %v1898 = vpack.c.b16 %v1610, %v1604
        %v1899 = vpack.c.b16 %v1611, %v1605
        %v1900 = vpack.c.b16 %v1612, %v1606
        %v1901 = vpack.c.b16 %v1613, %v1607
        %v1902 = vpack.c.b16 %v1614, %v1608
        %2191 = vmatpush.bf16.msra.mxu0 %v1657
        %2192 = vmatpush.bf16.msra.mxu0 %v1651
        %2193 = vmatpush.bf16.msra.mxu0 %v1645
        %2194 = vmatpush.bf16.msra.mxu0 %v1639
        %2195 = vmatpush.bf16.msra.mxu0 %v1633
        %2196 = vmatpush.bf16.msra.mxu0 %v1627
        %2197 = vmatpush.bf16.msra.mxu0 %v1621
        %2198 = vmatpush.bf16.msra.mxu0 %v1615
        %2199 = vmatmul.bf16.gmra.mxu0 %v739
        %v2200 = vpop.f32.mrf.mxu0
        %v2201 = vadd.f32 0.0, %v2200
        %v2202 = vpop.f32.mrf.mxu0
        %v2203 = vadd.f32 0.0, %v2202
        %2204 = vdwg.mxu0
        %2205 = vmatpush.bf16.msra.mxu0 %v1705
        %2206 = vmatpush.bf16.msra.mxu0 %v1699
        %2207 = vmatpush.bf16.msra.mxu0 %v1693
        %2208 = vmatpush.bf16.msra.mxu0 %v1687
        %2209 = vmatpush.bf16.msra.mxu0 %v1681
        %2210 = vmatpush.bf16.msra.mxu0 %v1675
        %2211 = vmatpush.bf16.msra.mxu0 %v1669
        %2212 = vmatpush.bf16.msra.mxu0 %v1663
        %2213 = vmatmul.bf16.gmra.mxu0 %v740
        %v2214 = vpop.f32.mrf.mxu0
        %v2215 = vadd.f32 %v2201, %v2214
        %v2216 = vpop.f32.mrf.mxu0
        %v2217 = vadd.f32 %v2203, %v2216
        %2218 = vdwg.mxu0
        %2219 = vmatpush.bf16.msra.mxu0 %v1753
        %2220 = vmatpush.bf16.msra.mxu0 %v1747
        %2221 = vmatpush.bf16.msra.mxu0 %v1741
        %2222 = vmatpush.bf16.msra.mxu0 %v1735
        %2223 = vmatpush.bf16.msra.mxu0 %v1729
        %2224 = vmatpush.bf16.msra.mxu0 %v1723
        %2225 = vmatpush.bf16.msra.mxu0 %v1717
        %2226 = vmatpush.bf16.msra.mxu0 %v1711
        %2227 = vmatmul.bf16.gmra.mxu0 %v741
        %v2228 = vpop.f32.mrf.mxu0
        %v2229 = vadd.f32 %v2215, %v2228
        %v2230 = vpop.f32.mrf.mxu0
        %v2231 = vadd.f32 %v2217, %v2230
        %2232 = vdwg.mxu0
        %2233 = vmatpush.bf16.msra.mxu0 %v1801
        %2234 = vmatpush.bf16.msra.mxu0 %v1795
        %2235 = vmatpush.bf16.msra.mxu0 %v1789
        %2236 = vmatpush.bf16.msra.mxu0 %v1783
        %2237 = vmatpush.bf16.msra.mxu0 %v1777
        %2238 = vmatpush.bf16.msra.mxu0 %v1771
        %2239 = vmatpush.bf16.msra.mxu0 %v1765
        %2240 = vmatpush.bf16.msra.mxu0 %v1759
        %2241 = vmatmul.bf16.gmra.mxu0 %v742
        %v2242 = vpop.f32.mrf.mxu0
        %v2243 = vadd.f32 %v2229, %v2242
        %v2244 = vpop.f32.mrf.mxu0
        %v2245 = vadd.f32 %v2231, %v2244
        %2246 = vdwg.mxu0
        %2247 = vmatpush.bf16.msra.mxu0 %v1849
        %2248 = vmatpush.bf16.msra.mxu0 %v1843
        %2249 = vmatpush.bf16.msra.mxu0 %v1837
        %2250 = vmatpush.bf16.msra.mxu0 %v1831
        %2251 = vmatpush.bf16.msra.mxu0 %v1825
        %2252 = vmatpush.bf16.msra.mxu0 %v1819
        %2253 = vmatpush.bf16.msra.mxu0 %v1813
        %2254 = vmatpush.bf16.msra.mxu0 %v1807
        %2255 = vmatmul.bf16.gmra.mxu0 %v743
        %v2256 = vpop.f32.mrf.mxu0
        %v2257 = vadd.f32 %v2243, %v2256
        %v2258 = vpop.f32.mrf.mxu0
        %v2259 = vadd.f32 %v2245, %v2258
        %2260 = vdwg.mxu0
        %2261 = vmatpush.bf16.msra.mxu0 %v1897
        %2262 = vmatpush.bf16.msra.mxu0 %v1891
        %2263 = vmatpush.bf16.msra.mxu0 %v1885
        %2264 = vmatpush.bf16.msra.mxu0 %v1879
        %2265 = vmatpush.bf16.msra.mxu0 %v1873
        %2266 = vmatpush.bf16.msra.mxu0 %v1867
        %2267 = vmatpush.bf16.msra.mxu0 %v1861
        %2268 = vmatpush.bf16.msra.mxu0 %v1855
        %2269 = vmatmul.bf16.gmra.mxu0 %v744
        %v2270 = vpop.f32.mrf.mxu0
        %v2271 = vadd.f32 %v2257, %v2270
        %v2272 = vpop.f32.mrf.mxu0
        %v2273 = vadd.f32 %v2259, %v2272
        %2274 = vdwg.mxu0
        %2275 = vmatpush.bf16.msra.mxu0 %v1658
        %2276 = vmatpush.bf16.msra.mxu0 %v1652
        %2277 = vmatpush.bf16.msra.mxu0 %v1646
        %2278 = vmatpush.bf16.msra.mxu0 %v1640
        %2279 = vmatpush.bf16.msra.mxu0 %v1634
        %2280 = vmatpush.bf16.msra.mxu0 %v1628
        %2281 = vmatpush.bf16.msra.mxu0 %v1622
        %2282 = vmatpush.bf16.msra.mxu0 %v1616
        %2283 = vmatmul.bf16.gmra.mxu0 %v739
        %v2284 = vpop.f32.mrf.mxu0
        %v2285 = vadd.f32 0.0, %v2284
        %v2286 = vpop.f32.mrf.mxu0
        %v2287 = vadd.f32 0.0, %v2286
        %2288 = vdwg.mxu0
        %2289 = vmatpush.bf16.msra.mxu0 %v1706
        %2290 = vmatpush.bf16.msra.mxu0 %v1700
        %2291 = vmatpush.bf16.msra.mxu0 %v1694
        %2292 = vmatpush.bf16.msra.mxu0 %v1688
        %2293 = vmatpush.bf16.msra.mxu0 %v1682
        %2294 = vmatpush.bf16.msra.mxu0 %v1676
        %2295 = vmatpush.bf16.msra.mxu0 %v1670
        %2296 = vmatpush.bf16.msra.mxu0 %v1664
        %2297 = vmatmul.bf16.gmra.mxu0 %v740
        %v2298 = vpop.f32.mrf.mxu0
        %v2299 = vadd.f32 %v2285, %v2298
        %v2300 = vpop.f32.mrf.mxu0
        %v2301 = vadd.f32 %v2287, %v2300
        %2302 = vdwg.mxu0
        %2303 = vmatpush.bf16.msra.mxu0 %v1754
        %2304 = vmatpush.bf16.msra.mxu0 %v1748
        %2305 = vmatpush.bf16.msra.mxu0 %v1742
        %2306 = vmatpush.bf16.msra.mxu0 %v1736
        %2307 = vmatpush.bf16.msra.mxu0 %v1730
        %2308 = vmatpush.bf16.msra.mxu0 %v1724
        %2309 = vmatpush.bf16.msra.mxu0 %v1718
        %2310 = vmatpush.bf16.msra.mxu0 %v1712
        %2311 = vmatmul.bf16.gmra.mxu0 %v741
        %v2312 = vpop.f32.mrf.mxu0
        %v2313 = vadd.f32 %v2299, %v2312
        %v2314 = vpop.f32.mrf.mxu0
        %v2315 = vadd.f32 %v2301, %v2314
        %2316 = vdwg.mxu0
        %2317 = vmatpush.bf16.msra.mxu0 %v1802
        %2318 = vmatpush.bf16.msra.mxu0 %v1796
        %2319 = vmatpush.bf16.msra.mxu0 %v1790
        %2320 = vmatpush.bf16.msra.mxu0 %v1784
        %2321 = vmatpush.bf16.msra.mxu0 %v1778
        %2322 = vmatpush.bf16.msra.mxu0 %v1772
        %2323 = vmatpush.bf16.msra.mxu0 %v1766
        %2324 = vmatpush.bf16.msra.mxu0 %v1760
        %2325 = vmatmul.bf16.gmra.mxu0 %v742
        %v2326 = vpop.f32.mrf.mxu0
        %v2327 = vadd.f32 %v2313, %v2326
        %v2328 = vpop.f32.mrf.mxu0
        %v2329 = vadd.f32 %v2315, %v2328
        %2330 = vdwg.mxu0
        %2331 = vmatpush.bf16.msra.mxu0 %v1850
        %2332 = vmatpush.bf16.msra.mxu0 %v1844
        %2333 = vmatpush.bf16.msra.mxu0 %v1838
        %2334 = vmatpush.bf16.msra.mxu0 %v1832
        %2335 = vmatpush.bf16.msra.mxu0 %v1826
        %2336 = vmatpush.bf16.msra.mxu0 %v1820
        %2337 = vmatpush.bf16.msra.mxu0 %v1814
        %2338 = vmatpush.bf16.msra.mxu0 %v1808
        %2339 = vmatmul.bf16.gmra.mxu0 %v743
        %v2340 = vpop.f32.mrf.mxu0
        %v2341 = vadd.f32 %v2327, %v2340
        %v2342 = vpop.f32.mrf.mxu0
        %v2343 = vadd.f32 %v2329, %v2342
        %2344 = vdwg.mxu0
        %2345 = vmatpush.bf16.msra.mxu0 %v1898
        %2346 = vmatpush.bf16.msra.mxu0 %v1892
        %2347 = vmatpush.bf16.msra.mxu0 %v1886
        %2348 = vmatpush.bf16.msra.mxu0 %v1880
        %2349 = vmatpush.bf16.msra.mxu0 %v1874
        %2350 = vmatpush.bf16.msra.mxu0 %v1868
        %2351 = vmatpush.bf16.msra.mxu0 %v1862
        %2352 = vmatpush.bf16.msra.mxu0 %v1856
        %2353 = vmatmul.bf16.gmra.mxu0 %v744
        %v2354 = vpop.f32.mrf.mxu0
        %v2355 = vadd.f32 %v2341, %v2354
        %v2356 = vpop.f32.mrf.mxu0
        %v2357 = vadd.f32 %v2343, %v2356
        %2358 = vdwg.mxu0
        %2359 = vmatpush.bf16.msra.mxu0 %v1659
        %2360 = vmatpush.bf16.msra.mxu0 %v1653
        %2361 = vmatpush.bf16.msra.mxu0 %v1647
        %2362 = vmatpush.bf16.msra.mxu0 %v1641
        %2363 = vmatpush.bf16.msra.mxu0 %v1635
        %2364 = vmatpush.bf16.msra.mxu0 %v1629
        %2365 = vmatpush.bf16.msra.mxu0 %v1623
        %2366 = vmatpush.bf16.msra.mxu0 %v1617
        %2367 = vmatmul.bf16.gmra.mxu0 %v739
        %v2368 = vpop.f32.mrf.mxu0
        %v2369 = vadd.f32 0.0, %v2368
        %v2370 = vpop.f32.mrf.mxu0
        %v2371 = vadd.f32 0.0, %v2370
        %2372 = vdwg.mxu0
        %2373 = vmatpush.bf16.msra.mxu0 %v1707
        %2374 = vmatpush.bf16.msra.mxu0 %v1701
        %2375 = vmatpush.bf16.msra.mxu0 %v1695
        %2376 = vmatpush.bf16.msra.mxu0 %v1689
        %2377 = vmatpush.bf16.msra.mxu0 %v1683
        %2378 = vmatpush.bf16.msra.mxu0 %v1677
        %2379 = vmatpush.bf16.msra.mxu0 %v1671
        %2380 = vmatpush.bf16.msra.mxu0 %v1665
        %2381 = vmatmul.bf16.gmra.mxu0 %v740
        %v2382 = vpop.f32.mrf.mxu0
        %v2383 = vadd.f32 %v2369, %v2382
        %v2384 = vpop.f32.mrf.mxu0
        %v2385 = vadd.f32 %v2371, %v2384
        %2386 = vdwg.mxu0
        %2387 = vmatpush.bf16.msra.mxu0 %v1755
        %2388 = vmatpush.bf16.msra.mxu0 %v1749
        %2389 = vmatpush.bf16.msra.mxu0 %v1743
        %2390 = vmatpush.bf16.msra.mxu0 %v1737
        %2391 = vmatpush.bf16.msra.mxu0 %v1731
        %2392 = vmatpush.bf16.msra.mxu0 %v1725
        %2393 = vmatpush.bf16.msra.mxu0 %v1719
        %2394 = vmatpush.bf16.msra.mxu0 %v1713
        %2395 = vmatmul.bf16.gmra.mxu0 %v741
        %v2396 = vpop.f32.mrf.mxu0
        %v2397 = vadd.f32 %v2383, %v2396
        %v2398 = vpop.f32.mrf.mxu0
        %v2399 = vadd.f32 %v2385, %v2398
        %2400 = vdwg.mxu0
        %2401 = vmatpush.bf16.msra.mxu0 %v1803
        %2402 = vmatpush.bf16.msra.mxu0 %v1797
        %2403 = vmatpush.bf16.msra.mxu0 %v1791
        %2404 = vmatpush.bf16.msra.mxu0 %v1785
        %2405 = vmatpush.bf16.msra.mxu0 %v1779
        %2406 = vmatpush.bf16.msra.mxu0 %v1773
        %2407 = vmatpush.bf16.msra.mxu0 %v1767
        %2408 = vmatpush.bf16.msra.mxu0 %v1761
        %2409 = vmatmul.bf16.gmra.mxu0 %v742
        %v2410 = vpop.f32.mrf.mxu0
        %v2411 = vadd.f32 %v2397, %v2410
        %v2412 = vpop.f32.mrf.mxu0
        %v2413 = vadd.f32 %v2399, %v2412
        %2414 = vdwg.mxu0
        %2415 = vmatpush.bf16.msra.mxu0 %v1851
        %2416 = vmatpush.bf16.msra.mxu0 %v1845
        %2417 = vmatpush.bf16.msra.mxu0 %v1839
        %2418 = vmatpush.bf16.msra.mxu0 %v1833
        %2419 = vmatpush.bf16.msra.mxu0 %v1827
        %2420 = vmatpush.bf16.msra.mxu0 %v1821
        %2421 = vmatpush.bf16.msra.mxu0 %v1815
        %2422 = vmatpush.bf16.msra.mxu0 %v1809
        %2423 = vmatmul.bf16.gmra.mxu0 %v743
        %v2424 = vpop.f32.mrf.mxu0
        %v2425 = vadd.f32 %v2411, %v2424
        %v2426 = vpop.f32.mrf.mxu0
        %v2427 = vadd.f32 %v2413, %v2426
        %2428 = vdwg.mxu0
        %2429 = vmatpush.bf16.msra.mxu0 %v1899
        %2430 = vmatpush.bf16.msra.mxu0 %v1893
        %2431 = vmatpush.bf16.msra.mxu0 %v1887
        %2432 = vmatpush.bf16.msra.mxu0 %v1881
        %2433 = vmatpush.bf16.msra.mxu0 %v1875
        %2434 = vmatpush.bf16.msra.mxu0 %v1869
        %2435 = vmatpush.bf16.msra.mxu0 %v1863
        %2436 = vmatpush.bf16.msra.mxu0 %v1857
        %2437 = vmatmul.bf16.gmra.mxu0 %v744
        %v2438 = vpop.f32.mrf.mxu0
        %v2439 = vadd.f32 %v2425, %v2438
        %v2440 = vpop.f32.mrf.mxu0
        %v2441 = vadd.f32 %v2427, %v2440
        %2442 = vdwg.mxu0
        %2443 = vmatpush.bf16.msra.mxu0 %v1660
        %2444 = vmatpush.bf16.msra.mxu0 %v1654
        %2445 = vmatpush.bf16.msra.mxu0 %v1648
        %2446 = vmatpush.bf16.msra.mxu0 %v1642
        %2447 = vmatpush.bf16.msra.mxu0 %v1636
        %2448 = vmatpush.bf16.msra.mxu0 %v1630
        %2449 = vmatpush.bf16.msra.mxu0 %v1624
        %2450 = vmatpush.bf16.msra.mxu0 %v1618
        %2451 = vmatmul.bf16.gmra.mxu0 %v739
        %v2452 = vpop.f32.mrf.mxu0
        %v2453 = vadd.f32 0.0, %v2452
        %v2454 = vpop.f32.mrf.mxu0
        %v2455 = vadd.f32 0.0, %v2454
        %2456 = vdwg.mxu0
        %2457 = vmatpush.bf16.msra.mxu0 %v1708
        %2458 = vmatpush.bf16.msra.mxu0 %v1702
        %2459 = vmatpush.bf16.msra.mxu0 %v1696
        %2460 = vmatpush.bf16.msra.mxu0 %v1690
        %2461 = vmatpush.bf16.msra.mxu0 %v1684
        %2462 = vmatpush.bf16.msra.mxu0 %v1678
        %2463 = vmatpush.bf16.msra.mxu0 %v1672
        %2464 = vmatpush.bf16.msra.mxu0 %v1666
        %2465 = vmatmul.bf16.gmra.mxu0 %v740
        %v2466 = vpop.f32.mrf.mxu0
        %v2467 = vadd.f32 %v2453, %v2466
        %v2468 = vpop.f32.mrf.mxu0
        %v2469 = vadd.f32 %v2455, %v2468
        %2470 = vdwg.mxu0
        %2471 = vmatpush.bf16.msra.mxu0 %v1756
        %2472 = vmatpush.bf16.msra.mxu0 %v1750
        %2473 = vmatpush.bf16.msra.mxu0 %v1744
        %2474 = vmatpush.bf16.msra.mxu0 %v1738
        %2475 = vmatpush.bf16.msra.mxu0 %v1732
        %2476 = vmatpush.bf16.msra.mxu0 %v1726
        %2477 = vmatpush.bf16.msra.mxu0 %v1720
        %2478 = vmatpush.bf16.msra.mxu0 %v1714
        %2479 = vmatmul.bf16.gmra.mxu0 %v741
        %v2480 = vpop.f32.mrf.mxu0
        %v2481 = vadd.f32 %v2467, %v2480
        %v2482 = vpop.f32.mrf.mxu0
        %v2483 = vadd.f32 %v2469, %v2482
        %2484 = vdwg.mxu0
        %2485 = vmatpush.bf16.msra.mxu0 %v1804
        %2486 = vmatpush.bf16.msra.mxu0 %v1798
        %2487 = vmatpush.bf16.msra.mxu0 %v1792
        %2488 = vmatpush.bf16.msra.mxu0 %v1786
        %2489 = vmatpush.bf16.msra.mxu0 %v1780
        %2490 = vmatpush.bf16.msra.mxu0 %v1774
        %2491 = vmatpush.bf16.msra.mxu0 %v1768
        %2492 = vmatpush.bf16.msra.mxu0 %v1762
        %2493 = vmatmul.bf16.gmra.mxu0 %v742
        %v2494 = vpop.f32.mrf.mxu0
        %v2495 = vadd.f32 %v2481, %v2494
        %v2496 = vpop.f32.mrf.mxu0
        %v2497 = vadd.f32 %v2483, %v2496
        %2498 = vdwg.mxu0
        %2499 = vmatpush.bf16.msra.mxu0 %v1852
        %2500 = vmatpush.bf16.msra.mxu0 %v1846
        %2501 = vmatpush.bf16.msra.mxu0 %v1840
        %2502 = vmatpush.bf16.msra.mxu0 %v1834
        %2503 = vmatpush.bf16.msra.mxu0 %v1828
        %2504 = vmatpush.bf16.msra.mxu0 %v1822
        %2505 = vmatpush.bf16.msra.mxu0 %v1816
        %2506 = vmatpush.bf16.msra.mxu0 %v1810
        %2507 = vmatmul.bf16.gmra.mxu0 %v743
        %v2508 = vpop.f32.mrf.mxu0
        %v2509 = vadd.f32 %v2495, %v2508
        %v2510 = vpop.f32.mrf.mxu0
        %v2511 = vadd.f32 %v2497, %v2510
        %2512 = vdwg.mxu0
        %2513 = vmatpush.bf16.msra.mxu0 %v1900
        %2514 = vmatpush.bf16.msra.mxu0 %v1894
        %2515 = vmatpush.bf16.msra.mxu0 %v1888
        %2516 = vmatpush.bf16.msra.mxu0 %v1882
        %2517 = vmatpush.bf16.msra.mxu0 %v1876
        %2518 = vmatpush.bf16.msra.mxu0 %v1870
        %2519 = vmatpush.bf16.msra.mxu0 %v1864
        %2520 = vmatpush.bf16.msra.mxu0 %v1858
        %2521 = vmatmul.bf16.gmra.mxu0 %v744
        %v2522 = vpop.f32.mrf.mxu0
        %v2523 = vadd.f32 %v2509, %v2522
        %v2524 = vpop.f32.mrf.mxu0
        %v2525 = vadd.f32 %v2511, %v2524
        %2526 = vdwg.mxu0
        %2527 = vmatpush.bf16.msra.mxu0 %v1661
        %2528 = vmatpush.bf16.msra.mxu0 %v1655
        %2529 = vmatpush.bf16.msra.mxu0 %v1649
        %2530 = vmatpush.bf16.msra.mxu0 %v1643
        %2531 = vmatpush.bf16.msra.mxu0 %v1637
        %2532 = vmatpush.bf16.msra.mxu0 %v1631
        %2533 = vmatpush.bf16.msra.mxu0 %v1625
        %2534 = vmatpush.bf16.msra.mxu0 %v1619
        %2535 = vmatmul.bf16.gmra.mxu0 %v739
        %v2536 = vpop.f32.mrf.mxu0
        %v2537 = vadd.f32 0.0, %v2536
        %v2538 = vpop.f32.mrf.mxu0
        %v2539 = vadd.f32 0.0, %v2538
        %2540 = vdwg.mxu0
        %2541 = vmatpush.bf16.msra.mxu0 %v1709
        %2542 = vmatpush.bf16.msra.mxu0 %v1703
        %2543 = vmatpush.bf16.msra.mxu0 %v1697
        %2544 = vmatpush.bf16.msra.mxu0 %v1691
        %2545 = vmatpush.bf16.msra.mxu0 %v1685
        %2546 = vmatpush.bf16.msra.mxu0 %v1679
        %2547 = vmatpush.bf16.msra.mxu0 %v1673
        %2548 = vmatpush.bf16.msra.mxu0 %v1667
        %2549 = vmatmul.bf16.gmra.mxu0 %v740
        %v2550 = vpop.f32.mrf.mxu0
        %v2551 = vadd.f32 %v2537, %v2550
        %v2552 = vpop.f32.mrf.mxu0
        %v2553 = vadd.f32 %v2539, %v2552
        %2554 = vdwg.mxu0
        %2555 = vmatpush.bf16.msra.mxu0 %v1757
        %2556 = vmatpush.bf16.msra.mxu0 %v1751
        %2557 = vmatpush.bf16.msra.mxu0 %v1745
        %2558 = vmatpush.bf16.msra.mxu0 %v1739
        %2559 = vmatpush.bf16.msra.mxu0 %v1733
        %2560 = vmatpush.bf16.msra.mxu0 %v1727
        %2561 = vmatpush.bf16.msra.mxu0 %v1721
        %2562 = vmatpush.bf16.msra.mxu0 %v1715
        %2563 = vmatmul.bf16.gmra.mxu0 %v741
        %v2564 = vpop.f32.mrf.mxu0
        %v2565 = vadd.f32 %v2551, %v2564
        %v2566 = vpop.f32.mrf.mxu0
        %v2567 = vadd.f32 %v2553, %v2566
        %2568 = vdwg.mxu0
        %2569 = vmatpush.bf16.msra.mxu0 %v1805
        %2570 = vmatpush.bf16.msra.mxu0 %v1799
        %2571 = vmatpush.bf16.msra.mxu0 %v1793
        %2572 = vmatpush.bf16.msra.mxu0 %v1787
        %2573 = vmatpush.bf16.msra.mxu0 %v1781
        %2574 = vmatpush.bf16.msra.mxu0 %v1775
        %2575 = vmatpush.bf16.msra.mxu0 %v1769
        %2576 = vmatpush.bf16.msra.mxu0 %v1763
        %2577 = vmatmul.bf16.gmra.mxu0 %v742
        %v2578 = vpop.f32.mrf.mxu0
        %v2579 = vadd.f32 %v2565, %v2578
        %v2580 = vpop.f32.mrf.mxu0
        %v2581 = vadd.f32 %v2567, %v2580
        %2582 = vdwg.mxu0
        %2583 = vmatpush.bf16.msra.mxu0 %v1853
        %2584 = vmatpush.bf16.msra.mxu0 %v1847
        %2585 = vmatpush.bf16.msra.mxu0 %v1841
        %2586 = vmatpush.bf16.msra.mxu0 %v1835
        %2587 = vmatpush.bf16.msra.mxu0 %v1829
        %2588 = vmatpush.bf16.msra.mxu0 %v1823
        %2589 = vmatpush.bf16.msra.mxu0 %v1817
        %2590 = vmatpush.bf16.msra.mxu0 %v1811
        %2591 = vmatmul.bf16.gmra.mxu0 %v743
        %v2592 = vpop.f32.mrf.mxu0
        %v2593 = vadd.f32 %v2579, %v2592
        %v2594 = vpop.f32.mrf.mxu0
        %v2595 = vadd.f32 %v2581, %v2594
        %2596 = vdwg.mxu0
        %2597 = vmatpush.bf16.msra.mxu0 %v1901
        %2598 = vmatpush.bf16.msra.mxu0 %v1895
        %2599 = vmatpush.bf16.msra.mxu0 %v1889
        %2600 = vmatpush.bf16.msra.mxu0 %v1883
        %2601 = vmatpush.bf16.msra.mxu0 %v1877
        %2602 = vmatpush.bf16.msra.mxu0 %v1871
        %2603 = vmatpush.bf16.msra.mxu0 %v1865
        %2604 = vmatpush.bf16.msra.mxu0 %v1859
        %2605 = vmatmul.bf16.gmra.mxu0 %v744
        %v2606 = vpop.f32.mrf.mxu0
        %v2607 = vadd.f32 %v2593, %v2606
        %v2608 = vpop.f32.mrf.mxu0
        %v2609 = vadd.f32 %v2595, %v2608
        %2610 = vdwg.mxu0
        %2611 = vmatpush.bf16.msra.mxu0 %v1662
        %2612 = vmatpush.bf16.msra.mxu0 %v1656
        %2613 = vmatpush.bf16.msra.mxu0 %v1650
        %2614 = vmatpush.bf16.msra.mxu0 %v1644
        %2615 = vmatpush.bf16.msra.mxu0 %v1638
        %2616 = vmatpush.bf16.msra.mxu0 %v1632
        %2617 = vmatpush.bf16.msra.mxu0 %v1626
        %2618 = vmatpush.bf16.msra.mxu0 %v1620
        %2619 = vmatmul.bf16.gmra.mxu0 %v739
        %v2620 = vpop.f32.mrf.mxu0
        %v2621 = vadd.f32 0.0, %v2620
        %v2622 = vpop.f32.mrf.mxu0
        %v2623 = vadd.f32 0.0, %v2622
        %2624 = vdwg.mxu0
        %2625 = vmatpush.bf16.msra.mxu0 %v1710
        %2626 = vmatpush.bf16.msra.mxu0 %v1704
        %2627 = vmatpush.bf16.msra.mxu0 %v1698
        %2628 = vmatpush.bf16.msra.mxu0 %v1692
        %2629 = vmatpush.bf16.msra.mxu0 %v1686
        %2630 = vmatpush.bf16.msra.mxu0 %v1680
        %2631 = vmatpush.bf16.msra.mxu0 %v1674
        %2632 = vmatpush.bf16.msra.mxu0 %v1668
        %2633 = vmatmul.bf16.gmra.mxu0 %v740
        %v2634 = vpop.f32.mrf.mxu0
        %v2635 = vadd.f32 %v2621, %v2634
        %v2636 = vpop.f32.mrf.mxu0
        %v2637 = vadd.f32 %v2623, %v2636
        %2638 = vdwg.mxu0
        %2639 = vmatpush.bf16.msra.mxu0 %v1758
        %2640 = vmatpush.bf16.msra.mxu0 %v1752
        %2641 = vmatpush.bf16.msra.mxu0 %v1746
        %2642 = vmatpush.bf16.msra.mxu0 %v1740
        %2643 = vmatpush.bf16.msra.mxu0 %v1734
        %2644 = vmatpush.bf16.msra.mxu0 %v1728
        %2645 = vmatpush.bf16.msra.mxu0 %v1722
        %2646 = vmatpush.bf16.msra.mxu0 %v1716
        %2647 = vmatmul.bf16.gmra.mxu0 %v741
        %v2648 = vpop.f32.mrf.mxu0
        %v2649 = vadd.f32 %v2635, %v2648
        %v2650 = vpop.f32.mrf.mxu0
        %v2651 = vadd.f32 %v2637, %v2650
        %2652 = vdwg.mxu0
        %2653 = vmatpush.bf16.msra.mxu0 %v1806
        %2654 = vmatpush.bf16.msra.mxu0 %v1800
        %2655 = vmatpush.bf16.msra.mxu0 %v1794
        %2656 = vmatpush.bf16.msra.mxu0 %v1788
        %2657 = vmatpush.bf16.msra.mxu0 %v1782
        %2658 = vmatpush.bf16.msra.mxu0 %v1776
        %2659 = vmatpush.bf16.msra.mxu0 %v1770
        %2660 = vmatpush.bf16.msra.mxu0 %v1764
        %2661 = vmatmul.bf16.gmra.mxu0 %v742
        %v2662 = vpop.f32.mrf.mxu0
        %v2663 = vadd.f32 %v2649, %v2662
        %v2664 = vpop.f32.mrf.mxu0
        %v2665 = vadd.f32 %v2651, %v2664
        %2666 = vdwg.mxu0
        %2667 = vmatpush.bf16.msra.mxu0 %v1854
        %2668 = vmatpush.bf16.msra.mxu0 %v1848
        %2669 = vmatpush.bf16.msra.mxu0 %v1842
        %2670 = vmatpush.bf16.msra.mxu0 %v1836
        %2671 = vmatpush.bf16.msra.mxu0 %v1830
        %2672 = vmatpush.bf16.msra.mxu0 %v1824
        %2673 = vmatpush.bf16.msra.mxu0 %v1818
        %2674 = vmatpush.bf16.msra.mxu0 %v1812
        %2675 = vmatmul.bf16.gmra.mxu0 %v743
        %v2676 = vpop.f32.mrf.mxu0
        %v2677 = vadd.f32 %v2663, %v2676
        %v2678 = vpop.f32.mrf.mxu0
        %v2679 = vadd.f32 %v2665, %v2678
        %2680 = vdwg.mxu0
        %2681 = vmatpush.bf16.msra.mxu0 %v1902
        %2682 = vmatpush.bf16.msra.mxu0 %v1896
        %2683 = vmatpush.bf16.msra.mxu0 %v1890
        %2684 = vmatpush.bf16.msra.mxu0 %v1884
        %2685 = vmatpush.bf16.msra.mxu0 %v1878
        %2686 = vmatpush.bf16.msra.mxu0 %v1872
        %2687 = vmatpush.bf16.msra.mxu0 %v1866
        %2688 = vmatpush.bf16.msra.mxu0 %v1860
        %2689 = vmatmul.bf16.gmra.mxu0 %v744
        %v2690 = vpop.f32.mrf.mxu0
        %v2691 = vadd.f32 %v2677, %v2690
        %v2692 = vpop.f32.mrf.mxu0
        %v2693 = vadd.f32 %v2679, %v2692
        %2694 = vdwg.mxu0
        %v2695 = vld [vmem:[#allocation9] sm:$0x7]
        %v2697 = vperm.slane %v2695, 0
        %v2698 = vperm.slane %v2695, 1
        %v2699 = vperm.slane %v2695, 2
        %v2703 = vadd.f32 %v2271, %v2697
        %v2704 = vadd.f32 %v2355, %v2698
        %v2705 = vadd.f32 %v2439, %v2699
        %v2706 = vadd.f32 %v2273, %v2697
        %v2707 = vadd.f32 %v2357, %v2698
        %v2708 = vadd.f32 %v2441, %v2699
        %2709 = vst [vmem:[#allocation2] sm:$0xff] %v2703
        %2710 = vst [vmem:[#allocation2 + $0x8] sm:$0xff] %v2704
        %2711 = vst [vmem:[#allocation2 + $0x10] sm:$0xff] %v2705
        %2712 = vst [vmem:[#allocation2 + $0x18] sm:$0xff] %v2706
        %2713 = vst [vmem:[#allocation2 + $0x20] sm:$0xff] %v2707
        %2714 = vst [vmem:[#allocation2 + $0x28] sm:$0xff] %v2708
        %v2715 = vpack.c.bf16 %v2525, %v2523
        %v2716 = vpack.c.bf16 %v2609, %v2607
        %v2717 = vpack.c.bf16 %v2693, %v2691
        %2718 = vmatpush.bf16.xpose.msra.mxu0 0
        %2719 = vmatpush.bf16.xpose.msra.mxu0 0
        %2720 = vmatpush.bf16.xpose.msra.mxu0 0
        %2721 = vmatpush.bf16.xpose.msra.mxu0 0
        %2722 = vmatpush.bf16.xpose.msra.mxu0 0
        %2723 = vmatpush.bf16.xpose.msra.mxu0 0
        %2724 = vmatpush.bf16.xpose.msra.mxu0 0
        %2725 = vmatpush.bf16.xpose.msra.mxu0 %v2716
        %2726 = vmatmul.bf16.gmra.mxu0 %v2715
        %v2727 = vpop.f32.mrf.mxu0
        %v2728 = vadd.f32 0.0, %v2727
        %v2729 = vpop.f32.mrf.mxu0
        %v2730 = vadd.f32 0.0, %v2729
        %2731 = vdwg.mxu0
        %v2732 = vmul.f32 %v2728, 0.088388346
        %v2733 = vmul.f32 %v2730, 0.088388346
        %vm2734 = vcmask 130048
        %v2735 = vsel %vm2734, %v2732, -inf
        %2736 = vmax.xlane.f32.xlu0 %v2735
        %v2737 = vpop.xlane.xlu0 %2736
        %v2738 = vsel %vm2734, %v2733, -inf
        %2739 = vmax.xlane.f32.xlu0 %v2738
        %v2740 = vpop.xlane.xlu0 %2739
        %v2741 = vsub.f32 %v2732, %v2737
        %v2742 = vsub.f32 %v2733, %v2740
        %v2743 = vmul.f32 %v2741, 1.442695
        %v2744 = vpow.pop %v2743
        %v2745 = vmul.f32 %v2742, 1.442695
        %v2746 = vpow.pop %v2745
        %v2747 = vsel %vm2734, %v2744, 0.0
        %2748 = vadd.xlane.f32.xlu0 %v2747
        %v2749 = vpop.xlane.xlu0 %2748
        %v2750 = vsel %vm2734, %v2746, 0.0
        %2751 = vadd.xlane.f32.xlu0 %v2750
        %v2752 = vpop.xlane.xlu0 %2751
        %v2753 = vrcp.pop %v2749
        %v2754 = vrcp.pop %v2752
        %v2755 = vmul.f32 %v2744, %v2753
        %v2756 = vmul.f32 %v2746, %v2754
        %v2757 = vpack.c.bf16 %v2756, %v2755
        %v2759 = vsel %vm2734, %v2757, 0
        %2761 = vmatpush.bf16.msra.mxu0 0
        %2762 = vmatpush.bf16.msra.mxu0 0
        %2763 = vmatpush.bf16.msra.mxu0 0
        %2764 = vmatpush.bf16.msra.mxu0 0
        %2765 = vmatpush.bf16.msra.mxu0 0
        %2766 = vmatpush.bf16.msra.mxu0 0
        %2767 = vmatpush.bf16.msra.mxu0 0
        %2768 = vmatpush.bf16.msra.mxu0 %v2717
        %2769 = vmatmul.bf16.gmra.mxu0 %v2759
        %v2770 = vpop.f32.mrf.mxu0
        %v2771 = vadd.f32 0.0, %v2770
        %v2772 = vpop.f32.mrf.mxu0
        %v2773 = vadd.f32 0.0, %v2772
        %2774 = vdwg.mxu0
        %v2775 = vpack.c.bf16 %v2773, %v2771
        %v2776 = vld [vmem:[#allocation15] sm:$0xf]
        %v2777 = vld [vmem:[#allocation15 + $0x4] sm:$0xf]
        %v2778 = vld [vmem:[#allocation15 + $0x8] sm:$0xf]
        %v2779 = vld [vmem:[#allocation15 + $0xc] sm:$0xf]
        %v2780 = vld [vmem:[#allocation15 + $0x10] sm:$0xf]
        %v2781 = vld [vmem:[#allocation15 + $0x14] sm:$0xf]
        %v2782 = vld [vmem:[#allocation15 + $0x18] sm:$0xf]
        %v2783 = vld [vmem:[#allocation15 + $0x1c] sm:$0xf]
        %v2784 = vld [vmem:[#allocation15 + $0x20] sm:$0xf]
        %v2785 = vld [vmem:[#allocation15 + $0x24] sm:$0xf]
        %v2786 = vld [vmem:[#allocation15 + $0x28] sm:$0xf]
        %v2787 = vld [vmem:[#allocation15 + $0x2c] sm:$0xf]
        %v2788 = vld [vmem:[#allocation15 + $0x30] sm:$0xf]
        %v2789 = vld [vmem:[#allocation15 + $0x34] sm:$0xf]
        %v2790 = vld [vmem:[#allocation15 + $0x38] sm:$0xf]
        %v2791 = vld [vmem:[#allocation15 + $0x3c] sm:$0xf]
        %v2792 = vld [vmem:[#allocation17] sm:$0x1]
        %v2794 = vperm.slane %v2792, 0
        %v2812 = vunpack.c.l.b16 %v2776
        %v2813 = vunpack.c.l.b16 %v2777
        %v2814 = vunpack.c.l.b16 %v2778
        %v2815 = vunpack.c.l.b16 %v2779
        %v2816 = vunpack.c.l.b16 %v2780
        %v2817 = vunpack.c.l.b16 %v2781
        %v2818 = vunpack.c.l.b16 %v2782
        %v2819 = vunpack.c.l.b16 %v2783
        %v2820 = vunpack.c.l.b16 %v2784
        %v2821 = vunpack.c.l.b16 %v2785
        %v2822 = vunpack.c.l.b16 %v2786
        %v2823 = vunpack.c.l.b16 %v2787
        %v2824 = vunpack.c.l.b16 %v2788
        %v2825 = vunpack.c.l.b16 %v2789
        %v2826 = vunpack.c.l.b16 %v2790
        %v2827 = vunpack.c.l.b16 %v2791
        %v2828 = vpack.c.b16 %v2813, %v2812
        %v2829 = vpack.c.b16 %v2815, %v2814
        %v2830 = vpack.c.b16 %v2817, %v2816
        %v2831 = vpack.c.b16 %v2819, %v2818
        %v2832 = vpack.c.b16 %v2821, %v2820
        %v2833 = vpack.c.b16 %v2823, %v2822
        %v2834 = vpack.c.b16 %v2825, %v2824
        %v2835 = vpack.c.b16 %v2827, %v2826
        %2844 = vmatpush.bf16.msra.mxu0 %v2835
        %2845 = vmatpush.bf16.msra.mxu0 %v2834
        %2846 = vmatpush.bf16.msra.mxu0 %v2833
        %2847 = vmatpush.bf16.msra.mxu0 %v2832
        %2848 = vmatpush.bf16.msra.mxu0 %v2831
        %2849 = vmatpush.bf16.msra.mxu0 %v2830
        %2850 = vmatpush.bf16.msra.mxu0 %v2829
        %2851 = vmatpush.bf16.msra.mxu0 %v2828
        %2852 = vmatmul.bf16.gmra.mxu0 %v2775
        %v2853 = vpop.f32.mrf.mxu0
        %v2854 = vadd.f32 %v2794, %v2853
        %v2855 = vpop.f32.mrf.mxu0
        %v2856 = vadd.f32 %v2794, %v2855
        %2857 = vdwg.mxu0
        %2858 = vst [vmem:[%s424] sm:$0xff] %v2854
        %2859 = vst [vmem:[%s424 + $0x8] sm:$0xff] %v2856
        %v2860 = vlaneseq
        %v2861 = vand.u32 %v2860, 127
        %vm2862 = vcmp.lt.s32.totalorder %v2861, 64
        %v2863 = vadd.s32 %v2861, 128
        %v2864 = vadd.s32 %v2861, 256
        %vm2865 = vcmp.lt.s32.totalorder %v2861, 0
        %v2866 = vsub.s32 0, %v2861
        %v2867 = vsel %vm2865, %v2866, %v2861
        %v2868 = vshrl.u32 %v2867, 7
        %v2869 = vand.u32 %v2867, 127
        %v2870 = vsub.s32 0, %v2869
        %v2871 = vsel %vm2865, %v2870, %v2869
        %vm2872 = vcmp.lt.s32.totalorder %v2863, 0
        %v2873 = vsub.s32 0, %v2863
        %v2874 = vsel %vm2872, %v2873, %v2863
        %v2875 = vshrl.u32 %v2874, 7
        %v2876 = vand.u32 %v2874, 127
        %v2877 = vsub.s32 0, %v2876
        %v2878 = vsel %vm2872, %v2877, %v2876
        %vm2879 = vcmp.lt.s32.totalorder %v2864, 0
        %v2880 = vsub.s32 0, %v2864
        %v2881 = vsel %vm2879, %v2880, %v2864
        %v2882 = vshrl.u32 %v2881, 7
        %v2883 = vand.u32 %v2881, 127
        %v2884 = vsub.s32 0, %v2883
        %v2885 = vsel %vm2879, %v2884, %v2883
        %vm2886 = vcmp.ne.s32.totalorder %v2871, 0
        %vm2887 = vcmp.ne.s32.totalorder %v2878, 0
        %vm2888 = vcmp.ne.s32.totalorder %v2885, 0
        %vm2889 = vcmp.lt.s32.totalorder %v2871, 0
        %vm2890 = vcmp.lt.s32.totalorder %v2878, 0
        %vm2891 = vcmp.lt.s32.totalorder %v2885, 0
        %vm2892 = vmand %vm2889, %vm2886
        %vm2893 = vmand %vm2890, %vm2887
        %vm2894 = vmand %vm2891, %vm2888
        %v2895 = vadd.s32 %v2871, 128
        %v2896 = vadd.s32 %v2878, 128
        %v2897 = vadd.s32 %v2885, 128
        %v2898 = vsel %vm2892, %v2895, %v2871
        %v2899 = vsel %vm2893, %v2896, %v2878
        %v2900 = vsel %vm2894, %v2897, %v2885
        %vm2901 = vcmp.lt.s32.totalorder %v2898, 64
        %vm2902 = vcmp.lt.s32.totalorder %v2899, 64
        %vm2903 = vcmp.lt.s32.totalorder %v2900, 64
        %s2904 = sadd.s32 8, 7
        %s2905 = smul.u32 0, 3
        %s2906 = smul.addr %s2905, 8
        %s2907 = scalar_lea.vmem [#allocation2], %s2906
        %v2908 = vld [vmem:[%s2907] ss:$8 sm:$0x7]
        %s2909 = sshra.s32 %s2904, 3
        %s2910 = sand.u32 %s2904, 7
        %s2911 = sshra.s32 %s2904, 3
        %s2912 = sand.u32 %s2904, 7
        %s2913 = smul.u32 %s2909, 3
        %s2914 = smul.u32 %s2913, 8
        %s2915 = sadd.s32 %s2914, %s2912
        %s2916 = scalar_lea.vmem [#allocation2], %s2915
        %v2917 = vld [vmem:[%s2916] ss:$8 sm:$0x7]
        %v2919 = vperm.slane %v2908, 0
        %v2920 = vperm.slane %v2908, 1
        %v2921 = vperm.slane %v2908, 2
        %v2926 = vperm.slane %v2917, 0
        %v2927 = vperm.slane %v2917, 1
        %v2928 = vperm.slane %v2917, 2
        %v2932 = vsel %vm2901, %v2919, %v2926
        %v2933 = vsel %vm2902, %v2920, %v2927
        %v2934 = vsel %vm2903, %v2921, %v2928
        %v2935 = vld [vmem:[#allocation11] sm:$0xff]
        %v2936 = vld [vmem:[#allocation11 + $0x8] sm:$0xf]
        %v2937 = vld [vmem:[#allocation11 + $0xc] sm:$0xff]
        %v2938 = vld [vmem:[#allocation11 + $0x14] sm:$0xf]
        %v2939 = vld [vmem:[#allocation11 + $0x18] sm:$0xff]
        %v2940 = vld [vmem:[#allocation11 + $0x20] sm:$0xf]
        %v2941 = vld [vmem:[#allocation11 + $0x24] sm:$0xff]
        %v2942 = vld [vmem:[#allocation11 + $0x2c] sm:$0xf]
        %v2943 = vld [vmem:[#allocation11 + $0x30] sm:$0xff]
        %v2944 = vld [vmem:[#allocation11 + $0x38] sm:$0xf]
        %v2945 = vld [vmem:[#allocation11 + $0x3c] sm:$0xff]
        %v2946 = vld [vmem:[#allocation11 + $0x44] sm:$0xf]
        %v2947 = vld [vmem:[#allocation11 + $0x48] sm:$0xff]
        %v2948 = vld [vmem:[#allocation11 + $0x50] sm:$0xf]
        %v2949 = vld [vmem:[#allocation11 + $0x54] sm:$0xff]
        %v2950 = vld [vmem:[#allocation11 + $0x5c] sm:$0xf]
        %v2951 = vld [vmem:[#allocation11 + $0x60] sm:$0xff]
        %v2952 = vld [vmem:[#allocation11 + $0x68] sm:$0xf]
        %v2953 = vld [vmem:[#allocation11 + $0x6c] sm:$0xff]
        %v2954 = vld [vmem:[#allocation11 + $0x74] sm:$0xf]
        %v2955 = vld [vmem:[#allocation11 + $0x78] sm:$0xff]
        %v2956 = vld [vmem:[#allocation11 + $0x80] sm:$0xf]
        %v2957 = vld [vmem:[#allocation11 + $0x84] sm:$0xff]
        %v2958 = vld [vmem:[#allocation11 + $0x8c] sm:$0xf]
        %v2959 = vld [vmem:[#allocation11 + $0x90] sm:$0xff]
        %v2960 = vld [vmem:[#allocation11 + $0x98] sm:$0xf]
        %v2961 = vld [vmem:[#allocation11 + $0x9c] sm:$0xff]
        %v2962 = vld [vmem:[#allocation11 + $0xa4] sm:$0xf]
        %v2963 = vld [vmem:[#allocation11 + $0xa8] sm:$0xff]
        %v2964 = vld [vmem:[#allocation11 + $0xb0] sm:$0xf]
        %v2965 = vld [vmem:[#allocation11 + $0xb4] sm:$0xff]
        %v2966 = vld [vmem:[#allocation11 + $0xbc] sm:$0xf]
        %v2967 = vld [vmem:[#allocation12] sm:$0x7]
        %v3000 = vunpack.c.l.b16 %v2935
        %v3001 = vunpack.c.h.b16 %v2935
        %v3002 = vunpack.c.l.b16 %v2936
        %v3003 = vunpack.c.l.b16 %v2937
        %v3004 = vunpack.c.h.b16 %v2937
        %v3005 = vunpack.c.l.b16 %v2938
        %v3006 = vunpack.c.l.b16 %v2939
        %v3007 = vunpack.c.h.b16 %v2939
        %v3008 = vunpack.c.l.b16 %v2940
        %v3009 = vunpack.c.l.b16 %v2941
        %v3010 = vunpack.c.h.b16 %v2941
        %v3011 = vunpack.c.l.b16 %v2942
        %v3012 = vunpack.c.l.b16 %v2943
        %v3013 = vunpack.c.h.b16 %v2943
        %v3014 = vunpack.c.l.b16 %v2944
        %v3015 = vunpack.c.l.b16 %v2945
        %v3016 = vunpack.c.h.b16 %v2945
        %v3017 = vunpack.c.l.b16 %v2946
        %v3018 = vunpack.c.l.b16 %v2947
        %v3019 = vunpack.c.h.b16 %v2947
        %v3020 = vunpack.c.l.b16 %v2948
        %v3021 = vunpack.c.l.b16 %v2949
        %v3022 = vunpack.c.h.b16 %v2949
        %v3023 = vunpack.c.l.b16 %v2950
        %v3024 = vunpack.c.l.b16 %v2951
        %v3025 = vunpack.c.h.b16 %v2951
        %v3026 = vunpack.c.l.b16 %v2952
        %v3027 = vunpack.c.l.b16 %v2953
        %v3028 = vunpack.c.h.b16 %v2953
        %v3029 = vunpack.c.l.b16 %v2954
        %v3030 = vunpack.c.l.b16 %v2955
        %v3031 = vunpack.c.h.b16 %v2955
        %v3032 = vunpack.c.l.b16 %v2956
        %v3033 = vunpack.c.l.b16 %v2957
        %v3034 = vunpack.c.h.b16 %v2957
        %v3035 = vunpack.c.l.b16 %v2958
        %v3036 = vunpack.c.l.b16 %v2959
        %v3037 = vunpack.c.h.b16 %v2959
        %v3038 = vunpack.c.l.b16 %v2960
        %v3039 = vunpack.c.l.b16 %v2961
        %v3040 = vunpack.c.h.b16 %v2961
        %v3041 = vunpack.c.l.b16 %v2962
        %v3042 = vunpack.c.l.b16 %v2963
        %v3043 = vunpack.c.h.b16 %v2963
        %v3044 = vunpack.c.l.b16 %v2964
        %v3045 = vunpack.c.l.b16 %v2965
        %v3046 = vunpack.c.h.b16 %v2965
        %v3047 = vunpack.c.l.b16 %v2966
        %v3048 = vpack.c.b16 %v3003, %v3000
        %v3049 = vpack.c.b16 %v3004, %v3001
        %v3050 = vpack.c.b16 %v3005, %v3002
        %v3051 = vpack.c.b16 %v3009, %v3006
        %v3052 = vpack.c.b16 %v3010, %v3007
        %v3053 = vpack.c.b16 %v3011, %v3008
        %v3054 = vpack.c.b16 %v3015, %v3012
        %v3055 = vpack.c.b16 %v3016, %v3013
        %v3056 = vpack.c.b16 %v3017, %v3014
        %v3057 = vpack.c.b16 %v3021, %v3018
        %v3058 = vpack.c.b16 %v3022, %v3019
        %v3059 = vpack.c.b16 %v3023, %v3020
        %v3060 = vpack.c.b16 %v3027, %v3024
        %v3061 = vpack.c.b16 %v3028, %v3025
        %v3062 = vpack.c.b16 %v3029, %v3026
        %v3063 = vpack.c.b16 %v3033, %v3030
        %v3064 = vpack.c.b16 %v3034, %v3031
        %v3065 = vpack.c.b16 %v3035, %v3032
        %v3066 = vpack.c.b16 %v3039, %v3036
        %v3067 = vpack.c.b16 %v3040, %v3037
        %v3068 = vpack.c.b16 %v3041, %v3038
        %v3069 = vpack.c.b16 %v3045, %v3042
        %v3070 = vpack.c.b16 %v3046, %v3043
        %v3071 = vpack.c.b16 %v3047, %v3044
        %v3097 = vperm.slane %v2967, 0
        %v3098 = vperm.slane %v2967, 1
        %v3099 = vperm.slane %v2967, 2
        %3103 = vmatpush.bf16.msra.mxu0 %v3069
        %3104 = vmatpush.bf16.msra.mxu0 %v3066
        %3105 = vmatpush.bf16.msra.mxu0 %v3063
        %3106 = vmatpush.bf16.msra.mxu0 %v3060
        %3107 = vmatpush.bf16.msra.mxu0 %v3057
        %3108 = vmatpush.bf16.msra.mxu0 %v3054
        %3109 = vmatpush.bf16.msra.mxu0 %v3051
        %3110 = vmatpush.bf16.msra.mxu0 %v3048
        %3111 = vmatmul.bf16.gmra.mxu0 0
        %v3112 = vpop.f32.mrf.mxu0
        %v3113 = vadd.f32 %v3097, %v3112
        %v3114 = vpop.f32.mrf.mxu0
        %3115 = vdwg.mxu0
        %3116 = vmatpush.bf16.msra.mxu0 %v3070
        %3117 = vmatpush.bf16.msra.mxu0 %v3067
        %3118 = vmatpush.bf16.msra.mxu0 %v3064
        %3119 = vmatpush.bf16.msra.mxu0 %v3061
        %3120 = vmatpush.bf16.msra.mxu0 %v3058
        %3121 = vmatpush.bf16.msra.mxu0 %v3055
        %3122 = vmatpush.bf16.msra.mxu0 %v3052
        %3123 = vmatpush.bf16.msra.mxu0 %v3049
        %3124 = vmatmul.bf16.gmra.mxu0 0
        %v3125 = vpop.f32.mrf.mxu0
        %v3126 = vadd.f32 %v3098, %v3125
        %v3127 = vpop.f32.mrf.mxu0
        %3128 = vdwg.mxu0
        %3129 = vmatpush.bf16.msra.mxu0 %v3071
        %3130 = vmatpush.bf16.msra.mxu0 %v3068
        %3131 = vmatpush.bf16.msra.mxu0 %v3065
        %3132 = vmatpush.bf16.msra.mxu0 %v3062
        %3133 = vmatpush.bf16.msra.mxu0 %v3059
        %3134 = vmatpush.bf16.msra.mxu0 %v3056
        %3135 = vmatpush.bf16.msra.mxu0 %v3053
        %3136 = vmatpush.bf16.msra.mxu0 %v3050
        %3137 = vmatmul.bf16.gmra.mxu0 0
        %v3138 = vpop.f32.mrf.mxu0
        %v3139 = vadd.f32 %v3099, %v3138
        %v3140 = vpop.f32.mrf.mxu0
        %3141 = vdwg.mxu0
        %v3142 = vadd.f32 %v2932, %v3113
        %v3143 = vxor.u32 %v3142, 2147483648
        %v3144 = vmul.f32 %v3143, 1.442695
        %v3145 = vpow.pop %v3144
        %v3146 = vadd.f32 %v3145, 1.0
        %v3147 = vrcp.pop %v3146
        %v3148 = vmul.f32 %v3146, %v3147
        %v3149 = vsub.f32 1.0, %v3148
        %v3150 = vmul.f32 %v3147, %v3149
        %v3151 = vadd.f32 %v3147, %v3150
        %vm3152 = vweird.f32 %v3146
        %vm3153 = vweird.f32 %v3147
        %vm3154 = vmor %vm3152, %vm3153
        %v3155 = vsel %vm3154, %v3147, %v3151
        %v3156 = vand.u32 2147483647, %v3146
        %vm3157 = vcmp.eq.f32.partialorder %v3156, 8.507059e+37
        %v3158 = vand.u32 %v3146, 2147483648
        %v3159 = vor.u32 1.1754944e-38, %v3158
        %v3160 = vsel %vm3157, %v3159, %v3155
        %v3161 = vmul.f32 1.0, %v3160
        %v3162 = vadd.f32 %v2933, %v3126
        %v3163 = vxor.u32 %v3162, 2147483648
        %v3164 = vmul.f32 %v3163, 1.442695
        %v3165 = vpow.pop %v3164
        %v3166 = vadd.f32 %v3165, 1.0
        %v3167 = vrcp.pop %v3166
        %v3168 = vmul.f32 %v3166, %v3167
        %v3169 = vsub.f32 1.0, %v3168
        %v3170 = vmul.f32 %v3167, %v3169
        %v3171 = vadd.f32 %v3167, %v3170
        %vm3172 = vweird.f32 %v3166
        %vm3173 = vweird.f32 %v3167
        %vm3174 = vmor %vm3172, %vm3173
        %v3175 = vsel %vm3174, %v3167, %v3171
        %v3176 = vand.u32 2147483647, %v3166
        %vm3177 = vcmp.eq.f32.partialorder %v3176, 8.507059e+37
        %v3178 = vand.u32 %v3166, 2147483648
        %v3179 = vor.u32 1.1754944e-38, %v3178
        %v3180 = vsel %vm3177, %v3179, %v3175
        %v3181 = vmul.f32 1.0, %v3180
        %v3182 = vmul.f32 %v3161, %v3139
        %v3183 = vadd.f32 %v2934, %v3182
        %v3184 = vtanh.pop %v3183
        %v3185 = vsub.f32 1.0, %v3181
        %v3186 = vmul.f32 %v3185, %v3184
        %v3187 = vmul.f32 %v3181, 0.0
        %v3188 = vadd.f32 %v3186, %v3187
        %v3189 = vstv 0
        %v3190 = vstv %s2904
        %v3191 = vsel %vm2862, %v3189, %v3190
        %v3192 = vstv %s426
        %vm3193 = vcmp.lt.s32.totalorder %v3191, %v3192
        %v3194 = vsel %vm3193, %v3188, 0.0
        %vm3195 = vmand %vm2862, %vm3193
        %v3196 = vsel %vm3195, %v3194, 0.0
        %vm3197 = vmxor %vm2862, 1
        %vm3198 = vmand %vm3197, %vm3193
        %v3199 = vsel %vm3198, %v3194, 0.0
        %s3200 = sadd.s32 0, 1
        %s3201 = sadd.s32 8, 6
        %s3202 = sshra.s32 %s3200, 3
        %s3203 = sand.u32 %s3200, 7
        %s3204 = sshra.s32 %s3200, 3
        %s3205 = sand.u32 %s3200, 7
        %s3206 = smul.u32 %s3202, 3
        %s3207 = smul.u32 %s3206, 8
        %s3208 = sadd.s32 %s3207, %s3205
        %s3209 = scalar_lea.vmem [#allocation2], %s3208
        %v3210 = vld [vmem:[%s3209] ss:$8 sm:$0x7]
        %s3211 = sshra.s32 %s3201, 3
        %s3212 = sand.u32 %s3201, 7
        %s3213 = sshra.s32 %s3201, 3
        %s3214 = sand.u32 %s3201, 7
        %s3215 = smul.u32 %s3211, 3
        %s3216 = smul.u32 %s3215, 8
        %s3217 = sadd.s32 %s3216, %s3214
        %s3218 = scalar_lea.vmem [#allocation2], %s3217
        %v3219 = vld [vmem:[%s3218] ss:$8 sm:$0x7]
        %v3221 = vperm.slane %v3210, 0
        %v3222 = vperm.slane %v3210, 1
        %v3223 = vperm.slane %v3210, 2
        %v3228 = vperm.slane %v3219, 0
        %v3229 = vperm.slane %v3219, 1
        %v3230 = vperm.slane %v3219, 2
        %v3234 = vsel %vm2901, %v3221, %v3228
        %v3235 = vsel %vm2902, %v3222, %v3229
        %v3236 = vsel %vm2903, %v3223, %v3230
        %v3237 = vpack.c.bf16 %v3194, %v3194
        %3238 = vmatpush.bf16.msra.mxu0 %v3069
        %3239 = vmatpush.bf16.msra.mxu0 %v3066
        %3240 = vmatpush.bf16.msra.mxu0 %v3063
        %3241 = vmatpush.bf16.msra.mxu0 %v3060
        %3242 = vmatpush.bf16.msra.mxu0 %v3057
        %3243 = vmatpush.bf16.msra.mxu0 %v3054
        %3244 = vmatpush.bf16.msra.mxu0 %v3051
        %3245 = vmatpush.bf16.msra.mxu0 %v3048
        %3246 = vmatmul.bf16.gmra.mxu0 %v3237
        %v3247 = vpop.f32.mrf.mxu0
        %v3248 = vadd.f32 %v3097, %v3247
        %v3249 = vpop.f32.mrf.mxu0
        %3250 = vdwg.mxu0
        %3251 = vmatpush.bf16.msra.mxu0 %v3070
        %3252 = vmatpush.bf16.msra.mxu0 %v3067
        %3253 = vmatpush.bf16.msra.mxu0 %v3064
        %3254 = vmatpush.bf16.msra.mxu0 %v3061
        %3255 = vmatpush.bf16.msra.mxu0 %v3058
        %3256 = vmatpush.bf16.msra.mxu0 %v3055
        %3257 = vmatpush.bf16.msra.mxu0 %v3052
        %3258 = vmatpush.bf16.msra.mxu0 %v3049
        %3259 = vmatmul.bf16.gmra.mxu0 %v3237
        %v3260 = vpop.f32.mrf.mxu0
        %v3261 = vadd.f32 %v3098, %v3260
        %v3262 = vpop.f32.mrf.mxu0
        %3263 = vdwg.mxu0
        %3264 = vmatpush.bf16.msra.mxu0 %v3071
        %3265 = vmatpush.bf16.msra.mxu0 %v3068
        %3266 = vmatpush.bf16.msra.mxu0 %v3065
        %3267 = vmatpush.bf16.msra.mxu0 %v3062
        %3268 = vmatpush.bf16.msra.mxu0 %v3059
        %3269 = vmatpush.bf16.msra.mxu0 %v3056
        %3270 = vmatpush.bf16.msra.mxu0 %v3053
        %3271 = vmatpush.bf16.msra.mxu0 %v3050
        %3272 = vmatmul.bf16.gmra.mxu0 %v3237
        %v3273 = vpop.f32.mrf.mxu0
        %v3274 = vadd.f32 %v3099, %v3273
        %v3275 = vpop.f32.mrf.mxu0
        %3276 = vdwg.mxu0
        %v3277 = vadd.f32 %v3234, %v3248
        %v3278 = vxor.u32 %v3277, 2147483648
        %v3279 = vmul.f32 %v3278, 1.442695
        %v3280 = vpow.pop %v3279
        %v3281 = vadd.f32 %v3280, 1.0
        %v3282 = vrcp.pop %v3281
        %v3283 = vmul.f32 %v3281, %v3282
        %v3284 = vsub.f32 1.0, %v3283
        %v3285 = vmul.f32 %v3282, %v3284
        %v3286 = vadd.f32 %v3282, %v3285
        %vm3287 = vweird.f32 %v3281
        %vm3288 = vweird.f32 %v3282
        %vm3289 = vmor %vm3287, %vm3288
        %v3290 = vsel %vm3289, %v3282, %v3286
        %v3291 = vand.u32 2147483647, %v3281
        %vm3292 = vcmp.eq.f32.partialorder %v3291, 8.507059e+37
        %v3293 = vand.u32 %v3281, 2147483648
        %v3294 = vor.u32 1.1754944e-38, %v3293
        %v3295 = vsel %vm3292, %v3294, %v3290
        %v3296 = vmul.f32 1.0, %v3295
        %v3297 = vadd.f32 %v3235, %v3261
        %v3298 = vxor.u32 %v3297, 2147483648
        %v3299 = vmul.f32 %v3298, 1.442695
        %v3300 = vpow.pop %v3299
        %v3301 = vadd.f32 %v3300, 1.0
        %v3302 = vrcp.pop %v3301
        %v3303 = vmul.f32 %v3301, %v3302
        %v3304 = vsub.f32 1.0, %v3303
        %v3305 = vmul.f32 %v3302, %v3304
        %v3306 = vadd.f32 %v3302, %v3305
        %vm3307 = vweird.f32 %v3301
        %vm3308 = vweird.f32 %v3302
        %vm3309 = vmor %vm3307, %vm3308
        %v3310 = vsel %vm3309, %v3302, %v3306
        %v3311 = vand.u32 2147483647, %v3301
        %vm3312 = vcmp.eq.f32.partialorder %v3311, 8.507059e+37
        %v3313 = vand.u32 %v3301, 2147483648
        %v3314 = vor.u32 1.1754944e-38, %v3313
        %v3315 = vsel %vm3312, %v3314, %v3310
        %v3316 = vmul.f32 1.0, %v3315
        %v3317 = vmul.f32 %v3296, %v3274
        %v3318 = vadd.f32 %v3236, %v3317
        %v3319 = vtanh.pop %v3318
        %v3320 = vsub.f32 1.0, %v3316
        %v3321 = vmul.f32 %v3320, %v3319
        %v3322 = vmul.f32 %v3316, %v3194
        %v3323 = vadd.f32 %v3321, %v3322
        %v3324 = vstv %s3200
        %v3325 = vstv %s3201
        %v3326 = vsel %vm2862, %v3324, %v3325
        %vm3327 = vcmp.lt.s32.totalorder %v3326, %v3192
        %v3328 = vsel %vm3327, %v3323, %v3194
        %vm3329 = vmand %vm2862, %vm3327
        %v3330 = vsel %vm3329, %v3328, 0.0
        %vm3331 = vmand %vm3197, %vm3327
        %v3332 = vsel %vm3331, %v3328, 0.0
        %s3333 = sadd.s32 0, 2
        %s3334 = sadd.s32 8, 5
        %s3335 = sshra.s32 %s3333, 3
        %s3336 = sand.u32 %s3333, 7
        %s3337 = sshra.s32 %s3333, 3
        %s3338 = sand.u32 %s3333, 7
        %s3339 = smul.u32 %s3335, 3
        %s3340 = smul.u32 %s3339, 8
        %s3341 = sadd.s32 %s3340, %s3338
        %s3342 = scalar_lea.vmem [#allocation2], %s3341
        %v3343 = vld [vmem:[%s3342] ss:$8 sm:$0x7]
        %s3344 = sshra.s32 %s3334, 3
        %s3345 = sand.u32 %s3334, 7
        %s3346 = sshra.s32 %s3334, 3
        %s3347 = sand.u32 %s3334, 7
        %s3348 = smul.u32 %s3344, 3
        %s3349 = smul.u32 %s3348, 8
        %s3350 = sadd.s32 %s3349, %s3347
        %s3351 = scalar_lea.vmem [#allocation2], %s3350
        %v3352 = vld [vmem:[%s3351] ss:$8 sm:$0x7]
        %v3354 = vperm.slane %v3343, 0
        %v3355 = vperm.slane %v3343, 1
        %v3356 = vperm.slane %v3343, 2
        %v3361 = vperm.slane %v3352, 0
        %v3362 = vperm.slane %v3352, 1
        %v3363 = vperm.slane %v3352, 2
        %v3367 = vsel %vm2901, %v3354, %v3361
        %v3368 = vsel %vm2902, %v3355, %v3362
        %v3369 = vsel %vm2903, %v3356, %v3363
        %v3370 = vpack.c.bf16 %v3328, %v3328
        %3371 = vmatpush.bf16.msra.mxu0 %v3069
        %3372 = vmatpush.bf16.msra.mxu0 %v3066
        %3373 = vmatpush.bf16.msra.mxu0 %v3063
        %3374 = vmatpush.bf16.msra.mxu0 %v3060
        %3375 = vmatpush.bf16.msra.mxu0 %v3057
        %3376 = vmatpush.bf16.msra.mxu0 %v3054
        %3377 = vmatpush.bf16.msra.mxu0 %v3051
        %3378 = vmatpush.bf16.msra.mxu0 %v3048
        %3379 = vmatmul.bf16.gmra.mxu0 %v3370
        %v3380 = vpop.f32.mrf.mxu0
        %v3381 = vadd.f32 %v3097, %v3380
        %v3382 = vpop.f32.mrf.mxu0
        %3383 = vdwg.mxu0
        %3384 = vmatpush.bf16.msra.mxu0 %v3070
        %3385 = vmatpush.bf16.msra.mxu0 %v3067
        %3386 = vmatpush.bf16.msra.mxu0 %v3064
        %3387 = vmatpush.bf16.msra.mxu0 %v3061
        %3388 = vmatpush.bf16.msra.mxu0 %v3058
        %3389 = vmatpush.bf16.msra.mxu0 %v3055
        %3390 = vmatpush.bf16.msra.mxu0 %v3052
        %3391 = vmatpush.bf16.msra.mxu0 %v3049
        %3392 = vmatmul.bf16.gmra.mxu0 %v3370
        %v3393 = vpop.f32.mrf.mxu0
        %v3394 = vadd.f32 %v3098, %v3393
        %v3395 = vpop.f32.mrf.mxu0
        %3396 = vdwg.mxu0
        %3397 = vmatpush.bf16.msra.mxu0 %v3071
        %3398 = vmatpush.bf16.msra.mxu0 %v3068
        %3399 = vmatpush.bf16.msra.mxu0 %v3065
        %3400 = vmatpush.bf16.msra.mxu0 %v3062
        %3401 = vmatpush.bf16.msra.mxu0 %v3059
        %3402 = vmatpush.bf16.msra.mxu0 %v3056
        %3403 = vmatpush.bf16.msra.mxu0 %v3053
        %3404 = vmatpush.bf16.msra.mxu0 %v3050
        %3405 = vmatmul.bf16.gmra.mxu0 %v3370
        %v3406 = vpop.f32.mrf.mxu0
        %v3407 = vadd.f32 %v3099, %v3406
        %v3408 = vpop.f32.mrf.mxu0
        %3409 = vdwg.mxu0
        %v3410 = vadd.f32 %v3367, %v3381
        %v3411 = vxor.u32 %v3410, 2147483648
        %v3412 = vmul.f32 %v3411, 1.442695
        %v3413 = vpow.pop %v3412
        %v3414 = vadd.f32 %v3413, 1.0
        %v3415 = vrcp.pop %v3414
        %v3416 = vmul.f32 %v3414, %v3415
        %v3417 = vsub.f32 1.0, %v3416
        %v3418 = vmul.f32 %v3415, %v3417
        %v3419 = vadd.f32 %v3415, %v3418
        %vm3420 = vweird.f32 %v3414
        %vm3421 = vweird.f32 %v3415
        %vm3422 = vmor %vm3420, %vm3421
        %v3423 = vsel %vm3422, %v3415, %v3419
        %v3424 = vand.u32 2147483647, %v3414
        %vm3425 = vcmp.eq.f32.partialorder %v3424, 8.507059e+37
        %v3426 = vand.u32 %v3414, 2147483648
        %v3427 = vor.u32 1.1754944e-38, %v3426
        %v3428 = vsel %vm3425, %v3427, %v3423
        %v3429 = vmul.f32 1.0, %v3428
        %v3430 = vadd.f32 %v3368, %v3394
        %v3431 = vxor.u32 %v3430, 2147483648
        %v3432 = vmul.f32 %v3431, 1.442695
        %v3433 = vpow.pop %v3432
        %v3434 = vadd.f32 %v3433, 1.0
        %v3435 = vrcp.pop %v3434
        %v3436 = vmul.f32 %v3434, %v3435
        %v3437 = vsub.f32 1.0, %v3436
        %v3438 = vmul.f32 %v3435, %v3437
        %v3439 = vadd.f32 %v3435, %v3438
        %vm3440 = vweird.f32 %v3434
        %vm3441 = vweird.f32 %v3435
        %vm3442 = vmor %vm3440, %vm3441
        %v3443 = vsel %vm3442, %v3435, %v3439
        %v3444 = vand.u32 2147483647, %v3434
        %vm3445 = vcmp.eq.f32.partialorder %v3444, 8.507059e+37
        %v3446 = vand.u32 %v3434, 2147483648
        %v3447 = vor.u32 1.1754944e-38, %v3446
        %v3448 = vsel %vm3445, %v3447, %v3443
        %v3449 = vmul.f32 1.0, %v3448
        %v3450 = vmul.f32 %v3429, %v3407
        %v3451 = vadd.f32 %v3369, %v3450
        %v3452 = vtanh.pop %v3451
        %v3453 = vsub.f32 1.0, %v3449
        %v3454 = vmul.f32 %v3453, %v3452
        %v3455 = vmul.f32 %v3449, %v3328
        %v3456 = vadd.f32 %v3454, %v3455
        %v3457 = vstv %s3333
        %v3458 = vstv %s3334
        %v3459 = vsel %vm2862, %v3457, %v3458
        %vm3460 = vcmp.lt.s32.totalorder %v3459, %v3192
        %v3461 = vsel %vm3460, %v3456, %v3328
        %vm3462 = vmand %vm2862, %vm3460
        %v3463 = vsel %vm3462, %v3461, 0.0
        %vm3464 = vmand %vm3197, %vm3460
        %v3465 = vsel %vm3464, %v3461, 0.0
        %s3466 = sadd.s32 0, 3
        %s3467 = sadd.s32 8, 4
        %s3468 = sshra.s32 %s3466, 3
        %s3469 = sand.u32 %s3466, 7
        %s3470 = sshra.s32 %s3466, 3
        %s3471 = sand.u32 %s3466, 7
        %s3472 = smul.u32 %s3468, 3
        %s3473 = smul.u32 %s3472, 8
        %s3474 = sadd.s32 %s3473, %s3471
        %s3475 = scalar_lea.vmem [#allocation2], %s3474
        %v3476 = vld [vmem:[%s3475] ss:$8 sm:$0x7]
        %s3477 = sshra.s32 %s3467, 3
        %s3478 = sand.u32 %s3467, 7
        %s3479 = sshra.s32 %s3467, 3
        %s3480 = sand.u32 %s3467, 7
        %s3481 = smul.u32 %s3477, 3
        %s3482 = smul.u32 %s3481, 8
        %s3483 = sadd.s32 %s3482, %s3480
        %s3484 = scalar_lea.vmem [#allocation2], %s3483
        %v3485 = vld [vmem:[%s3484] ss:$8 sm:$0x7]
        %v3487 = vperm.slane %v3476, 0
        %v3488 = vperm.slane %v3476, 1
        %v3489 = vperm.slane %v3476, 2
        %v3494 = vperm.slane %v3485, 0
        %v3495 = vperm.slane %v3485, 1
        %v3496 = vperm.slane %v3485, 2
        %v3500 = vsel %vm2901, %v3487, %v3494
        %v3501 = vsel %vm2902, %v3488, %v3495
        %v3502 = vsel %vm2903, %v3489, %v3496
        %v3503 = vpack.c.bf16 %v3461, %v3461
        %3504 = vmatpush.bf16.msra.mxu0 %v3069
        %3505 = vmatpush.bf16.msra.mxu0 %v3066
        %3506 = vmatpush.bf16.msra.mxu0 %v3063
        %3507 = vmatpush.bf16.msra.mxu0 %v3060
        %3508 = vmatpush.bf16.msra.mxu0 %v3057
        %3509 = vmatpush.bf16.msra.mxu0 %v3054
        %3510 = vmatpush.bf16.msra.mxu0 %v3051
        %3511 = vmatpush.bf16.msra.mxu0 %v3048
        %3512 = vmatmul.bf16.gmra.mxu0 %v3503
        %v3513 = vpop.f32.mrf.mxu0
        %v3514 = vadd.f32 %v3097, %v3513
        %v3515 = vpop.f32.mrf.mxu0
        %3516 = vdwg.mxu0
        %3517 = vmatpush.bf16.msra.mxu0 %v3070
        %3518 = vmatpush.bf16.msra.mxu0 %v3067
        %3519 = vmatpush.bf16.msra.mxu0 %v3064
        %3520 = vmatpush.bf16.msra.mxu0 %v3061
        %3521 = vmatpush.bf16.msra.mxu0 %v3058
        %3522 = vmatpush.bf16.msra.mxu0 %v3055
        %3523 = vmatpush.bf16.msra.mxu0 %v3052
        %3524 = vmatpush.bf16.msra.mxu0 %v3049
        %3525 = vmatmul.bf16.gmra.mxu0 %v3503
        %v3526 = vpop.f32.mrf.mxu0
        %v3527 = vadd.f32 %v3098, %v3526
        %v3528 = vpop.f32.mrf.mxu0
        %3529 = vdwg.mxu0
        %3530 = vmatpush.bf16.msra.mxu0 %v3071
        %3531 = vmatpush.bf16.msra.mxu0 %v3068
        %3532 = vmatpush.bf16.msra.mxu0 %v3065
        %3533 = vmatpush.bf16.msra.mxu0 %v3062
        %3534 = vmatpush.bf16.msra.mxu0 %v3059
        %3535 = vmatpush.bf16.msra.mxu0 %v3056
        %3536 = vmatpush.bf16.msra.mxu0 %v3053
        %3537 = vmatpush.bf16.msra.mxu0 %v3050
        %3538 = vmatmul.bf16.gmra.mxu0 %v3503
        %v3539 = vpop.f32.mrf.mxu0
        %v3540 = vadd.f32 %v3099, %v3539
        %v3541 = vpop.f32.mrf.mxu0
        %3542 = vdwg.mxu0
        %v3543 = vadd.f32 %v3500, %v3514
        %v3544 = vxor.u32 %v3543, 2147483648
        %v3545 = vmul.f32 %v3544, 1.442695
        %v3546 = vpow.pop %v3545
        %v3547 = vadd.f32 %v3546, 1.0
        %v3548 = vrcp.pop %v3547
        %v3549 = vmul.f32 %v3547, %v3548
        %v3550 = vsub.f32 1.0, %v3549
        %v3551 = vmul.f32 %v3548, %v3550
        %v3552 = vadd.f32 %v3548, %v3551
        %vm3553 = vweird.f32 %v3547
        %vm3554 = vweird.f32 %v3548
        %vm3555 = vmor %vm3553, %vm3554
        %v3556 = vsel %vm3555, %v3548, %v3552
        %v3557 = vand.u32 2147483647, %v3547
        %vm3558 = vcmp.eq.f32.partialorder %v3557, 8.507059e+37
        %v3559 = vand.u32 %v3547, 2147483648
        %v3560 = vor.u32 1.1754944e-38, %v3559
        %v3561 = vsel %vm3558, %v3560, %v3556
        %v3562 = vmul.f32 1.0, %v3561
        %v3563 = vadd.f32 %v3501, %v3527
        %v3564 = vxor.u32 %v3563, 2147483648
        %v3565 = vmul.f32 %v3564, 1.442695
        %v3566 = vpow.pop %v3565
        %v3567 = vadd.f32 %v3566, 1.0
        %v3568 = vrcp.pop %v3567
        %v3569 = vmul.f32 %v3567, %v3568
        %v3570 = vsub.f32 1.0, %v3569
        %v3571 = vmul.f32 %v3568, %v3570
        %v3572 = vadd.f32 %v3568, %v3571
        %vm3573 = vweird.f32 %v3567
        %vm3574 = vweird.f32 %v3568
        %vm3575 = vmor %vm3573, %vm3574
        %v3576 = vsel %vm3575, %v3568, %v3572
        %v3577 = vand.u32 2147483647, %v3567
        %vm3578 = vcmp.eq.f32.partialorder %v3577, 8.507059e+37
        %v3579 = vand.u32 %v3567, 2147483648
        %v3580 = vor.u32 1.1754944e-38, %v3579
        %v3581 = vsel %vm3578, %v3580, %v3576
        %v3582 = vmul.f32 1.0, %v3581
        %v3583 = vmul.f32 %v3562, %v3540
        %v3584 = vadd.f32 %v3502, %v3583
        %v3585 = vtanh.pop %v3584
        %v3586 = vsub.f32 1.0, %v3582
        %v3587 = vmul.f32 %v3586, %v3585
        %v3588 = vmul.f32 %v3582, %v3461
        %v3589 = vadd.f32 %v3587, %v3588
        %v3590 = vstv %s3466
        %v3591 = vstv %s3467
        %v3592 = vsel %vm2862, %v3590, %v3591
        %vm3593 = vcmp.lt.s32.totalorder %v3592, %v3192
        %v3594 = vsel %vm3593, %v3589, %v3461
        %vm3595 = vmand %vm2862, %vm3593
        %v3596 = vsel %vm3595, %v3594, 0.0
        %vm3597 = vmand %vm3197, %vm3593
        %v3598 = vsel %vm3597, %v3594, 0.0
        %s3599 = sadd.s32 0, 4
        %s3600 = sadd.s32 8, 3
        %s3601 = sshra.s32 %s3599, 3
        %s3602 = sand.u32 %s3599, 7
        %s3603 = sshra.s32 %s3599, 3
        %s3604 = sand.u32 %s3599, 7
        %s3605 = smul.u32 %s3601, 3
        %s3606 = smul.u32 %s3605, 8
        %s3607 = sadd.s32 %s3606, %s3604
        %s3608 = scalar_lea.vmem [#allocation2], %s3607
        %v3609 = vld [vmem:[%s3608] ss:$8 sm:$0x7]
        %s3610 = sshra.s32 %s3600, 3
        %s3611 = sand.u32 %s3600, 7
        %s3612 = sshra.s32 %s3600, 3
        %s3613 = sand.u32 %s3600, 7
        %s3614 = smul.u32 %s3610, 3
        %s3615 = smul.u32 %s3614, 8
        %s3616 = sadd.s32 %s3615, %s3613
        %s3617 = scalar_lea.vmem [#allocation2], %s3616
        %v3618 = vld [vmem:[%s3617] ss:$8 sm:$0x7]
        %v3620 = vperm.slane %v3609, 0
        %v3621 = vperm.slane %v3609, 1
        %v3622 = vperm.slane %v3609, 2
        %v3627 = vperm.slane %v3618, 0
        %v3628 = vperm.slane %v3618, 1
        %v3629 = vperm.slane %v3618, 2
        %v3633 = vsel %vm2901, %v3620, %v3627
        %v3634 = vsel %vm2902, %v3621, %v3628
        %v3635 = vsel %vm2903, %v3622, %v3629
        %v3636 = vpack.c.bf16 %v3594, %v3594
        %3637 = vmatpush.bf16.msra.mxu0 %v3069
        %3638 = vmatpush.bf16.msra.mxu0 %v3066
        %3639 = vmatpush.bf16.msra.mxu0 %v3063
        %3640 = vmatpush.bf16.msra.mxu0 %v3060
        %3641 = vmatpush.bf16.msra.mxu0 %v3057
        %3642 = vmatpush.bf16.msra.mxu0 %v3054
        %3643 = vmatpush.bf16.msra.mxu0 %v3051
        %3644 = vmatpush.bf16.msra.mxu0 %v3048
        %3645 = vmatmul.bf16.gmra.mxu0 %v3636
        %v3646 = vpop.f32.mrf.mxu0
        %v3647 = vadd.f32 %v3097, %v3646
        %v3648 = vpop.f32.mrf.mxu0
        %3649 = vdwg.mxu0
        %3650 = vmatpush.bf16.msra.mxu0 %v3070
        %3651 = vmatpush.bf16.msra.mxu0 %v3067
        %3652 = vmatpush.bf16.msra.mxu0 %v3064
        %3653 = vmatpush.bf16.msra.mxu0 %v3061
        %3654 = vmatpush.bf16.msra.mxu0 %v3058
        %3655 = vmatpush.bf16.msra.mxu0 %v3055
        %3656 = vmatpush.bf16.msra.mxu0 %v3052
        %3657 = vmatpush.bf16.msra.mxu0 %v3049
        %3658 = vmatmul.bf16.gmra.mxu0 %v3636
        %v3659 = vpop.f32.mrf.mxu0
        %v3660 = vadd.f32 %v3098, %v3659
        %v3661 = vpop.f32.mrf.mxu0
        %3662 = vdwg.mxu0
        %3663 = vmatpush.bf16.msra.mxu0 %v3071
        %3664 = vmatpush.bf16.msra.mxu0 %v3068
        %3665 = vmatpush.bf16.msra.mxu0 %v3065
        %3666 = vmatpush.bf16.msra.mxu0 %v3062
        %3667 = vmatpush.bf16.msra.mxu0 %v3059
        %3668 = vmatpush.bf16.msra.mxu0 %v3056
        %3669 = vmatpush.bf16.msra.mxu0 %v3053
        %3670 = vmatpush.bf16.msra.mxu0 %v3050
        %3671 = vmatmul.bf16.gmra.mxu0 %v3636
        %v3672 = vpop.f32.mrf.mxu0
        %v3673 = vadd.f32 %v3099, %v3672
        %v3674 = vpop.f32.mrf.mxu0
        %3675 = vdwg.mxu0
        %v3676 = vadd.f32 %v3633, %v3647
        %v3677 = vxor.u32 %v3676, 2147483648
        %v3678 = vmul.f32 %v3677, 1.442695
        %v3679 = vpow.pop %v3678
        %v3680 = vadd.f32 %v3679, 1.0
        %v3681 = vrcp.pop %v3680
        %v3682 = vmul.f32 %v3680, %v3681
        %v3683 = vsub.f32 1.0, %v3682
        %v3684 = vmul.f32 %v3681, %v3683
        %v3685 = vadd.f32 %v3681, %v3684
        %vm3686 = vweird.f32 %v3680
        %vm3687 = vweird.f32 %v3681
        %vm3688 = vmor %vm3686, %vm3687
        %v3689 = vsel %vm3688, %v3681, %v3685
        %v3690 = vand.u32 2147483647, %v3680
        %vm3691 = vcmp.eq.f32.partialorder %v3690, 8.507059e+37
        %v3692 = vand.u32 %v3680, 2147483648
        %v3693 = vor.u32 1.1754944e-38, %v3692
        %v3694 = vsel %vm3691, %v3693, %v3689
        %v3695 = vmul.f32 1.0, %v3694
        %v3696 = vadd.f32 %v3634, %v3660
        %v3697 = vxor.u32 %v3696, 2147483648
        %v3698 = vmul.f32 %v3697, 1.442695
        %v3699 = vpow.pop %v3698
        %v3700 = vadd.f32 %v3699, 1.0
        %v3701 = vrcp.pop %v3700
        %v3702 = vmul.f32 %v3700, %v3701
        %v3703 = vsub.f32 1.0, %v3702
        %v3704 = vmul.f32 %v3701, %v3703
        %v3705 = vadd.f32 %v3701, %v3704
        %vm3706 = vweird.f32 %v3700
        %vm3707 = vweird.f32 %v3701
        %vm3708 = vmor %vm3706, %vm3707
        %v3709 = vsel %vm3708, %v3701, %v3705
        %v3710 = vand.u32 2147483647, %v3700
        %vm3711 = vcmp.eq.f32.partialorder %v3710, 8.507059e+37
        %v3712 = vand.u32 %v3700, 2147483648
        %v3713 = vor.u32 1.1754944e-38, %v3712
        %v3714 = vsel %vm3711, %v3713, %v3709
        %v3715 = vmul.f32 1.0, %v3714
        %v3716 = vmul.f32 %v3695, %v3673
        %v3717 = vadd.f32 %v3635, %v3716
        %v3718 = vtanh.pop %v3717
        %v3719 = vsub.f32 1.0, %v3715
        %v3720 = vmul.f32 %v3719, %v3718
        %v3721 = vmul.f32 %v3715, %v3594
        %v3722 = vadd.f32 %v3720, %v3721
        %v3723 = vstv %s3599
        %v3724 = vstv %s3600
        %v3725 = vsel %vm2862, %v3723, %v3724
        %vm3726 = vcmp.lt.s32.totalorder %v3725, %v3192
        %v3727 = vsel %vm3726, %v3722, %v3594
        %vm3728 = vmand %vm2862, %vm3726
        %v3729 = vsel %vm3728, %v3727, 0.0
        %vm3730 = vmand %vm3197, %vm3726
        %v3731 = vsel %vm3730, %v3727, 0.0
        %s3732 = sadd.s32 0, 5
        %s3733 = sadd.s32 8, 2
        %s3734 = sshra.s32 %s3732, 3
        %s3735 = sand.u32 %s3732, 7
        %s3736 = sshra.s32 %s3732, 3
        %s3737 = sand.u32 %s3732, 7
        %s3738 = smul.u32 %s3734, 3
        %s3739 = smul.u32 %s3738, 8
        %s3740 = sadd.s32 %s3739, %s3737
        %s3741 = scalar_lea.vmem [#allocation2], %s3740
        %v3742 = vld [vmem:[%s3741] ss:$8 sm:$0x7]
        %s3743 = sshra.s32 %s3733, 3
        %s3744 = sand.u32 %s3733, 7
        %s3745 = sshra.s32 %s3733, 3
        %s3746 = sand.u32 %s3733, 7
        %s3747 = smul.u32 %s3743, 3
        %s3748 = smul.u32 %s3747, 8
        %s3749 = sadd.s32 %s3748, %s3746
        %s3750 = scalar_lea.vmem [#allocation2], %s3749
        %v3751 = vld [vmem:[%s3750] ss:$8 sm:$0x7]
        %v3753 = vperm.slane %v3742, 0
        %v3754 = vperm.slane %v3742, 1
        %v3755 = vperm.slane %v3742, 2
        %v3760 = vperm.slane %v3751, 0
        %v3761 = vperm.slane %v3751, 1
        %v3762 = vperm.slane %v3751, 2
        %v3766 = vsel %vm2901, %v3753, %v3760
        %v3767 = vsel %vm2902, %v3754, %v3761
        %v3768 = vsel %vm2903, %v3755, %v3762
        %v3769 = vpack.c.bf16 %v3727, %v3727
        %3770 = vmatpush.bf16.msra.mxu0 %v3069
        %3771 = vmatpush.bf16.msra.mxu0 %v3066
        %3772 = vmatpush.bf16.msra.mxu0 %v3063
        %3773 = vmatpush.bf16.msra.mxu0 %v3060
        %3774 = vmatpush.bf16.msra.mxu0 %v3057
        %3775 = vmatpush.bf16.msra.mxu0 %v3054
        %3776 = vmatpush.bf16.msra.mxu0 %v3051
        %3777 = vmatpush.bf16.msra.mxu0 %v3048
        %3778 = vmatmul.bf16.gmra.mxu0 %v3769
        %v3779 = vpop.f32.mrf.mxu0
        %v3780 = vadd.f32 %v3097, %v3779
        %v3781 = vpop.f32.mrf.mxu0
        %3782 = vdwg.mxu0
        %3783 = vmatpush.bf16.msra.mxu0 %v3070
        %3784 = vmatpush.bf16.msra.mxu0 %v3067
        %3785 = vmatpush.bf16.msra.mxu0 %v3064
        %3786 = vmatpush.bf16.msra.mxu0 %v3061
        %3787 = vmatpush.bf16.msra.mxu0 %v3058
        %3788 = vmatpush.bf16.msra.mxu0 %v3055
        %3789 = vmatpush.bf16.msra.mxu0 %v3052
        %3790 = vmatpush.bf16.msra.mxu0 %v3049
        %3791 = vmatmul.bf16.gmra.mxu0 %v3769
        %v3792 = vpop.f32.mrf.mxu0
        %v3793 = vadd.f32 %v3098, %v3792
        %v3794 = vpop.f32.mrf.mxu0
        %3795 = vdwg.mxu0
        %3796 = vmatpush.bf16.msra.mxu0 %v3071
        %3797 = vmatpush.bf16.msra.mxu0 %v3068
        %3798 = vmatpush.bf16.msra.mxu0 %v3065
        %3799 = vmatpush.bf16.msra.mxu0 %v3062
        %3800 = vmatpush.bf16.msra.mxu0 %v3059
        %3801 = vmatpush.bf16.msra.mxu0 %v3056
        %3802 = vmatpush.bf16.msra.mxu0 %v3053
        %3803 = vmatpush.bf16.msra.mxu0 %v3050
        %3804 = vmatmul.bf16.gmra.mxu0 %v3769
        %v3805 = vpop.f32.mrf.mxu0
        %v3806 = vadd.f32 %v3099, %v3805
        %v3807 = vpop.f32.mrf.mxu0
        %3808 = vdwg.mxu0
        %v3809 = vadd.f32 %v3766, %v3780
        %v3810 = vxor.u32 %v3809, 2147483648
        %v3811 = vmul.f32 %v3810, 1.442695
        %v3812 = vpow.pop %v3811
        %v3813 = vadd.f32 %v3812, 1.0
        %v3814 = vrcp.pop %v3813
        %v3815 = vmul.f32 %v3813, %v3814
        %v3816 = vsub.f32 1.0, %v3815
        %v3817 = vmul.f32 %v3814, %v3816
        %v3818 = vadd.f32 %v3814, %v3817
        %vm3819 = vweird.f32 %v3813
        %vm3820 = vweird.f32 %v3814
        %vm3821 = vmor %vm3819, %vm3820
        %v3822 = vsel %vm3821, %v3814, %v3818
        %v3823 = vand.u32 2147483647, %v3813
        %vm3824 = vcmp.eq.f32.partialorder %v3823, 8.507059e+37
        %v3825 = vand.u32 %v3813, 2147483648
        %v3826 = vor.u32 1.1754944e-38, %v3825
        %v3827 = vsel %vm3824, %v3826, %v3822
        %v3828 = vmul.f32 1.0, %v3827
        %v3829 = vadd.f32 %v3767, %v3793
        %v3830 = vxor.u32 %v3829, 2147483648
        %v3831 = vmul.f32 %v3830, 1.442695
        %v3832 = vpow.pop %v3831
        %v3833 = vadd.f32 %v3832, 1.0
        %v3834 = vrcp.pop %v3833
        %v3835 = vmul.f32 %v3833, %v3834
        %v3836 = vsub.f32 1.0, %v3835
        %v3837 = vmul.f32 %v3834, %v3836
        %v3838 = vadd.f32 %v3834, %v3837
        %vm3839 = vweird.f32 %v3833
        %vm3840 = vweird.f32 %v3834
        %vm3841 = vmor %vm3839, %vm3840
        %v3842 = vsel %vm3841, %v3834, %v3838
        %v3843 = vand.u32 2147483647, %v3833
        %vm3844 = vcmp.eq.f32.partialorder %v3843, 8.507059e+37
        %v3845 = vand.u32 %v3833, 2147483648
        %v3846 = vor.u32 1.1754944e-38, %v3845
        %v3847 = vsel %vm3844, %v3846, %v3842
        %v3848 = vmul.f32 1.0, %v3847
        %v3849 = vmul.f32 %v3828, %v3806
        %v3850 = vadd.f32 %v3768, %v3849
        %v3851 = vtanh.pop %v3850
        %v3852 = vsub.f32 1.0, %v3848
        %v3853 = vmul.f32 %v3852, %v3851
        %v3854 = vmul.f32 %v3848, %v3727
        %v3855 = vadd.f32 %v3853, %v3854
        %v3856 = vstv %s3732
        %v3857 = vstv %s3733
        %v3858 = vsel %vm2862, %v3856, %v3857
        %vm3859 = vcmp.lt.s32.totalorder %v3858, %v3192
        %v3860 = vsel %vm3859, %v3855, %v3727
        %vm3861 = vmand %vm2862, %vm3859
        %v3862 = vsel %vm3861, %v3860, 0.0
        %vm3863 = vmand %vm3197, %vm3859
        %v3864 = vsel %vm3863, %v3860, 0.0
        %s3865 = sadd.s32 0, 6
        %s3866 = sadd.s32 8, 1
        %s3867 = sshra.s32 %s3865, 3
        %s3868 = sand.u32 %s3865, 7
        %s3869 = sshra.s32 %s3865, 3
        %s3870 = sand.u32 %s3865, 7
        %s3871 = smul.u32 %s3867, 3
        %s3872 = smul.u32 %s3871, 8
        %s3873 = sadd.s32 %s3872, %s3870
        %s3874 = scalar_lea.vmem [#allocation2], %s3873
        %v3875 = vld [vmem:[%s3874] ss:$8 sm:$0x7]
        %s3876 = sshra.s32 %s3866, 3
        %s3877 = sand.u32 %s3866, 7
        %s3878 = sshra.s32 %s3866, 3
        %s3879 = sand.u32 %s3866, 7
        %s3880 = smul.u32 %s3876, 3
        %s3881 = smul.u32 %s3880, 8
        %s3882 = sadd.s32 %s3881, %s3879
        %s3883 = scalar_lea.vmem [#allocation2], %s3882
        %v3884 = vld [vmem:[%s3883] ss:$8 sm:$0x7]
        %v3886 = vperm.slane %v3875, 0
        %v3887 = vperm.slane %v3875, 1
        %v3888 = vperm.slane %v3875, 2
        %v3893 = vperm.slane %v3884, 0
        %v3894 = vperm.slane %v3884, 1
        %v3895 = vperm.slane %v3884, 2
        %v3899 = vsel %vm2901, %v3886, %v3893
        %v3900 = vsel %vm2902, %v3887, %v3894
        %v3901 = vsel %vm2903, %v3888, %v3895
        %v3902 = vpack.c.bf16 %v3860, %v3860
        %3903 = vmatpush.bf16.msra.mxu0 %v3069
        %3904 = vmatpush.bf16.msra.mxu0 %v3066
        %3905 = vmatpush.bf16.msra.mxu0 %v3063
        %3906 = vmatpush.bf16.msra.mxu0 %v3060
        %3907 = vmatpush.bf16.msra.mxu0 %v3057
        %3908 = vmatpush.bf16.msra.mxu0 %v3054
        %3909 = vmatpush.bf16.msra.mxu0 %v3051
        %3910 = vmatpush.bf16.msra.mxu0 %v3048
        %3911 = vmatmul.bf16.gmra.mxu0 %v3902
        %v3912 = vpop.f32.mrf.mxu0
        %v3913 = vadd.f32 %v3097, %v3912
        %v3914 = vpop.f32.mrf.mxu0
        %3915 = vdwg.mxu0
        %3916 = vmatpush.bf16.msra.mxu0 %v3070
        %3917 = vmatpush.bf16.msra.mxu0 %v3067
        %3918 = vmatpush.bf16.msra.mxu0 %v3064
        %3919 = vmatpush.bf16.msra.mxu0 %v3061
        %3920 = vmatpush.bf16.msra.mxu0 %v3058
        %3921 = vmatpush.bf16.msra.mxu0 %v3055
        %3922 = vmatpush.bf16.msra.mxu0 %v3052
        %3923 = vmatpush.bf16.msra.mxu0 %v3049
        %3924 = vmatmul.bf16.gmra.mxu0 %v3902
        %v3925 = vpop.f32.mrf.mxu0
        %v3926 = vadd.f32 %v3098, %v3925
        %v3927 = vpop.f32.mrf.mxu0
        %3928 = vdwg.mxu0
        %3929 = vmatpush.bf16.msra.mxu0 %v3071
        %3930 = vmatpush.bf16.msra.mxu0 %v3068
        %3931 = vmatpush.bf16.msra.mxu0 %v3065
        %3932 = vmatpush.bf16.msra.mxu0 %v3062
        %3933 = vmatpush.bf16.msra.mxu0 %v3059
        %3934 = vmatpush.bf16.msra.mxu0 %v3056
        %3935 = vmatpush.bf16.msra.mxu0 %v3053
        %3936 = vmatpush.bf16.msra.mxu0 %v3050
        %3937 = vmatmul.bf16.gmra.mxu0 %v3902
        %v3938 = vpop.f32.mrf.mxu0
        %v3939 = vadd.f32 %v3099, %v3938
        %v3940 = vpop.f32.mrf.mxu0
        %3941 = vdwg.mxu0
        %v3942 = vadd.f32 %v3899, %v3913
        %v3943 = vxor.u32 %v3942, 2147483648
        %v3944 = vmul.f32 %v3943, 1.442695
        %v3945 = vpow.pop %v3944
        %v3946 = vadd.f32 %v3945, 1.0
        %v3947 = vrcp.pop %v3946
        %v3948 = vmul.f32 %v3946, %v3947
        %v3949 = vsub.f32 1.0, %v3948
        %v3950 = vmul.f32 %v3947, %v3949
        %v3951 = vadd.f32 %v3947, %v3950
        %vm3952 = vweird.f32 %v3946
        %vm3953 = vweird.f32 %v3947
        %vm3954 = vmor %vm3952, %vm3953
        %v3955 = vsel %vm3954, %v3947, %v3951
        %v3956 = vand.u32 2147483647, %v3946
        %vm3957 = vcmp.eq.f32.partialorder %v3956, 8.507059e+37
        %v3958 = vand.u32 %v3946, 2147483648
        %v3959 = vor.u32 1.1754944e-38, %v3958
        %v3960 = vsel %vm3957, %v3959, %v3955
        %v3961 = vmul.f32 1.0, %v3960
        %v3962 = vadd.f32 %v3900, %v3926
        %v3963 = vxor.u32 %v3962, 2147483648
        %v3964 = vmul.f32 %v3963, 1.442695
        %v3965 = vpow.pop %v3964
        %v3966 = vadd.f32 %v3965, 1.0
        %v3967 = vrcp.pop %v3966
        %v3968 = vmul.f32 %v3966, %v3967
        %v3969 = vsub.f32 1.0, %v3968
        %v3970 = vmul.f32 %v3967, %v3969
        %v3971 = vadd.f32 %v3967, %v3970
        %vm3972 = vweird.f32 %v3966
        %vm3973 = vweird.f32 %v3967
        %vm3974 = vmor %vm3972, %vm3973
        %v3975 = vsel %vm3974, %v3967, %v3971
        %v3976 = vand.u32 2147483647, %v3966
        %vm3977 = vcmp.eq.f32.partialorder %v3976, 8.507059e+37
        %v3978 = vand.u32 %v3966, 2147483648
        %v3979 = vor.u32 1.1754944e-38, %v3978
        %v3980 = vsel %vm3977, %v3979, %v3975
        %v3981 = vmul.f32 1.0, %v3980
        %v3982 = vmul.f32 %v3961, %v3939
        %v3983 = vadd.f32 %v3901, %v3982
        %v3984 = vtanh.pop %v3983
        %v3985 = vsub.f32 1.0, %v3981
        %v3986 = vmul.f32 %v3985, %v3984
        %v3987 = vmul.f32 %v3981, %v3860
        %v3988 = vadd.f32 %v3986, %v3987
        %v3989 = vstv %s3865
        %v3990 = vstv %s3866
        %v3991 = vsel %vm2862, %v3989, %v3990
        %vm3992 = vcmp.lt.s32.totalorder %v3991, %v3192
        %v3993 = vsel %vm3992, %v3988, %v3860
        %vm3994 = vmand %vm2862, %vm3992
        %v3995 = vsel %vm3994, %v3993, 0.0
        %vm3996 = vmand %vm3197, %vm3992
        %v3997 = vsel %vm3996, %v3993, 0.0
        %s3998 = sadd.s32 0, 7
        %s3999 = sshra.s32 %s3998, 3
        %s4000 = sand.u32 %s3998, 7
        %s4001 = sshra.s32 %s3998, 3
        %s4002 = sand.u32 %s3998, 7
        %s4003 = smul.u32 %s3999, 3
        %s4004 = smul.u32 %s4003, 8
        %s4005 = sadd.s32 %s4004, %s4002
        %s4006 = scalar_lea.vmem [#allocation2], %s4005
        %v4007 = vld [vmem:[%s4006] ss:$8 sm:$0x7]
        %s4008 = smul.u32 1, 3
        %s4009 = smul.addr %s4008, 8
        %s4010 = scalar_lea.vmem [#allocation2], %s4009
        %v4011 = vld [vmem:[%s4010] ss:$8 sm:$0x7]
        %v4013 = vperm.slane %v4007, 0
        %v4014 = vperm.slane %v4007, 1
        %v4015 = vperm.slane %v4007, 2
        %v4020 = vperm.slane %v4011, 0
        %v4021 = vperm.slane %v4011, 1
        %v4022 = vperm.slane %v4011, 2
        %v4026 = vsel %vm2901, %v4013, %v4020
        %v4027 = vsel %vm2902, %v4014, %v4021
        %v4028 = vsel %vm2903, %v4015, %v4022
        %v4029 = vpack.c.bf16 %v3993, %v3993
        %4030 = vmatpush.bf16.msra.mxu0 %v3069
        %4031 = vmatpush.bf16.msra.mxu0 %v3066
        %4032 = vmatpush.bf16.msra.mxu0 %v3063
        %4033 = vmatpush.bf16.msra.mxu0 %v3060
        %4034 = vmatpush.bf16.msra.mxu0 %v3057
        %4035 = vmatpush.bf16.msra.mxu0 %v3054
        %4036 = vmatpush.bf16.msra.mxu0 %v3051
        %4037 = vmatpush.bf16.msra.mxu0 %v3048
        %4038 = vmatmul.bf16.gmra.mxu0 %v4029
        %v4039 = vpop.f32.mrf.mxu0
        %v4040 = vadd.f32 %v3097, %v4039
        %v4041 = vpop.f32.mrf.mxu0
        %4042 = vdwg.mxu0
        %4043 = vmatpush.bf16.msra.mxu0 %v3070
        %4044 = vmatpush.bf16.msra.mxu0 %v3067
        %4045 = vmatpush.bf16.msra.mxu0 %v3064
        %4046 = vmatpush.bf16.msra.mxu0 %v3061
        %4047 = vmatpush.bf16.msra.mxu0 %v3058
        %4048 = vmatpush.bf16.msra.mxu0 %v3055
        %4049 = vmatpush.bf16.msra.mxu0 %v3052
        %4050 = vmatpush.bf16.msra.mxu0 %v3049
        %4051 = vmatmul.bf16.gmra.mxu0 %v4029
        %v4052 = vpop.f32.mrf.mxu0
        %v4053 = vadd.f32 %v3098, %v4052
        %v4054 = vpop.f32.mrf.mxu0
        %4055 = vdwg.mxu0
        %4056 = vmatpush.bf16.msra.mxu0 %v3071
        %4057 = vmatpush.bf16.msra.mxu0 %v3068
        %4058 = vmatpush.bf16.msra.mxu0 %v3065
        %4059 = vmatpush.bf16.msra.mxu0 %v3062
        %4060 = vmatpush.bf16.msra.mxu0 %v3059
        %4061 = vmatpush.bf16.msra.mxu0 %v3056
        %4062 = vmatpush.bf16.msra.mxu0 %v3053
        %4063 = vmatpush.bf16.msra.mxu0 %v3050
        %4064 = vmatmul.bf16.gmra.mxu0 %v4029
        %v4065 = vpop.f32.mrf.mxu0
        %v4066 = vadd.f32 %v3099, %v4065
        %v4067 = vpop.f32.mrf.mxu0
        %4068 = vdwg.mxu0
        %v4069 = vadd.f32 %v4026, %v4040
        %v4070 = vxor.u32 %v4069, 2147483648
        %v4071 = vmul.f32 %v4070, 1.442695
        %v4072 = vpow.pop %v4071
        %v4073 = vadd.f32 %v4072, 1.0
        %v4074 = vrcp.pop %v4073
        %v4075 = vmul.f32 %v4073, %v4074
        %v4076 = vsub.f32 1.0, %v4075
        %v4077 = vmul.f32 %v4074, %v4076
        %v4078 = vadd.f32 %v4074, %v4077
        %vm4079 = vweird.f32 %v4073
        %vm4080 = vweird.f32 %v4074
        %vm4081 = vmor %vm4079, %vm4080
        %v4082 = vsel %vm4081, %v4074, %v4078
        %v4083 = vand.u32 2147483647, %v4073
        %vm4084 = vcmp.eq.f32.partialorder %v4083, 8.507059e+37
        %v4085 = vand.u32 %v4073, 2147483648
        %v4086 = vor.u32 1.1754944e-38, %v4085
        %v4087 = vsel %vm4084, %v4086, %v4082
        %v4088 = vmul.f32 1.0, %v4087
        %v4089 = vadd.f32 %v4027, %v4053
        %v4090 = vxor.u32 %v4089, 2147483648
        %v4091 = vmul.f32 %v4090, 1.442695
        %v4092 = vpow.pop %v4091
        %v4093 = vadd.f32 %v4092, 1.0
        %v4094 = vrcp.pop %v4093
        %v4095 = vmul.f32 %v4093, %v4094
        %v4096 = vsub.f32 1.0, %v4095
        %v4097 = vmul.f32 %v4094, %v4096
        %v4098 = vadd.f32 %v4094, %v4097
        %vm4099 = vweird.f32 %v4093
        %vm4100 = vweird.f32 %v4094
        %vm4101 = vmor %vm4099, %vm4100
        %v4102 = vsel %vm4101, %v4094, %v4098
        %v4103 = vand.u32 2147483647, %v4093
        %vm4104 = vcmp.eq.f32.partialorder %v4103, 8.507059e+37
        %v4105 = vand.u32 %v4093, 2147483648
        %v4106 = vor.u32 1.1754944e-38, %v4105
        %v4107 = vsel %vm4104, %v4106, %v4102
        %v4108 = vmul.f32 1.0, %v4107
        %v4109 = vmul.f32 %v4088, %v4066
        %v4110 = vadd.f32 %v4028, %v4109
        %v4111 = vtanh.pop %v4110
        %v4112 = vsub.f32 1.0, %v4108
        %v4113 = vmul.f32 %v4112, %v4111
        %v4114 = vmul.f32 %v4108, %v3993
        %v4115 = vadd.f32 %v4113, %v4114
        %v4116 = vstv %s3998
        %v4117 = vstv 8
        %v4118 = vsel %vm2862, %v4116, %v4117
        %vm4119 = vcmp.lt.s32.totalorder %v4118, %v3192
        %v4120 = vsel %vm4119, %v4115, %v3993
        %vm4121 = vmand %vm2862, %vm4119
        %v4122 = vsel %vm4121, %v4120, 0.0
        %vm4123 = vmand %vm3197, %vm4119
        %v4124 = vsel %vm4123, %v4120, 0.0
        %v4126 = vrot.slane %v3330, 7
        %v4129 = vrot.slane %v3463, 6
        %v4132 = vrot.slane %v3596, 5
        %v4135 = vrot.slane %v3729, 4
        %v4138 = vrot.slane %v3862, 3
        %v4141 = vrot.slane %v3995, 2
        %v4144 = vrot.slane %v4122, 1
        %vm4146 = vcmask 1040384
        %v4147 = vsel %vm4146, %v3196, %v4126
        %vm4148 = vcmask 1041408
        %v4149 = vsel %vm4148, %v4147, %v4129
        %vm4150 = vcmask 1042432
        %v4151 = vsel %vm4150, %v4149, %v4132
        %vm4152 = vcmask 1043456
        %v4153 = vsel %vm4152, %v4151, %v4135
        %vm4154 = vcmask 1044480
        %v4155 = vsel %vm4154, %v4153, %v4138
        %vm4156 = vcmask 1045504
        %v4157 = vsel %vm4156, %v4155, %v4141
        %vm4158 = vcmask 1046528
        %v4159 = vsel %vm4158, %v4157, %v4144
        %4160 = vst [vmem:[#allocation3] sm:$0xff] %v4159
        %v4162 = vrot.slane %v3997, 7
        %v4165 = vrot.slane %v3864, 6
        %v4168 = vrot.slane %v3731, 5
        %v4171 = vrot.slane %v3598, 4
        %v4174 = vrot.slane %v3465, 3
        %v4177 = vrot.slane %v3332, 2
        %v4180 = vrot.slane %v3199, 1
        %v4182 = vsel %vm4146, %v4124, %v4162
        %v4183 = vsel %vm4148, %v4182, %v4165
        %v4184 = vsel %vm4150, %v4183, %v4168
        %v4185 = vsel %vm4152, %v4184, %v4171
        %v4186 = vsel %vm4154, %v4185, %v4174
        %v4187 = vsel %vm4156, %v4186, %v4177
        %v4188 = vsel %vm4158, %v4187, %v4180
        %s4189 = scalar_lea.vmem [#allocation4], 8
        %4190 = vst [vmem:[%s4189] sm:$0xff] %v4188
        %v4191 = vld [vmem:[%s4010] ss:$8 sm:$0x7]
        %v4192 = vld [vmem:[%s4006] ss:$8 sm:$0x7]
        %v4194 = vperm.slane %v4191, 0
        %v4195 = vperm.slane %v4191, 1
        %v4196 = vperm.slane %v4191, 2
        %v4201 = vperm.slane %v4192, 0
        %v4202 = vperm.slane %v4192, 1
        %v4203 = vperm.slane %v4192, 2
        %v4207 = vsel %vm2901, %v4194, %v4201
        %v4208 = vsel %vm2902, %v4195, %v4202
        %v4209 = vsel %vm2903, %v4196, %v4203
        %v4210 = vpack.c.bf16 %v4120, %v4120
        %v4211 = vld [vmem:[#allocation11] sm:$0xff]
        %v4212 = vld [vmem:[#allocation11 + $0x8] sm:$0xf]
        %v4213 = vld [vmem:[#allocation11 + $0xc] sm:$0xff]
        %v4214 = vld [vmem:[#allocation11 + $0x14] sm:$0xf]
        %v4215 = vld [vmem:[#allocation11 + $0x18] sm:$0xff]
        %v4216 = vld [vmem:[#allocation11 + $0x20] sm:$0xf]
        %v4217 = vld [vmem:[#allocation11 + $0x24] sm:$0xff]
        %v4218 = vld [vmem:[#allocation11 + $0x2c] sm:$0xf]
        %v4219 = vld [vmem:[#allocation11 + $0x30] sm:$0xff]
        %v4220 = vld [vmem:[#allocation11 + $0x38] sm:$0xf]
        %v4221 = vld [vmem:[#allocation11 + $0x3c] sm:$0xff]
        %v4222 = vld [vmem:[#allocation11 + $0x44] sm:$0xf]
        %v4223 = vld [vmem:[#allocation11 + $0x48] sm:$0xff]
        %v4224 = vld [vmem:[#allocation11 + $0x50] sm:$0xf]
        %v4225 = vld [vmem:[#allocation11 + $0x54] sm:$0xff]
        %v4226 = vld [vmem:[#allocation11 + $0x5c] sm:$0xf]
        %v4227 = vld [vmem:[#allocation11 + $0x60] sm:$0xff]
        %v4228 = vld [vmem:[#allocation11 + $0x68] sm:$0xf]
        %v4229 = vld [vmem:[#allocation11 + $0x6c] sm:$0xff]
        %v4230 = vld [vmem:[#allocation11 + $0x74] sm:$0xf]
        %v4231 = vld [vmem:[#allocation11 + $0x78] sm:$0xff]
        %v4232 = vld [vmem:[#allocation11 + $0x80] sm:$0xf]
        %v4233 = vld [vmem:[#allocation11 + $0x84] sm:$0xff]
        %v4234 = vld [vmem:[#allocation11 + $0x8c] sm:$0xf]
        %v4235 = vld [vmem:[#allocation11 + $0x90] sm:$0xff]
        %v4236 = vld [vmem:[#allocation11 + $0x98] sm:$0xf]
        %v4237 = vld [vmem:[#allocation11 + $0x9c] sm:$0xff]
        %v4238 = vld [vmem:[#allocation11 + $0xa4] sm:$0xf]
        %v4239 = vld [vmem:[#allocation11 + $0xa8] sm:$0xff]
        %v4240 = vld [vmem:[#allocation11 + $0xb0] sm:$0xf]
        %v4241 = vld [vmem:[#allocation11 + $0xb4] sm:$0xff]
        %v4242 = vld [vmem:[#allocation11 + $0xbc] sm:$0xf]
        %v4243 = vld [vmem:[#allocation12] sm:$0x7]
        %v4276 = vunpack.c.l.b16 %v4211
        %v4277 = vunpack.c.h.b16 %v4211
        %v4278 = vunpack.c.l.b16 %v4212
        %v4279 = vunpack.c.l.b16 %v4213
        %v4280 = vunpack.c.h.b16 %v4213
        %v4281 = vunpack.c.l.b16 %v4214
        %v4282 = vunpack.c.l.b16 %v4215
        %v4283 = vunpack.c.h.b16 %v4215
        %v4284 = vunpack.c.l.b16 %v4216
        %v4285 = vunpack.c.l.b16 %v4217
        %v4286 = vunpack.c.h.b16 %v4217
        %v4287 = vunpack.c.l.b16 %v4218
        %v4288 = vunpack.c.l.b16 %v4219
        %v4289 = vunpack.c.h.b16 %v4219
        %v4290 = vunpack.c.l.b16 %v4220
        %v4291 = vunpack.c.l.b16 %v4221
        %v4292 = vunpack.c.h.b16 %v4221
        %v4293 = vunpack.c.l.b16 %v4222
        %v4294 = vunpack.c.l.b16 %v4223
        %v4295 = vunpack.c.h.b16 %v4223
        %v4296 = vunpack.c.l.b16 %v4224
        %v4297 = vunpack.c.l.b16 %v4225
        %v4298 = vunpack.c.h.b16 %v4225
        %v4299 = vunpack.c.l.b16 %v4226
        %v4300 = vunpack.c.l.b16 %v4227
        %v4301 = vunpack.c.h.b16 %v4227
        %v4302 = vunpack.c.l.b16 %v4228
        %v4303 = vunpack.c.l.b16 %v4229
        %v4304 = vunpack.c.h.b16 %v4229
        %v4305 = vunpack.c.l.b16 %v4230
        %v4306 = vunpack.c.l.b16 %v4231
        %v4307 = vunpack.c.h.b16 %v4231
        %v4308 = vunpack.c.l.b16 %v4232
        %v4309 = vunpack.c.l.b16 %v4233
        %v4310 = vunpack.c.h.b16 %v4233
        %v4311 = vunpack.c.l.b16 %v4234
        %v4312 = vunpack.c.l.b16 %v4235
        %v4313 = vunpack.c.h.b16 %v4235
        %v4314 = vunpack.c.l.b16 %v4236
        %v4315 = vunpack.c.l.b16 %v4237
        %v4316 = vunpack.c.h.b16 %v4237
        %v4317 = vunpack.c.l.b16 %v4238
        %v4318 = vunpack.c.l.b16 %v4239
        %v4319 = vunpack.c.h.b16 %v4239
        %v4320 = vunpack.c.l.b16 %v4240
        %v4321 = vunpack.c.l.b16 %v4241
        %v4322 = vunpack.c.h.b16 %v4241
        %v4323 = vunpack.c.l.b16 %v4242
        %v4324 = vpack.c.b16 %v4279, %v4276
        %v4325 = vpack.c.b16 %v4280, %v4277
        %v4326 = vpack.c.b16 %v4281, %v4278
        %v4327 = vpack.c.b16 %v4285, %v4282
        %v4328 = vpack.c.b16 %v4286, %v4283
        %v4329 = vpack.c.b16 %v4287, %v4284
        %v4330 = vpack.c.b16 %v4291, %v4288
        %v4331 = vpack.c.b16 %v4292, %v4289
        %v4332 = vpack.c.b16 %v4293, %v4290
        %v4333 = vpack.c.b16 %v4297, %v4294
        %v4334 = vpack.c.b16 %v4298, %v4295
        %v4335 = vpack.c.b16 %v4299, %v4296
        %v4336 = vpack.c.b16 %v4303, %v4300
        %v4337 = vpack.c.b16 %v4304, %v4301
        %v4338 = vpack.c.b16 %v4305, %v4302
        %v4339 = vpack.c.b16 %v4309, %v4306
        %v4340 = vpack.c.b16 %v4310, %v4307
        %v4341 = vpack.c.b16 %v4311, %v4308
        %v4342 = vpack.c.b16 %v4315, %v4312
        %v4343 = vpack.c.b16 %v4316, %v4313
        %v4344 = vpack.c.b16 %v4317, %v4314
        %v4345 = vpack.c.b16 %v4321, %v4318
        %v4346 = vpack.c.b16 %v4322, %v4319
        %v4347 = vpack.c.b16 %v4323, %v4320
        %v4373 = vperm.slane %v4243, 0
        %v4374 = vperm.slane %v4243, 1
        %v4375 = vperm.slane %v4243, 2
        %4379 = vmatpush.bf16.msra.mxu0 %v4345
        %4380 = vmatpush.bf16.msra.mxu0 %v4342
        %4381 = vmatpush.bf16.msra.mxu0 %v4339
        %4382 = vmatpush.bf16.msra.mxu0 %v4336
        %4383 = vmatpush.bf16.msra.mxu0 %v4333
        %4384 = vmatpush.bf16.msra.mxu0 %v4330
        %4385 = vmatpush.bf16.msra.mxu0 %v4327
        %4386 = vmatpush.bf16.msra.mxu0 %v4324
        %4387 = vmatmul.bf16.gmra.mxu0 %v4210
        %v4388 = vpop.f32.mrf.mxu0
        %v4389 = vadd.f32 %v4373, %v4388
        %v4390 = vpop.f32.mrf.mxu0
        %4391 = vdwg.mxu0
        %4392 = vmatpush.bf16.msra.mxu0 %v4346
        %4393 = vmatpush.bf16.msra.mxu0 %v4343
        %4394 = vmatpush.bf16.msra.mxu0 %v4340
        %4395 = vmatpush.bf16.msra.mxu0 %v4337
        %4396 = vmatpush.bf16.msra.mxu0 %v4334
        %4397 = vmatpush.bf16.msra.mxu0 %v4331
        %4398 = vmatpush.bf16.msra.mxu0 %v4328
        %4399 = vmatpush.bf16.msra.mxu0 %v4325
        %4400 = vmatmul.bf16.gmra.mxu0 %v4210
        %v4401 = vpop.f32.mrf.mxu0
        %v4402 = vadd.f32 %v4374, %v4401
        %v4403 = vpop.f32.mrf.mxu0
        %4404 = vdwg.mxu0
        %4405 = vmatpush.bf16.msra.mxu0 %v4347
        %4406 = vmatpush.bf16.msra.mxu0 %v4344
        %4407 = vmatpush.bf16.msra.mxu0 %v4341
        %4408 = vmatpush.bf16.msra.mxu0 %v4338
        %4409 = vmatpush.bf16.msra.mxu0 %v4335
        %4410 = vmatpush.bf16.msra.mxu0 %v4332
        %4411 = vmatpush.bf16.msra.mxu0 %v4329
        %4412 = vmatpush.bf16.msra.mxu0 %v4326
        %4413 = vmatmul.bf16.gmra.mxu0 %v4210
        %v4414 = vpop.f32.mrf.mxu0
        %v4415 = vadd.f32 %v4375, %v4414
        %v4416 = vpop.f32.mrf.mxu0
        %4417 = vdwg.mxu0
        %v4418 = vadd.f32 %v4207, %v4389
        %v4419 = vxor.u32 %v4418, 2147483648
        %v4420 = vmul.f32 %v4419, 1.442695
        %v4421 = vpow.pop %v4420
        %v4422 = vadd.f32 %v4421, 1.0
        %v4423 = vrcp.pop %v4422
        %v4424 = vmul.f32 %v4422, %v4423
        %v4425 = vsub.f32 1.0, %v4424
        %v4426 = vmul.f32 %v4423, %v4425
        %v4427 = vadd.f32 %v4423, %v4426
        %vm4428 = vweird.f32 %v4422
        %vm4429 = vweird.f32 %v4423
        %vm4430 = vmor %vm4428, %vm4429
        %v4431 = vsel %vm4430, %v4423, %v4427
        %v4432 = vand.u32 2147483647, %v4422
        %vm4433 = vcmp.eq.f32.partialorder %v4432, 8.507059e+37
        %v4434 = vand.u32 %v4422, 2147483648
        %v4435 = vor.u32 1.1754944e-38, %v4434
        %v4436 = vsel %vm4433, %v4435, %v4431
        %v4437 = vmul.f32 1.0, %v4436
        %v4438 = vadd.f32 %v4208, %v4402
        %v4439 = vxor.u32 %v4438, 2147483648
        %v4440 = vmul.f32 %v4439, 1.442695
        %v4441 = vpow.pop %v4440
        %v4442 = vadd.f32 %v4441, 1.0
        %v4443 = vrcp.pop %v4442
        %v4444 = vmul.f32 %v4442, %v4443
        %v4445 = vsub.f32 1.0, %v4444
        %v4446 = vmul.f32 %v4443, %v4445
        %v4447 = vadd.f32 %v4443, %v4446
        %vm4448 = vweird.f32 %v4442
        %vm4449 = vweird.f32 %v4443
        %vm4450 = vmor %vm4448, %vm4449
        %v4451 = vsel %vm4450, %v4443, %v4447
        %v4452 = vand.u32 2147483647, %v4442
        %vm4453 = vcmp.eq.f32.partialorder %v4452, 8.507059e+37
        %v4454 = vand.u32 %v4442, 2147483648
        %v4455 = vor.u32 1.1754944e-38, %v4454
        %v4456 = vsel %vm4453, %v4455, %v4451
        %v4457 = vmul.f32 1.0, %v4456
        %v4458 = vmul.f32 %v4437, %v4415
        %v4459 = vadd.f32 %v4209, %v4458
        %v4460 = vtanh.pop %v4459
        %v4461 = vsub.f32 1.0, %v4457
        %v4462 = vmul.f32 %v4461, %v4460
        %v4463 = vmul.f32 %v4457, %v4120
        %v4464 = vadd.f32 %v4462, %v4463
        %v4465 = vsel %vm2862, %v4117, %v4116
        %vm4466 = vcmp.lt.s32.totalorder %v4465, %v3192
        %v4467 = vsel %vm4466, %v4464, %v4120
        %vm4468 = vmand %vm2862, %vm4466
        %v4469 = vsel %vm4468, %v4467, 0.0
        %vm4470 = vmand %vm3197, %vm4466
        %v4471 = vsel %vm4470, %v4467, 0.0
        %v4472 = vld [vmem:[%s3883] ss:$8 sm:$0x7]
        %v4473 = vld [vmem:[%s3874] ss:$8 sm:$0x7]
        %v4475 = vperm.slane %v4472, 0
        %v4476 = vperm.slane %v4472, 1
        %v4477 = vperm.slane %v4472, 2
        %v4482 = vperm.slane %v4473, 0
        %v4483 = vperm.slane %v4473, 1
        %v4484 = vperm.slane %v4473, 2
        %v4488 = vsel %vm2901, %v4475, %v4482
        %v4489 = vsel %vm2902, %v4476, %v4483
        %v4490 = vsel %vm2903, %v4477, %v4484
        %v4491 = vpack.c.bf16 %v4467, %v4467
        %4492 = vmatpush.bf16.msra.mxu0 %v4345
        %4493 = vmatpush.bf16.msra.mxu0 %v4342
        %4494 = vmatpush.bf16.msra.mxu0 %v4339
        %4495 = vmatpush.bf16.msra.mxu0 %v4336
        %4496 = vmatpush.bf16.msra.mxu0 %v4333
        %4497 = vmatpush.bf16.msra.mxu0 %v4330
        %4498 = vmatpush.bf16.msra.mxu0 %v4327
        %4499 = vmatpush.bf16.msra.mxu0 %v4324
        %4500 = vmatmul.bf16.gmra.mxu0 %v4491
        %v4501 = vpop.f32.mrf.mxu0
        %v4502 = vadd.f32 %v4373, %v4501
        %v4503 = vpop.f32.mrf.mxu0
        %4504 = vdwg.mxu0
        %4505 = vmatpush.bf16.msra.mxu0 %v4346
        %4506 = vmatpush.bf16.msra.mxu0 %v4343
        %4507 = vmatpush.bf16.msra.mxu0 %v4340
        %4508 = vmatpush.bf16.msra.mxu0 %v4337
        %4509 = vmatpush.bf16.msra.mxu0 %v4334
        %4510 = vmatpush.bf16.msra.mxu0 %v4331
        %4511 = vmatpush.bf16.msra.mxu0 %v4328
        %4512 = vmatpush.bf16.msra.mxu0 %v4325
        %4513 = vmatmul.bf16.gmra.mxu0 %v4491
        %v4514 = vpop.f32.mrf.mxu0
        %v4515 = vadd.f32 %v4374, %v4514
        %v4516 = vpop.f32.mrf.mxu0
        %4517 = vdwg.mxu0
        %4518 = vmatpush.bf16.msra.mxu0 %v4347
        %4519 = vmatpush.bf16.msra.mxu0 %v4344
        %4520 = vmatpush.bf16.msra.mxu0 %v4341
        %4521 = vmatpush.bf16.msra.mxu0 %v4338
        %4522 = vmatpush.bf16.msra.mxu0 %v4335
        %4523 = vmatpush.bf16.msra.mxu0 %v4332
        %4524 = vmatpush.bf16.msra.mxu0 %v4329
        %4525 = vmatpush.bf16.msra.mxu0 %v4326
        %4526 = vmatmul.bf16.gmra.mxu0 %v4491
        %v4527 = vpop.f32.mrf.mxu0
        %v4528 = vadd.f32 %v4375, %v4527
        %v4529 = vpop.f32.mrf.mxu0
        %4530 = vdwg.mxu0
        %v4531 = vadd.f32 %v4488, %v4502
        %v4532 = vxor.u32 %v4531, 2147483648
        %v4533 = vmul.f32 %v4532, 1.442695
        %v4534 = vpow.pop %v4533
        %v4535 = vadd.f32 %v4534, 1.0
        %v4536 = vrcp.pop %v4535
        %v4537 = vmul.f32 %v4535, %v4536
        %v4538 = vsub.f32 1.0, %v4537
        %v4539 = vmul.f32 %v4536, %v4538
        %v4540 = vadd.f32 %v4536, %v4539
        %vm4541 = vweird.f32 %v4535
        %vm4542 = vweird.f32 %v4536
        %vm4543 = vmor %vm4541, %vm4542
        %v4544 = vsel %vm4543, %v4536, %v4540
        %v4545 = vand.u32 2147483647, %v4535
        %vm4546 = vcmp.eq.f32.partialorder %v4545, 8.507059e+37
        %v4547 = vand.u32 %v4535, 2147483648
        %v4548 = vor.u32 1.1754944e-38, %v4547
        %v4549 = vsel %vm4546, %v4548, %v4544
        %v4550 = vmul.f32 1.0, %v4549
        %v4551 = vadd.f32 %v4489, %v4515
        %v4552 = vxor.u32 %v4551, 2147483648
        %v4553 = vmul.f32 %v4552, 1.442695
        %v4554 = vpow.pop %v4553
        %v4555 = vadd.f32 %v4554, 1.0
        %v4556 = vrcp.pop %v4555
        %v4557 = vmul.f32 %v4555, %v4556
        %v4558 = vsub.f32 1.0, %v4557
        %v4559 = vmul.f32 %v4556, %v4558
        %v4560 = vadd.f32 %v4556, %v4559
        %vm4561 = vweird.f32 %v4555
        %vm4562 = vweird.f32 %v4556
        %vm4563 = vmor %vm4561, %vm4562
        %v4564 = vsel %vm4563, %v4556, %v4560
        %v4565 = vand.u32 2147483647, %v4555
        %vm4566 = vcmp.eq.f32.partialorder %v4565, 8.507059e+37
        %v4567 = vand.u32 %v4555, 2147483648
        %v4568 = vor.u32 1.1754944e-38, %v4567
        %v4569 = vsel %vm4566, %v4568, %v4564
        %v4570 = vmul.f32 1.0, %v4569
        %v4571 = vmul.f32 %v4550, %v4528
        %v4572 = vadd.f32 %v4490, %v4571
        %v4573 = vtanh.pop %v4572
        %v4574 = vsub.f32 1.0, %v4570
        %v4575 = vmul.f32 %v4574, %v4573
        %v4576 = vmul.f32 %v4570, %v4467
        %v4577 = vadd.f32 %v4575, %v4576
        %v4578 = vsel %vm2862, %v3990, %v3989
        %vm4579 = vcmp.lt.s32.totalorder %v4578, %v3192
        %v4580 = vsel %vm4579, %v4577, %v4467
        %vm4581 = vmand %vm2862, %vm4579
        %v4582 = vsel %vm4581, %v4580, 0.0
        %vm4583 = vmand %vm3197, %vm4579
        %v4584 = vsel %vm4583, %v4580, 0.0
        %v4585 = vld [vmem:[%s3750] ss:$8 sm:$0x7]
        %v4586 = vld [vmem:[%s3741] ss:$8 sm:$0x7]
        %v4588 = vperm.slane %v4585, 0
        %v4589 = vperm.slane %v4585, 1
        %v4590 = vperm.slane %v4585, 2
        %v4595 = vperm.slane %v4586, 0
        %v4596 = vperm.slane %v4586, 1
        %v4597 = vperm.slane %v4586, 2
        %v4601 = vsel %vm2901, %v4588, %v4595
        %v4602 = vsel %vm2902, %v4589, %v4596
        %v4603 = vsel %vm2903, %v4590, %v4597
        %v4604 = vpack.c.bf16 %v4580, %v4580
        %4605 = vmatpush.bf16.msra.mxu0 %v4345
        %4606 = vmatpush.bf16.msra.mxu0 %v4342
        %4607 = vmatpush.bf16.msra.mxu0 %v4339
        %4608 = vmatpush.bf16.msra.mxu0 %v4336
        %4609 = vmatpush.bf16.msra.mxu0 %v4333
        %4610 = vmatpush.bf16.msra.mxu0 %v4330
        %4611 = vmatpush.bf16.msra.mxu0 %v4327
        %4612 = vmatpush.bf16.msra.mxu0 %v4324
        %4613 = vmatmul.bf16.gmra.mxu0 %v4604
        %v4614 = vpop.f32.mrf.mxu0
        %v4615 = vadd.f32 %v4373, %v4614
        %v4616 = vpop.f32.mrf.mxu0
        %4617 = vdwg.mxu0
        %4618 = vmatpush.bf16.msra.mxu0 %v4346
        %4619 = vmatpush.bf16.msra.mxu0 %v4343
        %4620 = vmatpush.bf16.msra.mxu0 %v4340
        %4621 = vmatpush.bf16.msra.mxu0 %v4337
        %4622 = vmatpush.bf16.msra.mxu0 %v4334
        %4623 = vmatpush.bf16.msra.mxu0 %v4331
        %4624 = vmatpush.bf16.msra.mxu0 %v4328
        %4625 = vmatpush.bf16.msra.mxu0 %v4325
        %4626 = vmatmul.bf16.gmra.mxu0 %v4604
        %v4627 = vpop.f32.mrf.mxu0
        %v4628 = vadd.f32 %v4374, %v4627
        %v4629 = vpop.f32.mrf.mxu0
        %4630 = vdwg.mxu0
        %4631 = vmatpush.bf16.msra.mxu0 %v4347
        %4632 = vmatpush.bf16.msra.mxu0 %v4344
        %4633 = vmatpush.bf16.msra.mxu0 %v4341
        %4634 = vmatpush.bf16.msra.mxu0 %v4338
        %4635 = vmatpush.bf16.msra.mxu0 %v4335
        %4636 = vmatpush.bf16.msra.mxu0 %v4332
        %4637 = vmatpush.bf16.msra.mxu0 %v4329
        %4638 = vmatpush.bf16.msra.mxu0 %v4326
        %4639 = vmatmul.bf16.gmra.mxu0 %v4604
        %v4640 = vpop.f32.mrf.mxu0
        %v4641 = vadd.f32 %v4375, %v4640
        %v4642 = vpop.f32.mrf.mxu0
        %4643 = vdwg.mxu0
        %v4644 = vadd.f32 %v4601, %v4615
        %v4645 = vxor.u32 %v4644, 2147483648
        %v4646 = vmul.f32 %v4645, 1.442695
        %v4647 = vpow.pop %v4646
        %v4648 = vadd.f32 %v4647, 1.0
        %v4649 = vrcp.pop %v4648
        %v4650 = vmul.f32 %v4648, %v4649
        %v4651 = vsub.f32 1.0, %v4650
        %v4652 = vmul.f32 %v4649, %v4651
        %v4653 = vadd.f32 %v4649, %v4652
        %vm4654 = vweird.f32 %v4648
        %vm4655 = vweird.f32 %v4649
        %vm4656 = vmor %vm4654, %vm4655
        %v4657 = vsel %vm4656, %v4649, %v4653
        %v4658 = vand.u32 2147483647, %v4648
        %vm4659 = vcmp.eq.f32.partialorder %v4658, 8.507059e+37
        %v4660 = vand.u32 %v4648, 2147483648
        %v4661 = vor.u32 1.1754944e-38, %v4660
        %v4662 = vsel %vm4659, %v4661, %v4657
        %v4663 = vmul.f32 1.0, %v4662
        %v4664 = vadd.f32 %v4602, %v4628
        %v4665 = vxor.u32 %v4664, 2147483648
        %v4666 = vmul.f32 %v4665, 1.442695
        %v4667 = vpow.pop %v4666
        %v4668 = vadd.f32 %v4667, 1.0
        %v4669 = vrcp.pop %v4668
        %v4670 = vmul.f32 %v4668, %v4669
        %v4671 = vsub.f32 1.0, %v4670
        %v4672 = vmul.f32 %v4669, %v4671
        %v4673 = vadd.f32 %v4669, %v4672
        %vm4674 = vweird.f32 %v4668
        %vm4675 = vweird.f32 %v4669
        %vm4676 = vmor %vm4674, %vm4675
        %v4677 = vsel %vm4676, %v4669, %v4673
        %v4678 = vand.u32 2147483647, %v4668
        %vm4679 = vcmp.eq.f32.partialorder %v4678, 8.507059e+37
        %v4680 = vand.u32 %v4668, 2147483648
        %v4681 = vor.u32 1.1754944e-38, %v4680
        %v4682 = vsel %vm4679, %v4681, %v4677
        %v4683 = vmul.f32 1.0, %v4682
        %v4684 = vmul.f32 %v4663, %v4641
        %v4685 = vadd.f32 %v4603, %v4684
        %v4686 = vtanh.pop %v4685
        %v4687 = vsub.f32 1.0, %v4683
        %v4688 = vmul.f32 %v4687, %v4686
        %v4689 = vmul.f32 %v4683, %v4580
        %v4690 = vadd.f32 %v4688, %v4689
        %v4691 = vsel %vm2862, %v3857, %v3856
        %vm4692 = vcmp.lt.s32.totalorder %v4691, %v3192
        %v4693 = vsel %vm4692, %v4690, %v4580
        %vm4694 = vmand %vm2862, %vm4692
        %v4695 = vsel %vm4694, %v4693, 0.0
        %vm4696 = vmand %vm3197, %vm4692
        %v4697 = vsel %vm4696, %v4693, 0.0
        %v4698 = vld [vmem:[%s3617] ss:$8 sm:$0x7]
        %v4699 = vld [vmem:[%s3608] ss:$8 sm:$0x7]
        %v4701 = vperm.slane %v4698, 0
        %v4702 = vperm.slane %v4698, 1
        %v4703 = vperm.slane %v4698, 2
        %v4708 = vperm.slane %v4699, 0
        %v4709 = vperm.slane %v4699, 1
        %v4710 = vperm.slane %v4699, 2
        %v4714 = vsel %vm2901, %v4701, %v4708
        %v4715 = vsel %vm2902, %v4702, %v4709
        %v4716 = vsel %vm2903, %v4703, %v4710
        %v4717 = vpack.c.bf16 %v4693, %v4693
        %4718 = vmatpush.bf16.msra.mxu0 %v4345
        %4719 = vmatpush.bf16.msra.mxu0 %v4342
        %4720 = vmatpush.bf16.msra.mxu0 %v4339
        %4721 = vmatpush.bf16.msra.mxu0 %v4336
        %4722 = vmatpush.bf16.msra.mxu0 %v4333
        %4723 = vmatpush.bf16.msra.mxu0 %v4330
        %4724 = vmatpush.bf16.msra.mxu0 %v4327
        %4725 = vmatpush.bf16.msra.mxu0 %v4324
        %4726 = vmatmul.bf16.gmra.mxu0 %v4717
        %v4727 = vpop.f32.mrf.mxu0
        %v4728 = vadd.f32 %v4373, %v4727
        %v4729 = vpop.f32.mrf.mxu0
        %4730 = vdwg.mxu0
        %4731 = vmatpush.bf16.msra.mxu0 %v4346
        %4732 = vmatpush.bf16.msra.mxu0 %v4343
        %4733 = vmatpush.bf16.msra.mxu0 %v4340
        %4734 = vmatpush.bf16.msra.mxu0 %v4337
        %4735 = vmatpush.bf16.msra.mxu0 %v4334
        %4736 = vmatpush.bf16.msra.mxu0 %v4331
        %4737 = vmatpush.bf16.msra.mxu0 %v4328
        %4738 = vmatpush.bf16.msra.mxu0 %v4325
        %4739 = vmatmul.bf16.gmra.mxu0 %v4717
        %v4740 = vpop.f32.mrf.mxu0
        %v4741 = vadd.f32 %v4374, %v4740
        %v4742 = vpop.f32.mrf.mxu0
        %4743 = vdwg.mxu0
        %4744 = vmatpush.bf16.msra.mxu0 %v4347
        %4745 = vmatpush.bf16.msra.mxu0 %v4344
        %4746 = vmatpush.bf16.msra.mxu0 %v4341
        %4747 = vmatpush.bf16.msra.mxu0 %v4338
        %4748 = vmatpush.bf16.msra.mxu0 %v4335
        %4749 = vmatpush.bf16.msra.mxu0 %v4332
        %4750 = vmatpush.bf16.msra.mxu0 %v4329
        %4751 = vmatpush.bf16.msra.mxu0 %v4326
        %4752 = vmatmul.bf16.gmra.mxu0 %v4717
        %v4753 = vpop.f32.mrf.mxu0
        %v4754 = vadd.f32 %v4375, %v4753
        %v4755 = vpop.f32.mrf.mxu0
        %4756 = vdwg.mxu0
        %v4757 = vadd.f32 %v4714, %v4728
        %v4758 = vxor.u32 %v4757, 2147483648
        %v4759 = vmul.f32 %v4758, 1.442695
        %v4760 = vpow.pop %v4759
        %v4761 = vadd.f32 %v4760, 1.0
        %v4762 = vrcp.pop %v4761
        %v4763 = vmul.f32 %v4761, %v4762
        %v4764 = vsub.f32 1.0, %v4763
        %v4765 = vmul.f32 %v4762, %v4764
        %v4766 = vadd.f32 %v4762, %v4765
        %vm4767 = vweird.f32 %v4761
        %vm4768 = vweird.f32 %v4762
        %vm4769 = vmor %vm4767, %vm4768
        %v4770 = vsel %vm4769, %v4762, %v4766
        %v4771 = vand.u32 2147483647, %v4761
        %vm4772 = vcmp.eq.f32.partialorder %v4771, 8.507059e+37
        %v4773 = vand.u32 %v4761, 2147483648
        %v4774 = vor.u32 1.1754944e-38, %v4773
        %v4775 = vsel %vm4772, %v4774, %v4770
        %v4776 = vmul.f32 1.0, %v4775
        %v4777 = vadd.f32 %v4715, %v4741
        %v4778 = vxor.u32 %v4777, 2147483648
        %v4779 = vmul.f32 %v4778, 1.442695
        %v4780 = vpow.pop %v4779
        %v4781 = vadd.f32 %v4780, 1.0
        %v4782 = vrcp.pop %v4781
        %v4783 = vmul.f32 %v4781, %v4782
        %v4784 = vsub.f32 1.0, %v4783
        %v4785 = vmul.f32 %v4782, %v4784
        %v4786 = vadd.f32 %v4782, %v4785
        %vm4787 = vweird.f32 %v4781
        %vm4788 = vweird.f32 %v4782
        %vm4789 = vmor %vm4787, %vm4788
        %v4790 = vsel %vm4789, %v4782, %v4786
        %v4791 = vand.u32 2147483647, %v4781
        %vm4792 = vcmp.eq.f32.partialorder %v4791, 8.507059e+37
        %v4793 = vand.u32 %v4781, 2147483648
        %v4794 = vor.u32 1.1754944e-38, %v4793
        %v4795 = vsel %vm4792, %v4794, %v4790
        %v4796 = vmul.f32 1.0, %v4795
        %v4797 = vmul.f32 %v4776, %v4754
        %v4798 = vadd.f32 %v4716, %v4797
        %v4799 = vtanh.pop %v4798
        %v4800 = vsub.f32 1.0, %v4796
        %v4801 = vmul.f32 %v4800, %v4799
        %v4802 = vmul.f32 %v4796, %v4693
        %v4803 = vadd.f32 %v4801, %v4802
        %v4804 = vsel %vm2862, %v3724, %v3723
        %vm4805 = vcmp.lt.s32.totalorder %v4804, %v3192
        %v4806 = vsel %vm4805, %v4803, %v4693
        %vm4807 = vmand %vm2862, %vm4805
        %v4808 = vsel %vm4807, %v4806, 0.0
        %vm4809 = vmand %vm3197, %vm4805
        %v4810 = vsel %vm4809, %v4806, 0.0
        %v4811 = vld [vmem:[%s3484] ss:$8 sm:$0x7]
        %v4812 = vld [vmem:[%s3475] ss:$8 sm:$0x7]
        %v4814 = vperm.slane %v4811, 0
        %v4815 = vperm.slane %v4811, 1
        %v4816 = vperm.slane %v4811, 2
        %v4821 = vperm.slane %v4812, 0
        %v4822 = vperm.slane %v4812, 1
        %v4823 = vperm.slane %v4812, 2
        %v4827 = vsel %vm2901, %v4814, %v4821
        %v4828 = vsel %vm2902, %v4815, %v4822
        %v4829 = vsel %vm2903, %v4816, %v4823
        %v4830 = vpack.c.bf16 %v4806, %v4806
        %4831 = vmatpush.bf16.msra.mxu0 %v4345
        %4832 = vmatpush.bf16.msra.mxu0 %v4342
        %4833 = vmatpush.bf16.msra.mxu0 %v4339
        %4834 = vmatpush.bf16.msra.mxu0 %v4336
        %4835 = vmatpush.bf16.msra.mxu0 %v4333
        %4836 = vmatpush.bf16.msra.mxu0 %v4330
        %4837 = vmatpush.bf16.msra.mxu0 %v4327
        %4838 = vmatpush.bf16.msra.mxu0 %v4324
        %4839 = vmatmul.bf16.gmra.mxu0 %v4830
        %v4840 = vpop.f32.mrf.mxu0
        %v4841 = vadd.f32 %v4373, %v4840
        %v4842 = vpop.f32.mrf.mxu0
        %4843 = vdwg.mxu0
        %4844 = vmatpush.bf16.msra.mxu0 %v4346
        %4845 = vmatpush.bf16.msra.mxu0 %v4343
        %4846 = vmatpush.bf16.msra.mxu0 %v4340
        %4847 = vmatpush.bf16.msra.mxu0 %v4337
        %4848 = vmatpush.bf16.msra.mxu0 %v4334
        %4849 = vmatpush.bf16.msra.mxu0 %v4331
        %4850 = vmatpush.bf16.msra.mxu0 %v4328
        %4851 = vmatpush.bf16.msra.mxu0 %v4325
        %4852 = vmatmul.bf16.gmra.mxu0 %v4830
        %v4853 = vpop.f32.mrf.mxu0
        %v4854 = vadd.f32 %v4374, %v4853
        %v4855 = vpop.f32.mrf.mxu0
        %4856 = vdwg.mxu0
        %4857 = vmatpush.bf16.msra.mxu0 %v4347
        %4858 = vmatpush.bf16.msra.mxu0 %v4344
        %4859 = vmatpush.bf16.msra.mxu0 %v4341
        %4860 = vmatpush.bf16.msra.mxu0 %v4338
        %4861 = vmatpush.bf16.msra.mxu0 %v4335
        %4862 = vmatpush.bf16.msra.mxu0 %v4332
        %4863 = vmatpush.bf16.msra.mxu0 %v4329
        %4864 = vmatpush.bf16.msra.mxu0 %v4326
        %4865 = vmatmul.bf16.gmra.mxu0 %v4830
        %v4866 = vpop.f32.mrf.mxu0
        %v4867 = vadd.f32 %v4375, %v4866
        %v4868 = vpop.f32.mrf.mxu0
        %4869 = vdwg.mxu0
        %v4870 = vadd.f32 %v4827, %v4841
        %v4871 = vxor.u32 %v4870, 2147483648
        %v4872 = vmul.f32 %v4871, 1.442695
        %v4873 = vpow.pop %v4872
        %v4874 = vadd.f32 %v4873, 1.0
        %v4875 = vrcp.pop %v4874
        %v4876 = vmul.f32 %v4874, %v4875
        %v4877 = vsub.f32 1.0, %v4876
        %v4878 = vmul.f32 %v4875, %v4877
        %v4879 = vadd.f32 %v4875, %v4878
        %vm4880 = vweird.f32 %v4874
        %vm4881 = vweird.f32 %v4875
        %vm4882 = vmor %vm4880, %vm4881
        %v4883 = vsel %vm4882, %v4875, %v4879
        %v4884 = vand.u32 2147483647, %v4874
        %vm4885 = vcmp.eq.f32.partialorder %v4884, 8.507059e+37
        %v4886 = vand.u32 %v4874, 2147483648
        %v4887 = vor.u32 1.1754944e-38, %v4886
        %v4888 = vsel %vm4885, %v4887, %v4883
        %v4889 = vmul.f32 1.0, %v4888
        %v4890 = vadd.f32 %v4828, %v4854
        %v4891 = vxor.u32 %v4890, 2147483648
        %v4892 = vmul.f32 %v4891, 1.442695
        %v4893 = vpow.pop %v4892
        %v4894 = vadd.f32 %v4893, 1.0
        %v4895 = vrcp.pop %v4894
        %v4896 = vmul.f32 %v4894, %v4895
        %v4897 = vsub.f32 1.0, %v4896
        %v4898 = vmul.f32 %v4895, %v4897
        %v4899 = vadd.f32 %v4895, %v4898
        %vm4900 = vweird.f32 %v4894
        %vm4901 = vweird.f32 %v4895
        %vm4902 = vmor %vm4900, %vm4901
        %v4903 = vsel %vm4902, %v4895, %v4899
        %v4904 = vand.u32 2147483647, %v4894
        %vm4905 = vcmp.eq.f32.partialorder %v4904, 8.507059e+37
        %v4906 = vand.u32 %v4894, 2147483648
        %v4907 = vor.u32 1.1754944e-38, %v4906
        %v4908 = vsel %vm4905, %v4907, %v4903
        %v4909 = vmul.f32 1.0, %v4908
        %v4910 = vmul.f32 %v4889, %v4867
        %v4911 = vadd.f32 %v4829, %v4910
        %v4912 = vtanh.pop %v4911
        %v4913 = vsub.f32 1.0, %v4909
        %v4914 = vmul.f32 %v4913, %v4912
        %v4915 = vmul.f32 %v4909, %v4806
        %v4916 = vadd.f32 %v4914, %v4915
        %v4917 = vsel %vm2862, %v3591, %v3590
        %vm4918 = vcmp.lt.s32.totalorder %v4917, %v3192
        %v4919 = vsel %vm4918, %v4916, %v4806
        %vm4920 = vmand %vm2862, %vm4918
        %v4921 = vsel %vm4920, %v4919, 0.0
        %vm4922 = vmand %vm3197, %vm4918
        %v4923 = vsel %vm4922, %v4919, 0.0
        %v4924 = vld [vmem:[%s3351] ss:$8 sm:$0x7]
        %v4925 = vld [vmem:[%s3342] ss:$8 sm:$0x7]
        %v4927 = vperm.slane %v4924, 0
        %v4928 = vperm.slane %v4924, 1
        %v4929 = vperm.slane %v4924, 2
        %v4934 = vperm.slane %v4925, 0
        %v4935 = vperm.slane %v4925, 1
        %v4936 = vperm.slane %v4925, 2
        %v4940 = vsel %vm2901, %v4927, %v4934
        %v4941 = vsel %vm2902, %v4928, %v4935
        %v4942 = vsel %vm2903, %v4929, %v4936
        %v4943 = vpack.c.bf16 %v4919, %v4919
        %4944 = vmatpush.bf16.msra.mxu0 %v4345
        %4945 = vmatpush.bf16.msra.mxu0 %v4342
        %4946 = vmatpush.bf16.msra.mxu0 %v4339
        %4947 = vmatpush.bf16.msra.mxu0 %v4336
        %4948 = vmatpush.bf16.msra.mxu0 %v4333
        %4949 = vmatpush.bf16.msra.mxu0 %v4330
        %4950 = vmatpush.bf16.msra.mxu0 %v4327
        %4951 = vmatpush.bf16.msra.mxu0 %v4324
        %4952 = vmatmul.bf16.gmra.mxu0 %v4943
        %v4953 = vpop.f32.mrf.mxu0
        %v4954 = vadd.f32 %v4373, %v4953
        %v4955 = vpop.f32.mrf.mxu0
        %4956 = vdwg.mxu0
        %4957 = vmatpush.bf16.msra.mxu0 %v4346
        %4958 = vmatpush.bf16.msra.mxu0 %v4343
        %4959 = vmatpush.bf16.msra.mxu0 %v4340
        %4960 = vmatpush.bf16.msra.mxu0 %v4337
        %4961 = vmatpush.bf16.msra.mxu0 %v4334
        %4962 = vmatpush.bf16.msra.mxu0 %v4331
        %4963 = vmatpush.bf16.msra.mxu0 %v4328
        %4964 = vmatpush.bf16.msra.mxu0 %v4325
        %4965 = vmatmul.bf16.gmra.mxu0 %v4943
        %v4966 = vpop.f32.mrf.mxu0
        %v4967 = vadd.f32 %v4374, %v4966
        %v4968 = vpop.f32.mrf.mxu0
        %4969 = vdwg.mxu0
        %4970 = vmatpush.bf16.msra.mxu0 %v4347
        %4971 = vmatpush.bf16.msra.mxu0 %v4344
        %4972 = vmatpush.bf16.msra.mxu0 %v4341
        %4973 = vmatpush.bf16.msra.mxu0 %v4338
        %4974 = vmatpush.bf16.msra.mxu0 %v4335
        %4975 = vmatpush.bf16.msra.mxu0 %v4332
        %4976 = vmatpush.bf16.msra.mxu0 %v4329
        %4977 = vmatpush.bf16.msra.mxu0 %v4326
        %4978 = vmatmul.bf16.gmra.mxu0 %v4943
        %v4979 = vpop.f32.mrf.mxu0
        %v4980 = vadd.f32 %v4375, %v4979
        %v4981 = vpop.f32.mrf.mxu0
        %4982 = vdwg.mxu0
        %v4983 = vadd.f32 %v4940, %v4954
        %v4984 = vxor.u32 %v4983, 2147483648
        %v4985 = vmul.f32 %v4984, 1.442695
        %v4986 = vpow.pop %v4985
        %v4987 = vadd.f32 %v4986, 1.0
        %v4988 = vrcp.pop %v4987
        %v4989 = vmul.f32 %v4987, %v4988
        %v4990 = vsub.f32 1.0, %v4989
        %v4991 = vmul.f32 %v4988, %v4990
        %v4992 = vadd.f32 %v4988, %v4991
        %vm4993 = vweird.f32 %v4987
        %vm4994 = vweird.f32 %v4988
        %vm4995 = vmor %vm4993, %vm4994
        %v4996 = vsel %vm4995, %v4988, %v4992
        %v4997 = vand.u32 2147483647, %v4987
        %vm4998 = vcmp.eq.f32.partialorder %v4997, 8.507059e+37
        %v4999 = vand.u32 %v4987, 2147483648
        %v5000 = vor.u32 1.1754944e-38, %v4999
        %v5001 = vsel %vm4998, %v5000, %v4996
        %v5002 = vmul.f32 1.0, %v5001
        %v5003 = vadd.f32 %v4941, %v4967
        %v5004 = vxor.u32 %v5003, 2147483648
        %v5005 = vmul.f32 %v5004, 1.442695
        %v5006 = vpow.pop %v5005
        %v5007 = vadd.f32 %v5006, 1.0
        %v5008 = vrcp.pop %v5007
        %v5009 = vmul.f32 %v5007, %v5008
        %v5010 = vsub.f32 1.0, %v5009
        %v5011 = vmul.f32 %v5008, %v5010
        %v5012 = vadd.f32 %v5008, %v5011
        %vm5013 = vweird.f32 %v5007
        %vm5014 = vweird.f32 %v5008
        %vm5015 = vmor %vm5013, %vm5014
        %v5016 = vsel %vm5015, %v5008, %v5012
        %v5017 = vand.u32 2147483647, %v5007
        %vm5018 = vcmp.eq.f32.partialorder %v5017, 8.507059e+37
        %v5019 = vand.u32 %v5007, 2147483648
        %v5020 = vor.u32 1.1754944e-38, %v5019
        %v5021 = vsel %vm5018, %v5020, %v5016
        %v5022 = vmul.f32 1.0, %v5021
        %v5023 = vmul.f32 %v5002, %v4980
        %v5024 = vadd.f32 %v4942, %v5023
        %v5025 = vtanh.pop %v5024
        %v5026 = vsub.f32 1.0, %v5022
        %v5027 = vmul.f32 %v5026, %v5025
        %v5028 = vmul.f32 %v5022, %v4919
        %v5029 = vadd.f32 %v5027, %v5028
        %v5030 = vsel %vm2862, %v3458, %v3457
        %vm5031 = vcmp.lt.s32.totalorder %v5030, %v3192
        %v5032 = vsel %vm5031, %v5029, %v4919
        %vm5033 = vmand %vm2862, %vm5031
        %v5034 = vsel %vm5033, %v5032, 0.0
        %vm5035 = vmand %vm3197, %vm5031
        %v5036 = vsel %vm5035, %v5032, 0.0
        %v5037 = vld [vmem:[%s3218] ss:$8 sm:$0x7]
        %v5038 = vld [vmem:[%s3209] ss:$8 sm:$0x7]
        %v5040 = vperm.slane %v5037, 0
        %v5041 = vperm.slane %v5037, 1
        %v5042 = vperm.slane %v5037, 2
        %v5047 = vperm.slane %v5038, 0
        %v5048 = vperm.slane %v5038, 1
        %v5049 = vperm.slane %v5038, 2
        %v5053 = vsel %vm2901, %v5040, %v5047
        %v5054 = vsel %vm2902, %v5041, %v5048
        %v5055 = vsel %vm2903, %v5042, %v5049
        %v5056 = vpack.c.bf16 %v5032, %v5032
        %5057 = vmatpush.bf16.msra.mxu0 %v4345
        %5058 = vmatpush.bf16.msra.mxu0 %v4342
        %5059 = vmatpush.bf16.msra.mxu0 %v4339
        %5060 = vmatpush.bf16.msra.mxu0 %v4336
        %5061 = vmatpush.bf16.msra.mxu0 %v4333
        %5062 = vmatpush.bf16.msra.mxu0 %v4330
        %5063 = vmatpush.bf16.msra.mxu0 %v4327
        %5064 = vmatpush.bf16.msra.mxu0 %v4324
        %5065 = vmatmul.bf16.gmra.mxu0 %v5056
        %v5066 = vpop.f32.mrf.mxu0
        %v5067 = vadd.f32 %v4373, %v5066
        %v5068 = vpop.f32.mrf.mxu0
        %5069 = vdwg.mxu0
        %5070 = vmatpush.bf16.msra.mxu0 %v4346
        %5071 = vmatpush.bf16.msra.mxu0 %v4343
        %5072 = vmatpush.bf16.msra.mxu0 %v4340
        %5073 = vmatpush.bf16.msra.mxu0 %v4337
        %5074 = vmatpush.bf16.msra.mxu0 %v4334
        %5075 = vmatpush.bf16.msra.mxu0 %v4331
        %5076 = vmatpush.bf16.msra.mxu0 %v4328
        %5077 = vmatpush.bf16.msra.mxu0 %v4325
        %5078 = vmatmul.bf16.gmra.mxu0 %v5056
        %v5079 = vpop.f32.mrf.mxu0
        %v5080 = vadd.f32 %v4374, %v5079
        %v5081 = vpop.f32.mrf.mxu0
        %5082 = vdwg.mxu0
        %5083 = vmatpush.bf16.msra.mxu0 %v4347
        %5084 = vmatpush.bf16.msra.mxu0 %v4344
        %5085 = vmatpush.bf16.msra.mxu0 %v4341
        %5086 = vmatpush.bf16.msra.mxu0 %v4338
        %5087 = vmatpush.bf16.msra.mxu0 %v4335
        %5088 = vmatpush.bf16.msra.mxu0 %v4332
        %5089 = vmatpush.bf16.msra.mxu0 %v4329
        %5090 = vmatpush.bf16.msra.mxu0 %v4326
        %5091 = vmatmul.bf16.gmra.mxu0 %v5056
        %v5092 = vpop.f32.mrf.mxu0
        %v5093 = vadd.f32 %v4375, %v5092
        %v5094 = vpop.f32.mrf.mxu0
        %5095 = vdwg.mxu0
        %v5096 = vadd.f32 %v5053, %v5067
        %v5097 = vxor.u32 %v5096, 2147483648
        %v5098 = vmul.f32 %v5097, 1.442695
        %v5099 = vpow.pop %v5098
        %v5100 = vadd.f32 %v5099, 1.0
        %v5101 = vrcp.pop %v5100
        %v5102 = vmul.f32 %v5100, %v5101
        %v5103 = vsub.f32 1.0, %v5102
        %v5104 = vmul.f32 %v5101, %v5103
        %v5105 = vadd.f32 %v5101, %v5104
        %vm5106 = vweird.f32 %v5100
        %vm5107 = vweird.f32 %v5101
        %vm5108 = vmor %vm5106, %vm5107
        %v5109 = vsel %vm5108, %v5101, %v5105
        %v5110 = vand.u32 2147483647, %v5100
        %vm5111 = vcmp.eq.f32.partialorder %v5110, 8.507059e+37
        %v5112 = vand.u32 %v5100, 2147483648
        %v5113 = vor.u32 1.1754944e-38, %v5112
        %v5114 = vsel %vm5111, %v5113, %v5109
        %v5115 = vmul.f32 1.0, %v5114
        %v5116 = vadd.f32 %v5054, %v5080
        %v5117 = vxor.u32 %v5116, 2147483648
        %v5118 = vmul.f32 %v5117, 1.442695
        %v5119 = vpow.pop %v5118
        %v5120 = vadd.f32 %v5119, 1.0
        %v5121 = vrcp.pop %v5120
        %v5122 = vmul.f32 %v5120, %v5121
        %v5123 = vsub.f32 1.0, %v5122
        %v5124 = vmul.f32 %v5121, %v5123
        %v5125 = vadd.f32 %v5121, %v5124
        %vm5126 = vweird.f32 %v5120
        %vm5127 = vweird.f32 %v5121
        %vm5128 = vmor %vm5126, %vm5127
        %v5129 = vsel %vm5128, %v5121, %v5125
        %v5130 = vand.u32 2147483647, %v5120
        %vm5131 = vcmp.eq.f32.partialorder %v5130, 8.507059e+37
        %v5132 = vand.u32 %v5120, 2147483648
        %v5133 = vor.u32 1.1754944e-38, %v5132
        %v5134 = vsel %vm5131, %v5133, %v5129
        %v5135 = vmul.f32 1.0, %v5134
        %v5136 = vmul.f32 %v5115, %v5093
        %v5137 = vadd.f32 %v5055, %v5136
        %v5138 = vtanh.pop %v5137
        %v5139 = vsub.f32 1.0, %v5135
        %v5140 = vmul.f32 %v5139, %v5138
        %v5141 = vmul.f32 %v5135, %v5032
        %v5142 = vadd.f32 %v5140, %v5141
        %v5143 = vsel %vm2862, %v3325, %v3324
        %vm5144 = vcmp.lt.s32.totalorder %v5143, %v3192
        %v5145 = vsel %vm5144, %v5142, %v5032
        %vm5146 = vmand %vm2862, %vm5144
        %v5147 = vsel %vm5146, %v5145, 0.0
        %vm5148 = vmand %vm3197, %vm5144
        %v5149 = vsel %vm5148, %v5145, 0.0
        %v5150 = vld [vmem:[%s2916] ss:$8 sm:$0x7]
        %v5151 = vld [vmem:[%s2907] ss:$8 sm:$0x7]
        %v5153 = vperm.slane %v5150, 0
        %v5154 = vperm.slane %v5150, 1
        %v5155 = vperm.slane %v5150, 2
        %v5160 = vperm.slane %v5151, 0
        %v5161 = vperm.slane %v5151, 1
        %v5162 = vperm.slane %v5151, 2
        %v5166 = vsel %vm2901, %v5153, %v5160
        %v5167 = vsel %vm2902, %v5154, %v5161
        %v5168 = vsel %vm2903, %v5155, %v5162
        %v5169 = vpack.c.bf16 %v5145, %v5145
        %5170 = vmatpush.bf16.msra.mxu0 %v4345
        %5171 = vmatpush.bf16.msra.mxu0 %v4342
        %5172 = vmatpush.bf16.msra.mxu0 %v4339
        %5173 = vmatpush.bf16.msra.mxu0 %v4336
        %5174 = vmatpush.bf16.msra.mxu0 %v4333
        %5175 = vmatpush.bf16.msra.mxu0 %v4330
        %5176 = vmatpush.bf16.msra.mxu0 %v4327
        %5177 = vmatpush.bf16.msra.mxu0 %v4324
        %5178 = vmatmul.bf16.gmra.mxu0 %v5169
        %v5179 = vpop.f32.mrf.mxu0
        %v5180 = vadd.f32 %v4373, %v5179
        %v5181 = vpop.f32.mrf.mxu0
        %5182 = vdwg.mxu0
        %5183 = vmatpush.bf16.msra.mxu0 %v4346
        %5184 = vmatpush.bf16.msra.mxu0 %v4343
        %5185 = vmatpush.bf16.msra.mxu0 %v4340
        %5186 = vmatpush.bf16.msra.mxu0 %v4337
        %5187 = vmatpush.bf16.msra.mxu0 %v4334
        %5188 = vmatpush.bf16.msra.mxu0 %v4331
        %5189 = vmatpush.bf16.msra.mxu0 %v4328
        %5190 = vmatpush.bf16.msra.mxu0 %v4325
        %5191 = vmatmul.bf16.gmra.mxu0 %v5169
        %v5192 = vpop.f32.mrf.mxu0
        %v5193 = vadd.f32 %v4374, %v5192
        %v5194 = vpop.f32.mrf.mxu0
        %5195 = vdwg.mxu0
        %5196 = vmatpush.bf16.msra.mxu0 %v4347
        %5197 = vmatpush.bf16.msra.mxu0 %v4344
        %5198 = vmatpush.bf16.msra.mxu0 %v4341
        %5199 = vmatpush.bf16.msra.mxu0 %v4338
        %5200 = vmatpush.bf16.msra.mxu0 %v4335
        %5201 = vmatpush.bf16.msra.mxu0 %v4332
        %5202 = vmatpush.bf16.msra.mxu0 %v4329
        %5203 = vmatpush.bf16.msra.mxu0 %v4326
        %5204 = vmatmul.bf16.gmra.mxu0 %v5169
        %v5205 = vpop.f32.mrf.mxu0
        %v5206 = vadd.f32 %v4375, %v5205
        %v5207 = vpop.f32.mrf.mxu0
        %5208 = vdwg.mxu0
        %v5209 = vadd.f32 %v5166, %v5180
        %v5210 = vxor.u32 %v5209, 2147483648
        %v5211 = vmul.f32 %v5210, 1.442695
        %v5212 = vpow.pop %v5211
        %v5213 = vadd.f32 %v5212, 1.0
        %v5214 = vrcp.pop %v5213
        %v5215 = vmul.f32 %v5213, %v5214
        %v5216 = vsub.f32 1.0, %v5215
        %v5217 = vmul.f32 %v5214, %v5216
        %v5218 = vadd.f32 %v5214, %v5217
        %vm5219 = vweird.f32 %v5213
        %vm5220 = vweird.f32 %v5214
        %vm5221 = vmor %vm5219, %vm5220
        %v5222 = vsel %vm5221, %v5214, %v5218
        %v5223 = vand.u32 2147483647, %v5213
        %vm5224 = vcmp.eq.f32.partialorder %v5223, 8.507059e+37
        %v5225 = vand.u32 %v5213, 2147483648
        %v5226 = vor.u32 1.1754944e-38, %v5225
        %v5227 = vsel %vm5224, %v5226, %v5222
        %v5228 = vmul.f32 1.0, %v5227
        %v5229 = vadd.f32 %v5167, %v5193
        %v5230 = vxor.u32 %v5229, 2147483648
        %v5231 = vmul.f32 %v5230, 1.442695
        %v5232 = vpow.pop %v5231
        %v5233 = vadd.f32 %v5232, 1.0
        %v5234 = vrcp.pop %v5233
        %v5235 = vmul.f32 %v5233, %v5234
        %v5236 = vsub.f32 1.0, %v5235
        %v5237 = vmul.f32 %v5234, %v5236
        %v5238 = vadd.f32 %v5234, %v5237
        %vm5239 = vweird.f32 %v5233
        %vm5240 = vweird.f32 %v5234
        %vm5241 = vmor %vm5239, %vm5240
        %v5242 = vsel %vm5241, %v5234, %v5238
        %v5243 = vand.u32 2147483647, %v5233
        %vm5244 = vcmp.eq.f32.partialorder %v5243, 8.507059e+37
        %v5245 = vand.u32 %v5233, 2147483648
        %v5246 = vor.u32 1.1754944e-38, %v5245
        %v5247 = vsel %vm5244, %v5246, %v5242
        %v5248 = vmul.f32 1.0, %v5247
        %v5249 = vmul.f32 %v5228, %v5206
        %v5250 = vadd.f32 %v5168, %v5249
        %v5251 = vtanh.pop %v5250
        %v5252 = vsub.f32 1.0, %v5248
        %v5253 = vmul.f32 %v5252, %v5251
        %v5254 = vmul.f32 %v5248, %v5145
        %v5255 = vadd.f32 %v5253, %v5254
        %v5256 = vsel %vm2862, %v3190, %v3189
        %vm5257 = vcmp.lt.s32.totalorder %v5256, %v3192
        %v5258 = vsel %vm5257, %v5255, %v5145
        %vm5259 = vmand %vm2862, %vm5257
        %v5260 = vsel %vm5259, %v5258, 0.0
        %vm5261 = vmand %vm3197, %vm5257
        %v5262 = vsel %vm5261, %v5258, 0.0
        %v5264 = vrot.slane %v4582, 7
        %v5267 = vrot.slane %v4695, 6
        %v5270 = vrot.slane %v4808, 5
        %v5273 = vrot.slane %v4921, 4
        %v5276 = vrot.slane %v5034, 3
        %v5279 = vrot.slane %v5147, 2
        %v5282 = vrot.slane %v5260, 1
        %v5284 = vsel %vm4146, %v4469, %v5264
        %v5285 = vsel %vm4148, %v5284, %v5267
        %v5286 = vsel %vm4150, %v5285, %v5270
        %v5287 = vsel %vm4152, %v5286, %v5273
        %v5288 = vsel %vm4154, %v5287, %v5276
        %v5289 = vsel %vm4156, %v5288, %v5279
        %v5290 = vsel %vm4158, %v5289, %v5282
        %s5291 = scalar_lea.vmem [#allocation3], 8
        %5292 = vst [vmem:[%s5291] sm:$0xff] %v5290
        %v5294 = vrot.slane %v5149, 7
        %v5297 = vrot.slane %v5036, 6
        %v5300 = vrot.slane %v4923, 5
        %v5303 = vrot.slane %v4810, 4
        %v5306 = vrot.slane %v4697, 3
        %v5309 = vrot.slane %v4584, 2
        %v5312 = vrot.slane %v4471, 1
        %v5314 = vsel %vm4146, %v5262, %v5294
        %v5315 = vsel %vm4148, %v5314, %v5297
        %v5316 = vsel %vm4150, %v5315, %v5300
        %v5317 = vsel %vm4152, %v5316, %v5303
        %v5318 = vsel %vm4154, %v5317, %v5306
        %v5319 = vsel %vm4156, %v5318, %v5309
        %v5320 = vsel %vm4158, %v5319, %v5312
        %5321 = vst [vmem:[#allocation4] sm:$0xff] %v5320
        %v5322 = vld [vmem:[#allocation3] sm:$0xff]
        %v5323 = vld [vmem:[#allocation3 + $0x8] sm:$0xff]
        %v5324 = vld [vmem:[#allocation4] sm:$0xff]
        %v5325 = vld [vmem:[#allocation4 + $0x8] sm:$0xff]
        %v5326 = vadd.f32 %v5322, %v5324
        %v5327 = vadd.f32 %v5323, %v5325
        %v5328 = vpack.c.bf16 %v5327, %v5326
        %v5329 = vld [vmem:[%s424] sm:$0xff]
        %v5330 = vld [vmem:[%s424 + $0x8] sm:$0xff]
        %v5331 = vld [vmem:[#allocation14] sm:$0xf]
        %v5332 = vld [vmem:[#allocation14 + $0x4] sm:$0xf]
        %v5333 = vld [vmem:[#allocation14 + $0x8] sm:$0xf]
        %v5334 = vld [vmem:[#allocation14 + $0xc] sm:$0xf]
        %v5335 = vld [vmem:[#allocation14 + $0x10] sm:$0xf]
        %v5336 = vld [vmem:[#allocation14 + $0x14] sm:$0xf]
        %v5337 = vld [vmem:[#allocation14 + $0x18] sm:$0xf]
        %v5338 = vld [vmem:[#allocation14 + $0x1c] sm:$0xf]
        %v5339 = vld [vmem:[#allocation14 + $0x20] sm:$0xf]
        %v5340 = vld [vmem:[#allocation14 + $0x24] sm:$0xf]
        %v5341 = vld [vmem:[#allocation14 + $0x28] sm:$0xf]
        %v5342 = vld [vmem:[#allocation14 + $0x2c] sm:$0xf]
        %v5343 = vld [vmem:[#allocation14 + $0x30] sm:$0xf]
        %v5344 = vld [vmem:[#allocation14 + $0x34] sm:$0xf]
        %v5345 = vld [vmem:[#allocation14 + $0x38] sm:$0xf]
        %v5346 = vld [vmem:[#allocation14 + $0x3c] sm:$0xf]
        %v5363 = vunpack.c.l.b16 %v5331
        %v5364 = vunpack.c.l.b16 %v5332
        %v5365 = vunpack.c.l.b16 %v5333
        %v5366 = vunpack.c.l.b16 %v5334
        %v5367 = vunpack.c.l.b16 %v5335
        %v5368 = vunpack.c.l.b16 %v5336
        %v5369 = vunpack.c.l.b16 %v5337
        %v5370 = vunpack.c.l.b16 %v5338
        %v5371 = vunpack.c.l.b16 %v5339
        %v5372 = vunpack.c.l.b16 %v5340
        %v5373 = vunpack.c.l.b16 %v5341
        %v5374 = vunpack.c.l.b16 %v5342
        %v5375 = vunpack.c.l.b16 %v5343
        %v5376 = vunpack.c.l.b16 %v5344
        %v5377 = vunpack.c.l.b16 %v5345
        %v5378 = vunpack.c.l.b16 %v5346
        %v5379 = vpack.c.b16 %v5364, %v5363
        %v5380 = vpack.c.b16 %v5366, %v5365
        %v5381 = vpack.c.b16 %v5368, %v5367
        %v5382 = vpack.c.b16 %v5370, %v5369
        %v5383 = vpack.c.b16 %v5372, %v5371
        %v5384 = vpack.c.b16 %v5374, %v5373
        %v5385 = vpack.c.b16 %v5376, %v5375
        %v5386 = vpack.c.b16 %v5378, %v5377
        %5395 = vmatpush.bf16.msra.mxu0 %v5386
        %5396 = vmatpush.bf16.msra.mxu0 %v5385
        %5397 = vmatpush.bf16.msra.mxu0 %v5384
        %5398 = vmatpush.bf16.msra.mxu0 %v5383
        %5399 = vmatpush.bf16.msra.mxu0 %v5382
        %5400 = vmatpush.bf16.msra.mxu0 %v5381
        %5401 = vmatpush.bf16.msra.mxu0 %v5380
        %5402 = vmatpush.bf16.msra.mxu0 %v5379
        %5403 = vmatmul.bf16.gmra.mxu0 %v5328
        %v5404 = vpop.f32.mrf.mxu0
        %v5405 = vadd.f32 0.0, %v5404
        %v5406 = vpop.f32.mrf.mxu0
        %v5407 = vadd.f32 0.0, %v5406
        %5408 = vdwg.mxu0
        %v5409 = vadd.f32 %v5329, %v5405
        %v5410 = vadd.f32 %v5330, %v5407
        %5411 = vst [vmem:[%s424] sm:$0xff] %v5409
        %5412 = vst [vmem:[%s424 + $0x8] sm:$0xff] %v5410
        %p5413 = scmp.lt.s32.totalorder %s32, 1
        %s5414 = scalar_select %p5413, %s32, 1
        %s5415 = smul.addr %s5414, 2
        %s5416 = smul.addr %s5415, 8
        %s5417 = scalar_lea.vmem %s9, %s5416
        // Predicated region
        $region81: #{bert_bigru_att_crf_forward.1} parent=51 // pred_check
          %p5418 = pneg %p223
        $region82: #{bert_bigru_att_crf_forward.1} parent=51 // pred_check_branch
          %5420 = sbr.rel (%p5418) target = $region84
        $region83: #{bert_bigru_att_crf_forward.1} parent=51 // pred_region
          _
        $region84: #{bert_bigru_att_crf_forward.1} parent=51 // pred_fallthru
          _
      $region52: #{bert_bigru_att_crf_forward.1} parent=5 // pred_fallthru
        _
      %p5421 = scmp.le.s32.totalorder 2, %s27
      // Predicated region
      $region85: #{bert_bigru_att_crf_forward.1} parent=5 // pred_check
        %p5422 = pneg %p5421
      $region86: #{bert_bigru_att_crf_forward.1} parent=5 // pred_check_branch
        %5424 = sbr.rel (%p5422) target = $region88
      $region87: #{bert_bigru_att_crf_forward.1} parent=5 // pred_region
        %s5425 = ssub.s32 %s27, 2
        // Predicated region
        $region89: #{bert_bigru_att_crf_forward.1} parent=87 // pred_check
          %p5426 = pneg %p229
        $region90: #{bert_bigru_att_crf_forward.1} parent=87 // pred_check_branch
          %5428 = sbr.rel (%p5426) target = $region92
        $region91: #{bert_bigru_att_crf_forward.1} parent=87 // pred_region
          %p5429 = scmp.lt.s32.totalorder %s33, 1
          %s5430 = scalar_select %p5429, %s33, 1
          %s5431 = smul.addr %s5430, 2
          %s5432 = smul.addr %s5431, 8
          %s5433 = scalar_lea.vmem %s9, %s5432
        $region92: #{bert_bigru_att_crf_forward.1} parent=87 // pred_fallthru
          _
      $region88: #{bert_bigru_att_crf_forward.1} parent=5 // pred_fallthru
        _
    $region6: #{bert_bigru_att_crf_forward.1} parent=1 // loop_footer
      %s31 = sadd.s32 1, %s27
    $region7: #{bert_bigru_att_crf_forward.1} parent=1 // loop_footer_branch
      %26 = sbr.rel target = $region3
    $region8: #{bert_bigru_att_crf_forward.1} parent=1 // loop_exit
      _
    %5434 = vsyncpa [#allocation8], 1
    %s5435 = scalar_lea.sflag [#allocation8], 1
    %5436 = vsyncpa %s5435, 1
    %5437 = vsyncpa [#allocation10], 1
    %5438 = vsyncpa [#allocation13], 1
    %5439 = vsyncpa [#allocation16], 1

</llo_original>
